<compile_context>
chip_gen: v5e
topology: v5e:2x2
jax: 0.10.0
libtpu: 0.0.40
codegen_flags: <defaults>
</compile_context>

<pallas_src>
import functools

import jax
import jax.numpy as jnp
import numpy as np
from jax.experimental import pallas as pl
from jax.experimental.pallas import tpu as pltpu

_VMEM_LIMIT = 48 * 1024 * 1024  # explicit scoped-VMEM ceiling (headroom on v7x)


# -----------------------------------------------------------------------------
# Pallas kernels
# -----------------------------------------------------------------------------
def _bn_stats_kernel(x_ref, o_ref):
    """Pivoted per-channel sum / sum-of-squares accumulation.

    o_ref rows: 0 = sum(x - pivot), 1 = sum((x - pivot)^2), 2 = pivot.
    The pivot (mean of the first block) removes the catastrophic cancellation
    of the naive E[x^2] - E[x]^2 formula.
    """
    x = x_ref[...]  # (br, C)

    @pl.when(pl.program_id(0) == 0)
    def _():
        n0 = jnp.float32(x.shape[0])
        o_ref[2:3, :] = jnp.sum(x, axis=0, keepdims=True) / n0
        o_ref[0:2, :] = jnp.zeros_like(o_ref[0:2, :])

    d = x - o_ref[2:3, :]
    o_ref[0:1, :] += jnp.sum(d, axis=0, keepdims=True)
    o_ref[1:2, :] += jnp.sum(d * d, axis=0, keepdims=True)


def _conv3x3_kernel(x_ref, w_ref, b_ref, o_ref, *, Wp):
    """Direct 3x3 conv on a halo row-tile in flattened (rows*Wp, Cin) form.

    x_ref : ((th+4)*Wp, Cin)  halo tile (2 halo rows top/bottom, 2 pad cols each side)
    w_ref : (9, Cin, Cout)    per-tap weight matrices (tap = dy*3 + dx)
    b_ref : (1, Cout)
    o_ref : (th*Wp, Cout)     "wide" output; valid columns are [2, W+2)
    Because input and output share the same flat width Wp, tap (dy, dx) is one
    contiguous row shift:  src_idx = out_idx + (dy+1)*Wp + (dx-1).
    """
    Lo, Cout = o_ref.shape
    acc = jnp.zeros((Lo, Cout), jnp.float32) + b_ref[...]  # bias hoisted into init
    for dy in range(3):
        for dx in range(3):
            s = (dy + 1) * Wp + (dx - 1)
            acc = acc + jnp.dot(x_ref[pl.ds(s, Lo), :], w_ref[dy * 3 + dx],
                                preferred_element_type=jnp.float32)
    o_ref[...] = acc


def _spade_layer_kernel(x_ref, mod_ref, mask_ref, scale_ref, shift_ref,
                        w1_ref, b1_ref, wgb_ref, bgb_ref,
                        o_ref, co_ref, *, Wp, C):
    """Fused SPADELayer + LeakyReLU(0.2) for one (batch, row-tile) grid cell.

      conv_out   = conv3x3(modulation)      (kept in VMEM scratch, never in HBM)
      gamma|beta = conv3x3(conv_out)        (single fused 2C-wide matmul)
      xn         = x * scale + shift        (folded BatchNorm)
      out        = leaky_relu(xn + xn*gamma + beta, 0.2)
    """
    Lc, hidden = co_ref.shape
    Lo = o_ref.shape[0]

    # conv1(modulation) over the (th+4)-row halo needed by the gamma/beta conv.
    acc1 = jnp.zeros((Lc, hidden), jnp.float32) + b1_ref[...]
    for dy in range(3):
        for dx in range(3):
            s = (dy + 1) * Wp + (dx - 1)
            acc1 = acc1 + jnp.dot(mod_ref[pl.ds(s, Lc), :], w1_ref[dy * 3 + dx],
                                  preferred_element_type=jnp.float32)
    # Zero every position outside the true HxW image so the second conv sees the
    # same zero padding a standalone Conv2d(padding=1) would.
    co_ref[...] = acc1 * mask_ref[...]

    # gamma||beta = conv3x3(conv_out): both heads in one matmul (Cout = 2C).
    acc2 = jnp.zeros((Lo, 2 * C), jnp.float32) + bgb_ref[...]
    for dy in range(3):
        for dx in range(3):
            s = (dy + 1) * Wp + (dx - 1)
            acc2 = acc2 + jnp.dot(co_ref[pl.ds(s, Lo), :], wgb_ref[dy * 3 + dx],
                                  preferred_element_type=jnp.float32)
    gamma = acc2[:, :C]
    beta = acc2[:, C:]

    xn = x_ref[...] * scale_ref[...] + shift_ref[...]
    y = xn + xn * gamma + beta
    o_ref[...] = jnp.where(y >= 0.0, y, 0.2 * y)


# -----------------------------------------------------------------------------
# Tiling / layout helpers (JAX glue)
# -----------------------------------------------------------------------------
def _pick_row_tile(H, Wp, chans, budget_bytes=4 * 1024 * 1024):
    """Largest row-tile th (th | H, (th*Wp)%8==0 or th==H) fitting the VMEM budget."""
    legal = [th for th in range(H, 0, -1)
             if H % th == 0 and (th == H or (th * Wp) % 8 == 0)]
    for th in legal:
        if (th + 8) * Wp * max(chans, 1) * 4 <= budget_bytes:
            return th
    return legal[-1]


def _pick_stat_rows(R, C, budget_bytes=8 * 1024 * 1024):
    """Few, big blocks for the BN stats reduction (one block when it fits)."""
    max_rows = max(8, budget_bytes // (4 * max(C, 1)))
    if R <= max_rows:
        return R
    start = min(R, max_rows)
    start -= start % 8
    for br in range(start, 0, -8):
        if R % br == 0:
            return br
    return R


def _widen_flat(x_nhwc):
    """(N,H,W,C) -> (N, H*(W+4), C): two zero columns of padding on each side."""
    N, H, W, C = x_nhwc.shape
    xp = jnp.pad(x_nhwc, ((0, 0), (0, 0), (2, 2), (0, 0)))
    return xp.reshape(N, H * (W + 4), C)


def _narrow(y_flat, H, W):
    """(N, H*(W+4), C) -> (N,H,W,C): drop the padded columns."""
    N, _, C = y_flat.shape
    return y_flat.reshape(N, H, W + 4, C)[:, :, 2:2 + W, :]


def _halo_row_tiles(x_nhwc, th, halo):
    """Overlapping row tiles (halo rows above/below, 2 zero cols each side).

    Returns (N, T, (th + 2*halo)*(W+4), C).  Per-tile duplication ~(th+2*halo)/th
    instead of the 9x of im2col.
    """
    N, H, W, C = x_nhwc.shape
    Wp = W + 4
    T = H // th
    rows = th + 2 * halo
    xp = jnp.pad(x_nhwc, ((0, 0), (halo, halo), (2, 2), (0, 0)))
    tiles = jnp.stack([xp[:, t * th:t * th + rows] for t in range(T)], axis=1)
    return tiles.reshape(N, T, rows * Wp, C)


def _prep_conv_w(w_oihw):
    """(Cout, Cin, 3, 3) -> (9, Cin, Cout), tap index = dy*3 + dx."""
    cout, cin = w_oihw.shape[0], w_oihw.shape[1]
    return jnp.transpose(w_oihw, (2, 3, 1, 0)).reshape(9, cin, cout)


def _conv_out_mask(H, W, th, T):
    """Validity mask for the in-kernel conv_out halo: zero outside the HxW image."""
    Wp = W + 4
    rows = th + 4
    r = np.arange(rows)[None, :] + np.arange(T)[:, None] * th - 2  # (T, rows)
    rmask = (r >= 0) & (r < H)
    c = np.arange(Wp)
    cmask = (c >= 2) & (c < W + 2)
    m = rmask[:, :, None] & cmask[None, None, :]
    return jnp.asarray(m.reshape(T, rows * Wp, 1).astype(np.float32))


# -----------------------------------------------------------------------------
# pallas_call wrappers
# -----------------------------------------------------------------------------
def batchnorm_scale_shift(x_nhwc, bn_w, bn_b, eps=1e-5):
    """Training-mode BN batch statistics -> per-channel (scale, shift), each (1, C)."""
    N, H, W, C = x_nhwc.shape
    R = N * H * W
    xf = x_nhwc.reshape(R, C)
    br = _pick_stat_rows(R, C)
    G = R // br
    stats = pl.pallas_call(
        _bn_stats_kernel,
        out_shape=jax.ShapeDtypeStruct((3, C), jnp.float32),
        grid=(G,),
        in_specs=[pl.BlockSpec((br, C), lambda g: (g, 0))],
        out_specs=pl.BlockSpec((3, C), lambda g: (0, 0)),
        compiler_params=pltpu.CompilerParams(
            dimension_semantics=("arbitrary",),
            vmem_limit_bytes=_VMEM_LIMIT),
    )(xf)
    cnt = jnp.float32(R)
    d1 = stats[0] / cnt
    mean = stats[2] + d1
    var = stats[1] / cnt - d1 * d1          # exact shifted-variance identity
    scale = bn_w / jnp.sqrt(var + eps)
    shift = bn_b - mean * scale
    return scale.reshape(1, C), shift.reshape(1, C)


def conv3x3(x_nhwc, w_oihw, b):
    """3x3 stride-1 pad-1 conv via a direct halo-tile Pallas kernel (no im2col)."""
    N, H, W, Cin = x_nhwc.shape
    Cout = w_oihw.shape[0]
    Wp = W + 4
    th = _pick_row_tile(H, Wp, max(Cin, Cout))
    T = H // th
    tiles = _halo_row_tiles(x_nhwc, th, 2)          # (N, T, (th+4)*Wp, Cin)
    wt = _prep_conv_w(w_oihw)
    bm = b.reshape(1, Cout)
    Lo, Li = th * Wp, (th + 4) * Wp
    out = pl.pallas_call(
        functools.partial(_conv3x3_kernel, Wp=Wp),
        out_shape=jax.ShapeDtypeStruct((N, H * Wp, Cout), jnp.float32),
        grid=(N, T),
        in_specs=[
            pl.BlockSpec((None, None, Li, Cin), lambda n, t: (n, t, 0, 0)),
            pl.BlockSpec((9, Cin, Cout), lambda n, t: (0, 0, 0)),
            pl.BlockSpec((1, Cout), lambda n, t: (0, 0)),
        ],
        out_specs=pl.BlockSpec((None, Lo, Cout), lambda n, t: (n, t, 0)),
        compiler_params=pltpu.CompilerParams(
            dimension_semantics=("parallel", "parallel"),
            vmem_limit_bytes=_VMEM_LIMIT),
    )(tiles, wt, bm)
    return _narrow(out, H, W)


def spade_layer_fused(x_nhwc, mod_tiles, comask, p, *, th, Wp):
    """SPADELayer forward fused with the LeakyReLU that follows it in SPADE."""
    N, H, W, C = x_nhwc.shape
    T = H // th
    Cmod = mod_tiles.shape[-1]
    w1 = _prep_conv_w(p["w1"])                                       # (9, Cmod, hidden)
    hidden = w1.shape[-1]
    wgb = jnp.concatenate([_prep_conv_w(p["wg"]), _prep_conv_w(p["wb"])], axis=-1)
    bgb = jnp.concatenate([p["bg"], p["bb"]]).reshape(1, 2 * C)
    b1 = p["b1"].reshape(1, hidden)

    scale, shift = batchnorm_scale_shift(x_nhwc, p["bn_w"], p["bn_b"])
    x_flat = _widen_flat(x_nhwc)                                     # (N, H*Wp, C)

    Lo, Lm, Lc = th * Wp, (th + 8) * Wp, (th + 4) * Wp
    out = pl.pallas_call(
        functools.partial(_spade_layer_kernel, Wp=Wp, C=C),
        out_shape=jax.ShapeDtypeStruct((N, H * Wp, C), jnp.float32),
        grid=(N, T),
        in_specs=[
            pl.BlockSpec((None, Lo, C), lambda n, t: (n, t, 0)),            # x
            pl.BlockSpec((None, None, Lm, Cmod), lambda n, t: (n, t, 0, 0)),  # mod halo
            pl.BlockSpec((None, Lc, 1), lambda n, t: (t, 0, 0)),            # conv_out mask
            pl.BlockSpec((1, C), lambda n, t: (0, 0)),                      # BN scale
            pl.BlockSpec((1, C), lambda n, t: (0, 0)),                      # BN shift
            pl.BlockSpec((9, Cmod, hidden), lambda n, t: (0, 0, 0)),        # conv1 w
            pl.BlockSpec((1, hidden), lambda n, t: (0, 0)),                 # conv1 b
            pl.BlockSpec((9, hidden, 2 * C), lambda n, t: (0, 0, 0)),       # gamma|beta w
            pl.BlockSpec((1, 2 * C), lambda n, t: (0, 0)),                  # gamma|beta b
        ],
        out_specs=pl.BlockSpec((None, Lo, C), lambda n, t: (n, t, 0)),
        scratch_shapes=[pltpu.VMEM((Lc, hidden), jnp.float32)],
        compiler_params=pltpu.CompilerParams(
            dimension_semantics=("parallel", "parallel"),
            vmem_limit_bytes=_VMEM_LIMIT),
    )(x_flat, mod_tiles, comask, scale, shift, w1, b1, wgb, bgb)
    return _narrow(out, H, W)


# -----------------------------------------------------------------------------
# SPADE model (Pallas-backed forward)
# -----------------------------------------------------------------------------
def spade_forward(x_nchw, mod_nchw, params):
    x = jnp.transpose(x_nchw, (0, 2, 3, 1)).astype(jnp.float32)
    m = jnp.transpose(mod_nchw, (0, 2, 3, 1)).astype(jnp.float32)
    N, H, W, C = x.shape
    Wp = W + 4
    hidden = params["sl1"]["w1"].shape[0]
    th = _pick_row_tile(H, Wp, hidden)
    T = H // th

    # Modulation halo tiles + conv_out validity mask are shared by both layers.
    mod_tiles = _halo_row_tiles(m, th, 4)        # (N, T, (th+8)*Wp, Cmod)
    comask = _conv_out_mask(H, W, th, T)         # (T, (th+4)*Wp, 1)

    h = spade_layer_fused(x, mod_tiles, comask, params["sl1"], th=th, Wp=Wp)
    h = conv3x3(h, params["c1_w"], params["c1_b"])
    h = spade_layer_fused(h, mod_tiles, comask, params["sl2"], th=th, Wp=Wp)
    h = conv3x3(h, params["c2_w"], params["c2_b"])
    return jnp.transpose(h, (0, 3, 1, 2))


# -----------------------------------------------------------------------------
# Pure-JAX reference (for correctness check)
# -----------------------------------------------------------------------------
def _conv_ref(x, w_oihw, b):
    w = jnp.transpose(w_oihw, (2, 3, 1, 0))
    y = jax.lax.conv_general_dilated(
        x, w, (1, 1), "SAME", dimension_numbers=("NHWC", "HWIO", "NHWC"))
    return y + b.reshape(1, 1, 1, -1)


def _bn_ref(x, w, b, eps=1e-5):
    mean = jnp.mean(x, axis=(0, 1, 2), keepdims=True)
    var = jnp.var(x, axis=(0, 1, 2), keepdims=True)
    return (x - mean) / jnp.sqrt(var + eps) * w.reshape(1, 1, 1, -1) + b.reshape(1, 1, 1, -1)


def _spade_layer_ref(x, m, p):
    xn = _bn_ref(x, p["bn_w"], p["bn_b"])
    co = _conv_ref(m, p["w1"], p["b1"])
    gamma = _conv_ref(co, p["wg"], p["bg"])
    beta = _conv_ref(co, p["wb"], p["bb"])
    return xn + xn * gamma + beta


def _lrelu(x):
    return jnp.where(x >= 0.0, x, 0.2 * x)


def spade_ref(x_nchw, mod_nchw, params):
    x = jnp.transpose(x_nchw, (0, 2, 3, 1)).astype(jnp.float32)
    m = jnp.transpose(mod_nchw, (0, 2, 3, 1)).astype(jnp.float32)
    h = _lrelu(_spade_layer_ref(x, m, params["sl1"]))
    h = _conv_ref(h, params["c1_w"], params["c1_b"])
    h = _lrelu(_spade_layer_ref(h, m, params["sl2"]))
    h = _conv_ref(h, params["c2_w"], params["c2_b"])
    return jnp.transpose(h, (0, 3, 1, 2))


# -----------------------------------------------------------------------------
# Deterministic parameter construction (PyTorch module shapes)
# -----------------------------------------------------------------------------
def make_params(key, C, Cmod, hidden):
    ks = jax.random.split(key, 16)

    def conv_p(kw, kb, cout, cin):
        return (0.1 * jax.random.normal(kw, (cout, cin, 3, 3), jnp.float32),
                0.05 * jax.random.normal(kb, (cout,), jnp.float32))

    def spade_layer_p(keys):
        w1, b1 = conv_p(keys[0], keys[1], hidden, Cmod)
        wg, bg = conv_p(keys[2], keys[3], C, hidden)
        wb, bb = conv_p(keys[4], keys[5], C, hidden)
        bn_w = 1.0 + 0.1 * jax.random.normal(keys[6], (C,), jnp.float32)
        bn_b = 0.1 * jax.random.normal(keys[7], (C,), jnp.float32)
        return dict(w1=w1, b1=b1, wg=wg, bg=bg, wb=wb, bb=bb,
                    bn_w=bn_w, bn_b=bn_b)

    c1_w, c1_b = conv_p(ks[12], ks[13], C, C)
    c2_w, c2_b = conv_p(ks[14], ks[15], C, C)
    return dict(sl1=spade_layer_p(ks[0:8]),
                sl2=spade_layer_p(jax.random.split(ks[8], 8)),
                c1_w=c1_w, c1_b=c1_b, c2_w=c2_w, c2_b=c2_b)


# -----------------------------------------------------------------------------
# Main
# -----------------------------------------------------------------------------
if __name__ == "__main__":
    B, C, Cmod, hidden, H, W = 2, 4, 4, 32, 16, 16

    key = jax.random.PRNGKey(0)
    kx, km, kp = jax.random.split(key, 3)
    x = jax.random.normal(kx, (B, C, H, W), jnp.float32)               # NCHW
    modulations = jax.random.normal(km, (B, Cmod, H, W), jnp.float32)  # NCHW
    params = make_params(kp, C, Cmod, hidden)

    fwd = jax.jit(spade_forward)
    out = jax.block_until_ready(fwd(x, modulations, params))
    ref = jax.block_until_ready(spade_ref(x, modulations, params))

    assert out.shape == (B, C, H, W)
    np.testing.assert_allclose(np.asarray(out), np.asarray(ref),
                               rtol=1e-4, atol=1e-4)
    print("KERNEL_OK")
</pallas_src>

<mosaic_0001>
module attributes {stable_mosaic.version = 11 : i64} {
  func.func @_bn_stats_kernel(%arg0: i32, %arg1: memref<512x4xf32, #tpu.memory_space<vmem>>, %arg2: memref<3x4xf32, #tpu.memory_space<vmem>>) attributes {dimension_semantics = [#tpu.dimension_semantics<arbitrary>], iteration_bounds = array<i64: 1>, scalar_prefetch = 0 : i64, scratch_operands = 0 : i64, tpu.core_type = #tpu.core_type<tc>, window_params = [{transform_indices = @transform_0, window_bounds = array<i64: 512, 4>}, {pipeline_mode = #tpu.pipeline_mode<synchronous>, transform_indices = @transform_1, window_bounds = array<i64: 3, 4>}]} {
    %c0 = arith.constant 0 : index
    %c0_0 = arith.constant 0 : index
    %0 = vector.load %arg1[%c0, %c0_0] : memref<512x4xf32, #tpu.memory_space<vmem>>, vector<512x4xf32>
    %c0_i32 = arith.constant 0 : i32
    %1 = arith.cmpi eq, %arg0, %c0_i32 : i32
    %2 = arith.extui %1 : i1 to i32
    %c0_i32_1 = arith.constant 0 : i32
    %3 = arith.cmpi ne, %2, %c0_i32_1 : i32
    scf.if %3 {
      %cst_11 = arith.constant dense<0.000000e+00> : vector<4xf32>
      %18 = vector.multi_reduction <add>, %0, %cst_11 [0] : vector<512x4xf32> to vector<4xf32>
      %19 = vector.shape_cast %18 : vector<4xf32> to vector<1x4xf32>
      %cst_12 = arith.constant 5.120000e+02 : f32
      %20 = vector.broadcast %cst_12 : f32 to vector<1x4xf32>
      %21 = arith.divf %19, %20 : vector<1x4xf32>
      %c2_13 = arith.constant 2 : index
      %c0_14 = arith.constant 0 : index
      %22 = vector.load %arg2[%c2_13, %c0_14] : memref<3x4xf32, #tpu.memory_space<vmem>>, vector<1x4xf32>
      tpu.vector_store %arg2[%c2_13, %c0_14], %21 {strides = array<i32>} : memref<3x4xf32, #tpu.memory_space<vmem>>, vector<1x4xf32>,
      %cst_15 = arith.constant 0.000000e+00 : f32
      %23 = vector.broadcast %cst_15 : f32 to vector<2x4xf32>
      %c0_16 = arith.constant 0 : index
      %c0_17 = arith.constant 0 : index
      %24 = vector.load %arg2[%c0_16, %c0_17] : memref<3x4xf32, #tpu.memory_space<vmem>>, vector<2x4xf32>
      tpu.vector_store %arg2[%c0_16, %c0_17], %23 {strides = array<i32>} : memref<3x4xf32, #tpu.memory_space<vmem>>, vector<2x4xf32>,
    } else {
    }
    %c2 = arith.constant 2 : index
    %c0_2 = arith.constant 0 : index
    %4 = vector.load %arg2[%c2, %c0_2] : memref<3x4xf32, #tpu.memory_space<vmem>>, vector<1x4xf32>
    %5 = vector.broadcast %4 : vector<1x4xf32> to vector<512x4xf32>
    %6 = arith.subf %0, %5 : vector<512x4xf32>
    %c0_3 = arith.constant 0 : index
    %c0_4 = arith.constant 0 : index
    %7 = vector.load %arg2[%c0_3, %c0_4] : memref<3x4xf32, #tpu.memory_space<vmem>>, vector<1x4xf32>
    %cst = arith.constant dense<0.000000e+00> : vector<4xf32>
    %8 = vector.multi_reduction <add>, %6, %cst [0] : vector<512x4xf32> to vector<4xf32>
    %9 = vector.shape_cast %8 : vector<4xf32> to vector<1x4xf32>
    %10 = arith.addf %7, %9 : vector<1x4xf32>
    %c0_5 = arith.constant 0 : index
    %c0_6 = arith.constant 0 : index
    %11 = vector.load %arg2[%c0_5, %c0_6] : memref<3x4xf32, #tpu.memory_space<vmem>>, vector<1x4xf32>
    tpu.vector_store %arg2[%c0_5, %c0_6], %10 {strides = array<i32>} : memref<3x4xf32, #tpu.memory_space<vmem>>, vector<1x4xf32>,
    %c1 = arith.constant 1 : index
    %c0_7 = arith.constant 0 : index
    %12 = vector.load %arg2[%c1, %c0_7] : memref<3x4xf32, #tpu.memory_space<vmem>>, vector<1x4xf32>
    %13 = arith.mulf %6, %6 : vector<512x4xf32>
    %cst_8 = arith.constant dense<0.000000e+00> : vector<4xf32>
    %14 = vector.multi_reduction <add>, %13, %cst_8 [0] : vector<512x4xf32> to vector<4xf32>
    %15 = vector.shape_cast %14 : vector<4xf32> to vector<1x4xf32>
    %16 = arith.addf %12, %15 : vector<1x4xf32>
    %c1_9 = arith.constant 1 : index
    %c0_10 = arith.constant 0 : index
    %17 = vector.load %arg2[%c1_9, %c0_10] : memref<3x4xf32, #tpu.memory_space<vmem>>, vector<1x4xf32>
    tpu.vector_store %arg2[%c1_9, %c0_10], %16 {strides = array<i32>} : memref<3x4xf32, #tpu.memory_space<vmem>>, vector<1x4xf32>,
    return
  }
  func.func @transform_0(%arg0: i32) -> (i32, i32) {
    %c0_i32 = arith.constant 0 : i32
    %c0_i32_0 = arith.constant 0 : i32
    return %arg0, %c0_i32 : i32, i32
  }
  func.func @transform_1(%arg0: i32) -> (i32, i32) {
    %c0_i32 = arith.constant 0 : i32
    %c0_i32_0 = arith.constant 0 : i32
    %c0_i32_1 = arith.constant 0 : i32
    return %c0_i32, %c0_i32_0 : i32, i32
  }
}

module attributes {stable_mosaic.version = 11 : i64} {
  func.func @_spade_layer_kernel(%arg0: i32, %arg1: i32, %arg2: memref<1x320x4xf32, #tpu.memory_space<vmem>>, %arg3: memref<1x1x480x4xf32, #tpu.memory_space<vmem>>, %arg4: memref<1x400x1xf32, #tpu.memory_space<vmem>>, %arg5: memref<1x4xf32, #tpu.memory_space<vmem>>, %arg6: memref<1x4xf32, #tpu.memory_space<vmem>>, %arg7: memref<9x4x32xf32, #tpu.memory_space<vmem>>, %arg8: memref<1x32xf32, #tpu.memory_space<vmem>>, %arg9: memref<9x32x8xf32, #tpu.memory_space<vmem>>, %arg10: memref<1x8xf32, #tpu.memory_space<vmem>>, %arg11: memref<1x320x4xf32, #tpu.memory_space<vmem>>, %arg12: memref<400x32xf32, #tpu.memory_space<vmem>>) attributes {dimension_semantics = [#tpu.dimension_semantics<parallel>, #tpu.dimension_semantics<parallel>], iteration_bounds = array<i64: 2, 1>, scalar_prefetch = 0 : i64, scratch_operands = 1 : i64, tpu.core_type = #tpu.core_type<tc>, window_params = [{transform_indices = @transform_0, window_bounds = array<i64: 1, 320, 4>}, {transform_indices = @transform_1, window_bounds = array<i64: 1, 1, 480, 4>}, {transform_indices = @transform_2, window_bounds = array<i64: 1, 400, 1>}, {pipeline_mode = #tpu.pipeline_mode<synchronous>, transform_indices = @transform_3, window_bounds = array<i64: 1, 4>}, {pipeline_mode = #tpu.pipeline_mode<synchronous>, transform_indices = @transform_4, window_bounds = array<i64: 1, 4>}, {pipeline_mode = #tpu.pipeline_mode<synchronous>, transform_indices = @transform_5, window_bounds = array<i64: 9, 4, 32>}, {pipeline_mode = #tpu.pipeline_mode<synchronous>, transform_indices = @transform_6, window_bounds = array<i64: 1, 32>}, {pipeline_mode = #tpu.pipeline_mode<synchronous>, transform_indices = @transform_7, window_bounds = array<i64: 9, 32, 8>}, {pipeline_mode = #tpu.pipeline_mode<synchronous>, transform_indices = @transform_8, window_bounds = array<i64: 1, 8>}, {transform_indices = @transform_9, window_bounds = array<i64: 1, 320, 4>}]} {
    %cst = arith.constant 0.000000e+00 : f32
    %0 = vector.broadcast %cst : f32 to vector<400x32xf32>
    %c0 = arith.constant 0 : index
    %c0_0 = arith.constant 0 : index
    %1 = vector.load %arg8[%c0, %c0_0] : memref<1x32xf32, #tpu.memory_space<vmem>>, vector<1x32xf32>
    %2 = vector.broadcast %1 : vector<1x32xf32> to vector<400x32xf32>
    %3 = arith.addf %0, %2 : vector<400x32xf32>
    %c0_1 = arith.constant 0 : index
    %c0_2 = arith.constant 0 : index
    %c19 = arith.constant 19 : index
    %c0_3 = arith.constant 0 : index
    %4 = vector.load %arg3[%c0_1, %c0_2, %c19, %c0_3] : memref<1x1x480x4xf32, #tpu.memory_space<vmem>>, vector<1x1x400x4xf32>
    %5 = vector.shape_cast %4 : vector<1x1x400x4xf32> to vector<400x4xf32>
    %c0_4 = arith.constant 0 : index
    %c0_5 = arith.constant 0 : index
    %c0_6 = arith.constant 0 : index
    %6 = vector.load %arg7[%c0_4, %c0_5, %c0_6] : memref<9x4x32xf32, #tpu.memory_space<vmem>>, vector<1x4x32xf32>
    %7 = vector.shape_cast %6 : vector<1x4x32xf32> to vector<4x32xf32>
    %cst_7 = arith.constant dense<0.000000e+00> : vector<400x32xf32>
    %8 = tpu.matmul %5, %7, %cst_7 {dimension_numbers = #tpu.dot_dimension_numbers<[1], [0], [0], [1], [0, 0, 1, 1], [], []>} : vector<400x4xf32>, vector<4x32xf32>, vector<400x32xf32> -> vector<400x32xf32>
    %9 = arith.addf %3, %8 : vector<400x32xf32>
    %c0_8 = arith.constant 0 : index
    %c0_9 = arith.constant 0 : index
    %c20 = arith.constant 20 : index
    %c0_10 = arith.constant 0 : index
    %10 = vector.load %arg3[%c0_8, %c0_9, %c20, %c0_10] : memref<1x1x480x4xf32, #tpu.memory_space<vmem>>, vector<1x1x400x4xf32>
    %11 = vector.shape_cast %10 : vector<1x1x400x4xf32> to vector<400x4xf32>
    %c1 = arith.constant 1 : index
    %c0_11 = arith.constant 0 : index
    %c0_12 = arith.constant 0 : index
    %12 = vector.load %arg7[%c1, %c0_11, %c0_12] : memref<9x4x32xf32, #tpu.memory_space<vmem>>, vector<1x4x32xf32>
    %13 = vector.shape_cast %12 : vector<1x4x32xf32> to vector<4x32xf32>
    %cst_13 = arith.constant dense<0.000000e+00> : vector<400x32xf32>
    %14 = tpu.matmul %11, %13, %cst_13 {dimension_numbers = #tpu.dot_dimension_numbers<[1], [0], [0], [1], [0, 0, 1, 1], [], []>} : vector<400x4xf32>, vector<4x32xf32>, vector<400x32xf32> -> vector<400x32xf32>
    %15 = arith.addf %9, %14 : vector<400x32xf32>
    %c0_14 = arith.constant 0 : index
    %c0_15 = arith.constant 0 : index
    %c21 = arith.constant 21 : index
    %c0_16 = arith.constant 0 : index
    %16 = vector.load %arg3[%c0_14, %c0_15, %c21, %c0_16] : memref<1x1x480x4xf32, #tpu.memory_space<vmem>>, vector<1x1x400x4xf32>
    %17 = vector.shape_cast %16 : vector<1x1x400x4xf32> to vector<400x4xf32>
    %c2 = arith.constant 2 : index
    %c0_17 = arith.constant 0 : index
    %c0_18 = arith.constant 0 : index
    %18 = vector.load %arg7[%c2, %c0_17, %c0_18] : memref<9x4x32xf32, #tpu.memory_space<vmem>>, vector<1x4x32xf32>
    %19 = vector.shape_cast %18 : vector<1x4x32xf32> to vector<4x32xf32>
    %cst_19 = arith.constant dense<0.000000e+00> : vector<400x32xf32>
    %20 = tpu.matmul %17, %19, %cst_19 {dimension_numbers = #tpu.dot_dimension_numbers<[1], [0], [0], [1], [0, 0, 1, 1], [], []>} : vector<400x4xf32>, vector<4x32xf32>, vector<400x32xf32> -> vector<400x32xf32>
    %21 = arith.addf %15, %20 : vector<400x32xf32>
    %c0_20 = arith.constant 0 : index
    %c0_21 = arith.constant 0 : index
    %c39 = arith.constant 39 : index
    %c0_22 = arith.constant 0 : index
    %22 = vector.load %arg3[%c0_20, %c0_21, %c39, %c0_22] : memref<1x1x480x4xf32, #tpu.memory_space<vmem>>, vector<1x1x400x4xf32>
    %23 = vector.shape_cast %22 : vector<1x1x400x4xf32> to vector<400x4xf32>
    %c3 = arith.constant 3 : index
    %c0_23 = arith.constant 0 : index
    %c0_24 = arith.constant 0 : index
    %24 = vector.load %arg7[%c3, %c0_23, %c0_24] : memref<9x4x32xf32, #tpu.memory_space<vmem>>, vector<1x4x32xf32>
    %25 = vector.shape_cast %24 : vector<1x4x32xf32> to vector<4x32xf32>
    %cst_25 = arith.constant dense<0.000000e+00> : vector<400x32xf32>
    %26 = tpu.matmul %23, %25, %cst_25 {dimension_numbers = #tpu.dot_dimension_numbers<[1], [0], [0], [1], [0, 0, 1, 1], [], []>} : vector<400x4xf32>, vector<4x32xf32>, vector<400x32xf32> -> vector<400x32xf32>
    %27 = arith.addf %21, %26 : vector<400x32xf32>
    %c0_26 = arith.constant 0 : index
    %c0_27 = arith.constant 0 : index
    %c40 = arith.constant 40 : index
    %c0_28 = arith.constant 0 : index
    %28 = vector.load %arg3[%c0_26, %c0_27, %c40, %c0_28] : memref<1x1x480x4xf32, #tpu.memory_space<vmem>>, vector<1x1x400x4xf32>
    %29 = vector.shape_cast %28 : vector<1x1x400x4xf32> to vector<400x4xf32>
    %c4 = arith.constant 4 : index
    %c0_29 = arith.constant 0 : index
    %c0_30 = arith.constant 0 : index
    %30 = vector.load %arg7[%c4, %c0_29, %c0_30] : memref<9x4x32xf32, #tpu.memory_space<vmem>>, vector<1x4x32xf32>
    %31 = vector.shape_cast %30 : vector<1x4x32xf32> to vector<4x32xf32>
    %cst_31 = arith.constant dense<0.000000e+00> : vector<400x32xf32>
    %32 = tpu.matmul %29, %31, %cst_31 {dimension_numbers = #tpu.dot_dimension_numbers<[1], [0], [0], [1], [0, 0, 1, 1], [], []>} : vector<400x4xf32>, vector<4x32xf32>, vector<400x32xf32> -> vector<400x32xf32>
    %33 = arith.addf %27, %32 : vector<400x32xf32>
    %c0_32 = arith.constant 0 : index
    %c0_33 = arith.constant 0 : index
    %c41 = arith.constant 41 : index
    %c0_34 = arith.constant 0 : index
    %34 = vector.load %arg3[%c0_32, %c0_33, %c41, %c0_34] : memref<1x1x480x4xf32, #tpu.memory_space<vmem>>, vector<1x1x400x4xf32>
    %35 = vector.shape_cast %34 : vector<1x1x400x4xf32> to vector<400x4xf32>
    %c5 = arith.constant 5 : index
    %c0_35 = arith.constant 0 : index
    %c0_36 = arith.constant 0 : index
    %36 = vector.load %arg7[%c5, %c0_35, %c0_36] : memref<9x4x32xf32, #tpu.memory_space<vmem>>, vector<1x4x32xf32>
    %37 = vector.shape_cast %36 : vector<1x4x32xf32> to vector<4x32xf32>
    %cst_37 = arith.constant dense<0.000000e+00> : vector<400x32xf32>
    %38 = tpu.matmul %35, %37, %cst_37 {dimension_numbers = #tpu.dot_dimension_numbers<[1], [0], [0], [1], [0, 0, 1, 1], [], []>} : vector<400x4xf32>, vector<4x32xf32>, vector<400x32xf32> -> vector<400x32xf32>
    %39 = arith.addf %33, %38 : vector<400x32xf32>
    %c0_38 = arith.constant 0 : index
    %c0_39 = arith.constant 0 : index
    %c59 = arith.constant 59 : index
    %c0_40 = arith.constant 0 : index
    %40 = vector.load %arg3[%c0_38, %c0_39, %c59, %c0_40] : memref<1x1x480x4xf32, #tpu.memory_space<vmem>>, vector<1x1x400x4xf32>
    %41 = vector.shape_cast %40 : vector<1x1x400x4xf32> to vector<400x4xf32>
    %c6 = arith.constant 6 : index
    %c0_41 = arith.constant 0 : index
    %c0_42 = arith.constant 0 : index
    %42 = vector.load %arg7[%c6, %c0_41, %c0_42] : memref<9x4x32xf32, #tpu.memory_space<vmem>>, vector<1x4x32xf32>
    %43 = vector.shape_cast %42 : vector<1x4x32xf32> to vector<4x32xf32>
    %cst_43 = arith.constant dense<0.000000e+00> : vector<400x32xf32>
    %44 = tpu.matmul %41, %43, %cst_43 {dimension_numbers = #tpu.dot_dimension_numbers<[1], [0], [0], [1], [0, 0, 1, 1], [], []>} : vector<400x4xf32>, vector<4x32xf32>, vector<400x32xf32> -> vector<400x32xf32>
    %45 = arith.addf %39, %44 : vector<400x32xf32>
    %c0_44 = arith.constant 0 : index
    %c0_45 = arith.constant 0 : index
    %c60 = arith.constant 60 : index
    %c0_46 = arith.constant 0 : index
    %46 = vector.load %arg3[%c0_44, %c0_45, %c60, %c0_46] : memref<1x1x480x4xf32, #tpu.memory_space<vmem>>, vector<1x1x400x4xf32>
    %47 = vector.shape_cast %46 : vector<1x1x400x4xf32> to vector<400x4xf32>
    %c7 = arith.constant 7 : index
    %c0_47 = arith.constant 0 : index
    %c0_48 = arith.constant 0 : index
    %48 = vector.load %arg7[%c7, %c0_47, %c0_48] : memref<9x4x32xf32, #tpu.memory_space<vmem>>, vector<1x4x32xf32>
    %49 = vector.shape_cast %48 : vector<1x4x32xf32> to vector<4x32xf32>
    %cst_49 = arith.constant dense<0.000000e+00> : vector<400x32xf32>
    %50 = tpu.matmul %47, %49, %cst_49 {dimension_numbers = #tpu.dot_dimension_numbers<[1], [0], [0], [1], [0, 0, 1, 1], [], []>} : vector<400x4xf32>, vector<4x32xf32>, vector<400x32xf32> -> vector<400x32xf32>
    %51 = arith.addf %45, %50 : vector<400x32xf32>
    %c0_50 = arith.constant 0 : index
    %c0_51 = arith.constant 0 : index
    %c61 = arith.constant 61 : index
    %c0_52 = arith.constant 0 : index
    %52 = vector.load %arg3[%c0_50, %c0_51, %c61, %c0_52] : memref<1x1x480x4xf32, #tpu.memory_space<vmem>>, vector<1x1x400x4xf32>
    %53 = vector.shape_cast %52 : vector<1x1x400x4xf32> to vector<400x4xf32>
    %c8 = arith.constant 8 : index
    %c0_53 = arith.constant 0 : index
    %c0_54 = arith.constant 0 : index
    %54 = vector.load %arg7[%c8, %c0_53, %c0_54] : memref<9x4x32xf32, #tpu.memory_space<vmem>>, vector<1x4x32xf32>
    %55 = vector.shape_cast %54 : vector<1x4x32xf32> to vector<4x32xf32>
    %cst_55 = arith.constant dense<0.000000e+00> : vector<400x32xf32>
    %56 = tpu.matmul %53, %55, %cst_55 {dimension_numbers = #tpu.dot_dimension_numbers<[1], [0], [0], [1], [0, 0, 1, 1], [], []>} : vector<400x4xf32>, vector<4x32xf32>, vector<400x32xf32> -> vector<400x32xf32>
    %57 = arith.addf %51, %56 : vector<400x32xf32>
    %c0_56 = arith.constant 0 : index
    %c0_57 = arith.constant 0 : index
    %c0_58 = arith.constant 0 : index
    %58 = vector.load %arg4[%c0_56, %c0_57, %c0_58] : memref<1x400x1xf32, #tpu.memory_space<vmem>>, vector<1x400x1xf32>
    %59 = vector.shape_cast %58 : vector<1x400x1xf32> to vector<400x1xf32>
    %60 = vector.broadcast %59 : vector<400x1xf32> to vector<400x32xf32>
    %61 = arith.mulf %57, %60 : vector<400x32xf32>
    %c0_59 = arith.constant 0 : index
    %c0_60 = arith.constant 0 : index
    %62 = vector.load %arg12[%c0_59, %c0_60] : memref<400x32xf32, #tpu.memory_space<vmem>>, vector<400x32xf32>
    tpu.vector_store %arg12[%c0_59, %c0_60], %61 {strides = array<i32>} : memref<400x32xf32, #tpu.memory_space<vmem>>, vector<400x32xf32>,
    %cst_61 = arith.constant 0.000000e+00 : f32
    %63 = vector.broadcast %cst_61 : f32 to vector<320x8xf32>
    %c0_62 = arith.constant 0 : index
    %c0_63 = arith.constant 0 : index
    %64 = vector.load %arg10[%c0_62, %c0_63] : memref<1x8xf32, #tpu.memory_space<vmem>>, vector<1x8xf32>
    %65 = vector.broadcast %64 : vector<1x8xf32> to vector<320x8xf32>
    %66 = arith.addf %63, %65 : vector<320x8xf32>
    %c19_64 = arith.constant 19 : index
    %c0_65 = arith.constant 0 : index
    %67 = vector.load %arg12[%c19_64, %c0_65] : memref<400x32xf32, #tpu.memory_space<vmem>>, vector<320x32xf32>
    %c0_66 = arith.constant 0 : index
    %c0_67 = arith.constant 0 : index
    %c0_68 = arith.constant 0 : index
    %68 = vector.load %arg9[%c0_66, %c0_67, %c0_68] : memref<9x32x8xf32, #tpu.memory_space<vmem>>, vector<1x32x8xf32>
    %69 = vector.shape_cast %68 : vector<1x32x8xf32> to vector<32x8xf32>
    %cst_69 = arith.constant dense<0.000000e+00> : vector<320x8xf32>
    %70 = tpu.matmul %67, %69, %cst_69 {dimension_numbers = #tpu.dot_dimension_numbers<[1], [0], [0], [1], [0, 0, 1, 1], [], []>} : vector<320x32xf32>, vector<32x8xf32>, vector<320x8xf32> -> vector<320x8xf32>
    %71 = arith.addf %66, %70 : vector<320x8xf32>
    %c20_70 = arith.constant 20 : index
    %c0_71 = arith.constant 0 : index
    %72 = vector.load %arg12[%c20_70, %c0_71] : memref<400x32xf32, #tpu.memory_space<vmem>>, vector<320x32xf32>
    %c1_72 = arith.constant 1 : index
    %c0_73 = arith.constant 0 : index
    %c0_74 = arith.constant 0 : index
    %73 = vector.load %arg9[%c1_72, %c0_73, %c0_74] : memref<9x32x8xf32, #tpu.memory_space<vmem>>, vector<1x32x8xf32>
    %74 = vector.shape_cast %73 : vector<1x32x8xf32> to vector<32x8xf32>
    %cst_75 = arith.constant dense<0.000000e+00> : vector<320x8xf32>
    %75 = tpu.matmul %72, %74, %cst_75 {dimension_numbers = #tpu.dot_dimension_numbers<[1], [0], [0], [1], [0, 0, 1, 1], [], []>} : vector<320x32xf32>, vector<32x8xf32>, vector<320x8xf32> -> vector<320x8xf32>
    %76 = arith.addf %71, %75 : vector<320x8xf32>
    %c21_76 = arith.constant 21 : index
    %c0_77 = arith.constant 0 : index
    %77 = vector.load %arg12[%c21_76, %c0_77] : memref<400x32xf32, #tpu.memory_space<vmem>>, vector<320x32xf32>
    %c2_78 = arith.constant 2 : index
    %c0_79 = arith.constant 0 : index
    %c0_80 = arith.constant 0 : index
    %78 = vector.load %arg9[%c2_78, %c0_79, %c0_80] : memref<9x32x8xf32, #tpu.memory_space<vmem>>, vector<1x32x8xf32>
    %79 = vector.shape_cast %78 : vector<1x32x8xf32> to vector<32x8xf32>
    %cst_81 = arith.constant dense<0.000000e+00> : vector<320x8xf32>
    %80 = tpu.matmul %77, %79, %cst_81 {dimension_numbers = #tpu.dot_dimension_numbers<[1], [0], [0], [1], [0, 0, 1, 1], [], []>} : vector<320x32xf32>, vector<32x8xf32>, vector<320x8xf32> -> vector<320x8xf32>
    %81 = arith.addf %76, %80 : vector<320x8xf32>
    %c39_82 = arith.constant 39 : index
    %c0_83 = arith.constant 0 : index
    %82 = vector.load %arg12[%c39_82, %c0_83] : memref<400x32xf32, #tpu.memory_space<vmem>>, vector<320x32xf32>
    %c3_84 = arith.constant 3 : index
    %c0_85 = arith.constant 0 : index
    %c0_86 = arith.constant 0 : index
    %83 = vector.load %arg9[%c3_84, %c0_85, %c0_86] : memref<9x32x8xf32, #tpu.memory_space<vmem>>, vector<1x32x8xf32>
    %84 = vector.shape_cast %83 : vector<1x32x8xf32> to vector<32x8xf32>
    %cst_87 = arith.constant dense<0.000000e+00> : vector<320x8xf32>
    %85 = tpu.matmul %82, %84, %cst_87 {dimension_numbers = #tpu.dot_dimension_numbers<[1], [0], [0], [1], [0, 0, 1, 1], [], []>} : vector<320x32xf32>, vector<32x8xf32>, vector<320x8xf32> -> vector<320x8xf32>
    %86 = arith.addf %81, %85 : vector<320x8xf32>
    %c40_88 = arith.constant 40 : index
    %c0_89 = arith.constant 0 : index
    %87 = vector.load %arg12[%c40_88, %c0_89] : memref<400x32xf32, #tpu.memory_space<vmem>>, vector<320x32xf32>
    %c4_90 = arith.constant 4 : index
    %c0_91 = arith.constant 0 : index
    %c0_92 = arith.constant 0 : index
    %88 = vector.load %arg9[%c4_90, %c0_91, %c0_92] : memref<9x32x8xf32, #tpu.memory_space<vmem>>, vector<1x32x8xf32>
    %89 = vector.shape_cast %88 : vector<1x32x8xf32> to vector<32x8xf32>
    %cst_93 = arith.constant dense<0.000000e+00> : vector<320x8xf32>
    %90 = tpu.matmul %87, %89, %cst_93 {dimension_numbers = #tpu.dot_dimension_numbers<[1], [0], [0], [1], [0, 0, 1, 1], [], []>} : vector<320x32xf32>, vector<32x8xf32>, vector<320x8xf32> -> vector<320x8xf32>
    %91 = arith.addf %86, %90 : vector<320x8xf32>
    %c41_94 = arith.constant 41 : index
    %c0_95 = arith.constant 0 : index
    %92 = vector.load %arg12[%c41_94, %c0_95] : memref<400x32xf32, #tpu.memory_space<vmem>>, vector<320x32xf32>
    %c5_96 = arith.constant 5 : index
    %c0_97 = arith.constant 0 : index
    %c0_98 = arith.constant 0 : index
    %93 = vector.load %arg9[%c5_96, %c0_97, %c0_98] : memref<9x32x8xf32, #tpu.memory_space<vmem>>, vector<1x32x8xf32>
    %94 = vector.shape_cast %93 : vector<1x32x8xf32> to vector<32x8xf32>
    %cst_99 = arith.constant dense<0.000000e+00> : vector<320x8xf32>
    %95 = tpu.matmul %92, %94, %cst_99 {dimension_numbers = #tpu.dot_dimension_numbers<[1], [0], [0], [1], [0, 0, 1, 1], [], []>} : vector<320x32xf32>, vector<32x8xf32>, vector<320x8xf32> -> vector<320x8xf32>
    %96 = arith.addf %91, %95 : vector<320x8xf32>
    %c59_100 = arith.constant 59 : index
    %c0_101 = arith.constant 0 : index
    %97 = vector.load %arg12[%c59_100, %c0_101] : memref<400x32xf32, #tpu.memory_space<vmem>>, vector<320x32xf32>
    %c6_102 = arith.constant 6 : index
    %c0_103 = arith.constant 0 : index
    %c0_104 = arith.constant 0 : index
    %98 = vector.load %arg9[%c6_102, %c0_103, %c0_104] : memref<9x32x8xf32, #tpu.memory_space<vmem>>, vector<1x32x8xf32>
    %99 = vector.shape_cast %98 : vector<1x32x8xf32> to vector<32x8xf32>
    %cst_105 = arith.constant dense<0.000000e+00> : vector<320x8xf32>
    %100 = tpu.matmul %97, %99, %cst_105 {dimension_numbers = #tpu.dot_dimension_numbers<[1], [0], [0], [1], [0, 0, 1, 1], [], []>} : vector<320x32xf32>, vector<32x8xf32>, vector<320x8xf32> -> vector<320x8xf32>
    %101 = arith.addf %96, %100 : vector<320x8xf32>
    %c60_106 = arith.constant 60 : index
    %c0_107 = arith.constant 0 : index
    %102 = vector.load %arg12[%c60_106, %c0_107] : memref<400x32xf32, #tpu.memory_space<vmem>>, vector<320x32xf32>
    %c7_108 = arith.constant 7 : index
    %c0_109 = arith.constant 0 : index
    %c0_110 = arith.constant 0 : index
    %103 = vector.load %arg9[%c7_108, %c0_109, %c0_110] : memref<9x32x8xf32, #tpu.memory_space<vmem>>, vector<1x32x8xf32>
    %104 = vector.shape_cast %103 : vector<1x32x8xf32> to vector<32x8xf32>
    %cst_111 = arith.constant dense<0.000000e+00> : vector<320x8xf32>
    %105 = tpu.matmul %102, %104, %cst_111 {dimension_numbers = #tpu.dot_dimension_numbers<[1], [0], [0], [1], [0, 0, 1, 1], [], []>} : vector<320x32xf32>, vector<32x8xf32>, vector<320x8xf32> -> vector<320x8xf32>
    %106 = arith.addf %101, %105 : vector<320x8xf32>
    %c61_112 = arith.constant 61 : index
    %c0_113 = arith.constant 0 : index
    %107 = vector.load %arg12[%c61_112, %c0_113] : memref<400x32xf32, #tpu.memory_space<vmem>>, vector<320x32xf32>
    %c8_114 = arith.constant 8 : index
    %c0_115 = arith.constant 0 : index
    %c0_116 = arith.constant 0 : index
    %108 = vector.load %arg9[%c8_114, %c0_115, %c0_116] : memref<9x32x8xf32, #tpu.memory_space<vmem>>, vector<1x32x8xf32>
    %109 = vector.shape_cast %108 : vector<1x32x8xf32> to vector<32x8xf32>
    %cst_117 = arith.constant dense<0.000000e+00> : vector<320x8xf32>
    %110 = tpu.matmul %107, %109, %cst_117 {dimension_numbers = #tpu.dot_dimension_numbers<[1], [0], [0], [1], [0, 0, 1, 1], [], []>} : vector<320x32xf32>, vector<32x8xf32>, vector<320x8xf32> -> vector<320x8xf32>
    %111 = arith.addf %106, %110 : vector<320x8xf32>
    %112 = vector.extract_strided_slice %111 {offsets = [0, 0], sizes = [320, 4], strides = [1, 1]} : vector<320x8xf32> to vector<320x4xf32>
    %113 = vector.extract_strided_slice %111 {offsets = [0, 4], sizes = [320, 4], strides = [1, 1]} : vector<320x8xf32> to vector<320x4xf32>
    %c0_118 = arith.constant 0 : index
    %c0_119 = arith.constant 0 : index
    %c0_120 = arith.constant 0 : index
    %114 = vector.load %arg2[%c0_118, %c0_119, %c0_120] : memref<1x320x4xf32, #tpu.memory_space<vmem>>, vector<1x320x4xf32>
    %115 = vector.shape_cast %114 : vector<1x320x4xf32> to vector<320x4xf32>
    %c0_121 = arith.constant 0 : index
    %c0_122 = arith.constant 0 : index
    %116 = vector.load %arg5[%c0_121, %c0_122] : memref<1x4xf32, #tpu.memory_space<vmem>>, vector<1x4xf32>
    %117 = vector.broadcast %116 : vector<1x4xf32> to vector<320x4xf32>
    %118 = arith.mulf %115, %117 : vector<320x4xf32>
    %c0_123 = arith.constant 0 : index
    %c0_124 = arith.constant 0 : index
    %119 = vector.load %arg6[%c0_123, %c0_124] : memref<1x4xf32, #tpu.memory_space<vmem>>, vector<1x4xf32>
    %120 = vector.broadcast %119 : vector<1x4xf32> to vector<320x4xf32>
    %121 = arith.addf %118, %120 : vector<320x4xf32>
    %122 = arith.mulf %121, %112 : vector<320x4xf32>
    %123 = arith.addf %121, %122 : vector<320x4xf32>
    %124 = arith.addf %123, %113 : vector<320x4xf32>
    %cst_125 = arith.constant 0.000000e+00 : f32
    %125 = vector.broadcast %cst_125 : f32 to vector<320x4xf32>
    %126 = arith.cmpf oge, %124, %125 : vector<320x4xf32>
    %cst_126 = arith.constant 2.000000e-01 : f32
    %127 = vector.broadcast %cst_126 : f32 to vector<320x4xf32>
    %128 = arith.mulf %127, %124 : vector<320x4xf32>
    %129 = arith.select %126, %124, %128 : vector<320x4xi1>, vector<320x4xf32>
    %c0_127 = arith.constant 0 : index
    %c0_128 = arith.constant 0 : index
    %c0_129 = arith.constant 0 : index
    %130 = vector.load %arg11[%c0_127, %c0_128, %c0_129] : memref<1x320x4xf32, #tpu.memory_space<vmem>>, vector<1x320x4xf32>
    %131 = vector.shape_cast %130 : vector<1x320x4xf32> to vector<320x4xf32>
    %132 = vector.shape_cast %129 : vector<320x4xf32> to vector<1x320x4xf32>
    tpu.vector_store %arg11[%c0_127, %c0_128, %c0_129], %132 {strides = array<i32>} : memref<1x320x4xf32, #tpu.memory_space<vmem>>, vector<1x320x4xf32>,
    return
  }
  func.func @transform_0(%arg0: i32, %arg1: i32) -> (i32, i32, i32) {
    %c0_i32 = arith.constant 0 : i32
    %c0_i32_0 = arith.constant 0 : i32
    return %arg0, %arg1, %c0_i32 : i32, i32, i32
  }
  func.func @transform_1(%arg0: i32, %arg1: i32) -> (i32, i32, i32, i32) {
    %c0_i32 = arith.constant 0 : i32
    %c0_i32_0 = arith.constant 0 : i32
    %c0_i32_1 = arith.constant 0 : i32
    return %arg0, %arg1, %c0_i32, %c0_i32_0 : i32, i32, i32, i32
  }
  func.func @transform_2(%arg0: i32, %arg1: i32) -> (i32, i32, i32) {
    %c0_i32 = arith.constant 0 : i32
    %c0_i32_0 = arith.constant 0 : i32
    %c0_i32_1 = arith.constant 0 : i32
    return %arg1, %c0_i32, %c0_i32_0 : i32, i32, i32
  }
  func.func @transform_3(%arg0: i32, %arg1: i32) -> (i32, i32) {
    %c0_i32 = arith.constant 0 : i32
    %c0_i32_0 = arith.constant 0 : i32
    %c0_i32_1 = arith.constant 0 : i32
    return %c0_i32, %c0_i32_0 : i32, i32
  }
  func.func @transform_4(%arg0: i32, %arg1: i32) -> (i32, i32) {
    %c0_i32 = arith.constant 0 : i32
    %c0_i32_0 = arith.constant 0 : i32
    %c0_i32_1 = arith.constant 0 : i32
    return %c0_i32, %c0_i32_0 : i32, i32
  }
  func.func @transform_5(%arg0: i32, %arg1: i32) -> (i32, i32, i32) {
    %c0_i32 = arith.constant 0 : i32
    %c0_i32_0 = arith.constant 0 : i32
    %c0_i32_1 = arith.constant 0 : i32
    %c0_i32_2 = arith.constant 0 : i32
    return %c0_i32, %c0_i32_0, %c0_i32_1 : i32, i32, i32
  }
  func.func @transform_6(%arg0: i32, %arg1: i32) -> (i32, i32) {
    %c0_i32 = arith.constant 0 : i32
    %c0_i32_0 = arith.constant 0 : i32
    %c0_i32_1 = arith.constant 0 : i32
    return %c0_i32, %c0_i32_0 : i32, i32
  }
  func.func @transform_7(%arg0: i32, %arg1: i32) -> (i32, i32, i32) {
    %c0_i32 = arith.constant 0 : i32
    %c0_i32_0 = arith.constant 0 : i32
    %c0_i32_1 = arith.constant 0 : i32
    %c0_i32_2 = arith.constant 0 : i32
    return %c0_i32, %c0_i32_0, %c0_i32_1 : i32, i32, i32
  }
  func.func @transform_8(%arg0: i32, %arg1: i32) -> (i32, i32) {
    %c0_i32 = arith.constant 0 : i32
    %c0_i32_0 = arith.constant 0 : i32
    %c0_i32_1 = arith.constant 0 : i32
    return %c0_i32, %c0_i32_0 : i32, i32
  }
  func.func @transform_9(%arg0: i32, %arg1: i32) -> (i32, i32, i32) {
    %c0_i32 = arith.constant 0 : i32
    %c0_i32_0 = arith.constant 0 : i32
    return %arg0, %arg1, %c0_i32 : i32, i32, i32
  }
}

module attributes {stable_mosaic.version = 11 : i64} {
  func.func @_conv3x3_kernel(%arg0: i32, %arg1: i32, %arg2: memref<1x1x400x4xf32, #tpu.memory_space<vmem>>, %arg3: memref<9x4x4xf32, #tpu.memory_space<vmem>>, %arg4: memref<1x4xf32, #tpu.memory_space<vmem>>, %arg5: memref<1x320x4xf32, #tpu.memory_space<vmem>>) attributes {dimension_semantics = [#tpu.dimension_semantics<parallel>, #tpu.dimension_semantics<parallel>], iteration_bounds = array<i64: 2, 1>, scalar_prefetch = 0 : i64, scratch_operands = 0 : i64, tpu.core_type = #tpu.core_type<tc>, window_params = [{transform_indices = @transform_0, window_bounds = array<i64: 1, 1, 400, 4>}, {pipeline_mode = #tpu.pipeline_mode<synchronous>, transform_indices = @transform_1, window_bounds = array<i64: 9, 4, 4>}, {pipeline_mode = #tpu.pipeline_mode<synchronous>, transform_indices = @transform_2, window_bounds = array<i64: 1, 4>}, {transform_indices = @transform_3, window_bounds = array<i64: 1, 320, 4>}]} {
    %cst = arith.constant 0.000000e+00 : f32
    %0 = vector.broadcast %cst : f32 to vector<320x4xf32>
    %c0 = arith.constant 0 : index
    %c0_0 = arith.constant 0 : index
    %1 = vector.load %arg4[%c0, %c0_0] : memref<1x4xf32, #tpu.memory_space<vmem>>, vector<1x4xf32>
    %2 = vector.broadcast %1 : vector<1x4xf32> to vector<320x4xf32>
    %3 = arith.addf %0, %2 : vector<320x4xf32>
    %c0_1 = arith.constant 0 : index
    %c0_2 = arith.constant 0 : index
    %c19 = arith.constant 19 : index
    %c0_3 = arith.constant 0 : index
    %4 = vector.load %arg2[%c0_1, %c0_2, %c19, %c0_3] : memref<1x1x400x4xf32, #tpu.memory_space<vmem>>, vector<1x1x320x4xf32>
    %5 = vector.shape_cast %4 : vector<1x1x320x4xf32> to vector<320x4xf32>
    %c0_4 = arith.constant 0 : index
    %c0_5 = arith.constant 0 : index
    %c0_6 = arith.constant 0 : index
    %6 = vector.load %arg3[%c0_4, %c0_5, %c0_6] : memref<9x4x4xf32, #tpu.memory_space<vmem>>, vector<1x4x4xf32>
    %7 = vector.shape_cast %6 : vector<1x4x4xf32> to vector<4x4xf32>
    %cst_7 = arith.constant dense<0.000000e+00> : vector<320x4xf32>
    %8 = tpu.matmul %5, %7, %cst_7 {dimension_numbers = #tpu.dot_dimension_numbers<[1], [0], [0], [1], [0, 0, 1, 1], [], []>} : vector<320x4xf32>, vector<4x4xf32>, vector<320x4xf32> -> vector<320x4xf32>
    %9 = arith.addf %3, %8 : vector<320x4xf32>
    %c0_8 = arith.constant 0 : index
    %c0_9 = arith.constant 0 : index
    %c20 = arith.constant 20 : index
    %c0_10 = arith.constant 0 : index
    %10 = vector.load %arg2[%c0_8, %c0_9, %c20, %c0_10] : memref<1x1x400x4xf32, #tpu.memory_space<vmem>>, vector<1x1x320x4xf32>
    %11 = vector.shape_cast %10 : vector<1x1x320x4xf32> to vector<320x4xf32>
    %c1 = arith.constant 1 : index
    %c0_11 = arith.constant 0 : index
    %c0_12 = arith.constant 0 : index
    %12 = vector.load %arg3[%c1, %c0_11, %c0_12] : memref<9x4x4xf32, #tpu.memory_space<vmem>>, vector<1x4x4xf32>
    %13 = vector.shape_cast %12 : vector<1x4x4xf32> to vector<4x4xf32>
    %cst_13 = arith.constant dense<0.000000e+00> : vector<320x4xf32>
    %14 = tpu.matmul %11, %13, %cst_13 {dimension_numbers = #tpu.dot_dimension_numbers<[1], [0], [0], [1], [0, 0, 1, 1], [], []>} : vector<320x4xf32>, vector<4x4xf32>, vector<320x4xf32> -> vector<320x4xf32>
    %15 = arith.addf %9, %14 : vector<320x4xf32>
    %c0_14 = arith.constant 0 : index
    %c0_15 = arith.constant 0 : index
    %c21 = arith.constant 21 : index
    %c0_16 = arith.constant 0 : index
    %16 = vector.load %arg2[%c0_14, %c0_15, %c21, %c0_16] : memref<1x1x400x4xf32, #tpu.memory_space<vmem>>, vector<1x1x320x4xf32>
    %17 = vector.shape_cast %16 : vector<1x1x320x4xf32> to vector<320x4xf32>
    %c2 = arith.constant 2 : index
    %c0_17 = arith.constant 0 : index
    %c0_18 = arith.constant 0 : index
    %18 = vector.load %arg3[%c2, %c0_17, %c0_18] : memref<9x4x4xf32, #tpu.memory_space<vmem>>, vector<1x4x4xf32>
    %19 = vector.shape_cast %18 : vector<1x4x4xf32> to vector<4x4xf32>
    %cst_19 = arith.constant dense<0.000000e+00> : vector<320x4xf32>
    %20 = tpu.matmul %17, %19, %cst_19 {dimension_numbers = #tpu.dot_dimension_numbers<[1], [0], [0], [1], [0, 0, 1, 1], [], []>} : vector<320x4xf32>, vector<4x4xf32>, vector<320x4xf32> -> vector<320x4xf32>
    %21 = arith.addf %15, %20 : vector<320x4xf32>
    %c0_20 = arith.constant 0 : index
    %c0_21 = arith.constant 0 : index
    %c39 = arith.constant 39 : index
    %c0_22 = arith.constant 0 : index
    %22 = vector.load %arg2[%c0_20, %c0_21, %c39, %c0_22] : memref<1x1x400x4xf32, #tpu.memory_space<vmem>>, vector<1x1x320x4xf32>
    %23 = vector.shape_cast %22 : vector<1x1x320x4xf32> to vector<320x4xf32>
    %c3 = arith.constant 3 : index
    %c0_23 = arith.constant 0 : index
    %c0_24 = arith.constant 0 : index
    %24 = vector.load %arg3[%c3, %c0_23, %c0_24] : memref<9x4x4xf32, #tpu.memory_space<vmem>>, vector<1x4x4xf32>
    %25 = vector.shape_cast %24 : vector<1x4x4xf32> to vector<4x4xf32>
    %cst_25 = arith.constant dense<0.000000e+00> : vector<320x4xf32>
    %26 = tpu.matmul %23, %25, %cst_25 {dimension_numbers = #tpu.dot_dimension_numbers<[1], [0], [0], [1], [0, 0, 1, 1], [], []>} : vector<320x4xf32>, vector<4x4xf32>, vector<320x4xf32> -> vector<320x4xf32>
    %27 = arith.addf %21, %26 : vector<320x4xf32>
    %c0_26 = arith.constant 0 : index
    %c0_27 = arith.constant 0 : index
    %c40 = arith.constant 40 : index
    %c0_28 = arith.constant 0 : index
    %28 = vector.load %arg2[%c0_26, %c0_27, %c40, %c0_28] : memref<1x1x400x4xf32, #tpu.memory_space<vmem>>, vector<1x1x320x4xf32>
    %29 = vector.shape_cast %28 : vector<1x1x320x4xf32> to vector<320x4xf32>
    %c4 = arith.constant 4 : index
    %c0_29 = arith.constant 0 : index
    %c0_30 = arith.constant 0 : index
    %30 = vector.load %arg3[%c4, %c0_29, %c0_30] : memref<9x4x4xf32, #tpu.memory_space<vmem>>, vector<1x4x4xf32>
    %31 = vector.shape_cast %30 : vector<1x4x4xf32> to vector<4x4xf32>
    %cst_31 = arith.constant dense<0.000000e+00> : vector<320x4xf32>
    %32 = tpu.matmul %29, %31, %cst_31 {dimension_numbers = #tpu.dot_dimension_numbers<[1], [0], [0], [1], [0, 0, 1, 1], [], []>} : vector<320x4xf32>, vector<4x4xf32>, vector<320x4xf32> -> vector<320x4xf32>
    %33 = arith.addf %27, %32 : vector<320x4xf32>
    %c0_32 = arith.constant 0 : index
    %c0_33 = arith.constant 0 : index
    %c41 = arith.constant 41 : index
    %c0_34 = arith.constant 0 : index
    %34 = vector.load %arg2[%c0_32, %c0_33, %c41, %c0_34] : memref<1x1x400x4xf32, #tpu.memory_space<vmem>>, vector<1x1x320x4xf32>
    %35 = vector.shape_cast %34 : vector<1x1x320x4xf32> to vector<320x4xf32>
    %c5 = arith.constant 5 : index
    %c0_35 = arith.constant 0 : index
    %c0_36 = arith.constant 0 : index
    %36 = vector.load %arg3[%c5, %c0_35, %c0_36] : memref<9x4x4xf32, #tpu.memory_space<vmem>>, vector<1x4x4xf32>
    %37 = vector.shape_cast %36 : vector<1x4x4xf32> to vector<4x4xf32>
    %cst_37 = arith.constant dense<0.000000e+00> : vector<320x4xf32>
    %38 = tpu.matmul %35, %37, %cst_37 {dimension_numbers = #tpu.dot_dimension_numbers<[1], [0], [0], [1], [0, 0, 1, 1], [], []>} : vector<320x4xf32>, vector<4x4xf32>, vector<320x4xf32> -> vector<320x4xf32>
    %39 = arith.addf %33, %38 : vector<320x4xf32>
    %c0_38 = arith.constant 0 : index
    %c0_39 = arith.constant 0 : index
    %c59 = arith.constant 59 : index
    %c0_40 = arith.constant 0 : index
    %40 = vector.load %arg2[%c0_38, %c0_39, %c59, %c0_40] : memref<1x1x400x4xf32, #tpu.memory_space<vmem>>, vector<1x1x320x4xf32>
    %41 = vector.shape_cast %40 : vector<1x1x320x4xf32> to vector<320x4xf32>
    %c6 = arith.constant 6 : index
    %c0_41 = arith.constant 0 : index
    %c0_42 = arith.constant 0 : index
    %42 = vector.load %arg3[%c6, %c0_41, %c0_42] : memref<9x4x4xf32, #tpu.memory_space<vmem>>, vector<1x4x4xf32>
    %43 = vector.shape_cast %42 : vector<1x4x4xf32> to vector<4x4xf32>
    %cst_43 = arith.constant dense<0.000000e+00> : vector<320x4xf32>
    %44 = tpu.matmul %41, %43, %cst_43 {dimension_numbers = #tpu.dot_dimension_numbers<[1], [0], [0], [1], [0, 0, 1, 1], [], []>} : vector<320x4xf32>, vector<4x4xf32>, vector<320x4xf32> -> vector<320x4xf32>
    %45 = arith.addf %39, %44 : vector<320x4xf32>
    %c0_44 = arith.constant 0 : index
    %c0_45 = arith.constant 0 : index
    %c60 = arith.constant 60 : index
    %c0_46 = arith.constant 0 : index
    %46 = vector.load %arg2[%c0_44, %c0_45, %c60, %c0_46] : memref<1x1x400x4xf32, #tpu.memory_space<vmem>>, vector<1x1x320x4xf32>
    %47 = vector.shape_cast %46 : vector<1x1x320x4xf32> to vector<320x4xf32>
    %c7 = arith.constant 7 : index
    %c0_47 = arith.constant 0 : index
    %c0_48 = arith.constant 0 : index
    %48 = vector.load %arg3[%c7, %c0_47, %c0_48] : memref<9x4x4xf32, #tpu.memory_space<vmem>>, vector<1x4x4xf32>
    %49 = vector.shape_cast %48 : vector<1x4x4xf32> to vector<4x4xf32>
    %cst_49 = arith.constant dense<0.000000e+00> : vector<320x4xf32>
    %50 = tpu.matmul %47, %49, %cst_49 {dimension_numbers = #tpu.dot_dimension_numbers<[1], [0], [0], [1], [0, 0, 1, 1], [], []>} : vector<320x4xf32>, vector<4x4xf32>, vector<320x4xf32> -> vector<320x4xf32>
    %51 = arith.addf %45, %50 : vector<320x4xf32>
    %c0_50 = arith.constant 0 : index
    %c0_51 = arith.constant 0 : index
    %c61 = arith.constant 61 : index
    %c0_52 = arith.constant 0 : index
    %52 = vector.load %arg2[%c0_50, %c0_51, %c61, %c0_52] : memref<1x1x400x4xf32, #tpu.memory_space<vmem>>, vector<1x1x320x4xf32>
    %53 = vector.shape_cast %52 : vector<1x1x320x4xf32> to vector<320x4xf32>
    %c8 = arith.constant 8 : index
    %c0_53 = arith.constant 0 : index
    %c0_54 = arith.constant 0 : index
    %54 = vector.load %arg3[%c8, %c0_53, %c0_54] : memref<9x4x4xf32, #tpu.memory_space<vmem>>, vector<1x4x4xf32>
    %55 = vector.shape_cast %54 : vector<1x4x4xf32> to vector<4x4xf32>
    %cst_55 = arith.constant dense<0.000000e+00> : vector<320x4xf32>
    %56 = tpu.matmul %53, %55, %cst_55 {dimension_numbers = #tpu.dot_dimension_numbers<[1], [0], [0], [1], [0, 0, 1, 1], [], []>} : vector<320x4xf32>, vector<4x4xf32>, vector<320x4xf32> -> vector<320x4xf32>
    %57 = arith.addf %51, %56 : vector<320x4xf32>
    %c0_56 = arith.constant 0 : index
    %c0_57 = arith.constant 0 : index
    %c0_58 = arith.constant 0 : index
    %58 = vector.load %arg5[%c0_56, %c0_57, %c0_58] : memref<1x320x4xf32, #tpu.memory_space<vmem>>, vector<1x320x4xf32>
    %59 = vector.shape_cast %58 : vector<1x320x4xf32> to vector<320x4xf32>
    %60 = vector.shape_cast %57 : vector<320x4xf32> to vector<1x320x4xf32>
    tpu.vector_store %arg5[%c0_56, %c0_57, %c0_58], %60 {strides = array<i32>} : memref<1x320x4xf32, #tpu.memory_space<vmem>>, vector<1x320x4xf32>,
    return
  }
  func.func @transform_0(%arg0: i32, %arg1: i32) -> (i32, i32, i32, i32) {
    %c0_i32 = arith.constant 0 : i32
    %c0_i32_0 = arith.constant 0 : i32
    %c0_i32_1 = arith.constant 0 : i32
    return %arg0, %arg1, %c0_i32, %c0_i32_0 : i32, i32, i32, i32
  }
  func.func @transform_1(%arg0: i32, %arg1: i32) -> (i32, i32, i32) {
    %c0_i32 = arith.constant 0 : i32
    %c0_i32_0 = arith.constant 0 : i32
    %c0_i32_1 = arith.constant 0 : i32
    %c0_i32_2 = arith.constant 0 : i32
    return %c0_i32, %c0_i32_0, %c0_i32_1 : i32, i32, i32
  }
  func.func @transform_2(%arg0: i32, %arg1: i32) -> (i32, i32) {
    %c0_i32 = arith.constant 0 : i32
    %c0_i32_0 = arith.constant 0 : i32
    %c0_i32_1 = arith.constant 0 : i32
    return %c0_i32, %c0_i32_0 : i32, i32
  }
  func.func @transform_3(%arg0: i32, %arg1: i32) -> (i32, i32, i32) {
    %c0_i32 = arith.constant 0 : i32
    %c0_i32_0 = arith.constant 0 : i32
    return %arg0, %arg1, %c0_i32 : i32, i32, i32
  }
}

</mosaic_0001>

<llo_original>
// kernel: spade_forward.6
$region0: #{spade_forward.6}
  #allocation0 [shape = 'u32[]', space=smem, size = 0x4, offset = 0x4, fixed_abs, tag = 'smem constant byte address 0x4 - core index']
  #allocation1 [shape = 'u32[72,128]{1,0:T(1,128)}', space=vmem, size = 0x9000, scoped, tag = 'internal scratch']
  %s0 = inlined_call_operand.vmem [shape: f32[512,4], index: 0, kind: input, shape index: {}]
  %s1 = inlined_call_operand.vmem [shape: f32[3,4], index: 1, kind: output, shape index: {}]
  %s2 = sld [smem:[#allocation0]]
  $region18: #{spade_forward.6} parent=0
    _
  %s4 = ssub.s32 1, %s2
  %s5 = scalar_select 0, %s4, %s2
  // Predicated region
  $region2: #{spade_forward.6} parent=0 // pred_check
    _
  $region3: #{spade_forward.6} parent=0 // pred_check_branch
    %7 = sbr.rel (0) target = $region5
  $region4: #{spade_forward.6} parent=0 // pred_region
    _
  $region5: #{spade_forward.6} parent=0 // pred_fallthru
    _
  %v8 = vld [vmem:[%s0] sm:$0xff]
  %v9 = vld [vmem:[%s0 + $0x8] sm:$0xff]
  %v10 = vld [vmem:[%s0 + $0x10] sm:$0xff]
  %v11 = vld [vmem:[%s0 + $0x18] sm:$0xff]
  %v12 = vld [vmem:[%s0 + $0x20] sm:$0xff]
  %v13 = vld [vmem:[%s0 + $0x28] sm:$0xff]
  %v14 = vld [vmem:[%s0 + $0x30] sm:$0xff]
  %v15 = vld [vmem:[%s0 + $0x38] sm:$0xff]
  %v16 = vld [vmem:[%s0 + $0x40] sm:$0xff]
  %v17 = vld [vmem:[%s0 + $0x48] sm:$0xff]
  %v18 = vld [vmem:[%s0 + $0x50] sm:$0xff]
  %v19 = vld [vmem:[%s0 + $0x58] sm:$0xff]
  %v20 = vld [vmem:[%s0 + $0x60] sm:$0xff]
  %v21 = vld [vmem:[%s0 + $0x68] sm:$0xff]
  %v22 = vld [vmem:[%s0 + $0x70] sm:$0xff]
  %v23 = vld [vmem:[%s0 + $0x78] sm:$0xff]
  %v24 = vld [vmem:[%s0 + $0x80] sm:$0xff]
  %v25 = vld [vmem:[%s0 + $0x88] sm:$0xff]
  %v26 = vld [vmem:[%s0 + $0x90] sm:$0xff]
  %v27 = vld [vmem:[%s0 + $0x98] sm:$0xff]
  %v28 = vld [vmem:[%s0 + $0xa0] sm:$0xff]
  %v29 = vld [vmem:[%s0 + $0xa8] sm:$0xff]
  %v30 = vld [vmem:[%s0 + $0xb0] sm:$0xff]
  %v31 = vld [vmem:[%s0 + $0xb8] sm:$0xff]
  %v32 = vld [vmem:[%s0 + $0xc0] sm:$0xff]
  %v33 = vld [vmem:[%s0 + $0xc8] sm:$0xff]
  %v34 = vld [vmem:[%s0 + $0xd0] sm:$0xff]
  %v35 = vld [vmem:[%s0 + $0xd8] sm:$0xff]
  %v36 = vld [vmem:[%s0 + $0xe0] sm:$0xff]
  %v37 = vld [vmem:[%s0 + $0xe8] sm:$0xff]
  %v38 = vld [vmem:[%s0 + $0xf0] sm:$0xff]
  %v39 = vld [vmem:[%s0 + $0xf8] sm:$0xff]
  %v40 = vld [vmem:[%s0 + $0x100] sm:$0xff]
  %v41 = vld [vmem:[%s0 + $0x108] sm:$0xff]
  %v42 = vld [vmem:[%s0 + $0x110] sm:$0xff]
  %v43 = vld [vmem:[%s0 + $0x118] sm:$0xff]
  %v44 = vld [vmem:[%s0 + $0x120] sm:$0xff]
  %v45 = vld [vmem:[%s0 + $0x128] sm:$0xff]
  %v46 = vld [vmem:[%s0 + $0x130] sm:$0xff]
  %v47 = vld [vmem:[%s0 + $0x138] sm:$0xff]
  %v48 = vld [vmem:[%s0 + $0x140] sm:$0xff]
  %v49 = vld [vmem:[%s0 + $0x148] sm:$0xff]
  %v50 = vld [vmem:[%s0 + $0x150] sm:$0xff]
  %v51 = vld [vmem:[%s0 + $0x158] sm:$0xff]
  %v52 = vld [vmem:[%s0 + $0x160] sm:$0xff]
  %v53 = vld [vmem:[%s0 + $0x168] sm:$0xff]
  %v54 = vld [vmem:[%s0 + $0x170] sm:$0xff]
  %v55 = vld [vmem:[%s0 + $0x178] sm:$0xff]
  %v56 = vld [vmem:[%s0 + $0x180] sm:$0xff]
  %v57 = vld [vmem:[%s0 + $0x188] sm:$0xff]
  %v58 = vld [vmem:[%s0 + $0x190] sm:$0xff]
  %v59 = vld [vmem:[%s0 + $0x198] sm:$0xff]
  %v60 = vld [vmem:[%s0 + $0x1a0] sm:$0xff]
  %v61 = vld [vmem:[%s0 + $0x1a8] sm:$0xff]
  %v62 = vld [vmem:[%s0 + $0x1b0] sm:$0xff]
  %v63 = vld [vmem:[%s0 + $0x1b8] sm:$0xff]
  %v64 = vld [vmem:[%s0 + $0x1c0] sm:$0xff]
  %v65 = vld [vmem:[%s0 + $0x1c8] sm:$0xff]
  %v66 = vld [vmem:[%s0 + $0x1d0] sm:$0xff]
  %v67 = vld [vmem:[%s0 + $0x1d8] sm:$0xff]
  %v68 = vld [vmem:[%s0 + $0x1e0] sm:$0xff]
  %v69 = vld [vmem:[%s0 + $0x1e8] sm:$0xff]
  %v70 = vld [vmem:[%s0 + $0x1f0] sm:$0xff]
  %v71 = vld [vmem:[%s0 + $0x1f8] sm:$0xff]
  %p72 = scmp.eq.s32.totalorder 0, 0
  // Predicated region
  $region6: #{spade_forward.6} parent=0 // pred_check
    %p73 = pneg %p72
  $region7: #{spade_forward.6} parent=0 // pred_check_branch
    %75 = sbr.rel (%p73) target = $region9
  $region8: #{spade_forward.6} parent=0 // pred_region
    %vm76 = vcmask 31744
    %v77 = vsel %vm76, %v8, 0.0
    %v78 = vsel %vm76, %v9, 0.0
    %v79 = vadd.f32 %v77, %v78
    %v80 = vsel %vm76, %v10, 0.0
    %v81 = vadd.f32 %v79, %v80
    %v82 = vsel %vm76, %v11, 0.0
    %v83 = vadd.f32 %v81, %v82
    %v84 = vsel %vm76, %v12, 0.0
    %v85 = vadd.f32 %v83, %v84
    %v86 = vsel %vm76, %v13, 0.0
    %v87 = vadd.f32 %v85, %v86
    %v88 = vsel %vm76, %v14, 0.0
    %v89 = vadd.f32 %v87, %v88
    %v90 = vsel %vm76, %v15, 0.0
    %v91 = vadd.f32 %v89, %v90
    %v92 = vsel %vm76, %v16, 0.0
    %v93 = vadd.f32 %v91, %v92
    %v94 = vsel %vm76, %v17, 0.0
    %v95 = vadd.f32 %v93, %v94
    %v96 = vsel %vm76, %v18, 0.0
    %v97 = vadd.f32 %v95, %v96
    %v98 = vsel %vm76, %v19, 0.0
    %v99 = vadd.f32 %v97, %v98
    %v100 = vsel %vm76, %v20, 0.0
    %v101 = vadd.f32 %v99, %v100
    %v102 = vsel %vm76, %v21, 0.0
    %v103 = vadd.f32 %v101, %v102
    %v104 = vsel %vm76, %v22, 0.0
    %v105 = vadd.f32 %v103, %v104
    %v106 = vsel %vm76, %v23, 0.0
    %v107 = vadd.f32 %v105, %v106
    %v108 = vsel %vm76, %v24, 0.0
    %v109 = vadd.f32 %v107, %v108
    %v110 = vsel %vm76, %v25, 0.0
    %v111 = vadd.f32 %v109, %v110
    %v112 = vsel %vm76, %v26, 0.0
    %v113 = vadd.f32 %v111, %v112
    %v114 = vsel %vm76, %v27, 0.0
    %v115 = vadd.f32 %v113, %v114
    %v116 = vsel %vm76, %v28, 0.0
    %v117 = vadd.f32 %v115, %v116
    %v118 = vsel %vm76, %v29, 0.0
    %v119 = vadd.f32 %v117, %v118
    %v120 = vsel %vm76, %v30, 0.0
    %v121 = vadd.f32 %v119, %v120
    %v122 = vsel %vm76, %v31, 0.0
    %v123 = vadd.f32 %v121, %v122
    %v124 = vsel %vm76, %v32, 0.0
    %v125 = vadd.f32 %v123, %v124
    %v126 = vsel %vm76, %v33, 0.0
    %v127 = vadd.f32 %v125, %v126
    %v128 = vsel %vm76, %v34, 0.0
    %v129 = vadd.f32 %v127, %v128
    %v130 = vsel %vm76, %v35, 0.0
    %v131 = vadd.f32 %v129, %v130
    %v132 = vsel %vm76, %v36, 0.0
    %v133 = vadd.f32 %v131, %v132
    %v134 = vsel %vm76, %v37, 0.0
    %v135 = vadd.f32 %v133, %v134
    %v136 = vsel %vm76, %v38, 0.0
    %v137 = vadd.f32 %v135, %v136
    %v138 = vsel %vm76, %v39, 0.0
    %v139 = vadd.f32 %v137, %v138
    %v140 = vsel %vm76, %v40, 0.0
    %v141 = vadd.f32 %v139, %v140
    %v142 = vsel %vm76, %v41, 0.0
    %v143 = vadd.f32 %v141, %v142
    %v144 = vsel %vm76, %v42, 0.0
    %v145 = vadd.f32 %v143, %v144
    %v146 = vsel %vm76, %v43, 0.0
    %v147 = vadd.f32 %v145, %v146
    %v148 = vsel %vm76, %v44, 0.0
    %v149 = vadd.f32 %v147, %v148
    %v150 = vsel %vm76, %v45, 0.0
    %v151 = vadd.f32 %v149, %v150
    %v152 = vsel %vm76, %v46, 0.0
    %v153 = vadd.f32 %v151, %v152
    %v154 = vsel %vm76, %v47, 0.0
    %v155 = vadd.f32 %v153, %v154
    %v156 = vsel %vm76, %v48, 0.0
    %v157 = vadd.f32 %v155, %v156
    %v158 = vsel %vm76, %v49, 0.0
    %v159 = vadd.f32 %v157, %v158
    %v160 = vsel %vm76, %v50, 0.0
    %v161 = vadd.f32 %v159, %v160
    %v162 = vsel %vm76, %v51, 0.0
    %v163 = vadd.f32 %v161, %v162
    %v164 = vsel %vm76, %v52, 0.0
    %v165 = vadd.f32 %v163, %v164
    %v166 = vsel %vm76, %v53, 0.0
    %v167 = vadd.f32 %v165, %v166
    %v168 = vsel %vm76, %v54, 0.0
    %v169 = vadd.f32 %v167, %v168
    %v170 = vsel %vm76, %v55, 0.0
    %v171 = vadd.f32 %v169, %v170
    %v172 = vsel %vm76, %v56, 0.0
    %v173 = vadd.f32 %v171, %v172
    %v174 = vsel %vm76, %v57, 0.0
    %v175 = vadd.f32 %v173, %v174
    %v176 = vsel %vm76, %v58, 0.0
    %v177 = vadd.f32 %v175, %v176
    %v178 = vsel %vm76, %v59, 0.0
    %v179 = vadd.f32 %v177, %v178
    %v180 = vsel %vm76, %v60, 0.0
    %v181 = vadd.f32 %v179, %v180
    %v182 = vsel %vm76, %v61, 0.0
    %v183 = vadd.f32 %v181, %v182
    %v184 = vsel %vm76, %v62, 0.0
    %v185 = vadd.f32 %v183, %v184
    %v186 = vsel %vm76, %v63, 0.0
    %v187 = vadd.f32 %v185, %v186
    %v188 = vsel %vm76, %v64, 0.0
    %v189 = vadd.f32 %v187, %v188
    %v190 = vsel %vm76, %v65, 0.0
    %v191 = vadd.f32 %v189, %v190
    %v192 = vsel %vm76, %v66, 0.0
    %v193 = vadd.f32 %v191, %v192
    %v194 = vsel %vm76, %v67, 0.0
    %v195 = vadd.f32 %v193, %v194
    %v196 = vsel %vm76, %v68, 0.0
    %v197 = vadd.f32 %v195, %v196
    %v198 = vsel %vm76, %v69, 0.0
    %v199 = vadd.f32 %v197, %v198
    %v200 = vsel %vm76, %v70, 0.0
    %v201 = vadd.f32 %v199, %v200
    %v202 = vsel %vm76, %v71, 0.0
    %v203 = vadd.f32 %v201, %v202
    %v204 = vrot.slane %v203, 4
    %v205 = vadd.f32 %v203, %v204
    %v206 = vrot.slane %v205, 2
    %v207 = vadd.f32 %v205, %v206
    %v208 = vrot.slane %v207, 1
    %v209 = vadd.f32 %v207, %v208
    %v210 = vrcp.pop 512.0
    %v211 = vmul.f32 512.0, %v210
    %v212 = vsub.f32 1.0, %v211
    %v213 = vmul.f32 %v210, %v212
    %v214 = vadd.f32 %v210, %v213
    %vm215 = vweird.f32 %v210
    %v216 = vsel %vm215, %v210, %v214
    %v217 = vmul.f32 %v209, %v216
    %vm218 = vcmask 24576
    %219 = vst.msk [vmem:[%s1 + $0x2] sm:$0x1] %vm218, %v217
    %vm220 = vcmask 25600
    %221 = vst.msk [vmem:[%s1] sm:$0x3] %vm220, 0.0
  $region9: #{spade_forward.6} parent=0 // pred_fallthru
    _
  %v222 = vld [vmem:[%s1 + $0x2] sm:$0x1]
  %v223 = vperm.slane %v222, 0
  %v224 = vsub.f32 %v8, %v223
  %v225 = vsub.f32 %v9, %v223
  %v226 = vsub.f32 %v10, %v223
  %v227 = vsub.f32 %v11, %v223
  %v228 = vsub.f32 %v12, %v223
  %v229 = vsub.f32 %v13, %v223
  %v230 = vsub.f32 %v14, %v223
  %v231 = vsub.f32 %v15, %v223
  %v232 = vsub.f32 %v16, %v223
  %v233 = vsub.f32 %v17, %v223
  %v234 = vsub.f32 %v18, %v223
  %v235 = vsub.f32 %v19, %v223
  %v236 = vsub.f32 %v20, %v223
  %v237 = vsub.f32 %v21, %v223
  %v238 = vsub.f32 %v22, %v223
  %v239 = vsub.f32 %v23, %v223
  %v240 = vsub.f32 %v24, %v223
  %v241 = vsub.f32 %v25, %v223
  %v242 = vsub.f32 %v26, %v223
  %v243 = vsub.f32 %v27, %v223
  %v244 = vsub.f32 %v28, %v223
  %v245 = vsub.f32 %v29, %v223
  %v246 = vsub.f32 %v30, %v223
  %v247 = vsub.f32 %v31, %v223
  %v248 = vsub.f32 %v32, %v223
  %v249 = vsub.f32 %v33, %v223
  %v250 = vsub.f32 %v34, %v223
  %v251 = vsub.f32 %v35, %v223
  %v252 = vsub.f32 %v36, %v223
  %v253 = vsub.f32 %v37, %v223
  %v254 = vsub.f32 %v38, %v223
  %v255 = vsub.f32 %v39, %v223
  %v256 = vsub.f32 %v40, %v223
  %v257 = vsub.f32 %v41, %v223
  %v258 = vsub.f32 %v42, %v223
  %v259 = vsub.f32 %v43, %v223
  %v260 = vsub.f32 %v44, %v223
  %v261 = vsub.f32 %v45, %v223
  %v262 = vsub.f32 %v46, %v223
  %v263 = vsub.f32 %v47, %v223
  %v264 = vsub.f32 %v48, %v223
  %v265 = vsub.f32 %v49, %v223
  %v266 = vsub.f32 %v50, %v223
  %v267 = vsub.f32 %v51, %v223
  %v268 = vsub.f32 %v52, %v223
  %v269 = vsub.f32 %v53, %v223
  %v270 = vsub.f32 %v54, %v223
  %v271 = vsub.f32 %v55, %v223
  %v272 = vsub.f32 %v56, %v223
  %v273 = vsub.f32 %v57, %v223
  %v274 = vsub.f32 %v58, %v223
  %v275 = vsub.f32 %v59, %v223
  %v276 = vsub.f32 %v60, %v223
  %v277 = vsub.f32 %v61, %v223
  %v278 = vsub.f32 %v62, %v223
  %v279 = vsub.f32 %v63, %v223
  %v280 = vsub.f32 %v64, %v223
  %v281 = vsub.f32 %v65, %v223
  %v282 = vsub.f32 %v66, %v223
  %v283 = vsub.f32 %v67, %v223
  %v284 = vsub.f32 %v68, %v223
  %v285 = vsub.f32 %v69, %v223
  %v286 = vsub.f32 %v70, %v223
  %v287 = vsub.f32 %v71, %v223
  %v288 = vld [vmem:[%s1] sm:$0x1]
  %vm289 = vcmask 31744
  %v290 = vsel %vm289, %v224, 0.0
  %v291 = vsel %vm289, %v225, 0.0
  %v292 = vadd.f32 %v290, %v291
  %v293 = vsel %vm289, %v226, 0.0
  %v294 = vadd.f32 %v292, %v293
  %v295 = vsel %vm289, %v227, 0.0
  %v296 = vadd.f32 %v294, %v295
  %v297 = vsel %vm289, %v228, 0.0
  %v298 = vadd.f32 %v296, %v297
  %v299 = vsel %vm289, %v229, 0.0
  %v300 = vadd.f32 %v298, %v299
  %v301 = vsel %vm289, %v230, 0.0
  %v302 = vadd.f32 %v300, %v301
  %v303 = vsel %vm289, %v231, 0.0
  %v304 = vadd.f32 %v302, %v303
  %v305 = vsel %vm289, %v232, 0.0
  %v306 = vadd.f32 %v304, %v305
  %v307 = vsel %vm289, %v233, 0.0
  %v308 = vadd.f32 %v306, %v307
  %v309 = vsel %vm289, %v234, 0.0
  %v310 = vadd.f32 %v308, %v309
  %v311 = vsel %vm289, %v235, 0.0
  %v312 = vadd.f32 %v310, %v311
  %v313 = vsel %vm289, %v236, 0.0
  %v314 = vadd.f32 %v312, %v313
  %v315 = vsel %vm289, %v237, 0.0
  %v316 = vadd.f32 %v314, %v315
  %v317 = vsel %vm289, %v238, 0.0
  %v318 = vadd.f32 %v316, %v317
  %v319 = vsel %vm289, %v239, 0.0
  %v320 = vadd.f32 %v318, %v319
  %v321 = vsel %vm289, %v240, 0.0
  %v322 = vadd.f32 %v320, %v321
  %v323 = vsel %vm289, %v241, 0.0
  %v324 = vadd.f32 %v322, %v323
  %v325 = vsel %vm289, %v242, 0.0
  %v326 = vadd.f32 %v324, %v325
  %v327 = vsel %vm289, %v243, 0.0
  %v328 = vadd.f32 %v326, %v327
  %v329 = vsel %vm289, %v244, 0.0
  %v330 = vadd.f32 %v328, %v329
  %v331 = vsel %vm289, %v245, 0.0
  %v332 = vadd.f32 %v330, %v331
  %v333 = vsel %vm289, %v246, 0.0
  %v334 = vadd.f32 %v332, %v333
  %v335 = vsel %vm289, %v247, 0.0
  %v336 = vadd.f32 %v334, %v335
  %v337 = vsel %vm289, %v248, 0.0
  %v338 = vadd.f32 %v336, %v337
  %v339 = vsel %vm289, %v249, 0.0
  %v340 = vadd.f32 %v338, %v339
  %v341 = vsel %vm289, %v250, 0.0
  %v342 = vadd.f32 %v340, %v341
  %v343 = vsel %vm289, %v251, 0.0
  %v344 = vadd.f32 %v342, %v343
  %v345 = vsel %vm289, %v252, 0.0
  %v346 = vadd.f32 %v344, %v345
  %v347 = vsel %vm289, %v253, 0.0
  %v348 = vadd.f32 %v346, %v347
  %v349 = vsel %vm289, %v254, 0.0
  %v350 = vadd.f32 %v348, %v349
  %v351 = vsel %vm289, %v255, 0.0
  %v352 = vadd.f32 %v350, %v351
  %v353 = vsel %vm289, %v256, 0.0
  %v354 = vadd.f32 %v352, %v353
  %v355 = vsel %vm289, %v257, 0.0
  %v356 = vadd.f32 %v354, %v355
  %v357 = vsel %vm289, %v258, 0.0
  %v358 = vadd.f32 %v356, %v357
  %v359 = vsel %vm289, %v259, 0.0
  %v360 = vadd.f32 %v358, %v359
  %v361 = vsel %vm289, %v260, 0.0
  %v362 = vadd.f32 %v360, %v361
  %v363 = vsel %vm289, %v261, 0.0
  %v364 = vadd.f32 %v362, %v363
  %v365 = vsel %vm289, %v262, 0.0
  %v366 = vadd.f32 %v364, %v365
  %v367 = vsel %vm289, %v263, 0.0
  %v368 = vadd.f32 %v366, %v367
  %v369 = vsel %vm289, %v264, 0.0
  %v370 = vadd.f32 %v368, %v369
  %v371 = vsel %vm289, %v265, 0.0
  %v372 = vadd.f32 %v370, %v371
  %v373 = vsel %vm289, %v266, 0.0
  %v374 = vadd.f32 %v372, %v373
  %v375 = vsel %vm289, %v267, 0.0
  %v376 = vadd.f32 %v374, %v375
  %v377 = vsel %vm289, %v268, 0.0
  %v378 = vadd.f32 %v376, %v377
  %v379 = vsel %vm289, %v269, 0.0
  %v380 = vadd.f32 %v378, %v379
  %v381 = vsel %vm289, %v270, 0.0
  %v382 = vadd.f32 %v380, %v381
  %v383 = vsel %vm289, %v271, 0.0
  %v384 = vadd.f32 %v382, %v383
  %v385 = vsel %vm289, %v272, 0.0
  %v386 = vadd.f32 %v384, %v385
  %v387 = vsel %vm289, %v273, 0.0
  %v388 = vadd.f32 %v386, %v387
  %v389 = vsel %vm289, %v274, 0.0
  %v390 = vadd.f32 %v388, %v389
  %v391 = vsel %vm289, %v275, 0.0
  %v392 = vadd.f32 %v390, %v391
  %v393 = vsel %vm289, %v276, 0.0
  %v394 = vadd.f32 %v392, %v393
  %v395 = vsel %vm289, %v277, 0.0
  %v396 = vadd.f32 %v394, %v395
  %v397 = vsel %vm289, %v278, 0.0
  %v398 = vadd.f32 %v396, %v397
  %v399 = vsel %vm289, %v279, 0.0
  %v400 = vadd.f32 %v398, %v399
  %v401 = vsel %vm289, %v280, 0.0
  %v402 = vadd.f32 %v400, %v401
  %v403 = vsel %vm289, %v281, 0.0
  %v404 = vadd.f32 %v402, %v403
  %v405 = vsel %vm289, %v282, 0.0
  %v406 = vadd.f32 %v404, %v405
  %v407 = vsel %vm289, %v283, 0.0
  %v408 = vadd.f32 %v406, %v407
  %v409 = vsel %vm289, %v284, 0.0
  %v410 = vadd.f32 %v408, %v409
  %v411 = vsel %vm289, %v285, 0.0
  %v412 = vadd.f32 %v410, %v411
  %v413 = vsel %vm289, %v286, 0.0
  %v414 = vadd.f32 %v412, %v413
  %v415 = vsel %vm289, %v287, 0.0
  %v416 = vadd.f32 %v414, %v415
  %v417 = vrot.slane %v416, 4
  %v418 = vadd.f32 %v416, %v417
  %v419 = vrot.slane %v418, 2
  %v420 = vadd.f32 %v418, %v419
  %v421 = vrot.slane %v420, 1
  %v422 = vadd.f32 %v420, %v421
  %v423 = vadd.f32 %v288, %v422
  %vm424 = vcmask 24576
  %425 = vst.msk [vmem:[%s1] sm:$0x1] %vm424, %v423
  %v426 = vld [vmem:[%s1 + $0x1] sm:$0x1]
  %v427 = vmul.f32 %v224, %v224
  %v428 = vmul.f32 %v225, %v225
  %v429 = vmul.f32 %v226, %v226
  %v430 = vmul.f32 %v227, %v227
  %v431 = vmul.f32 %v228, %v228
  %v432 = vmul.f32 %v229, %v229
  %v433 = vmul.f32 %v230, %v230
  %v434 = vmul.f32 %v231, %v231
  %v435 = vmul.f32 %v232, %v232
  %v436 = vmul.f32 %v233, %v233
  %v437 = vmul.f32 %v234, %v234
  %v438 = vmul.f32 %v235, %v235
  %v439 = vmul.f32 %v236, %v236
  %v440 = vmul.f32 %v237, %v237
  %v441 = vmul.f32 %v238, %v238
  %v442 = vmul.f32 %v239, %v239
  %v443 = vmul.f32 %v240, %v240
  %v444 = vmul.f32 %v241, %v241
  %v445 = vmul.f32 %v242, %v242
  %v446 = vmul.f32 %v243, %v243
  %v447 = vmul.f32 %v244, %v244
  %v448 = vmul.f32 %v245, %v245
  %v449 = vmul.f32 %v246, %v246
  %v450 = vmul.f32 %v247, %v247
  %v451 = vmul.f32 %v248, %v248
  %v452 = vmul.f32 %v249, %v249
  %v453 = vmul.f32 %v250, %v250
  %v454 = vmul.f32 %v251, %v251
  %v455 = vmul.f32 %v252, %v252
  %v456 = vmul.f32 %v253, %v253
  %v457 = vmul.f32 %v254, %v254
  %v458 = vmul.f32 %v255, %v255
  %v459 = vmul.f32 %v256, %v256
  %v460 = vmul.f32 %v257, %v257
  %v461 = vmul.f32 %v258, %v258
  %v462 = vmul.f32 %v259, %v259
  %v463 = vmul.f32 %v260, %v260
  %v464 = vmul.f32 %v261, %v261
  %v465 = vmul.f32 %v262, %v262
  %v466 = vmul.f32 %v263, %v263
  %v467 = vmul.f32 %v264, %v264
  %v468 = vmul.f32 %v265, %v265
  %v469 = vmul.f32 %v266, %v266
  %v470 = vmul.f32 %v267, %v267
  %v471 = vmul.f32 %v268, %v268
  %v472 = vmul.f32 %v269, %v269
  %v473 = vmul.f32 %v270, %v270
  %v474 = vmul.f32 %v271, %v271
  %v475 = vmul.f32 %v272, %v272
  %v476 = vmul.f32 %v273, %v273
  %v477 = vmul.f32 %v274, %v274
  %v478 = vmul.f32 %v275, %v275
  %v479 = vmul.f32 %v276, %v276
  %v480 = vmul.f32 %v277, %v277
  %v481 = vmul.f32 %v278, %v278
  %v482 = vmul.f32 %v279, %v279
  %v483 = vmul.f32 %v280, %v280
  %v484 = vmul.f32 %v281, %v281
  %v485 = vmul.f32 %v282, %v282
  %v486 = vmul.f32 %v283, %v283
  %v487 = vmul.f32 %v284, %v284
  %v488 = vmul.f32 %v285, %v285
  %v489 = vmul.f32 %v286, %v286
  %v490 = vmul.f32 %v287, %v287
  %v491 = vsel %vm289, %v427, 0.0
  %v492 = vsel %vm289, %v428, 0.0
  %v493 = vadd.f32 %v491, %v492
  %v494 = vsel %vm289, %v429, 0.0
  %v495 = vadd.f32 %v493, %v494
  %v496 = vsel %vm289, %v430, 0.0
  %v497 = vadd.f32 %v495, %v496
  %v498 = vsel %vm289, %v431, 0.0
  %v499 = vadd.f32 %v497, %v498
  %v500 = vsel %vm289, %v432, 0.0
  %v501 = vadd.f32 %v499, %v500
  %v502 = vsel %vm289, %v433, 0.0
  %v503 = vadd.f32 %v501, %v502
  %v504 = vsel %vm289, %v434, 0.0
  %v505 = vadd.f32 %v503, %v504
  %v506 = vsel %vm289, %v435, 0.0
  %v507 = vadd.f32 %v505, %v506
  %v508 = vsel %vm289, %v436, 0.0
  %v509 = vadd.f32 %v507, %v508
  %v510 = vsel %vm289, %v437, 0.0
  %v511 = vadd.f32 %v509, %v510
  %v512 = vsel %vm289, %v438, 0.0
  %v513 = vadd.f32 %v511, %v512
  %v514 = vsel %vm289, %v439, 0.0
  %v515 = vadd.f32 %v513, %v514
  %v516 = vsel %vm289, %v440, 0.0
  %v517 = vadd.f32 %v515, %v516
  %v518 = vsel %vm289, %v441, 0.0
  %v519 = vadd.f32 %v517, %v518
  %v520 = vsel %vm289, %v442, 0.0
  %v521 = vadd.f32 %v519, %v520
  %v522 = vsel %vm289, %v443, 0.0
  %v523 = vadd.f32 %v521, %v522
  %v524 = vsel %vm289, %v444, 0.0
  %v525 = vadd.f32 %v523, %v524
  %v526 = vsel %vm289, %v445, 0.0
  %v527 = vadd.f32 %v525, %v526
  %v528 = vsel %vm289, %v446, 0.0
  %v529 = vadd.f32 %v527, %v528
  %v530 = vsel %vm289, %v447, 0.0
  %v531 = vadd.f32 %v529, %v530
  %v532 = vsel %vm289, %v448, 0.0
  %v533 = vadd.f32 %v531, %v532
  %v534 = vsel %vm289, %v449, 0.0
  %v535 = vadd.f32 %v533, %v534
  %v536 = vsel %vm289, %v450, 0.0
  %v537 = vadd.f32 %v535, %v536
  %v538 = vsel %vm289, %v451, 0.0
  %v539 = vadd.f32 %v537, %v538
  %v540 = vsel %vm289, %v452, 0.0
  %v541 = vadd.f32 %v539, %v540
  %v542 = vsel %vm289, %v453, 0.0
  %v543 = vadd.f32 %v541, %v542
  %v544 = vsel %vm289, %v454, 0.0
  %v545 = vadd.f32 %v543, %v544
  %v546 = vsel %vm289, %v455, 0.0
  %v547 = vadd.f32 %v545, %v546
  %v548 = vsel %vm289, %v456, 0.0
  %v549 = vadd.f32 %v547, %v548
  %v550 = vsel %vm289, %v457, 0.0
  %v551 = vadd.f32 %v549, %v550
  %v552 = vsel %vm289, %v458, 0.0
  %v553 = vadd.f32 %v551, %v552
  %v554 = vsel %vm289, %v459, 0.0
  %v555 = vadd.f32 %v553, %v554
  %v556 = vsel %vm289, %v460, 0.0
  %v557 = vadd.f32 %v555, %v556
  %v558 = vsel %vm289, %v461, 0.0
  %v559 = vadd.f32 %v557, %v558
  %v560 = vsel %vm289, %v462, 0.0
  %v561 = vadd.f32 %v559, %v560
  %v562 = vsel %vm289, %v463, 0.0
  %v563 = vadd.f32 %v561, %v562
  %v564 = vsel %vm289, %v464, 0.0
  %v565 = vadd.f32 %v563, %v564
  %v566 = vsel %vm289, %v465, 0.0
  %v567 = vadd.f32 %v565, %v566
  %v568 = vsel %vm289, %v466, 0.0
  %v569 = vadd.f32 %v567, %v568
  %v570 = vsel %vm289, %v467, 0.0
  %v571 = vadd.f32 %v569, %v570
  %v572 = vsel %vm289, %v468, 0.0
  %v573 = vadd.f32 %v571, %v572
  %v574 = vsel %vm289, %v469, 0.0
  %v575 = vadd.f32 %v573, %v574
  %v576 = vsel %vm289, %v470, 0.0
  %v577 = vadd.f32 %v575, %v576
  %v578 = vsel %vm289, %v471, 0.0
  %v579 = vadd.f32 %v577, %v578
  %v580 = vsel %vm289, %v472, 0.0
  %v581 = vadd.f32 %v579, %v580
  %v582 = vsel %vm289, %v473, 0.0
  %v583 = vadd.f32 %v581, %v582
  %v584 = vsel %vm289, %v474, 0.0
  %v585 = vadd.f32 %v583, %v584
  %v586 = vsel %vm289, %v475, 0.0
  %v587 = vadd.f32 %v585, %v586
  %v588 = vsel %vm289, %v476, 0.0
  %v589 = vadd.f32 %v587, %v588
  %v590 = vsel %vm289, %v477, 0.0
  %v591 = vadd.f32 %v589, %v590
  %v592 = vsel %vm289, %v478, 0.0
  %v593 = vadd.f32 %v591, %v592
  %v594 = vsel %vm289, %v479, 0.0
  %v595 = vadd.f32 %v593, %v594
  %v596 = vsel %vm289, %v480, 0.0
  %v597 = vadd.f32 %v595, %v596
  %v598 = vsel %vm289, %v481, 0.0
  %v599 = vadd.f32 %v597, %v598
  %v600 = vsel %vm289, %v482, 0.0
  %v601 = vadd.f32 %v599, %v600
  %v602 = vsel %vm289, %v483, 0.0
  %v603 = vadd.f32 %v601, %v602
  %v604 = vsel %vm289, %v484, 0.0
  %v605 = vadd.f32 %v603, %v604
  %v606 = vsel %vm289, %v485, 0.0
  %v607 = vadd.f32 %v605, %v606
  %v608 = vsel %vm289, %v486, 0.0
  %v609 = vadd.f32 %v607, %v608
  %v610 = vsel %vm289, %v487, 0.0
  %v611 = vadd.f32 %v609, %v610
  %v612 = vsel %vm289, %v488, 0.0
  %v613 = vadd.f32 %v611, %v612
  %v614 = vsel %vm289, %v489, 0.0
  %v615 = vadd.f32 %v613, %v614
  %v616 = vsel %vm289, %v490, 0.0
  %v617 = vadd.f32 %v615, %v616
  %v618 = vrot.slane %v617, 4
  %v619 = vadd.f32 %v617, %v618
  %v620 = vrot.slane %v619, 2
  %v621 = vadd.f32 %v619, %v620
  %v622 = vrot.slane %v621, 1
  %v623 = vadd.f32 %v621, %v622
  %v624 = vadd.f32 %v426, %v623
  %625 = vst.msk [vmem:[%s1 + $0x1] sm:$0x1] %vm424, %v624
  // Predicated region
  $region10: #{spade_forward.6} parent=0 // pred_check
    _
  $region11: #{spade_forward.6} parent=0 // pred_check_branch
    %627 = sbr.rel (0) target = $region13
  $region12: #{spade_forward.6} parent=0 // pred_region
    _
  $region13: #{spade_forward.6} parent=0 // pred_fallthru
    _
  // Predicated region
  $region14: #{spade_forward.6} parent=0 // pred_check
    _
  $region15: #{spade_forward.6} parent=0 // pred_check_branch
    %629 = sbr.rel (0) target = $region17
  $region16: #{spade_forward.6} parent=0 // pred_region
    _
  $region17: #{spade_forward.6} parent=0 // pred_fallthru
    _

// kernel: spade_forward.8
$region0: #{spade_forward.8}
  #allocation0 [shape = 'u32[]', space=smem, size = 0x4, offset = 0x4, fixed_abs, tag = 'smem constant byte address 0x4 - core index']
  #allocation1 [shape = 'u32[72,128]{1,0:T(1,128)}', space=vmem, size = 0x9000, scoped, tag = 'internal scratch']
  %s0 = inlined_call_operand.vmem [shape: f32[2,1,400,4], index: 0, kind: input, shape index: {}]
  %s1 = inlined_call_operand.vmem [shape: f32[9,4,4], index: 1, kind: input, shape index: {}]
  %s2 = inlined_call_operand.vmem [shape: f32[1,4], index: 2, kind: input, shape index: {}]
  %s3 = inlined_call_operand.vmem [shape: f32[2,320,4], index: 3, kind: output, shape index: {}]
  %s4 = sld [smem:[#allocation0]]
  $region45: #{spade_forward.8} parent=0
    _
  %s6 = ssub.s32 1, %s4
  %s7 = scalar_select 0, %s6, %s4
  loop: start=0, step=1, limit=4
  $region2: #{spade_forward.8} parent=0 // loop_pre_header
    _
  $region3: #{spade_forward.8} parent=0 // loop_header
    %s9 = sphi 0, %s13
    %p10 = scmp.ge.s32.totalorder %s9, 4
    %s16 = sphi 0, %s28
    %s17 = sphi 0, %s24
    %s18 = sphi 0, %s16
    %s19 = sphi 0, %s17
    %s20 = sphi 0, %s18
    %s21 = sphi 0, %s19
    %s33 = sphi 0, %s35
    %s36 = sphi 0, %s33
    %s37 = sphi 0, %s36
    %s53 = sphi 0, %s37
    %s57 = sphi 0, %s57
    %s59 = sphi 0, %s57
    %s60 = sphi 0, %s59
    %s74 = sphi 0, %s60
    %s78 = sphi 0, %s78
    %s80 = sphi 0, %s78
    %s81 = sphi 0, %s80
    %s95 = sphi 0, %s81
    %s103 = sphi 0, %s105
    %s106 = sphi 0, %s103
    %s107 = sphi 0, %s106
    %s123 = sphi 0, %s107
  $region4: #{spade_forward.8} parent=0 // loop_header_branch
    %12 = sbr.rel (%p10) target = $region8
  $region5: #{spade_forward.8} parent=0 // loop_body
    %s14 = ssub.s32 %s9, 1
    %s15 = ssub.s32 %s9, 2
    %s22 = sadd.s32 1, %s17
    %p23 = scmp.ge.s32.totalorder %s22, 1
    %s24 = scalar_select %p23, 0, %s22
    %s25 = sadd.s32 1, %s16
    %s26 = scalar_select %p23, %s25, %s16
    %p27 = scmp.ge.s32.totalorder %s26, 2
    %s28 = scalar_select %p27, 0, %s26
    %s29 = ssub.s32 %s16, %s28
    %s30 = ssub.s32 %s17, %s24
    %s31 = sor.u32 %s29, %s30
    %p32 = scmp.eq.s32.totalorder %s31, 0
    %s34 = sadd.s32 %s33, 1
    %s35 = scalar_select %p32, %s33, %s34
    %p38 = pneg %p32
    %p39 = scmp.eq.s32.totalorder %s9, 1
    %p40 = por %p38, %p39
    %p41 = scmp.ne.s32.totalorder %s33, %s36
    %p42 = scmp.eq.s32.totalorder %s9, 0
    %p43 = por %p41, %p42
    %p44 = scmp.ne.s32.totalorder %s33, %s36
    %p45 = scmp.eq.s32.totalorder %s14, 1
    %p46 = por %p44, %p45
    %p47 = scmp.ne.s32.totalorder %s36, %s37
    %p48 = scmp.eq.s32.totalorder %s14, 0
    %p49 = por %p47, %p48
    %p50 = scmp.ne.s32.totalorder %s36, %s37
    %p51 = scmp.eq.s32.totalorder %s15, 1
    %p52 = por %p50, %p51
    %p54 = scmp.ne.s32.totalorder %s37, %s53
    %p55 = scmp.eq.s32.totalorder %s15, 0
    %p56 = por %p54, %p55
    %s58 = sadd.s32 %s57, 1
    %p61 = scmp.eq.s32.totalorder %s9, 1
    %p62 = scmp.ne.s32.totalorder %s57, %s59
    %p63 = scmp.eq.s32.totalorder %s9, 0
    %p64 = por %p62, %p63
    %p65 = scmp.ne.s32.totalorder %s57, %s59
    %p66 = scmp.eq.s32.totalorder %s14, 1
    %p67 = por %p65, %p66
    %p68 = scmp.ne.s32.totalorder %s59, %s60
    %p69 = scmp.eq.s32.totalorder %s14, 0
    %p70 = por %p68, %p69
    %p71 = scmp.ne.s32.totalorder %s59, %s60
    %p72 = scmp.eq.s32.totalorder %s15, 1
    %p73 = por %p71, %p72
    %p75 = scmp.ne.s32.totalorder %s60, %s74
    %p76 = scmp.eq.s32.totalorder %s15, 0
    %p77 = por %p75, %p76
    %s79 = sadd.s32 %s78, 1
    %p82 = scmp.eq.s32.totalorder %s9, 1
    %p83 = scmp.ne.s32.totalorder %s78, %s80
    %p84 = scmp.eq.s32.totalorder %s9, 0
    %p85 = por %p83, %p84
    %p86 = scmp.ne.s32.totalorder %s78, %s80
    %p87 = scmp.eq.s32.totalorder %s14, 1
    %p88 = por %p86, %p87
    %p89 = scmp.ne.s32.totalorder %s80, %s81
    %p90 = scmp.eq.s32.totalorder %s14, 0
    %p91 = por %p89, %p90
    %p92 = scmp.ne.s32.totalorder %s80, %s81
    %p93 = scmp.eq.s32.totalorder %s15, 1
    %p94 = por %p92, %p93
    %p96 = scmp.ne.s32.totalorder %s81, %s95
    %p97 = scmp.eq.s32.totalorder %s15, 0
    %p98 = por %p96, %p97
    %s99 = ssub.s32 %s16, %s28
    %s100 = ssub.s32 %s17, %s24
    %s101 = sor.u32 %s99, %s100
    %p102 = scmp.eq.s32.totalorder %s101, 0
    %s104 = sadd.s32 %s103, 1
    %s105 = scalar_select %p102, %s103, %s104
    %p108 = pneg %p102
    %p109 = scmp.eq.s32.totalorder %s9, 1
    %p110 = por %p108, %p109
    %p111 = scmp.ne.s32.totalorder %s103, %s106
    %p112 = scmp.eq.s32.totalorder %s9, 0
    %p113 = por %p111, %p112
    %p114 = scmp.ne.s32.totalorder %s103, %s106
    %p115 = scmp.eq.s32.totalorder %s14, 1
    %p116 = por %p114, %p115
    %p117 = scmp.ne.s32.totalorder %s106, %s107
    %p118 = scmp.eq.s32.totalorder %s14, 0
    %p119 = por %p117, %p118
    %p120 = scmp.ne.s32.totalorder %s106, %s107
    %p121 = scmp.eq.s32.totalorder %s15, 1
    %p122 = por %p120, %p121
    %p124 = scmp.ne.s32.totalorder %s107, %s123
    %p125 = scmp.eq.s32.totalorder %s15, 0
    %p126 = por %p124, %p125
    %p127 = scmp.le.s32.totalorder 1, %s9
    %p128 = scmp.lt.s32.totalorder %s9, 3
    %p129 = pnand %p127, %p128
    %p130 = pneg %p129
    // Predicated region
    $region9: #{spade_forward.8} parent=5 // pred_check
      _
    $region10: #{spade_forward.8} parent=5 // pred_check_branch
      %132 = sbr.rel (%p129) target = $region12
    $region11: #{spade_forward.8} parent=5 // pred_region
      %s133 = ssub.s32 %s9, 1
      // Predicated region
      $region13: #{spade_forward.8} parent=11 // pred_check
        %p134 = pneg %p70
      $region14: #{spade_forward.8} parent=11 // pred_check_branch
        %136 = sbr.rel (%p134) target = $region16
      $region15: #{spade_forward.8} parent=11 // pred_region
        _
      $region16: #{spade_forward.8} parent=11 // pred_fallthru
        _
      // Predicated region
      $region17: #{spade_forward.8} parent=11 // pred_check
        %p137 = pneg %p91
      $region18: #{spade_forward.8} parent=11 // pred_check_branch
        %139 = sbr.rel (%p137) target = $region20
      $region19: #{spade_forward.8} parent=11 // pred_region
        _
      $region20: #{spade_forward.8} parent=11 // pred_fallthru
        _
    $region12: #{spade_forward.8} parent=5 // pred_fallthru
      _
    %p140 = scmp.lt.s32.totalorder %s9, 2
    // Predicated region
    $region21: #{spade_forward.8} parent=5 // pred_check
      %p141 = pneg %p140
    $region22: #{spade_forward.8} parent=5 // pred_check_branch
      %143 = sbr.rel (%p141) target = $region24
    $region23: #{spade_forward.8} parent=5 // pred_region
      // Predicated region
      $region25: #{spade_forward.8} parent=23 // pred_check
        %p144 = pneg %p43
      $region26: #{spade_forward.8} parent=23 // pred_check_branch
        %146 = sbr.rel (%p144) target = $region28
      $region27: #{spade_forward.8} parent=23 // pred_region
        %p147 = scmp.lt.s32.totalorder %s16, 1
        %s148 = scalar_select %p147, %s16, 1
        %p149 = scmp.lt.s32.totalorder %s17, 0
        %s150 = scalar_select %p149, %s17, 0
        %s151 = smul.addr %s150, 50
        %s152 = smul.addr %s148, 50
        %s153 = sadd.s32 %s151, %s152
        %s154 = smul.addr %s153, 8
        %s155 = scalar_lea.vmem %s0, %s154
      $region28: #{spade_forward.8} parent=23 // pred_fallthru
        _
    $region24: #{spade_forward.8} parent=5 // pred_fallthru
      _
    %p156 = scmp.le.s32.totalorder 1, %s9
    %p157 = scmp.lt.s32.totalorder %s9, 3
    %p158 = pnand %p156, %p157
    %p159 = pneg %p158
    // Predicated region
    $region29: #{spade_forward.8} parent=5 // pred_check
      _
    $region30: #{spade_forward.8} parent=5 // pred_check_branch
      %161 = sbr.rel (%p158) target = $region32
    $region31: #{spade_forward.8} parent=5 // pred_region
      %s162 = ssub.s32 %s9, 1
      %p163 = scmp.lt.s32.totalorder %s18, 1
      %s164 = scalar_select %p163, %s18, 1
      %p165 = scmp.lt.s32.totalorder %s19, 0
      %s166 = scalar_select %p165, %s19, 0
      %s167 = smul.addr %s166, 50
      %s168 = smul.addr %s164, 50
      %s169 = sadd.s32 %s167, %s168
      %s170 = smul.addr %s169, 8
      %s171 = scalar_lea.vmem %s0, %s170
      %p172 = pneg %p49
      %p173 = pneg %p46
      %p174 = pneg %p70
      %p175 = pneg %p67
      %p176 = pneg %p91
      %p177 = pneg %p88
      %p178 = pneg %p119
      %p179 = pneg %p116
      %s180 = smul.u32 40, %s19
      %p181 = scmp.lt.s32.totalorder %s18, 1
      %s182 = scalar_select %p181, %s18, 1
      %p183 = scmp.lt.s32.totalorder %s180, 39
      %s184 = scalar_select %p183, %s180, 39
      %s185 = smul.addr %s182, 40
      %s186 = sadd.s32 %s184, %s185
      %s187 = smul.addr %s186, 8
      %s188 = scalar_lea.vmem %s3, %s187
      %p189 = scmp.lt.s32.totalorder %s18, 1
      %s190 = scalar_select %p189, %s18, 1
      %p191 = scmp.lt.s32.totalorder %s19, 0
      %s192 = scalar_select %p191, %s19, 0
      %s193 = smul.addr %s192, 50
      %s194 = smul.addr %s190, 50
      %s195 = sadd.s32 %s193, %s194
      %s196 = smul.addr %s195, 8
      %s197 = scalar_lea.vmem %s0, %s196
      %s198 = smul.u32 40, %s19
      %p199 = scmp.lt.s32.totalorder %s18, 1
      %s200 = scalar_select %p199, %s18, 1
      %p201 = scmp.lt.s32.totalorder %s198, 39
      %s202 = scalar_select %p201, %s198, 39
      %s203 = smul.addr %s200, 40
      %s204 = sadd.s32 %s202, %s203
      %s205 = smul.addr %s204, 8
      %s206 = scalar_lea.vmem %s3, %s205
      %s207 = smul.u32 40, %s19
      %v208 = vld [vmem:[%s2] sm:$0x1]
      %v210 = vperm.slane %v208, 0
      %v212 = vadd.f32 %v210, 0.0
      %v213 = vld [vmem:[%s197 + $0x13] sm:$0xff]
      %v214 = vld [vmem:[%s197 + $0x1b] sm:$0xff]
      %v215 = vld [vmem:[%s197 + $0x23] sm:$0xff]
      %v216 = vld [vmem:[%s197 + $0x2b] sm:$0xff]
      %v217 = vld [vmem:[%s197 + $0x33] sm:$0xff]
      %v218 = vld [vmem:[%s197 + $0x3b] sm:$0xff]
      %v219 = vld [vmem:[%s197 + $0x43] sm:$0xff]
      %v220 = vld [vmem:[%s197 + $0x4b] sm:$0xff]
      %v221 = vld [vmem:[%s197 + $0x53] sm:$0xff]
      %v222 = vld [vmem:[%s197 + $0x5b] sm:$0xff]
      %v223 = vld [vmem:[%s197 + $0x63] sm:$0xff]
      %v224 = vld [vmem:[%s197 + $0x6b] sm:$0xff]
      %v225 = vld [vmem:[%s197 + $0x73] sm:$0xff]
      %v226 = vld [vmem:[%s197 + $0x7b] sm:$0xff]
      %v227 = vld [vmem:[%s197 + $0x83] sm:$0xff]
      %v228 = vld [vmem:[%s197 + $0x8b] sm:$0xff]
      %v229 = vld [vmem:[%s197 + $0x93] sm:$0xff]
      %v230 = vld [vmem:[%s197 + $0x9b] sm:$0xff]
      %v231 = vld [vmem:[%s197 + $0xa3] sm:$0xff]
      %v232 = vld [vmem:[%s197 + $0xab] sm:$0xff]
      %v233 = vld [vmem:[%s197 + $0xb3] sm:$0xff]
      %v234 = vld [vmem:[%s197 + $0xbb] sm:$0xff]
      %v235 = vld [vmem:[%s197 + $0xc3] sm:$0xff]
      %v236 = vld [vmem:[%s197 + $0xcb] sm:$0xff]
      %v237 = vld [vmem:[%s197 + $0xd3] sm:$0xff]
      %v238 = vld [vmem:[%s197 + $0xdb] sm:$0xff]
      %v239 = vld [vmem:[%s197 + $0xe3] sm:$0xff]
      %v240 = vld [vmem:[%s197 + $0xeb] sm:$0xff]
      %v241 = vld [vmem:[%s197 + $0xf3] sm:$0xff]
      %v242 = vld [vmem:[%s197 + $0xfb] sm:$0xff]
      %v243 = vld [vmem:[%s197 + $0x103] sm:$0xff]
      %v244 = vld [vmem:[%s197 + $0x10b] sm:$0xff]
      %v245 = vld [vmem:[%s197 + $0x113] sm:$0xff]
      %v246 = vld [vmem:[%s197 + $0x11b] sm:$0xff]
      %v247 = vld [vmem:[%s197 + $0x123] sm:$0xff]
      %v248 = vld [vmem:[%s197 + $0x12b] sm:$0xff]
      %v249 = vld [vmem:[%s197 + $0x133] sm:$0xff]
      %v250 = vld [vmem:[%s197 + $0x13b] sm:$0xff]
      %v251 = vld [vmem:[%s197 + $0x143] sm:$0xff]
      %v252 = vld [vmem:[%s197 + $0x14b] sm:$0xff]
      %v253 = vld [vmem:[%s1] sm:$0xf]
      %vm254 = vcmask 31744
      %v256 = vsel %vm254, %v213, 0
      %v259 = vsel %vm254, %v214, 0
      %v262 = vsel %vm254, %v215, 0
      %v265 = vsel %vm254, %v216, 0
      %v268 = vsel %vm254, %v217, 0
      %v271 = vsel %vm254, %v218, 0
      %v274 = vsel %vm254, %v219, 0
      %v277 = vsel %vm254, %v220, 0
      %v280 = vsel %vm254, %v221, 0
      %v283 = vsel %vm254, %v222, 0
      %v286 = vsel %vm254, %v223, 0
      %v289 = vsel %vm254, %v224, 0
      %v292 = vsel %vm254, %v225, 0
      %v295 = vsel %vm254, %v226, 0
      %v298 = vsel %vm254, %v227, 0
      %v301 = vsel %vm254, %v228, 0
      %v304 = vsel %vm254, %v229, 0
      %v307 = vsel %vm254, %v230, 0
      %v310 = vsel %vm254, %v231, 0
      %v313 = vsel %vm254, %v232, 0
      %v316 = vsel %vm254, %v233, 0
      %v319 = vsel %vm254, %v234, 0
      %v322 = vsel %vm254, %v235, 0
      %v325 = vsel %vm254, %v236, 0
      %v328 = vsel %vm254, %v237, 0
      %v331 = vsel %vm254, %v238, 0
      %v334 = vsel %vm254, %v239, 0
      %v337 = vsel %vm254, %v240, 0
      %v340 = vsel %vm254, %v241, 0
      %v343 = vsel %vm254, %v242, 0
      %v346 = vsel %vm254, %v243, 0
      %v349 = vsel %vm254, %v244, 0
      %v352 = vsel %vm254, %v245, 0
      %v355 = vsel %vm254, %v246, 0
      %v358 = vsel %vm254, %v247, 0
      %v361 = vsel %vm254, %v248, 0
      %v364 = vsel %vm254, %v249, 0
      %v367 = vsel %vm254, %v250, 0
      %v370 = vsel %vm254, %v251, 0
      %v373 = vsel %vm254, %v252, 0
      %vm375 = vcmask 1043456
      %v377 = vsel %vm375, %v253, 0
      %379 = vmatpush.msra.mxu0 0.0
      %380 = vmatpush.msra.mxu0 0.0
      %381 = vmatpush.msra.mxu0 0.0
      %382 = vmatpush.msra.mxu0 0.0
      %383 = vmatpush.msra.mxu0 0.0
      %384 = vmatpush.msra.mxu0 0.0
      %385 = vmatpush.msra.mxu0 0.0
      %386 = vmatpush.msra.mxu0 0.0
      %387 = vmatpush.msra.mxu0 0.0
      %388 = vmatpush.msra.mxu0 0.0
      %389 = vmatpush.msra.mxu0 0.0
      %390 = vmatpush.msra.mxu0 0.0
      %391 = vmatpush.msra.mxu0 0.0
      %392 = vmatpush.msra.mxu0 0.0
      %393 = vmatpush.msra.mxu0 0.0
      %394 = vmatpush.msra.mxu0 %v377
      %395 = vmatmul.f32.gmra.mxu0 %v256
      %v396 = vpop.f32.mrf.mxu0
      %v397 = vadd.f32 0.0, %v396
      %398 = vmatmul.f32.gmra.mxu0 %v259
      %v399 = vpop.f32.mrf.mxu0
      %v400 = vadd.f32 0.0, %v399
      %401 = vmatmul.f32.gmra.mxu0 %v262
      %v402 = vpop.f32.mrf.mxu0
      %v403 = vadd.f32 0.0, %v402
      %404 = vmatmul.f32.gmra.mxu0 %v265
      %v405 = vpop.f32.mrf.mxu0
      %v406 = vadd.f32 0.0, %v405
      %407 = vmatmul.f32.gmra.mxu0 %v268
      %v408 = vpop.f32.mrf.mxu0
      %v409 = vadd.f32 0.0, %v408
      %410 = vmatmul.f32.gmra.mxu0 %v271
      %v411 = vpop.f32.mrf.mxu0
      %v412 = vadd.f32 0.0, %v411
      %413 = vmatmul.f32.gmra.mxu0 %v274
      %v414 = vpop.f32.mrf.mxu0
      %v415 = vadd.f32 0.0, %v414
      %416 = vmatmul.f32.gmra.mxu0 %v277
      %v417 = vpop.f32.mrf.mxu0
      %v418 = vadd.f32 0.0, %v417
      %419 = vmatmul.f32.gmra.mxu0 %v280
      %v420 = vpop.f32.mrf.mxu0
      %v421 = vadd.f32 0.0, %v420
      %422 = vmatmul.f32.gmra.mxu0 %v283
      %v423 = vpop.f32.mrf.mxu0
      %v424 = vadd.f32 0.0, %v423
      %425 = vmatmul.f32.gmra.mxu0 %v286
      %v426 = vpop.f32.mrf.mxu0
      %v427 = vadd.f32 0.0, %v426
      %428 = vmatmul.f32.gmra.mxu0 %v289
      %v429 = vpop.f32.mrf.mxu0
      %v430 = vadd.f32 0.0, %v429
      %431 = vmatmul.f32.gmra.mxu0 %v292
      %v432 = vpop.f32.mrf.mxu0
      %v433 = vadd.f32 0.0, %v432
      %434 = vmatmul.f32.gmra.mxu0 %v295
      %v435 = vpop.f32.mrf.mxu0
      %v436 = vadd.f32 0.0, %v435
      %437 = vmatmul.f32.gmra.mxu0 %v298
      %v438 = vpop.f32.mrf.mxu0
      %v439 = vadd.f32 0.0, %v438
      %440 = vmatmul.f32.gmra.mxu0 %v301
      %v441 = vpop.f32.mrf.mxu0
      %v442 = vadd.f32 0.0, %v441
      %443 = vmatmul.f32.gmra.mxu0 %v304
      %v444 = vpop.f32.mrf.mxu0
      %v445 = vadd.f32 0.0, %v444
      %446 = vmatmul.f32.gmra.mxu0 %v307
      %v447 = vpop.f32.mrf.mxu0
      %v448 = vadd.f32 0.0, %v447
      %449 = vmatmul.f32.gmra.mxu0 %v310
      %v450 = vpop.f32.mrf.mxu0
      %v451 = vadd.f32 0.0, %v450
      %452 = vmatmul.f32.gmra.mxu0 %v313
      %v453 = vpop.f32.mrf.mxu0
      %v454 = vadd.f32 0.0, %v453
      %455 = vmatmul.f32.gmra.mxu0 %v316
      %v456 = vpop.f32.mrf.mxu0
      %v457 = vadd.f32 0.0, %v456
      %458 = vmatmul.f32.gmra.mxu0 %v319
      %v459 = vpop.f32.mrf.mxu0
      %v460 = vadd.f32 0.0, %v459
      %461 = vmatmul.f32.gmra.mxu0 %v322
      %v462 = vpop.f32.mrf.mxu0
      %v463 = vadd.f32 0.0, %v462
      %464 = vmatmul.f32.gmra.mxu0 %v325
      %v465 = vpop.f32.mrf.mxu0
      %v466 = vadd.f32 0.0, %v465
      %467 = vmatmul.f32.gmra.mxu0 %v328
      %v468 = vpop.f32.mrf.mxu0
      %v469 = vadd.f32 0.0, %v468
      %470 = vmatmul.f32.gmra.mxu0 %v331
      %v471 = vpop.f32.mrf.mxu0
      %v472 = vadd.f32 0.0, %v471
      %473 = vmatmul.f32.gmra.mxu0 %v334
      %v474 = vpop.f32.mrf.mxu0
      %v475 = vadd.f32 0.0, %v474
      %476 = vmatmul.f32.gmra.mxu0 %v337
      %v477 = vpop.f32.mrf.mxu0
      %v478 = vadd.f32 0.0, %v477
      %479 = vmatmul.f32.gmra.mxu0 %v340
      %v480 = vpop.f32.mrf.mxu0
      %v481 = vadd.f32 0.0, %v480
      %482 = vmatmul.f32.gmra.mxu0 %v343
      %v483 = vpop.f32.mrf.mxu0
      %v484 = vadd.f32 0.0, %v483
      %485 = vmatmul.f32.gmra.mxu0 %v346
      %v486 = vpop.f32.mrf.mxu0
      %v487 = vadd.f32 0.0, %v486
      %488 = vmatmul.f32.gmra.mxu0 %v349
      %v489 = vpop.f32.mrf.mxu0
      %v490 = vadd.f32 0.0, %v489
      %491 = vmatmul.f32.gmra.mxu0 %v352
      %v492 = vpop.f32.mrf.mxu0
      %v493 = vadd.f32 0.0, %v492
      %494 = vmatmul.f32.gmra.mxu0 %v355
      %v495 = vpop.f32.mrf.mxu0
      %v496 = vadd.f32 0.0, %v495
      %497 = vmatmul.f32.gmra.mxu0 %v358
      %v498 = vpop.f32.mrf.mxu0
      %v499 = vadd.f32 0.0, %v498
      %500 = vmatmul.f32.gmra.mxu0 %v361
      %v501 = vpop.f32.mrf.mxu0
      %v502 = vadd.f32 0.0, %v501
      %503 = vmatmul.f32.gmra.mxu0 %v364
      %v504 = vpop.f32.mrf.mxu0
      %v505 = vadd.f32 0.0, %v504
      %506 = vmatmul.f32.gmra.mxu0 %v367
      %v507 = vpop.f32.mrf.mxu0
      %v508 = vadd.f32 0.0, %v507
      %509 = vmatmul.f32.gmra.mxu0 %v370
      %v510 = vpop.f32.mrf.mxu0
      %v511 = vadd.f32 0.0, %v510
      %512 = vmatmul.f32.gmra.mxu0 %v373
      %v513 = vpop.f32.mrf.mxu0
      %v514 = vadd.f32 0.0, %v513
      %515 = vdwg.mxu0
      %v516 = vadd.f32 %v212, %v397
      %v517 = vadd.f32 %v212, %v400
      %v518 = vadd.f32 %v212, %v403
      %v519 = vadd.f32 %v212, %v406
      %v520 = vadd.f32 %v212, %v409
      %v521 = vadd.f32 %v212, %v412
      %v522 = vadd.f32 %v212, %v415
      %v523 = vadd.f32 %v212, %v418
      %v524 = vadd.f32 %v212, %v421
      %v525 = vadd.f32 %v212, %v424
      %v526 = vadd.f32 %v212, %v427
      %v527 = vadd.f32 %v212, %v430
      %v528 = vadd.f32 %v212, %v433
      %v529 = vadd.f32 %v212, %v436
      %v530 = vadd.f32 %v212, %v439
      %v531 = vadd.f32 %v212, %v442
      %v532 = vadd.f32 %v212, %v445
      %v533 = vadd.f32 %v212, %v448
      %v534 = vadd.f32 %v212, %v451
      %v535 = vadd.f32 %v212, %v454
      %v536 = vadd.f32 %v212, %v457
      %v537 = vadd.f32 %v212, %v460
      %v538 = vadd.f32 %v212, %v463
      %v539 = vadd.f32 %v212, %v466
      %v540 = vadd.f32 %v212, %v469
      %v541 = vadd.f32 %v212, %v472
      %v542 = vadd.f32 %v212, %v475
      %v543 = vadd.f32 %v212, %v478
      %v544 = vadd.f32 %v212, %v481
      %v545 = vadd.f32 %v212, %v484
      %v546 = vadd.f32 %v212, %v487
      %v547 = vadd.f32 %v212, %v490
      %v548 = vadd.f32 %v212, %v493
      %v549 = vadd.f32 %v212, %v496
      %v550 = vadd.f32 %v212, %v499
      %v551 = vadd.f32 %v212, %v502
      %v552 = vadd.f32 %v212, %v505
      %v553 = vadd.f32 %v212, %v508
      %v554 = vadd.f32 %v212, %v511
      %v555 = vadd.f32 %v212, %v514
      %v556 = vld [vmem:[%s197 + $0x14] sm:$0xff]
      %v557 = vld [vmem:[%s197 + $0x1c] sm:$0xff]
      %v558 = vld [vmem:[%s197 + $0x24] sm:$0xff]
      %v559 = vld [vmem:[%s197 + $0x2c] sm:$0xff]
      %v560 = vld [vmem:[%s197 + $0x34] sm:$0xff]
      %v561 = vld [vmem:[%s197 + $0x3c] sm:$0xff]
      %v562 = vld [vmem:[%s197 + $0x44] sm:$0xff]
      %v563 = vld [vmem:[%s197 + $0x4c] sm:$0xff]
      %v564 = vld [vmem:[%s197 + $0x54] sm:$0xff]
      %v565 = vld [vmem:[%s197 + $0x5c] sm:$0xff]
      %v566 = vld [vmem:[%s197 + $0x64] sm:$0xff]
      %v567 = vld [vmem:[%s197 + $0x6c] sm:$0xff]
      %v568 = vld [vmem:[%s197 + $0x74] sm:$0xff]
      %v569 = vld [vmem:[%s197 + $0x7c] sm:$0xff]
      %v570 = vld [vmem:[%s197 + $0x84] sm:$0xff]
      %v571 = vld [vmem:[%s197 + $0x8c] sm:$0xff]
      %v572 = vld [vmem:[%s197 + $0x94] sm:$0xff]
      %v573 = vld [vmem:[%s197 + $0x9c] sm:$0xff]
      %v574 = vld [vmem:[%s197 + $0xa4] sm:$0xff]
      %v575 = vld [vmem:[%s197 + $0xac] sm:$0xff]
      %v576 = vld [vmem:[%s197 + $0xb4] sm:$0xff]
      %v577 = vld [vmem:[%s197 + $0xbc] sm:$0xff]
      %v578 = vld [vmem:[%s197 + $0xc4] sm:$0xff]
      %v579 = vld [vmem:[%s197 + $0xcc] sm:$0xff]
      %v580 = vld [vmem:[%s197 + $0xd4] sm:$0xff]
      %v581 = vld [vmem:[%s197 + $0xdc] sm:$0xff]
      %v582 = vld [vmem:[%s197 + $0xe4] sm:$0xff]
      %v583 = vld [vmem:[%s197 + $0xec] sm:$0xff]
      %v584 = vld [vmem:[%s197 + $0xf4] sm:$0xff]
      %v585 = vld [vmem:[%s197 + $0xfc] sm:$0xff]
      %v586 = vld [vmem:[%s197 + $0x104] sm:$0xff]
      %v587 = vld [vmem:[%s197 + $0x10c] sm:$0xff]
      %v588 = vld [vmem:[%s197 + $0x114] sm:$0xff]
      %v589 = vld [vmem:[%s197 + $0x11c] sm:$0xff]
      %v590 = vld [vmem:[%s197 + $0x124] sm:$0xff]
      %v591 = vld [vmem:[%s197 + $0x12c] sm:$0xff]
      %v592 = vld [vmem:[%s197 + $0x134] sm:$0xff]
      %v593 = vld [vmem:[%s197 + $0x13c] sm:$0xff]
      %v594 = vld [vmem:[%s197 + $0x144] sm:$0xff]
      %v595 = vld [vmem:[%s197 + $0x14c] sm:$0xff]
      %s596 = scalar_lea.vmem %s1, 4
      %v597 = vld [vmem:[%s596] sm:$0xf]
      %v599 = vsel %vm254, %v556, 0
      %v602 = vsel %vm254, %v557, 0
      %v605 = vsel %vm254, %v558, 0
      %v608 = vsel %vm254, %v559, 0
      %v611 = vsel %vm254, %v560, 0
      %v614 = vsel %vm254, %v561, 0
      %v617 = vsel %vm254, %v562, 0
      %v620 = vsel %vm254, %v563, 0
      %v623 = vsel %vm254, %v564, 0
      %v626 = vsel %vm254, %v565, 0
      %v629 = vsel %vm254, %v566, 0
      %v632 = vsel %vm254, %v567, 0
      %v635 = vsel %vm254, %v568, 0
      %v638 = vsel %vm254, %v569, 0
      %v641 = vsel %vm254, %v570, 0
      %v644 = vsel %vm254, %v571, 0
      %v647 = vsel %vm254, %v572, 0
      %v650 = vsel %vm254, %v573, 0
      %v653 = vsel %vm254, %v574, 0
      %v656 = vsel %vm254, %v575, 0
      %v659 = vsel %vm254, %v576, 0
      %v662 = vsel %vm254, %v577, 0
      %v665 = vsel %vm254, %v578, 0
      %v668 = vsel %vm254, %v579, 0
      %v671 = vsel %vm254, %v580, 0
      %v674 = vsel %vm254, %v581, 0
      %v677 = vsel %vm254, %v582, 0
      %v680 = vsel %vm254, %v583, 0
      %v683 = vsel %vm254, %v584, 0
      %v686 = vsel %vm254, %v585, 0
      %v689 = vsel %vm254, %v586, 0
      %v692 = vsel %vm254, %v587, 0
      %v695 = vsel %vm254, %v588, 0
      %v698 = vsel %vm254, %v589, 0
      %v701 = vsel %vm254, %v590, 0
      %v704 = vsel %vm254, %v591, 0
      %v707 = vsel %vm254, %v592, 0
      %v710 = vsel %vm254, %v593, 0
      %v713 = vsel %vm254, %v594, 0
      %v716 = vsel %vm254, %v595, 0
      %v719 = vsel %vm375, %v597, 0
      %721 = vmatpush.msra.mxu0 0.0
      %722 = vmatpush.msra.mxu0 0.0
      %723 = vmatpush.msra.mxu0 0.0
      %724 = vmatpush.msra.mxu0 0.0
      %725 = vmatpush.msra.mxu0 0.0
      %726 = vmatpush.msra.mxu0 0.0
      %727 = vmatpush.msra.mxu0 0.0
      %728 = vmatpush.msra.mxu0 0.0
      %729 = vmatpush.msra.mxu0 0.0
      %730 = vmatpush.msra.mxu0 0.0
      %731 = vmatpush.msra.mxu0 0.0
      %732 = vmatpush.msra.mxu0 0.0
      %733 = vmatpush.msra.mxu0 0.0
      %734 = vmatpush.msra.mxu0 0.0
      %735 = vmatpush.msra.mxu0 0.0
      %736 = vmatpush.msra.mxu0 %v719
      %737 = vmatmul.f32.gmra.mxu0 %v599
      %v738 = vpop.f32.mrf.mxu0
      %v739 = vadd.f32 0.0, %v738
      %740 = vmatmul.f32.gmra.mxu0 %v602
      %v741 = vpop.f32.mrf.mxu0
      %v742 = vadd.f32 0.0, %v741
      %743 = vmatmul.f32.gmra.mxu0 %v605
      %v744 = vpop.f32.mrf.mxu0
      %v745 = vadd.f32 0.0, %v744
      %746 = vmatmul.f32.gmra.mxu0 %v608
      %v747 = vpop.f32.mrf.mxu0
      %v748 = vadd.f32 0.0, %v747
      %749 = vmatmul.f32.gmra.mxu0 %v611
      %v750 = vpop.f32.mrf.mxu0
      %v751 = vadd.f32 0.0, %v750
      %752 = vmatmul.f32.gmra.mxu0 %v614
      %v753 = vpop.f32.mrf.mxu0
      %v754 = vadd.f32 0.0, %v753
      %755 = vmatmul.f32.gmra.mxu0 %v617
      %v756 = vpop.f32.mrf.mxu0
      %v757 = vadd.f32 0.0, %v756
      %758 = vmatmul.f32.gmra.mxu0 %v620
      %v759 = vpop.f32.mrf.mxu0
      %v760 = vadd.f32 0.0, %v759
      %761 = vmatmul.f32.gmra.mxu0 %v623
      %v762 = vpop.f32.mrf.mxu0
      %v763 = vadd.f32 0.0, %v762
      %764 = vmatmul.f32.gmra.mxu0 %v626
      %v765 = vpop.f32.mrf.mxu0
      %v766 = vadd.f32 0.0, %v765
      %767 = vmatmul.f32.gmra.mxu0 %v629
      %v768 = vpop.f32.mrf.mxu0
      %v769 = vadd.f32 0.0, %v768
      %770 = vmatmul.f32.gmra.mxu0 %v632
      %v771 = vpop.f32.mrf.mxu0
      %v772 = vadd.f32 0.0, %v771
      %773 = vmatmul.f32.gmra.mxu0 %v635
      %v774 = vpop.f32.mrf.mxu0
      %v775 = vadd.f32 0.0, %v774
      %776 = vmatmul.f32.gmra.mxu0 %v638
      %v777 = vpop.f32.mrf.mxu0
      %v778 = vadd.f32 0.0, %v777
      %779 = vmatmul.f32.gmra.mxu0 %v641
      %v780 = vpop.f32.mrf.mxu0
      %v781 = vadd.f32 0.0, %v780
      %782 = vmatmul.f32.gmra.mxu0 %v644
      %v783 = vpop.f32.mrf.mxu0
      %v784 = vadd.f32 0.0, %v783
      %785 = vmatmul.f32.gmra.mxu0 %v647
      %v786 = vpop.f32.mrf.mxu0
      %v787 = vadd.f32 0.0, %v786
      %788 = vmatmul.f32.gmra.mxu0 %v650
      %v789 = vpop.f32.mrf.mxu0
      %v790 = vadd.f32 0.0, %v789
      %791 = vmatmul.f32.gmra.mxu0 %v653
      %v792 = vpop.f32.mrf.mxu0
      %v793 = vadd.f32 0.0, %v792
      %794 = vmatmul.f32.gmra.mxu0 %v656
      %v795 = vpop.f32.mrf.mxu0
      %v796 = vadd.f32 0.0, %v795
      %797 = vmatmul.f32.gmra.mxu0 %v659
      %v798 = vpop.f32.mrf.mxu0
      %v799 = vadd.f32 0.0, %v798
      %800 = vmatmul.f32.gmra.mxu0 %v662
      %v801 = vpop.f32.mrf.mxu0
      %v802 = vadd.f32 0.0, %v801
      %803 = vmatmul.f32.gmra.mxu0 %v665
      %v804 = vpop.f32.mrf.mxu0
      %v805 = vadd.f32 0.0, %v804
      %806 = vmatmul.f32.gmra.mxu0 %v668
      %v807 = vpop.f32.mrf.mxu0
      %v808 = vadd.f32 0.0, %v807
      %809 = vmatmul.f32.gmra.mxu0 %v671
      %v810 = vpop.f32.mrf.mxu0
      %v811 = vadd.f32 0.0, %v810
      %812 = vmatmul.f32.gmra.mxu0 %v674
      %v813 = vpop.f32.mrf.mxu0
      %v814 = vadd.f32 0.0, %v813
      %815 = vmatmul.f32.gmra.mxu0 %v677
      %v816 = vpop.f32.mrf.mxu0
      %v817 = vadd.f32 0.0, %v816
      %818 = vmatmul.f32.gmra.mxu0 %v680
      %v819 = vpop.f32.mrf.mxu0
      %v820 = vadd.f32 0.0, %v819
      %821 = vmatmul.f32.gmra.mxu0 %v683
      %v822 = vpop.f32.mrf.mxu0
      %v823 = vadd.f32 0.0, %v822
      %824 = vmatmul.f32.gmra.mxu0 %v686
      %v825 = vpop.f32.mrf.mxu0
      %v826 = vadd.f32 0.0, %v825
      %827 = vmatmul.f32.gmra.mxu0 %v689
      %v828 = vpop.f32.mrf.mxu0
      %v829 = vadd.f32 0.0, %v828
      %830 = vmatmul.f32.gmra.mxu0 %v692
      %v831 = vpop.f32.mrf.mxu0
      %v832 = vadd.f32 0.0, %v831
      %833 = vmatmul.f32.gmra.mxu0 %v695
      %v834 = vpop.f32.mrf.mxu0
      %v835 = vadd.f32 0.0, %v834
      %836 = vmatmul.f32.gmra.mxu0 %v698
      %v837 = vpop.f32.mrf.mxu0
      %v838 = vadd.f32 0.0, %v837
      %839 = vmatmul.f32.gmra.mxu0 %v701
      %v840 = vpop.f32.mrf.mxu0
      %v841 = vadd.f32 0.0, %v840
      %842 = vmatmul.f32.gmra.mxu0 %v704
      %v843 = vpop.f32.mrf.mxu0
      %v844 = vadd.f32 0.0, %v843
      %845 = vmatmul.f32.gmra.mxu0 %v707
      %v846 = vpop.f32.mrf.mxu0
      %v847 = vadd.f32 0.0, %v846
      %848 = vmatmul.f32.gmra.mxu0 %v710
      %v849 = vpop.f32.mrf.mxu0
      %v850 = vadd.f32 0.0, %v849
      %851 = vmatmul.f32.gmra.mxu0 %v713
      %v852 = vpop.f32.mrf.mxu0
      %v853 = vadd.f32 0.0, %v852
      %854 = vmatmul.f32.gmra.mxu0 %v716
      %v855 = vpop.f32.mrf.mxu0
      %v856 = vadd.f32 0.0, %v855
      %857 = vdwg.mxu0
      %v858 = vadd.f32 %v516, %v739
      %v859 = vadd.f32 %v517, %v742
      %v860 = vadd.f32 %v518, %v745
      %v861 = vadd.f32 %v519, %v748
      %v862 = vadd.f32 %v520, %v751
      %v863 = vadd.f32 %v521, %v754
      %v864 = vadd.f32 %v522, %v757
      %v865 = vadd.f32 %v523, %v760
      %v866 = vadd.f32 %v524, %v763
      %v867 = vadd.f32 %v525, %v766
      %v868 = vadd.f32 %v526, %v769
      %v869 = vadd.f32 %v527, %v772
      %v870 = vadd.f32 %v528, %v775
      %v871 = vadd.f32 %v529, %v778
      %v872 = vadd.f32 %v530, %v781
      %v873 = vadd.f32 %v531, %v784
      %v874 = vadd.f32 %v532, %v787
      %v875 = vadd.f32 %v533, %v790
      %v876 = vadd.f32 %v534, %v793
      %v877 = vadd.f32 %v535, %v796
      %v878 = vadd.f32 %v536, %v799
      %v879 = vadd.f32 %v537, %v802
      %v880 = vadd.f32 %v538, %v805
      %v881 = vadd.f32 %v539, %v808
      %v882 = vadd.f32 %v540, %v811
      %v883 = vadd.f32 %v541, %v814
      %v884 = vadd.f32 %v542, %v817
      %v885 = vadd.f32 %v543, %v820
      %v886 = vadd.f32 %v544, %v823
      %v887 = vadd.f32 %v545, %v826
      %v888 = vadd.f32 %v546, %v829
      %v889 = vadd.f32 %v547, %v832
      %v890 = vadd.f32 %v548, %v835
      %v891 = vadd.f32 %v549, %v838
      %v892 = vadd.f32 %v550, %v841
      %v893 = vadd.f32 %v551, %v844
      %v894 = vadd.f32 %v552, %v847
      %v895 = vadd.f32 %v553, %v850
      %v896 = vadd.f32 %v554, %v853
      %v897 = vadd.f32 %v555, %v856
      %v898 = vld [vmem:[%s197 + $0x15] sm:$0xff]
      %v899 = vld [vmem:[%s197 + $0x1d] sm:$0xff]
      %v900 = vld [vmem:[%s197 + $0x25] sm:$0xff]
      %v901 = vld [vmem:[%s197 + $0x2d] sm:$0xff]
      %v902 = vld [vmem:[%s197 + $0x35] sm:$0xff]
      %v903 = vld [vmem:[%s197 + $0x3d] sm:$0xff]
      %v904 = vld [vmem:[%s197 + $0x45] sm:$0xff]
      %v905 = vld [vmem:[%s197 + $0x4d] sm:$0xff]
      %v906 = vld [vmem:[%s197 + $0x55] sm:$0xff]
      %v907 = vld [vmem:[%s197 + $0x5d] sm:$0xff]
      %v908 = vld [vmem:[%s197 + $0x65] sm:$0xff]
      %v909 = vld [vmem:[%s197 + $0x6d] sm:$0xff]
      %v910 = vld [vmem:[%s197 + $0x75] sm:$0xff]
      %v911 = vld [vmem:[%s197 + $0x7d] sm:$0xff]
      %v912 = vld [vmem:[%s197 + $0x85] sm:$0xff]
      %v913 = vld [vmem:[%s197 + $0x8d] sm:$0xff]
      %v914 = vld [vmem:[%s197 + $0x95] sm:$0xff]
      %v915 = vld [vmem:[%s197 + $0x9d] sm:$0xff]
      %v916 = vld [vmem:[%s197 + $0xa5] sm:$0xff]
      %v917 = vld [vmem:[%s197 + $0xad] sm:$0xff]
      %v918 = vld [vmem:[%s197 + $0xb5] sm:$0xff]
      %v919 = vld [vmem:[%s197 + $0xbd] sm:$0xff]
      %v920 = vld [vmem:[%s197 + $0xc5] sm:$0xff]
      %v921 = vld [vmem:[%s197 + $0xcd] sm:$0xff]
      %v922 = vld [vmem:[%s197 + $0xd5] sm:$0xff]
      %v923 = vld [vmem:[%s197 + $0xdd] sm:$0xff]
      %v924 = vld [vmem:[%s197 + $0xe5] sm:$0xff]
      %v925 = vld [vmem:[%s197 + $0xed] sm:$0xff]
      %v926 = vld [vmem:[%s197 + $0xf5] sm:$0xff]
      %v927 = vld [vmem:[%s197 + $0xfd] sm:$0xff]
      %v928 = vld [vmem:[%s197 + $0x105] sm:$0xff]
      %v929 = vld [vmem:[%s197 + $0x10d] sm:$0xff]
      %v930 = vld [vmem:[%s197 + $0x115] sm:$0xff]
      %v931 = vld [vmem:[%s197 + $0x11d] sm:$0xff]
      %v932 = vld [vmem:[%s197 + $0x125] sm:$0xff]
      %v933 = vld [vmem:[%s197 + $0x12d] sm:$0xff]
      %v934 = vld [vmem:[%s197 + $0x135] sm:$0xff]
      %v935 = vld [vmem:[%s197 + $0x13d] sm:$0xff]
      %v936 = vld [vmem:[%s197 + $0x145] sm:$0xff]
      %v937 = vld [vmem:[%s197 + $0x14d] sm:$0xff]
      %s938 = scalar_lea.vmem %s1, 8
      %v939 = vld [vmem:[%s938] sm:$0xf]
      %v941 = vsel %vm254, %v898, 0
      %v944 = vsel %vm254, %v899, 0
      %v947 = vsel %vm254, %v900, 0
      %v950 = vsel %vm254, %v901, 0
      %v953 = vsel %vm254, %v902, 0
      %v956 = vsel %vm254, %v903, 0
      %v959 = vsel %vm254, %v904, 0
      %v962 = vsel %vm254, %v905, 0
      %v965 = vsel %vm254, %v906, 0
      %v968 = vsel %vm254, %v907, 0
      %v971 = vsel %vm254, %v908, 0
      %v974 = vsel %vm254, %v909, 0
      %v977 = vsel %vm254, %v910, 0
      %v980 = vsel %vm254, %v911, 0
      %v983 = vsel %vm254, %v912, 0
      %v986 = vsel %vm254, %v913, 0
      %v989 = vsel %vm254, %v914, 0
      %v992 = vsel %vm254, %v915, 0
      %v995 = vsel %vm254, %v916, 0
      %v998 = vsel %vm254, %v917, 0
      %v1001 = vsel %vm254, %v918, 0
      %v1004 = vsel %vm254, %v919, 0
      %v1007 = vsel %vm254, %v920, 0
      %v1010 = vsel %vm254, %v921, 0
      %v1013 = vsel %vm254, %v922, 0
      %v1016 = vsel %vm254, %v923, 0
      %v1019 = vsel %vm254, %v924, 0
      %v1022 = vsel %vm254, %v925, 0
      %v1025 = vsel %vm254, %v926, 0
      %v1028 = vsel %vm254, %v927, 0
      %v1031 = vsel %vm254, %v928, 0
      %v1034 = vsel %vm254, %v929, 0
      %v1037 = vsel %vm254, %v930, 0
      %v1040 = vsel %vm254, %v931, 0
      %v1043 = vsel %vm254, %v932, 0
      %v1046 = vsel %vm254, %v933, 0
      %v1049 = vsel %vm254, %v934, 0
      %v1052 = vsel %vm254, %v935, 0
      %v1055 = vsel %vm254, %v936, 0
      %v1058 = vsel %vm254, %v937, 0
      %v1061 = vsel %vm375, %v939, 0
      %1063 = vmatpush.msra.mxu0 0.0
      %1064 = vmatpush.msra.mxu0 0.0
      %1065 = vmatpush.msra.mxu0 0.0
      %1066 = vmatpush.msra.mxu0 0.0
      %1067 = vmatpush.msra.mxu0 0.0
      %1068 = vmatpush.msra.mxu0 0.0
      %1069 = vmatpush.msra.mxu0 0.0
      %1070 = vmatpush.msra.mxu0 0.0
      %1071 = vmatpush.msra.mxu0 0.0
      %1072 = vmatpush.msra.mxu0 0.0
      %1073 = vmatpush.msra.mxu0 0.0
      %1074 = vmatpush.msra.mxu0 0.0
      %1075 = vmatpush.msra.mxu0 0.0
      %1076 = vmatpush.msra.mxu0 0.0
      %1077 = vmatpush.msra.mxu0 0.0
      %1078 = vmatpush.msra.mxu0 %v1061
      %1079 = vmatmul.f32.gmra.mxu0 %v941
      %v1080 = vpop.f32.mrf.mxu0
      %v1081 = vadd.f32 0.0, %v1080
      %1082 = vmatmul.f32.gmra.mxu0 %v944
      %v1083 = vpop.f32.mrf.mxu0
      %v1084 = vadd.f32 0.0, %v1083
      %1085 = vmatmul.f32.gmra.mxu0 %v947
      %v1086 = vpop.f32.mrf.mxu0
      %v1087 = vadd.f32 0.0, %v1086
      %1088 = vmatmul.f32.gmra.mxu0 %v950
      %v1089 = vpop.f32.mrf.mxu0
      %v1090 = vadd.f32 0.0, %v1089
      %1091 = vmatmul.f32.gmra.mxu0 %v953
      %v1092 = vpop.f32.mrf.mxu0
      %v1093 = vadd.f32 0.0, %v1092
      %1094 = vmatmul.f32.gmra.mxu0 %v956
      %v1095 = vpop.f32.mrf.mxu0
      %v1096 = vadd.f32 0.0, %v1095
      %1097 = vmatmul.f32.gmra.mxu0 %v959
      %v1098 = vpop.f32.mrf.mxu0
      %v1099 = vadd.f32 0.0, %v1098
      %1100 = vmatmul.f32.gmra.mxu0 %v962
      %v1101 = vpop.f32.mrf.mxu0
      %v1102 = vadd.f32 0.0, %v1101
      %1103 = vmatmul.f32.gmra.mxu0 %v965
      %v1104 = vpop.f32.mrf.mxu0
      %v1105 = vadd.f32 0.0, %v1104
      %1106 = vmatmul.f32.gmra.mxu0 %v968
      %v1107 = vpop.f32.mrf.mxu0
      %v1108 = vadd.f32 0.0, %v1107
      %1109 = vmatmul.f32.gmra.mxu0 %v971
      %v1110 = vpop.f32.mrf.mxu0
      %v1111 = vadd.f32 0.0, %v1110
      %1112 = vmatmul.f32.gmra.mxu0 %v974
      %v1113 = vpop.f32.mrf.mxu0
      %v1114 = vadd.f32 0.0, %v1113
      %1115 = vmatmul.f32.gmra.mxu0 %v977
      %v1116 = vpop.f32.mrf.mxu0
      %v1117 = vadd.f32 0.0, %v1116
      %1118 = vmatmul.f32.gmra.mxu0 %v980
      %v1119 = vpop.f32.mrf.mxu0
      %v1120 = vadd.f32 0.0, %v1119
      %1121 = vmatmul.f32.gmra.mxu0 %v983
      %v1122 = vpop.f32.mrf.mxu0
      %v1123 = vadd.f32 0.0, %v1122
      %1124 = vmatmul.f32.gmra.mxu0 %v986
      %v1125 = vpop.f32.mrf.mxu0
      %v1126 = vadd.f32 0.0, %v1125
      %1127 = vmatmul.f32.gmra.mxu0 %v989
      %v1128 = vpop.f32.mrf.mxu0
      %v1129 = vadd.f32 0.0, %v1128
      %1130 = vmatmul.f32.gmra.mxu0 %v992
      %v1131 = vpop.f32.mrf.mxu0
      %v1132 = vadd.f32 0.0, %v1131
      %1133 = vmatmul.f32.gmra.mxu0 %v995
      %v1134 = vpop.f32.mrf.mxu0
      %v1135 = vadd.f32 0.0, %v1134
      %1136 = vmatmul.f32.gmra.mxu0 %v998
      %v1137 = vpop.f32.mrf.mxu0
      %v1138 = vadd.f32 0.0, %v1137
      %1139 = vmatmul.f32.gmra.mxu0 %v1001
      %v1140 = vpop.f32.mrf.mxu0
      %v1141 = vadd.f32 0.0, %v1140
      %1142 = vmatmul.f32.gmra.mxu0 %v1004
      %v1143 = vpop.f32.mrf.mxu0
      %v1144 = vadd.f32 0.0, %v1143
      %1145 = vmatmul.f32.gmra.mxu0 %v1007
      %v1146 = vpop.f32.mrf.mxu0
      %v1147 = vadd.f32 0.0, %v1146
      %1148 = vmatmul.f32.gmra.mxu0 %v1010
      %v1149 = vpop.f32.mrf.mxu0
      %v1150 = vadd.f32 0.0, %v1149
      %1151 = vmatmul.f32.gmra.mxu0 %v1013
      %v1152 = vpop.f32.mrf.mxu0
      %v1153 = vadd.f32 0.0, %v1152
      %1154 = vmatmul.f32.gmra.mxu0 %v1016
      %v1155 = vpop.f32.mrf.mxu0
      %v1156 = vadd.f32 0.0, %v1155
      %1157 = vmatmul.f32.gmra.mxu0 %v1019
      %v1158 = vpop.f32.mrf.mxu0
      %v1159 = vadd.f32 0.0, %v1158
      %1160 = vmatmul.f32.gmra.mxu0 %v1022
      %v1161 = vpop.f32.mrf.mxu0
      %v1162 = vadd.f32 0.0, %v1161
      %1163 = vmatmul.f32.gmra.mxu0 %v1025
      %v1164 = vpop.f32.mrf.mxu0
      %v1165 = vadd.f32 0.0, %v1164
      %1166 = vmatmul.f32.gmra.mxu0 %v1028
      %v1167 = vpop.f32.mrf.mxu0
      %v1168 = vadd.f32 0.0, %v1167
      %1169 = vmatmul.f32.gmra.mxu0 %v1031
      %v1170 = vpop.f32.mrf.mxu0
      %v1171 = vadd.f32 0.0, %v1170
      %1172 = vmatmul.f32.gmra.mxu0 %v1034
      %v1173 = vpop.f32.mrf.mxu0
      %v1174 = vadd.f32 0.0, %v1173
      %1175 = vmatmul.f32.gmra.mxu0 %v1037
      %v1176 = vpop.f32.mrf.mxu0
      %v1177 = vadd.f32 0.0, %v1176
      %1178 = vmatmul.f32.gmra.mxu0 %v1040
      %v1179 = vpop.f32.mrf.mxu0
      %v1180 = vadd.f32 0.0, %v1179
      %1181 = vmatmul.f32.gmra.mxu0 %v1043
      %v1182 = vpop.f32.mrf.mxu0
      %v1183 = vadd.f32 0.0, %v1182
      %1184 = vmatmul.f32.gmra.mxu0 %v1046
      %v1185 = vpop.f32.mrf.mxu0
      %v1186 = vadd.f32 0.0, %v1185
      %1187 = vmatmul.f32.gmra.mxu0 %v1049
      %v1188 = vpop.f32.mrf.mxu0
      %v1189 = vadd.f32 0.0, %v1188
      %1190 = vmatmul.f32.gmra.mxu0 %v1052
      %v1191 = vpop.f32.mrf.mxu0
      %v1192 = vadd.f32 0.0, %v1191
      %1193 = vmatmul.f32.gmra.mxu0 %v1055
      %v1194 = vpop.f32.mrf.mxu0
      %v1195 = vadd.f32 0.0, %v1194
      %1196 = vmatmul.f32.gmra.mxu0 %v1058
      %v1197 = vpop.f32.mrf.mxu0
      %v1198 = vadd.f32 0.0, %v1197
      %1199 = vdwg.mxu0
      %v1200 = vadd.f32 %v858, %v1081
      %v1201 = vadd.f32 %v859, %v1084
      %v1202 = vadd.f32 %v860, %v1087
      %v1203 = vadd.f32 %v861, %v1090
      %v1204 = vadd.f32 %v862, %v1093
      %v1205 = vadd.f32 %v863, %v1096
      %v1206 = vadd.f32 %v864, %v1099
      %v1207 = vadd.f32 %v865, %v1102
      %v1208 = vadd.f32 %v866, %v1105
      %v1209 = vadd.f32 %v867, %v1108
      %v1210 = vadd.f32 %v868, %v1111
      %v1211 = vadd.f32 %v869, %v1114
      %v1212 = vadd.f32 %v870, %v1117
      %v1213 = vadd.f32 %v871, %v1120
      %v1214 = vadd.f32 %v872, %v1123
      %v1215 = vadd.f32 %v873, %v1126
      %v1216 = vadd.f32 %v874, %v1129
      %v1217 = vadd.f32 %v875, %v1132
      %v1218 = vadd.f32 %v876, %v1135
      %v1219 = vadd.f32 %v877, %v1138
      %v1220 = vadd.f32 %v878, %v1141
      %v1221 = vadd.f32 %v879, %v1144
      %v1222 = vadd.f32 %v880, %v1147
      %v1223 = vadd.f32 %v881, %v1150
      %v1224 = vadd.f32 %v882, %v1153
      %v1225 = vadd.f32 %v883, %v1156
      %v1226 = vadd.f32 %v884, %v1159
      %v1227 = vadd.f32 %v885, %v1162
      %v1228 = vadd.f32 %v886, %v1165
      %v1229 = vadd.f32 %v887, %v1168
      %v1230 = vadd.f32 %v888, %v1171
      %v1231 = vadd.f32 %v889, %v1174
      %v1232 = vadd.f32 %v890, %v1177
      %v1233 = vadd.f32 %v891, %v1180
      %v1234 = vadd.f32 %v892, %v1183
      %v1235 = vadd.f32 %v893, %v1186
      %v1236 = vadd.f32 %v894, %v1189
      %v1237 = vadd.f32 %v895, %v1192
      %v1238 = vadd.f32 %v896, %v1195
      %v1239 = vadd.f32 %v897, %v1198
      %v1240 = vld [vmem:[%s197 + $0x27] sm:$0xff]
      %v1241 = vld [vmem:[%s197 + $0x2f] sm:$0xff]
      %v1242 = vld [vmem:[%s197 + $0x37] sm:$0xff]
      %v1243 = vld [vmem:[%s197 + $0x3f] sm:$0xff]
      %v1244 = vld [vmem:[%s197 + $0x47] sm:$0xff]
      %v1245 = vld [vmem:[%s197 + $0x4f] sm:$0xff]
      %v1246 = vld [vmem:[%s197 + $0x57] sm:$0xff]
      %v1247 = vld [vmem:[%s197 + $0x5f] sm:$0xff]
      %v1248 = vld [vmem:[%s197 + $0x67] sm:$0xff]
      %v1249 = vld [vmem:[%s197 + $0x6f] sm:$0xff]
      %v1250 = vld [vmem:[%s197 + $0x77] sm:$0xff]
      %v1251 = vld [vmem:[%s197 + $0x7f] sm:$0xff]
      %v1252 = vld [vmem:[%s197 + $0x87] sm:$0xff]
      %v1253 = vld [vmem:[%s197 + $0x8f] sm:$0xff]
      %v1254 = vld [vmem:[%s197 + $0x97] sm:$0xff]
      %v1255 = vld [vmem:[%s197 + $0x9f] sm:$0xff]
      %v1256 = vld [vmem:[%s197 + $0xa7] sm:$0xff]
      %v1257 = vld [vmem:[%s197 + $0xaf] sm:$0xff]
      %v1258 = vld [vmem:[%s197 + $0xb7] sm:$0xff]
      %v1259 = vld [vmem:[%s197 + $0xbf] sm:$0xff]
      %v1260 = vld [vmem:[%s197 + $0xc7] sm:$0xff]
      %v1261 = vld [vmem:[%s197 + $0xcf] sm:$0xff]
      %v1262 = vld [vmem:[%s197 + $0xd7] sm:$0xff]
      %v1263 = vld [vmem:[%s197 + $0xdf] sm:$0xff]
      %v1264 = vld [vmem:[%s197 + $0xe7] sm:$0xff]
      %v1265 = vld [vmem:[%s197 + $0xef] sm:$0xff]
      %v1266 = vld [vmem:[%s197 + $0xf7] sm:$0xff]
      %v1267 = vld [vmem:[%s197 + $0xff] sm:$0xff]
      %v1268 = vld [vmem:[%s197 + $0x107] sm:$0xff]
      %v1269 = vld [vmem:[%s197 + $0x10f] sm:$0xff]
      %v1270 = vld [vmem:[%s197 + $0x117] sm:$0xff]
      %v1271 = vld [vmem:[%s197 + $0x11f] sm:$0xff]
      %v1272 = vld [vmem:[%s197 + $0x127] sm:$0xff]
      %v1273 = vld [vmem:[%s197 + $0x12f] sm:$0xff]
      %v1274 = vld [vmem:[%s197 + $0x137] sm:$0xff]
      %v1275 = vld [vmem:[%s197 + $0x13f] sm:$0xff]
      %v1276 = vld [vmem:[%s197 + $0x147] sm:$0xff]
      %v1277 = vld [vmem:[%s197 + $0x14f] sm:$0xff]
      %v1278 = vld [vmem:[%s197 + $0x157] sm:$0xff]
      %v1279 = vld [vmem:[%s197 + $0x15f] sm:$0xff]
      %s1280 = scalar_lea.vmem %s1, 12
      %v1281 = vld [vmem:[%s1280] sm:$0xf]
      %v1283 = vsel %vm254, %v1240, 0
      %v1286 = vsel %vm254, %v1241, 0
      %v1289 = vsel %vm254, %v1242, 0
      %v1292 = vsel %vm254, %v1243, 0
      %v1295 = vsel %vm254, %v1244, 0
      %v1298 = vsel %vm254, %v1245, 0
      %v1301 = vsel %vm254, %v1246, 0
      %v1304 = vsel %vm254, %v1247, 0
      %v1307 = vsel %vm254, %v1248, 0
      %v1310 = vsel %vm254, %v1249, 0
      %v1313 = vsel %vm254, %v1250, 0
      %v1316 = vsel %vm254, %v1251, 0
      %v1319 = vsel %vm254, %v1252, 0
      %v1322 = vsel %vm254, %v1253, 0
      %v1325 = vsel %vm254, %v1254, 0
      %v1328 = vsel %vm254, %v1255, 0
      %v1331 = vsel %vm254, %v1256, 0
      %v1334 = vsel %vm254, %v1257, 0
      %v1337 = vsel %vm254, %v1258, 0
      %v1340 = vsel %vm254, %v1259, 0
      %v1343 = vsel %vm254, %v1260, 0
      %v1346 = vsel %vm254, %v1261, 0
      %v1349 = vsel %vm254, %v1262, 0
      %v1352 = vsel %vm254, %v1263, 0
      %v1355 = vsel %vm254, %v1264, 0
      %v1358 = vsel %vm254, %v1265, 0
      %v1361 = vsel %vm254, %v1266, 0
      %v1364 = vsel %vm254, %v1267, 0
      %v1367 = vsel %vm254, %v1268, 0
      %v1370 = vsel %vm254, %v1269, 0
      %v1373 = vsel %vm254, %v1270, 0
      %v1376 = vsel %vm254, %v1271, 0
      %v1379 = vsel %vm254, %v1272, 0
      %v1382 = vsel %vm254, %v1273, 0
      %v1385 = vsel %vm254, %v1274, 0
      %v1388 = vsel %vm254, %v1275, 0
      %v1391 = vsel %vm254, %v1276, 0
      %v1394 = vsel %vm254, %v1277, 0
      %v1397 = vsel %vm254, %v1278, 0
      %v1400 = vsel %vm254, %v1279, 0
      %v1403 = vsel %vm375, %v1281, 0
      %1405 = vmatpush.msra.mxu0 0.0
      %1406 = vmatpush.msra.mxu0 0.0
      %1407 = vmatpush.msra.mxu0 0.0
      %1408 = vmatpush.msra.mxu0 0.0
      %1409 = vmatpush.msra.mxu0 0.0
      %1410 = vmatpush.msra.mxu0 0.0
      %1411 = vmatpush.msra.mxu0 0.0
      %1412 = vmatpush.msra.mxu0 0.0
      %1413 = vmatpush.msra.mxu0 0.0
      %1414 = vmatpush.msra.mxu0 0.0
      %1415 = vmatpush.msra.mxu0 0.0
      %1416 = vmatpush.msra.mxu0 0.0
      %1417 = vmatpush.msra.mxu0 0.0
      %1418 = vmatpush.msra.mxu0 0.0
      %1419 = vmatpush.msra.mxu0 0.0
      %1420 = vmatpush.msra.mxu0 %v1403
      %1421 = vmatmul.f32.gmra.mxu0 %v1283
      %v1422 = vpop.f32.mrf.mxu0
      %v1423 = vadd.f32 0.0, %v1422
      %1424 = vmatmul.f32.gmra.mxu0 %v1286
      %v1425 = vpop.f32.mrf.mxu0
      %v1426 = vadd.f32 0.0, %v1425
      %1427 = vmatmul.f32.gmra.mxu0 %v1289
      %v1428 = vpop.f32.mrf.mxu0
      %v1429 = vadd.f32 0.0, %v1428
      %1430 = vmatmul.f32.gmra.mxu0 %v1292
      %v1431 = vpop.f32.mrf.mxu0
      %v1432 = vadd.f32 0.0, %v1431
      %1433 = vmatmul.f32.gmra.mxu0 %v1295
      %v1434 = vpop.f32.mrf.mxu0
      %v1435 = vadd.f32 0.0, %v1434
      %1436 = vmatmul.f32.gmra.mxu0 %v1298
      %v1437 = vpop.f32.mrf.mxu0
      %v1438 = vadd.f32 0.0, %v1437
      %1439 = vmatmul.f32.gmra.mxu0 %v1301
      %v1440 = vpop.f32.mrf.mxu0
      %v1441 = vadd.f32 0.0, %v1440
      %1442 = vmatmul.f32.gmra.mxu0 %v1304
      %v1443 = vpop.f32.mrf.mxu0
      %v1444 = vadd.f32 0.0, %v1443
      %1445 = vmatmul.f32.gmra.mxu0 %v1307
      %v1446 = vpop.f32.mrf.mxu0
      %v1447 = vadd.f32 0.0, %v1446
      %1448 = vmatmul.f32.gmra.mxu0 %v1310
      %v1449 = vpop.f32.mrf.mxu0
      %v1450 = vadd.f32 0.0, %v1449
      %1451 = vmatmul.f32.gmra.mxu0 %v1313
      %v1452 = vpop.f32.mrf.mxu0
      %v1453 = vadd.f32 0.0, %v1452
      %1454 = vmatmul.f32.gmra.mxu0 %v1316
      %v1455 = vpop.f32.mrf.mxu0
      %v1456 = vadd.f32 0.0, %v1455
      %1457 = vmatmul.f32.gmra.mxu0 %v1319
      %v1458 = vpop.f32.mrf.mxu0
      %v1459 = vadd.f32 0.0, %v1458
      %1460 = vmatmul.f32.gmra.mxu0 %v1322
      %v1461 = vpop.f32.mrf.mxu0
      %v1462 = vadd.f32 0.0, %v1461
      %1463 = vmatmul.f32.gmra.mxu0 %v1325
      %v1464 = vpop.f32.mrf.mxu0
      %v1465 = vadd.f32 0.0, %v1464
      %1466 = vmatmul.f32.gmra.mxu0 %v1328
      %v1467 = vpop.f32.mrf.mxu0
      %v1468 = vadd.f32 0.0, %v1467
      %1469 = vmatmul.f32.gmra.mxu0 %v1331
      %v1470 = vpop.f32.mrf.mxu0
      %v1471 = vadd.f32 0.0, %v1470
      %1472 = vmatmul.f32.gmra.mxu0 %v1334
      %v1473 = vpop.f32.mrf.mxu0
      %v1474 = vadd.f32 0.0, %v1473
      %1475 = vmatmul.f32.gmra.mxu0 %v1337
      %v1476 = vpop.f32.mrf.mxu0
      %v1477 = vadd.f32 0.0, %v1476
      %1478 = vmatmul.f32.gmra.mxu0 %v1340
      %v1479 = vpop.f32.mrf.mxu0
      %v1480 = vadd.f32 0.0, %v1479
      %1481 = vmatmul.f32.gmra.mxu0 %v1343
      %v1482 = vpop.f32.mrf.mxu0
      %v1483 = vadd.f32 0.0, %v1482
      %1484 = vmatmul.f32.gmra.mxu0 %v1346
      %v1485 = vpop.f32.mrf.mxu0
      %v1486 = vadd.f32 0.0, %v1485
      %1487 = vmatmul.f32.gmra.mxu0 %v1349
      %v1488 = vpop.f32.mrf.mxu0
      %v1489 = vadd.f32 0.0, %v1488
      %1490 = vmatmul.f32.gmra.mxu0 %v1352
      %v1491 = vpop.f32.mrf.mxu0
      %v1492 = vadd.f32 0.0, %v1491
      %1493 = vmatmul.f32.gmra.mxu0 %v1355
      %v1494 = vpop.f32.mrf.mxu0
      %v1495 = vadd.f32 0.0, %v1494
      %1496 = vmatmul.f32.gmra.mxu0 %v1358
      %v1497 = vpop.f32.mrf.mxu0
      %v1498 = vadd.f32 0.0, %v1497
      %1499 = vmatmul.f32.gmra.mxu0 %v1361
      %v1500 = vpop.f32.mrf.mxu0
      %v1501 = vadd.f32 0.0, %v1500
      %1502 = vmatmul.f32.gmra.mxu0 %v1364
      %v1503 = vpop.f32.mrf.mxu0
      %v1504 = vadd.f32 0.0, %v1503
      %1505 = vmatmul.f32.gmra.mxu0 %v1367
      %v1506 = vpop.f32.mrf.mxu0
      %v1507 = vadd.f32 0.0, %v1506
      %1508 = vmatmul.f32.gmra.mxu0 %v1370
      %v1509 = vpop.f32.mrf.mxu0
      %v1510 = vadd.f32 0.0, %v1509
      %1511 = vmatmul.f32.gmra.mxu0 %v1373
      %v1512 = vpop.f32.mrf.mxu0
      %v1513 = vadd.f32 0.0, %v1512
      %1514 = vmatmul.f32.gmra.mxu0 %v1376
      %v1515 = vpop.f32.mrf.mxu0
      %v1516 = vadd.f32 0.0, %v1515
      %1517 = vmatmul.f32.gmra.mxu0 %v1379
      %v1518 = vpop.f32.mrf.mxu0
      %v1519 = vadd.f32 0.0, %v1518
      %1520 = vmatmul.f32.gmra.mxu0 %v1382
      %v1521 = vpop.f32.mrf.mxu0
      %v1522 = vadd.f32 0.0, %v1521
      %1523 = vmatmul.f32.gmra.mxu0 %v1385
      %v1524 = vpop.f32.mrf.mxu0
      %v1525 = vadd.f32 0.0, %v1524
      %1526 = vmatmul.f32.gmra.mxu0 %v1388
      %v1527 = vpop.f32.mrf.mxu0
      %v1528 = vadd.f32 0.0, %v1527
      %1529 = vmatmul.f32.gmra.mxu0 %v1391
      %v1530 = vpop.f32.mrf.mxu0
      %v1531 = vadd.f32 0.0, %v1530
      %1532 = vmatmul.f32.gmra.mxu0 %v1394
      %v1533 = vpop.f32.mrf.mxu0
      %v1534 = vadd.f32 0.0, %v1533
      %1535 = vmatmul.f32.gmra.mxu0 %v1397
      %v1536 = vpop.f32.mrf.mxu0
      %v1537 = vadd.f32 0.0, %v1536
      %1538 = vmatmul.f32.gmra.mxu0 %v1400
      %v1539 = vpop.f32.mrf.mxu0
      %v1540 = vadd.f32 0.0, %v1539
      %1541 = vdwg.mxu0
      %v1542 = vadd.f32 %v1200, %v1423
      %v1543 = vadd.f32 %v1201, %v1426
      %v1544 = vadd.f32 %v1202, %v1429
      %v1545 = vadd.f32 %v1203, %v1432
      %v1546 = vadd.f32 %v1204, %v1435
      %v1547 = vadd.f32 %v1205, %v1438
      %v1548 = vadd.f32 %v1206, %v1441
      %v1549 = vadd.f32 %v1207, %v1444
      %v1550 = vadd.f32 %v1208, %v1447
      %v1551 = vadd.f32 %v1209, %v1450
      %v1552 = vadd.f32 %v1210, %v1453
      %v1553 = vadd.f32 %v1211, %v1456
      %v1554 = vadd.f32 %v1212, %v1459
      %v1555 = vadd.f32 %v1213, %v1462
      %v1556 = vadd.f32 %v1214, %v1465
      %v1557 = vadd.f32 %v1215, %v1468
      %v1558 = vadd.f32 %v1216, %v1471
      %v1559 = vadd.f32 %v1217, %v1474
      %v1560 = vadd.f32 %v1218, %v1477
      %v1561 = vadd.f32 %v1219, %v1480
      %v1562 = vadd.f32 %v1220, %v1483
      %v1563 = vadd.f32 %v1221, %v1486
      %v1564 = vadd.f32 %v1222, %v1489
      %v1565 = vadd.f32 %v1223, %v1492
      %v1566 = vadd.f32 %v1224, %v1495
      %v1567 = vadd.f32 %v1225, %v1498
      %v1568 = vadd.f32 %v1226, %v1501
      %v1569 = vadd.f32 %v1227, %v1504
      %v1570 = vadd.f32 %v1228, %v1507
      %v1571 = vadd.f32 %v1229, %v1510
      %v1572 = vadd.f32 %v1230, %v1513
      %v1573 = vadd.f32 %v1231, %v1516
      %v1574 = vadd.f32 %v1232, %v1519
      %v1575 = vadd.f32 %v1233, %v1522
      %v1576 = vadd.f32 %v1234, %v1525
      %v1577 = vadd.f32 %v1235, %v1528
      %v1578 = vadd.f32 %v1236, %v1531
      %v1579 = vadd.f32 %v1237, %v1534
      %v1580 = vadd.f32 %v1238, %v1537
      %v1581 = vadd.f32 %v1239, %v1540
      %v1582 = vld [vmem:[%s197 + $0x28] sm:$0xff]
      %v1583 = vld [vmem:[%s197 + $0x30] sm:$0xff]
      %v1584 = vld [vmem:[%s197 + $0x38] sm:$0xff]
      %v1585 = vld [vmem:[%s197 + $0x40] sm:$0xff]
      %v1586 = vld [vmem:[%s197 + $0x48] sm:$0xff]
      %v1587 = vld [vmem:[%s197 + $0x50] sm:$0xff]
      %v1588 = vld [vmem:[%s197 + $0x58] sm:$0xff]
      %v1589 = vld [vmem:[%s197 + $0x60] sm:$0xff]
      %v1590 = vld [vmem:[%s197 + $0x68] sm:$0xff]
      %v1591 = vld [vmem:[%s197 + $0x70] sm:$0xff]
      %v1592 = vld [vmem:[%s197 + $0x78] sm:$0xff]
      %v1593 = vld [vmem:[%s197 + $0x80] sm:$0xff]
      %v1594 = vld [vmem:[%s197 + $0x88] sm:$0xff]
      %v1595 = vld [vmem:[%s197 + $0x90] sm:$0xff]
      %v1596 = vld [vmem:[%s197 + $0x98] sm:$0xff]
      %v1597 = vld [vmem:[%s197 + $0xa0] sm:$0xff]
      %v1598 = vld [vmem:[%s197 + $0xa8] sm:$0xff]
      %v1599 = vld [vmem:[%s197 + $0xb0] sm:$0xff]
      %v1600 = vld [vmem:[%s197 + $0xb8] sm:$0xff]
      %v1601 = vld [vmem:[%s197 + $0xc0] sm:$0xff]
      %v1602 = vld [vmem:[%s197 + $0xc8] sm:$0xff]
      %v1603 = vld [vmem:[%s197 + $0xd0] sm:$0xff]
      %v1604 = vld [vmem:[%s197 + $0xd8] sm:$0xff]
      %v1605 = vld [vmem:[%s197 + $0xe0] sm:$0xff]
      %v1606 = vld [vmem:[%s197 + $0xe8] sm:$0xff]
      %v1607 = vld [vmem:[%s197 + $0xf0] sm:$0xff]
      %v1608 = vld [vmem:[%s197 + $0xf8] sm:$0xff]
      %v1609 = vld [vmem:[%s197 + $0x100] sm:$0xff]
      %v1610 = vld [vmem:[%s197 + $0x108] sm:$0xff]
      %v1611 = vld [vmem:[%s197 + $0x110] sm:$0xff]
      %v1612 = vld [vmem:[%s197 + $0x118] sm:$0xff]
      %v1613 = vld [vmem:[%s197 + $0x120] sm:$0xff]
      %v1614 = vld [vmem:[%s197 + $0x128] sm:$0xff]
      %v1615 = vld [vmem:[%s197 + $0x130] sm:$0xff]
      %v1616 = vld [vmem:[%s197 + $0x138] sm:$0xff]
      %v1617 = vld [vmem:[%s197 + $0x140] sm:$0xff]
      %v1618 = vld [vmem:[%s197 + $0x148] sm:$0xff]
      %v1619 = vld [vmem:[%s197 + $0x150] sm:$0xff]
      %v1620 = vld [vmem:[%s197 + $0x158] sm:$0xff]
      %v1621 = vld [vmem:[%s197 + $0x160] sm:$0xff]
      %s1622 = scalar_lea.vmem %s1, 16
      %v1623 = vld [vmem:[%s1622] sm:$0xf]
      %v1625 = vsel %vm254, %v1582, 0
      %v1628 = vsel %vm254, %v1583, 0
      %v1631 = vsel %vm254, %v1584, 0
      %v1634 = vsel %vm254, %v1585, 0
      %v1637 = vsel %vm254, %v1586, 0
      %v1640 = vsel %vm254, %v1587, 0
      %v1643 = vsel %vm254, %v1588, 0
      %v1646 = vsel %vm254, %v1589, 0
      %v1649 = vsel %vm254, %v1590, 0
      %v1652 = vsel %vm254, %v1591, 0
      %v1655 = vsel %vm254, %v1592, 0
      %v1658 = vsel %vm254, %v1593, 0
      %v1661 = vsel %vm254, %v1594, 0
      %v1664 = vsel %vm254, %v1595, 0
      %v1667 = vsel %vm254, %v1596, 0
      %v1670 = vsel %vm254, %v1597, 0
      %v1673 = vsel %vm254, %v1598, 0
      %v1676 = vsel %vm254, %v1599, 0
      %v1679 = vsel %vm254, %v1600, 0
      %v1682 = vsel %vm254, %v1601, 0
      %v1685 = vsel %vm254, %v1602, 0
      %v1688 = vsel %vm254, %v1603, 0
      %v1691 = vsel %vm254, %v1604, 0
      %v1694 = vsel %vm254, %v1605, 0
      %v1697 = vsel %vm254, %v1606, 0
      %v1700 = vsel %vm254, %v1607, 0
      %v1703 = vsel %vm254, %v1608, 0
      %v1706 = vsel %vm254, %v1609, 0
      %v1709 = vsel %vm254, %v1610, 0
      %v1712 = vsel %vm254, %v1611, 0
      %v1715 = vsel %vm254, %v1612, 0
      %v1718 = vsel %vm254, %v1613, 0
      %v1721 = vsel %vm254, %v1614, 0
      %v1724 = vsel %vm254, %v1615, 0
      %v1727 = vsel %vm254, %v1616, 0
      %v1730 = vsel %vm254, %v1617, 0
      %v1733 = vsel %vm254, %v1618, 0
      %v1736 = vsel %vm254, %v1619, 0
      %v1739 = vsel %vm254, %v1620, 0
      %v1742 = vsel %vm254, %v1621, 0
      %v1745 = vsel %vm375, %v1623, 0
      %1747 = vmatpush.msra.mxu0 0.0
      %1748 = vmatpush.msra.mxu0 0.0
      %1749 = vmatpush.msra.mxu0 0.0
      %1750 = vmatpush.msra.mxu0 0.0
      %1751 = vmatpush.msra.mxu0 0.0
      %1752 = vmatpush.msra.mxu0 0.0
      %1753 = vmatpush.msra.mxu0 0.0
      %1754 = vmatpush.msra.mxu0 0.0
      %1755 = vmatpush.msra.mxu0 0.0
      %1756 = vmatpush.msra.mxu0 0.0
      %1757 = vmatpush.msra.mxu0 0.0
      %1758 = vmatpush.msra.mxu0 0.0
      %1759 = vmatpush.msra.mxu0 0.0
      %1760 = vmatpush.msra.mxu0 0.0
      %1761 = vmatpush.msra.mxu0 0.0
      %1762 = vmatpush.msra.mxu0 %v1745
      %1763 = vmatmul.f32.gmra.mxu0 %v1625
      %v1764 = vpop.f32.mrf.mxu0
      %v1765 = vadd.f32 0.0, %v1764
      %1766 = vmatmul.f32.gmra.mxu0 %v1628
      %v1767 = vpop.f32.mrf.mxu0
      %v1768 = vadd.f32 0.0, %v1767
      %1769 = vmatmul.f32.gmra.mxu0 %v1631
      %v1770 = vpop.f32.mrf.mxu0
      %v1771 = vadd.f32 0.0, %v1770
      %1772 = vmatmul.f32.gmra.mxu0 %v1634
      %v1773 = vpop.f32.mrf.mxu0
      %v1774 = vadd.f32 0.0, %v1773
      %1775 = vmatmul.f32.gmra.mxu0 %v1637
      %v1776 = vpop.f32.mrf.mxu0
      %v1777 = vadd.f32 0.0, %v1776
      %1778 = vmatmul.f32.gmra.mxu0 %v1640
      %v1779 = vpop.f32.mrf.mxu0
      %v1780 = vadd.f32 0.0, %v1779
      %1781 = vmatmul.f32.gmra.mxu0 %v1643
      %v1782 = vpop.f32.mrf.mxu0
      %v1783 = vadd.f32 0.0, %v1782
      %1784 = vmatmul.f32.gmra.mxu0 %v1646
      %v1785 = vpop.f32.mrf.mxu0
      %v1786 = vadd.f32 0.0, %v1785
      %1787 = vmatmul.f32.gmra.mxu0 %v1649
      %v1788 = vpop.f32.mrf.mxu0
      %v1789 = vadd.f32 0.0, %v1788
      %1790 = vmatmul.f32.gmra.mxu0 %v1652
      %v1791 = vpop.f32.mrf.mxu0
      %v1792 = vadd.f32 0.0, %v1791
      %1793 = vmatmul.f32.gmra.mxu0 %v1655
      %v1794 = vpop.f32.mrf.mxu0
      %v1795 = vadd.f32 0.0, %v1794
      %1796 = vmatmul.f32.gmra.mxu0 %v1658
      %v1797 = vpop.f32.mrf.mxu0
      %v1798 = vadd.f32 0.0, %v1797
      %1799 = vmatmul.f32.gmra.mxu0 %v1661
      %v1800 = vpop.f32.mrf.mxu0
      %v1801 = vadd.f32 0.0, %v1800
      %1802 = vmatmul.f32.gmra.mxu0 %v1664
      %v1803 = vpop.f32.mrf.mxu0
      %v1804 = vadd.f32 0.0, %v1803
      %1805 = vmatmul.f32.gmra.mxu0 %v1667
      %v1806 = vpop.f32.mrf.mxu0
      %v1807 = vadd.f32 0.0, %v1806
      %1808 = vmatmul.f32.gmra.mxu0 %v1670
      %v1809 = vpop.f32.mrf.mxu0
      %v1810 = vadd.f32 0.0, %v1809
      %1811 = vmatmul.f32.gmra.mxu0 %v1673
      %v1812 = vpop.f32.mrf.mxu0
      %v1813 = vadd.f32 0.0, %v1812
      %1814 = vmatmul.f32.gmra.mxu0 %v1676
      %v1815 = vpop.f32.mrf.mxu0
      %v1816 = vadd.f32 0.0, %v1815
      %1817 = vmatmul.f32.gmra.mxu0 %v1679
      %v1818 = vpop.f32.mrf.mxu0
      %v1819 = vadd.f32 0.0, %v1818
      %1820 = vmatmul.f32.gmra.mxu0 %v1682
      %v1821 = vpop.f32.mrf.mxu0
      %v1822 = vadd.f32 0.0, %v1821
      %1823 = vmatmul.f32.gmra.mxu0 %v1685
      %v1824 = vpop.f32.mrf.mxu0
      %v1825 = vadd.f32 0.0, %v1824
      %1826 = vmatmul.f32.gmra.mxu0 %v1688
      %v1827 = vpop.f32.mrf.mxu0
      %v1828 = vadd.f32 0.0, %v1827
      %1829 = vmatmul.f32.gmra.mxu0 %v1691
      %v1830 = vpop.f32.mrf.mxu0
      %v1831 = vadd.f32 0.0, %v1830
      %1832 = vmatmul.f32.gmra.mxu0 %v1694
      %v1833 = vpop.f32.mrf.mxu0
      %v1834 = vadd.f32 0.0, %v1833
      %1835 = vmatmul.f32.gmra.mxu0 %v1697
      %v1836 = vpop.f32.mrf.mxu0
      %v1837 = vadd.f32 0.0, %v1836
      %1838 = vmatmul.f32.gmra.mxu0 %v1700
      %v1839 = vpop.f32.mrf.mxu0
      %v1840 = vadd.f32 0.0, %v1839
      %1841 = vmatmul.f32.gmra.mxu0 %v1703
      %v1842 = vpop.f32.mrf.mxu0
      %v1843 = vadd.f32 0.0, %v1842
      %1844 = vmatmul.f32.gmra.mxu0 %v1706
      %v1845 = vpop.f32.mrf.mxu0
      %v1846 = vadd.f32 0.0, %v1845
      %1847 = vmatmul.f32.gmra.mxu0 %v1709
      %v1848 = vpop.f32.mrf.mxu0
      %v1849 = vadd.f32 0.0, %v1848
      %1850 = vmatmul.f32.gmra.mxu0 %v1712
      %v1851 = vpop.f32.mrf.mxu0
      %v1852 = vadd.f32 0.0, %v1851
      %1853 = vmatmul.f32.gmra.mxu0 %v1715
      %v1854 = vpop.f32.mrf.mxu0
      %v1855 = vadd.f32 0.0, %v1854
      %1856 = vmatmul.f32.gmra.mxu0 %v1718
      %v1857 = vpop.f32.mrf.mxu0
      %v1858 = vadd.f32 0.0, %v1857
      %1859 = vmatmul.f32.gmra.mxu0 %v1721
      %v1860 = vpop.f32.mrf.mxu0
      %v1861 = vadd.f32 0.0, %v1860
      %1862 = vmatmul.f32.gmra.mxu0 %v1724
      %v1863 = vpop.f32.mrf.mxu0
      %v1864 = vadd.f32 0.0, %v1863
      %1865 = vmatmul.f32.gmra.mxu0 %v1727
      %v1866 = vpop.f32.mrf.mxu0
      %v1867 = vadd.f32 0.0, %v1866
      %1868 = vmatmul.f32.gmra.mxu0 %v1730
      %v1869 = vpop.f32.mrf.mxu0
      %v1870 = vadd.f32 0.0, %v1869
      %1871 = vmatmul.f32.gmra.mxu0 %v1733
      %v1872 = vpop.f32.mrf.mxu0
      %v1873 = vadd.f32 0.0, %v1872
      %1874 = vmatmul.f32.gmra.mxu0 %v1736
      %v1875 = vpop.f32.mrf.mxu0
      %v1876 = vadd.f32 0.0, %v1875
      %1877 = vmatmul.f32.gmra.mxu0 %v1739
      %v1878 = vpop.f32.mrf.mxu0
      %v1879 = vadd.f32 0.0, %v1878
      %1880 = vmatmul.f32.gmra.mxu0 %v1742
      %v1881 = vpop.f32.mrf.mxu0
      %v1882 = vadd.f32 0.0, %v1881
      %1883 = vdwg.mxu0
      %v1884 = vadd.f32 %v1542, %v1765
      %v1885 = vadd.f32 %v1543, %v1768
      %v1886 = vadd.f32 %v1544, %v1771
      %v1887 = vadd.f32 %v1545, %v1774
      %v1888 = vadd.f32 %v1546, %v1777
      %v1889 = vadd.f32 %v1547, %v1780
      %v1890 = vadd.f32 %v1548, %v1783
      %v1891 = vadd.f32 %v1549, %v1786
      %v1892 = vadd.f32 %v1550, %v1789
      %v1893 = vadd.f32 %v1551, %v1792
      %v1894 = vadd.f32 %v1552, %v1795
      %v1895 = vadd.f32 %v1553, %v1798
      %v1896 = vadd.f32 %v1554, %v1801
      %v1897 = vadd.f32 %v1555, %v1804
      %v1898 = vadd.f32 %v1556, %v1807
      %v1899 = vadd.f32 %v1557, %v1810
      %v1900 = vadd.f32 %v1558, %v1813
      %v1901 = vadd.f32 %v1559, %v1816
      %v1902 = vadd.f32 %v1560, %v1819
      %v1903 = vadd.f32 %v1561, %v1822
      %v1904 = vadd.f32 %v1562, %v1825
      %v1905 = vadd.f32 %v1563, %v1828
      %v1906 = vadd.f32 %v1564, %v1831
      %v1907 = vadd.f32 %v1565, %v1834
      %v1908 = vadd.f32 %v1566, %v1837
      %v1909 = vadd.f32 %v1567, %v1840
      %v1910 = vadd.f32 %v1568, %v1843
      %v1911 = vadd.f32 %v1569, %v1846
      %v1912 = vadd.f32 %v1570, %v1849
      %v1913 = vadd.f32 %v1571, %v1852
      %v1914 = vadd.f32 %v1572, %v1855
      %v1915 = vadd.f32 %v1573, %v1858
      %v1916 = vadd.f32 %v1574, %v1861
      %v1917 = vadd.f32 %v1575, %v1864
      %v1918 = vadd.f32 %v1576, %v1867
      %v1919 = vadd.f32 %v1577, %v1870
      %v1920 = vadd.f32 %v1578, %v1873
      %v1921 = vadd.f32 %v1579, %v1876
      %v1922 = vadd.f32 %v1580, %v1879
      %v1923 = vadd.f32 %v1581, %v1882
      %v1924 = vld [vmem:[%s197 + $0x29] sm:$0xff]
      %v1925 = vld [vmem:[%s197 + $0x31] sm:$0xff]
      %v1926 = vld [vmem:[%s197 + $0x39] sm:$0xff]
      %v1927 = vld [vmem:[%s197 + $0x41] sm:$0xff]
      %v1928 = vld [vmem:[%s197 + $0x49] sm:$0xff]
      %v1929 = vld [vmem:[%s197 + $0x51] sm:$0xff]
      %v1930 = vld [vmem:[%s197 + $0x59] sm:$0xff]
      %v1931 = vld [vmem:[%s197 + $0x61] sm:$0xff]
      %v1932 = vld [vmem:[%s197 + $0x69] sm:$0xff]
      %v1933 = vld [vmem:[%s197 + $0x71] sm:$0xff]
      %v1934 = vld [vmem:[%s197 + $0x79] sm:$0xff]
      %v1935 = vld [vmem:[%s197 + $0x81] sm:$0xff]
      %v1936 = vld [vmem:[%s197 + $0x89] sm:$0xff]
      %v1937 = vld [vmem:[%s197 + $0x91] sm:$0xff]
      %v1938 = vld [vmem:[%s197 + $0x99] sm:$0xff]
      %v1939 = vld [vmem:[%s197 + $0xa1] sm:$0xff]
      %v1940 = vld [vmem:[%s197 + $0xa9] sm:$0xff]
      %v1941 = vld [vmem:[%s197 + $0xb1] sm:$0xff]
      %v1942 = vld [vmem:[%s197 + $0xb9] sm:$0xff]
      %v1943 = vld [vmem:[%s197 + $0xc1] sm:$0xff]
      %v1944 = vld [vmem:[%s197 + $0xc9] sm:$0xff]
      %v1945 = vld [vmem:[%s197 + $0xd1] sm:$0xff]
      %v1946 = vld [vmem:[%s197 + $0xd9] sm:$0xff]
      %v1947 = vld [vmem:[%s197 + $0xe1] sm:$0xff]
      %v1948 = vld [vmem:[%s197 + $0xe9] sm:$0xff]
      %v1949 = vld [vmem:[%s197 + $0xf1] sm:$0xff]
      %v1950 = vld [vmem:[%s197 + $0xf9] sm:$0xff]
      %v1951 = vld [vmem:[%s197 + $0x101] sm:$0xff]
      %v1952 = vld [vmem:[%s197 + $0x109] sm:$0xff]
      %v1953 = vld [vmem:[%s197 + $0x111] sm:$0xff]
      %v1954 = vld [vmem:[%s197 + $0x119] sm:$0xff]
      %v1955 = vld [vmem:[%s197 + $0x121] sm:$0xff]
      %v1956 = vld [vmem:[%s197 + $0x129] sm:$0xff]
      %v1957 = vld [vmem:[%s197 + $0x131] sm:$0xff]
      %v1958 = vld [vmem:[%s197 + $0x139] sm:$0xff]
      %v1959 = vld [vmem:[%s197 + $0x141] sm:$0xff]
      %v1960 = vld [vmem:[%s197 + $0x149] sm:$0xff]
      %v1961 = vld [vmem:[%s197 + $0x151] sm:$0xff]
      %v1962 = vld [vmem:[%s197 + $0x159] sm:$0xff]
      %v1963 = vld [vmem:[%s197 + $0x161] sm:$0xff]
      %s1964 = scalar_lea.vmem %s1, 20
      %v1965 = vld [vmem:[%s1964] sm:$0xf]
      %v1967 = vsel %vm254, %v1924, 0
      %v1970 = vsel %vm254, %v1925, 0
      %v1973 = vsel %vm254, %v1926, 0
      %v1976 = vsel %vm254, %v1927, 0
      %v1979 = vsel %vm254, %v1928, 0
      %v1982 = vsel %vm254, %v1929, 0
      %v1985 = vsel %vm254, %v1930, 0
      %v1988 = vsel %vm254, %v1931, 0
      %v1991 = vsel %vm254, %v1932, 0
      %v1994 = vsel %vm254, %v1933, 0
      %v1997 = vsel %vm254, %v1934, 0
      %v2000 = vsel %vm254, %v1935, 0
      %v2003 = vsel %vm254, %v1936, 0
      %v2006 = vsel %vm254, %v1937, 0
      %v2009 = vsel %vm254, %v1938, 0
      %v2012 = vsel %vm254, %v1939, 0
      %v2015 = vsel %vm254, %v1940, 0
      %v2018 = vsel %vm254, %v1941, 0
      %v2021 = vsel %vm254, %v1942, 0
      %v2024 = vsel %vm254, %v1943, 0
      %v2027 = vsel %vm254, %v1944, 0
      %v2030 = vsel %vm254, %v1945, 0
      %v2033 = vsel %vm254, %v1946, 0
      %v2036 = vsel %vm254, %v1947, 0
      %v2039 = vsel %vm254, %v1948, 0
      %v2042 = vsel %vm254, %v1949, 0
      %v2045 = vsel %vm254, %v1950, 0
      %v2048 = vsel %vm254, %v1951, 0
      %v2051 = vsel %vm254, %v1952, 0
      %v2054 = vsel %vm254, %v1953, 0
      %v2057 = vsel %vm254, %v1954, 0
      %v2060 = vsel %vm254, %v1955, 0
      %v2063 = vsel %vm254, %v1956, 0
      %v2066 = vsel %vm254, %v1957, 0
      %v2069 = vsel %vm254, %v1958, 0
      %v2072 = vsel %vm254, %v1959, 0
      %v2075 = vsel %vm254, %v1960, 0
      %v2078 = vsel %vm254, %v1961, 0
      %v2081 = vsel %vm254, %v1962, 0
      %v2084 = vsel %vm254, %v1963, 0
      %v2087 = vsel %vm375, %v1965, 0
      %2089 = vmatpush.msra.mxu0 0.0
      %2090 = vmatpush.msra.mxu0 0.0
      %2091 = vmatpush.msra.mxu0 0.0
      %2092 = vmatpush.msra.mxu0 0.0
      %2093 = vmatpush.msra.mxu0 0.0
      %2094 = vmatpush.msra.mxu0 0.0
      %2095 = vmatpush.msra.mxu0 0.0
      %2096 = vmatpush.msra.mxu0 0.0
      %2097 = vmatpush.msra.mxu0 0.0
      %2098 = vmatpush.msra.mxu0 0.0
      %2099 = vmatpush.msra.mxu0 0.0
      %2100 = vmatpush.msra.mxu0 0.0
      %2101 = vmatpush.msra.mxu0 0.0
      %2102 = vmatpush.msra.mxu0 0.0
      %2103 = vmatpush.msra.mxu0 0.0
      %2104 = vmatpush.msra.mxu0 %v2087
      %2105 = vmatmul.f32.gmra.mxu0 %v1967
      %v2106 = vpop.f32.mrf.mxu0
      %v2107 = vadd.f32 0.0, %v2106
      %2108 = vmatmul.f32.gmra.mxu0 %v1970
      %v2109 = vpop.f32.mrf.mxu0
      %v2110 = vadd.f32 0.0, %v2109
      %2111 = vmatmul.f32.gmra.mxu0 %v1973
      %v2112 = vpop.f32.mrf.mxu0
      %v2113 = vadd.f32 0.0, %v2112
      %2114 = vmatmul.f32.gmra.mxu0 %v1976
      %v2115 = vpop.f32.mrf.mxu0
      %v2116 = vadd.f32 0.0, %v2115
      %2117 = vmatmul.f32.gmra.mxu0 %v1979
      %v2118 = vpop.f32.mrf.mxu0
      %v2119 = vadd.f32 0.0, %v2118
      %2120 = vmatmul.f32.gmra.mxu0 %v1982
      %v2121 = vpop.f32.mrf.mxu0
      %v2122 = vadd.f32 0.0, %v2121
      %2123 = vmatmul.f32.gmra.mxu0 %v1985
      %v2124 = vpop.f32.mrf.mxu0
      %v2125 = vadd.f32 0.0, %v2124
      %2126 = vmatmul.f32.gmra.mxu0 %v1988
      %v2127 = vpop.f32.mrf.mxu0
      %v2128 = vadd.f32 0.0, %v2127
      %2129 = vmatmul.f32.gmra.mxu0 %v1991
      %v2130 = vpop.f32.mrf.mxu0
      %v2131 = vadd.f32 0.0, %v2130
      %2132 = vmatmul.f32.gmra.mxu0 %v1994
      %v2133 = vpop.f32.mrf.mxu0
      %v2134 = vadd.f32 0.0, %v2133
      %2135 = vmatmul.f32.gmra.mxu0 %v1997
      %v2136 = vpop.f32.mrf.mxu0
      %v2137 = vadd.f32 0.0, %v2136
      %2138 = vmatmul.f32.gmra.mxu0 %v2000
      %v2139 = vpop.f32.mrf.mxu0
      %v2140 = vadd.f32 0.0, %v2139
      %2141 = vmatmul.f32.gmra.mxu0 %v2003
      %v2142 = vpop.f32.mrf.mxu0
      %v2143 = vadd.f32 0.0, %v2142
      %2144 = vmatmul.f32.gmra.mxu0 %v2006
      %v2145 = vpop.f32.mrf.mxu0
      %v2146 = vadd.f32 0.0, %v2145
      %2147 = vmatmul.f32.gmra.mxu0 %v2009
      %v2148 = vpop.f32.mrf.mxu0
      %v2149 = vadd.f32 0.0, %v2148
      %2150 = vmatmul.f32.gmra.mxu0 %v2012
      %v2151 = vpop.f32.mrf.mxu0
      %v2152 = vadd.f32 0.0, %v2151
      %2153 = vmatmul.f32.gmra.mxu0 %v2015
      %v2154 = vpop.f32.mrf.mxu0
      %v2155 = vadd.f32 0.0, %v2154
      %2156 = vmatmul.f32.gmra.mxu0 %v2018
      %v2157 = vpop.f32.mrf.mxu0
      %v2158 = vadd.f32 0.0, %v2157
      %2159 = vmatmul.f32.gmra.mxu0 %v2021
      %v2160 = vpop.f32.mrf.mxu0
      %v2161 = vadd.f32 0.0, %v2160
      %2162 = vmatmul.f32.gmra.mxu0 %v2024
      %v2163 = vpop.f32.mrf.mxu0
      %v2164 = vadd.f32 0.0, %v2163
      %2165 = vmatmul.f32.gmra.mxu0 %v2027
      %v2166 = vpop.f32.mrf.mxu0
      %v2167 = vadd.f32 0.0, %v2166
      %2168 = vmatmul.f32.gmra.mxu0 %v2030
      %v2169 = vpop.f32.mrf.mxu0
      %v2170 = vadd.f32 0.0, %v2169
      %2171 = vmatmul.f32.gmra.mxu0 %v2033
      %v2172 = vpop.f32.mrf.mxu0
      %v2173 = vadd.f32 0.0, %v2172
      %2174 = vmatmul.f32.gmra.mxu0 %v2036
      %v2175 = vpop.f32.mrf.mxu0
      %v2176 = vadd.f32 0.0, %v2175
      %2177 = vmatmul.f32.gmra.mxu0 %v2039
      %v2178 = vpop.f32.mrf.mxu0
      %v2179 = vadd.f32 0.0, %v2178
      %2180 = vmatmul.f32.gmra.mxu0 %v2042
      %v2181 = vpop.f32.mrf.mxu0
      %v2182 = vadd.f32 0.0, %v2181
      %2183 = vmatmul.f32.gmra.mxu0 %v2045
      %v2184 = vpop.f32.mrf.mxu0
      %v2185 = vadd.f32 0.0, %v2184
      %2186 = vmatmul.f32.gmra.mxu0 %v2048
      %v2187 = vpop.f32.mrf.mxu0
      %v2188 = vadd.f32 0.0, %v2187
      %2189 = vmatmul.f32.gmra.mxu0 %v2051
      %v2190 = vpop.f32.mrf.mxu0
      %v2191 = vadd.f32 0.0, %v2190
      %2192 = vmatmul.f32.gmra.mxu0 %v2054
      %v2193 = vpop.f32.mrf.mxu0
      %v2194 = vadd.f32 0.0, %v2193
      %2195 = vmatmul.f32.gmra.mxu0 %v2057
      %v2196 = vpop.f32.mrf.mxu0
      %v2197 = vadd.f32 0.0, %v2196
      %2198 = vmatmul.f32.gmra.mxu0 %v2060
      %v2199 = vpop.f32.mrf.mxu0
      %v2200 = vadd.f32 0.0, %v2199
      %2201 = vmatmul.f32.gmra.mxu0 %v2063
      %v2202 = vpop.f32.mrf.mxu0
      %v2203 = vadd.f32 0.0, %v2202
      %2204 = vmatmul.f32.gmra.mxu0 %v2066
      %v2205 = vpop.f32.mrf.mxu0
      %v2206 = vadd.f32 0.0, %v2205
      %2207 = vmatmul.f32.gmra.mxu0 %v2069
      %v2208 = vpop.f32.mrf.mxu0
      %v2209 = vadd.f32 0.0, %v2208
      %2210 = vmatmul.f32.gmra.mxu0 %v2072
      %v2211 = vpop.f32.mrf.mxu0
      %v2212 = vadd.f32 0.0, %v2211
      %2213 = vmatmul.f32.gmra.mxu0 %v2075
      %v2214 = vpop.f32.mrf.mxu0
      %v2215 = vadd.f32 0.0, %v2214
      %2216 = vmatmul.f32.gmra.mxu0 %v2078
      %v2217 = vpop.f32.mrf.mxu0
      %v2218 = vadd.f32 0.0, %v2217
      %2219 = vmatmul.f32.gmra.mxu0 %v2081
      %v2220 = vpop.f32.mrf.mxu0
      %v2221 = vadd.f32 0.0, %v2220
      %2222 = vmatmul.f32.gmra.mxu0 %v2084
      %v2223 = vpop.f32.mrf.mxu0
      %v2224 = vadd.f32 0.0, %v2223
      %2225 = vdwg.mxu0
      %v2226 = vadd.f32 %v1884, %v2107
      %v2227 = vadd.f32 %v1885, %v2110
      %v2228 = vadd.f32 %v1886, %v2113
      %v2229 = vadd.f32 %v1887, %v2116
      %v2230 = vadd.f32 %v1888, %v2119
      %v2231 = vadd.f32 %v1889, %v2122
      %v2232 = vadd.f32 %v1890, %v2125
      %v2233 = vadd.f32 %v1891, %v2128
      %v2234 = vadd.f32 %v1892, %v2131
      %v2235 = vadd.f32 %v1893, %v2134
      %v2236 = vadd.f32 %v1894, %v2137
      %v2237 = vadd.f32 %v1895, %v2140
      %v2238 = vadd.f32 %v1896, %v2143
      %v2239 = vadd.f32 %v1897, %v2146
      %v2240 = vadd.f32 %v1898, %v2149
      %v2241 = vadd.f32 %v1899, %v2152
      %v2242 = vadd.f32 %v1900, %v2155
      %v2243 = vadd.f32 %v1901, %v2158
      %v2244 = vadd.f32 %v1902, %v2161
      %v2245 = vadd.f32 %v1903, %v2164
      %v2246 = vadd.f32 %v1904, %v2167
      %v2247 = vadd.f32 %v1905, %v2170
      %v2248 = vadd.f32 %v1906, %v2173
      %v2249 = vadd.f32 %v1907, %v2176
      %v2250 = vadd.f32 %v1908, %v2179
      %v2251 = vadd.f32 %v1909, %v2182
      %v2252 = vadd.f32 %v1910, %v2185
      %v2253 = vadd.f32 %v1911, %v2188
      %v2254 = vadd.f32 %v1912, %v2191
      %v2255 = vadd.f32 %v1913, %v2194
      %v2256 = vadd.f32 %v1914, %v2197
      %v2257 = vadd.f32 %v1915, %v2200
      %v2258 = vadd.f32 %v1916, %v2203
      %v2259 = vadd.f32 %v1917, %v2206
      %v2260 = vadd.f32 %v1918, %v2209
      %v2261 = vadd.f32 %v1919, %v2212
      %v2262 = vadd.f32 %v1920, %v2215
      %v2263 = vadd.f32 %v1921, %v2218
      %v2264 = vadd.f32 %v1922, %v2221
      %v2265 = vadd.f32 %v1923, %v2224
      %v2266 = vld [vmem:[%s197 + $0x3b] sm:$0xff]
      %v2267 = vld [vmem:[%s197 + $0x43] sm:$0xff]
      %v2268 = vld [vmem:[%s197 + $0x4b] sm:$0xff]
      %v2269 = vld [vmem:[%s197 + $0x53] sm:$0xff]
      %v2270 = vld [vmem:[%s197 + $0x5b] sm:$0xff]
      %v2271 = vld [vmem:[%s197 + $0x63] sm:$0xff]
      %v2272 = vld [vmem:[%s197 + $0x6b] sm:$0xff]
      %v2273 = vld [vmem:[%s197 + $0x73] sm:$0xff]
      %v2274 = vld [vmem:[%s197 + $0x7b] sm:$0xff]
      %v2275 = vld [vmem:[%s197 + $0x83] sm:$0xff]
      %v2276 = vld [vmem:[%s197 + $0x8b] sm:$0xff]
      %v2277 = vld [vmem:[%s197 + $0x93] sm:$0xff]
      %v2278 = vld [vmem:[%s197 + $0x9b] sm:$0xff]
      %v2279 = vld [vmem:[%s197 + $0xa3] sm:$0xff]
      %v2280 = vld [vmem:[%s197 + $0xab] sm:$0xff]
      %v2281 = vld [vmem:[%s197 + $0xb3] sm:$0xff]
      %v2282 = vld [vmem:[%s197 + $0xbb] sm:$0xff]
      %v2283 = vld [vmem:[%s197 + $0xc3] sm:$0xff]
      %v2284 = vld [vmem:[%s197 + $0xcb] sm:$0xff]
      %v2285 = vld [vmem:[%s197 + $0xd3] sm:$0xff]
      %v2286 = vld [vmem:[%s197 + $0xdb] sm:$0xff]
      %v2287 = vld [vmem:[%s197 + $0xe3] sm:$0xff]
      %v2288 = vld [vmem:[%s197 + $0xeb] sm:$0xff]
      %v2289 = vld [vmem:[%s197 + $0xf3] sm:$0xff]
      %v2290 = vld [vmem:[%s197 + $0xfb] sm:$0xff]
      %v2291 = vld [vmem:[%s197 + $0x103] sm:$0xff]
      %v2292 = vld [vmem:[%s197 + $0x10b] sm:$0xff]
      %v2293 = vld [vmem:[%s197 + $0x113] sm:$0xff]
      %v2294 = vld [vmem:[%s197 + $0x11b] sm:$0xff]
      %v2295 = vld [vmem:[%s197 + $0x123] sm:$0xff]
      %v2296 = vld [vmem:[%s197 + $0x12b] sm:$0xff]
      %v2297 = vld [vmem:[%s197 + $0x133] sm:$0xff]
      %v2298 = vld [vmem:[%s197 + $0x13b] sm:$0xff]
      %v2299 = vld [vmem:[%s197 + $0x143] sm:$0xff]
      %v2300 = vld [vmem:[%s197 + $0x14b] sm:$0xff]
      %v2301 = vld [vmem:[%s197 + $0x153] sm:$0xff]
      %v2302 = vld [vmem:[%s197 + $0x15b] sm:$0xff]
      %v2303 = vld [vmem:[%s197 + $0x163] sm:$0xff]
      %v2304 = vld [vmem:[%s197 + $0x16b] sm:$0xff]
      %v2305 = vld [vmem:[%s197 + $0x173] sm:$0xff]
      %s2306 = scalar_lea.vmem %s1, 24
      %v2307 = vld [vmem:[%s2306] sm:$0xf]
      %v2309 = vsel %vm254, %v2266, 0
      %v2312 = vsel %vm254, %v2267, 0
      %v2315 = vsel %vm254, %v2268, 0
      %v2318 = vsel %vm254, %v2269, 0
      %v2321 = vsel %vm254, %v2270, 0
      %v2324 = vsel %vm254, %v2271, 0
      %v2327 = vsel %vm254, %v2272, 0
      %v2330 = vsel %vm254, %v2273, 0
      %v2333 = vsel %vm254, %v2274, 0
      %v2336 = vsel %vm254, %v2275, 0
      %v2339 = vsel %vm254, %v2276, 0
      %v2342 = vsel %vm254, %v2277, 0
      %v2345 = vsel %vm254, %v2278, 0
      %v2348 = vsel %vm254, %v2279, 0
      %v2351 = vsel %vm254, %v2280, 0
      %v2354 = vsel %vm254, %v2281, 0
      %v2357 = vsel %vm254, %v2282, 0
      %v2360 = vsel %vm254, %v2283, 0
      %v2363 = vsel %vm254, %v2284, 0
      %v2366 = vsel %vm254, %v2285, 0
      %v2369 = vsel %vm254, %v2286, 0
      %v2372 = vsel %vm254, %v2287, 0
      %v2375 = vsel %vm254, %v2288, 0
      %v2378 = vsel %vm254, %v2289, 0
      %v2381 = vsel %vm254, %v2290, 0
      %v2384 = vsel %vm254, %v2291, 0
      %v2387 = vsel %vm254, %v2292, 0
      %v2390 = vsel %vm254, %v2293, 0
      %v2393 = vsel %vm254, %v2294, 0
      %v2396 = vsel %vm254, %v2295, 0
      %v2399 = vsel %vm254, %v2296, 0
      %v2402 = vsel %vm254, %v2297, 0
      %v2405 = vsel %vm254, %v2298, 0
      %v2408 = vsel %vm254, %v2299, 0
      %v2411 = vsel %vm254, %v2300, 0
      %v2414 = vsel %vm254, %v2301, 0
      %v2417 = vsel %vm254, %v2302, 0
      %v2420 = vsel %vm254, %v2303, 0
      %v2423 = vsel %vm254, %v2304, 0
      %v2426 = vsel %vm254, %v2305, 0
      %v2429 = vsel %vm375, %v2307, 0
      %2431 = vmatpush.msra.mxu0 0.0
      %2432 = vmatpush.msra.mxu0 0.0
      %2433 = vmatpush.msra.mxu0 0.0
      %2434 = vmatpush.msra.mxu0 0.0
      %2435 = vmatpush.msra.mxu0 0.0
      %2436 = vmatpush.msra.mxu0 0.0
      %2437 = vmatpush.msra.mxu0 0.0
      %2438 = vmatpush.msra.mxu0 0.0
      %2439 = vmatpush.msra.mxu0 0.0
      %2440 = vmatpush.msra.mxu0 0.0
      %2441 = vmatpush.msra.mxu0 0.0
      %2442 = vmatpush.msra.mxu0 0.0
      %2443 = vmatpush.msra.mxu0 0.0
      %2444 = vmatpush.msra.mxu0 0.0
      %2445 = vmatpush.msra.mxu0 0.0
      %2446 = vmatpush.msra.mxu0 %v2429
      %2447 = vmatmul.f32.gmra.mxu0 %v2309
      %v2448 = vpop.f32.mrf.mxu0
      %v2449 = vadd.f32 0.0, %v2448
      %2450 = vmatmul.f32.gmra.mxu0 %v2312
      %v2451 = vpop.f32.mrf.mxu0
      %v2452 = vadd.f32 0.0, %v2451
      %2453 = vmatmul.f32.gmra.mxu0 %v2315
      %v2454 = vpop.f32.mrf.mxu0
      %v2455 = vadd.f32 0.0, %v2454
      %2456 = vmatmul.f32.gmra.mxu0 %v2318
      %v2457 = vpop.f32.mrf.mxu0
      %v2458 = vadd.f32 0.0, %v2457
      %2459 = vmatmul.f32.gmra.mxu0 %v2321
      %v2460 = vpop.f32.mrf.mxu0
      %v2461 = vadd.f32 0.0, %v2460
      %2462 = vmatmul.f32.gmra.mxu0 %v2324
      %v2463 = vpop.f32.mrf.mxu0
      %v2464 = vadd.f32 0.0, %v2463
      %2465 = vmatmul.f32.gmra.mxu0 %v2327
      %v2466 = vpop.f32.mrf.mxu0
      %v2467 = vadd.f32 0.0, %v2466
      %2468 = vmatmul.f32.gmra.mxu0 %v2330
      %v2469 = vpop.f32.mrf.mxu0
      %v2470 = vadd.f32 0.0, %v2469
      %2471 = vmatmul.f32.gmra.mxu0 %v2333
      %v2472 = vpop.f32.mrf.mxu0
      %v2473 = vadd.f32 0.0, %v2472
      %2474 = vmatmul.f32.gmra.mxu0 %v2336
      %v2475 = vpop.f32.mrf.mxu0
      %v2476 = vadd.f32 0.0, %v2475
      %2477 = vmatmul.f32.gmra.mxu0 %v2339
      %v2478 = vpop.f32.mrf.mxu0
      %v2479 = vadd.f32 0.0, %v2478
      %2480 = vmatmul.f32.gmra.mxu0 %v2342
      %v2481 = vpop.f32.mrf.mxu0
      %v2482 = vadd.f32 0.0, %v2481
      %2483 = vmatmul.f32.gmra.mxu0 %v2345
      %v2484 = vpop.f32.mrf.mxu0
      %v2485 = vadd.f32 0.0, %v2484
      %2486 = vmatmul.f32.gmra.mxu0 %v2348
      %v2487 = vpop.f32.mrf.mxu0
      %v2488 = vadd.f32 0.0, %v2487
      %2489 = vmatmul.f32.gmra.mxu0 %v2351
      %v2490 = vpop.f32.mrf.mxu0
      %v2491 = vadd.f32 0.0, %v2490
      %2492 = vmatmul.f32.gmra.mxu0 %v2354
      %v2493 = vpop.f32.mrf.mxu0
      %v2494 = vadd.f32 0.0, %v2493
      %2495 = vmatmul.f32.gmra.mxu0 %v2357
      %v2496 = vpop.f32.mrf.mxu0
      %v2497 = vadd.f32 0.0, %v2496
      %2498 = vmatmul.f32.gmra.mxu0 %v2360
      %v2499 = vpop.f32.mrf.mxu0
      %v2500 = vadd.f32 0.0, %v2499
      %2501 = vmatmul.f32.gmra.mxu0 %v2363
      %v2502 = vpop.f32.mrf.mxu0
      %v2503 = vadd.f32 0.0, %v2502
      %2504 = vmatmul.f32.gmra.mxu0 %v2366
      %v2505 = vpop.f32.mrf.mxu0
      %v2506 = vadd.f32 0.0, %v2505
      %2507 = vmatmul.f32.gmra.mxu0 %v2369
      %v2508 = vpop.f32.mrf.mxu0
      %v2509 = vadd.f32 0.0, %v2508
      %2510 = vmatmul.f32.gmra.mxu0 %v2372
      %v2511 = vpop.f32.mrf.mxu0
      %v2512 = vadd.f32 0.0, %v2511
      %2513 = vmatmul.f32.gmra.mxu0 %v2375
      %v2514 = vpop.f32.mrf.mxu0
      %v2515 = vadd.f32 0.0, %v2514
      %2516 = vmatmul.f32.gmra.mxu0 %v2378
      %v2517 = vpop.f32.mrf.mxu0
      %v2518 = vadd.f32 0.0, %v2517
      %2519 = vmatmul.f32.gmra.mxu0 %v2381
      %v2520 = vpop.f32.mrf.mxu0
      %v2521 = vadd.f32 0.0, %v2520
      %2522 = vmatmul.f32.gmra.mxu0 %v2384
      %v2523 = vpop.f32.mrf.mxu0
      %v2524 = vadd.f32 0.0, %v2523
      %2525 = vmatmul.f32.gmra.mxu0 %v2387
      %v2526 = vpop.f32.mrf.mxu0
      %v2527 = vadd.f32 0.0, %v2526
      %2528 = vmatmul.f32.gmra.mxu0 %v2390
      %v2529 = vpop.f32.mrf.mxu0
      %v2530 = vadd.f32 0.0, %v2529
      %2531 = vmatmul.f32.gmra.mxu0 %v2393
      %v2532 = vpop.f32.mrf.mxu0
      %v2533 = vadd.f32 0.0, %v2532
      %2534 = vmatmul.f32.gmra.mxu0 %v2396
      %v2535 = vpop.f32.mrf.mxu0
      %v2536 = vadd.f32 0.0, %v2535
      %2537 = vmatmul.f32.gmra.mxu0 %v2399
      %v2538 = vpop.f32.mrf.mxu0
      %v2539 = vadd.f32 0.0, %v2538
      %2540 = vmatmul.f32.gmra.mxu0 %v2402
      %v2541 = vpop.f32.mrf.mxu0
      %v2542 = vadd.f32 0.0, %v2541
      %2543 = vmatmul.f32.gmra.mxu0 %v2405
      %v2544 = vpop.f32.mrf.mxu0
      %v2545 = vadd.f32 0.0, %v2544
      %2546 = vmatmul.f32.gmra.mxu0 %v2408
      %v2547 = vpop.f32.mrf.mxu0
      %v2548 = vadd.f32 0.0, %v2547
      %2549 = vmatmul.f32.gmra.mxu0 %v2411
      %v2550 = vpop.f32.mrf.mxu0
      %v2551 = vadd.f32 0.0, %v2550
      %2552 = vmatmul.f32.gmra.mxu0 %v2414
      %v2553 = vpop.f32.mrf.mxu0
      %v2554 = vadd.f32 0.0, %v2553
      %2555 = vmatmul.f32.gmra.mxu0 %v2417
      %v2556 = vpop.f32.mrf.mxu0
      %v2557 = vadd.f32 0.0, %v2556
      %2558 = vmatmul.f32.gmra.mxu0 %v2420
      %v2559 = vpop.f32.mrf.mxu0
      %v2560 = vadd.f32 0.0, %v2559
      %2561 = vmatmul.f32.gmra.mxu0 %v2423
      %v2562 = vpop.f32.mrf.mxu0
      %v2563 = vadd.f32 0.0, %v2562
      %2564 = vmatmul.f32.gmra.mxu0 %v2426
      %v2565 = vpop.f32.mrf.mxu0
      %v2566 = vadd.f32 0.0, %v2565
      %2567 = vdwg.mxu0
      %v2568 = vadd.f32 %v2226, %v2449
      %v2569 = vadd.f32 %v2227, %v2452
      %v2570 = vadd.f32 %v2228, %v2455
      %v2571 = vadd.f32 %v2229, %v2458
      %v2572 = vadd.f32 %v2230, %v2461
      %v2573 = vadd.f32 %v2231, %v2464
      %v2574 = vadd.f32 %v2232, %v2467
      %v2575 = vadd.f32 %v2233, %v2470
      %v2576 = vadd.f32 %v2234, %v2473
      %v2577 = vadd.f32 %v2235, %v2476
      %v2578 = vadd.f32 %v2236, %v2479
      %v2579 = vadd.f32 %v2237, %v2482
      %v2580 = vadd.f32 %v2238, %v2485
      %v2581 = vadd.f32 %v2239, %v2488
      %v2582 = vadd.f32 %v2240, %v2491
      %v2583 = vadd.f32 %v2241, %v2494
      %v2584 = vadd.f32 %v2242, %v2497
      %v2585 = vadd.f32 %v2243, %v2500
      %v2586 = vadd.f32 %v2244, %v2503
      %v2587 = vadd.f32 %v2245, %v2506
      %v2588 = vadd.f32 %v2246, %v2509
      %v2589 = vadd.f32 %v2247, %v2512
      %v2590 = vadd.f32 %v2248, %v2515
      %v2591 = vadd.f32 %v2249, %v2518
      %v2592 = vadd.f32 %v2250, %v2521
      %v2593 = vadd.f32 %v2251, %v2524
      %v2594 = vadd.f32 %v2252, %v2527
      %v2595 = vadd.f32 %v2253, %v2530
      %v2596 = vadd.f32 %v2254, %v2533
      %v2597 = vadd.f32 %v2255, %v2536
      %v2598 = vadd.f32 %v2256, %v2539
      %v2599 = vadd.f32 %v2257, %v2542
      %v2600 = vadd.f32 %v2258, %v2545
      %v2601 = vadd.f32 %v2259, %v2548
      %v2602 = vadd.f32 %v2260, %v2551
      %v2603 = vadd.f32 %v2261, %v2554
      %v2604 = vadd.f32 %v2262, %v2557
      %v2605 = vadd.f32 %v2263, %v2560
      %v2606 = vadd.f32 %v2264, %v2563
      %v2607 = vadd.f32 %v2265, %v2566
      %v2608 = vld [vmem:[%s197 + $0x3c] sm:$0xff]
      %v2609 = vld [vmem:[%s197 + $0x44] sm:$0xff]
      %v2610 = vld [vmem:[%s197 + $0x4c] sm:$0xff]
      %v2611 = vld [vmem:[%s197 + $0x54] sm:$0xff]
      %v2612 = vld [vmem:[%s197 + $0x5c] sm:$0xff]
      %v2613 = vld [vmem:[%s197 + $0x64] sm:$0xff]
      %v2614 = vld [vmem:[%s197 + $0x6c] sm:$0xff]
      %v2615 = vld [vmem:[%s197 + $0x74] sm:$0xff]
      %v2616 = vld [vmem:[%s197 + $0x7c] sm:$0xff]
      %v2617 = vld [vmem:[%s197 + $0x84] sm:$0xff]
      %v2618 = vld [vmem:[%s197 + $0x8c] sm:$0xff]
      %v2619 = vld [vmem:[%s197 + $0x94] sm:$0xff]
      %v2620 = vld [vmem:[%s197 + $0x9c] sm:$0xff]
      %v2621 = vld [vmem:[%s197 + $0xa4] sm:$0xff]
      %v2622 = vld [vmem:[%s197 + $0xac] sm:$0xff]
      %v2623 = vld [vmem:[%s197 + $0xb4] sm:$0xff]
      %v2624 = vld [vmem:[%s197 + $0xbc] sm:$0xff]
      %v2625 = vld [vmem:[%s197 + $0xc4] sm:$0xff]
      %v2626 = vld [vmem:[%s197 + $0xcc] sm:$0xff]
      %v2627 = vld [vmem:[%s197 + $0xd4] sm:$0xff]
      %v2628 = vld [vmem:[%s197 + $0xdc] sm:$0xff]
      %v2629 = vld [vmem:[%s197 + $0xe4] sm:$0xff]
      %v2630 = vld [vmem:[%s197 + $0xec] sm:$0xff]
      %v2631 = vld [vmem:[%s197 + $0xf4] sm:$0xff]
      %v2632 = vld [vmem:[%s197 + $0xfc] sm:$0xff]
      %v2633 = vld [vmem:[%s197 + $0x104] sm:$0xff]
      %v2634 = vld [vmem:[%s197 + $0x10c] sm:$0xff]
      %v2635 = vld [vmem:[%s197 + $0x114] sm:$0xff]
      %v2636 = vld [vmem:[%s197 + $0x11c] sm:$0xff]
      %v2637 = vld [vmem:[%s197 + $0x124] sm:$0xff]
      %v2638 = vld [vmem:[%s197 + $0x12c] sm:$0xff]
      %v2639 = vld [vmem:[%s197 + $0x134] sm:$0xff]
      %v2640 = vld [vmem:[%s197 + $0x13c] sm:$0xff]
      %v2641 = vld [vmem:[%s197 + $0x144] sm:$0xff]
      %v2642 = vld [vmem:[%s197 + $0x14c] sm:$0xff]
      %v2643 = vld [vmem:[%s197 + $0x154] sm:$0xff]
      %v2644 = vld [vmem:[%s197 + $0x15c] sm:$0xff]
      %v2645 = vld [vmem:[%s197 + $0x164] sm:$0xff]
      %v2646 = vld [vmem:[%s197 + $0x16c] sm:$0xff]
      %v2647 = vld [vmem:[%s197 + $0x174] sm:$0xff]
      %s2648 = scalar_lea.vmem %s1, 28
      %v2649 = vld [vmem:[%s2648] sm:$0xf]
      %v2651 = vsel %vm254, %v2608, 0
      %v2654 = vsel %vm254, %v2609, 0
      %v2657 = vsel %vm254, %v2610, 0
      %v2660 = vsel %vm254, %v2611, 0
      %v2663 = vsel %vm254, %v2612, 0
      %v2666 = vsel %vm254, %v2613, 0
      %v2669 = vsel %vm254, %v2614, 0
      %v2672 = vsel %vm254, %v2615, 0
      %v2675 = vsel %vm254, %v2616, 0
      %v2678 = vsel %vm254, %v2617, 0
      %v2681 = vsel %vm254, %v2618, 0
      %v2684 = vsel %vm254, %v2619, 0
      %v2687 = vsel %vm254, %v2620, 0
      %v2690 = vsel %vm254, %v2621, 0
      %v2693 = vsel %vm254, %v2622, 0
      %v2696 = vsel %vm254, %v2623, 0
      %v2699 = vsel %vm254, %v2624, 0
      %v2702 = vsel %vm254, %v2625, 0
      %v2705 = vsel %vm254, %v2626, 0
      %v2708 = vsel %vm254, %v2627, 0
      %v2711 = vsel %vm254, %v2628, 0
      %v2714 = vsel %vm254, %v2629, 0
      %v2717 = vsel %vm254, %v2630, 0
      %v2720 = vsel %vm254, %v2631, 0
      %v2723 = vsel %vm254, %v2632, 0
      %v2726 = vsel %vm254, %v2633, 0
      %v2729 = vsel %vm254, %v2634, 0
      %v2732 = vsel %vm254, %v2635, 0
      %v2735 = vsel %vm254, %v2636, 0
      %v2738 = vsel %vm254, %v2637, 0
      %v2741 = vsel %vm254, %v2638, 0
      %v2744 = vsel %vm254, %v2639, 0
      %v2747 = vsel %vm254, %v2640, 0
      %v2750 = vsel %vm254, %v2641, 0
      %v2753 = vsel %vm254, %v2642, 0
      %v2756 = vsel %vm254, %v2643, 0
      %v2759 = vsel %vm254, %v2644, 0
      %v2762 = vsel %vm254, %v2645, 0
      %v2765 = vsel %vm254, %v2646, 0
      %v2768 = vsel %vm254, %v2647, 0
      %v2771 = vsel %vm375, %v2649, 0
      %2773 = vmatpush.msra.mxu0 0.0
      %2774 = vmatpush.msra.mxu0 0.0
      %2775 = vmatpush.msra.mxu0 0.0
      %2776 = vmatpush.msra.mxu0 0.0
      %2777 = vmatpush.msra.mxu0 0.0
      %2778 = vmatpush.msra.mxu0 0.0
      %2779 = vmatpush.msra.mxu0 0.0
      %2780 = vmatpush.msra.mxu0 0.0
      %2781 = vmatpush.msra.mxu0 0.0
      %2782 = vmatpush.msra.mxu0 0.0
      %2783 = vmatpush.msra.mxu0 0.0
      %2784 = vmatpush.msra.mxu0 0.0
      %2785 = vmatpush.msra.mxu0 0.0
      %2786 = vmatpush.msra.mxu0 0.0
      %2787 = vmatpush.msra.mxu0 0.0
      %2788 = vmatpush.msra.mxu0 %v2771
      %2789 = vmatmul.f32.gmra.mxu0 %v2651
      %v2790 = vpop.f32.mrf.mxu0
      %v2791 = vadd.f32 0.0, %v2790
      %2792 = vmatmul.f32.gmra.mxu0 %v2654
      %v2793 = vpop.f32.mrf.mxu0
      %v2794 = vadd.f32 0.0, %v2793
      %2795 = vmatmul.f32.gmra.mxu0 %v2657
      %v2796 = vpop.f32.mrf.mxu0
      %v2797 = vadd.f32 0.0, %v2796
      %2798 = vmatmul.f32.gmra.mxu0 %v2660
      %v2799 = vpop.f32.mrf.mxu0
      %v2800 = vadd.f32 0.0, %v2799
      %2801 = vmatmul.f32.gmra.mxu0 %v2663
      %v2802 = vpop.f32.mrf.mxu0
      %v2803 = vadd.f32 0.0, %v2802
      %2804 = vmatmul.f32.gmra.mxu0 %v2666
      %v2805 = vpop.f32.mrf.mxu0
      %v2806 = vadd.f32 0.0, %v2805
      %2807 = vmatmul.f32.gmra.mxu0 %v2669
      %v2808 = vpop.f32.mrf.mxu0
      %v2809 = vadd.f32 0.0, %v2808
      %2810 = vmatmul.f32.gmra.mxu0 %v2672
      %v2811 = vpop.f32.mrf.mxu0
      %v2812 = vadd.f32 0.0, %v2811
      %2813 = vmatmul.f32.gmra.mxu0 %v2675
      %v2814 = vpop.f32.mrf.mxu0
      %v2815 = vadd.f32 0.0, %v2814
      %2816 = vmatmul.f32.gmra.mxu0 %v2678
      %v2817 = vpop.f32.mrf.mxu0
      %v2818 = vadd.f32 0.0, %v2817
      %2819 = vmatmul.f32.gmra.mxu0 %v2681
      %v2820 = vpop.f32.mrf.mxu0
      %v2821 = vadd.f32 0.0, %v2820
      %2822 = vmatmul.f32.gmra.mxu0 %v2684
      %v2823 = vpop.f32.mrf.mxu0
      %v2824 = vadd.f32 0.0, %v2823
      %2825 = vmatmul.f32.gmra.mxu0 %v2687
      %v2826 = vpop.f32.mrf.mxu0
      %v2827 = vadd.f32 0.0, %v2826
      %2828 = vmatmul.f32.gmra.mxu0 %v2690
      %v2829 = vpop.f32.mrf.mxu0
      %v2830 = vadd.f32 0.0, %v2829
      %2831 = vmatmul.f32.gmra.mxu0 %v2693
      %v2832 = vpop.f32.mrf.mxu0
      %v2833 = vadd.f32 0.0, %v2832
      %2834 = vmatmul.f32.gmra.mxu0 %v2696
      %v2835 = vpop.f32.mrf.mxu0
      %v2836 = vadd.f32 0.0, %v2835
      %2837 = vmatmul.f32.gmra.mxu0 %v2699
      %v2838 = vpop.f32.mrf.mxu0
      %v2839 = vadd.f32 0.0, %v2838
      %2840 = vmatmul.f32.gmra.mxu0 %v2702
      %v2841 = vpop.f32.mrf.mxu0
      %v2842 = vadd.f32 0.0, %v2841
      %2843 = vmatmul.f32.gmra.mxu0 %v2705
      %v2844 = vpop.f32.mrf.mxu0
      %v2845 = vadd.f32 0.0, %v2844
      %2846 = vmatmul.f32.gmra.mxu0 %v2708
      %v2847 = vpop.f32.mrf.mxu0
      %v2848 = vadd.f32 0.0, %v2847
      %2849 = vmatmul.f32.gmra.mxu0 %v2711
      %v2850 = vpop.f32.mrf.mxu0
      %v2851 = vadd.f32 0.0, %v2850
      %2852 = vmatmul.f32.gmra.mxu0 %v2714
      %v2853 = vpop.f32.mrf.mxu0
      %v2854 = vadd.f32 0.0, %v2853
      %2855 = vmatmul.f32.gmra.mxu0 %v2717
      %v2856 = vpop.f32.mrf.mxu0
      %v2857 = vadd.f32 0.0, %v2856
      %2858 = vmatmul.f32.gmra.mxu0 %v2720
      %v2859 = vpop.f32.mrf.mxu0
      %v2860 = vadd.f32 0.0, %v2859
      %2861 = vmatmul.f32.gmra.mxu0 %v2723
      %v2862 = vpop.f32.mrf.mxu0
      %v2863 = vadd.f32 0.0, %v2862
      %2864 = vmatmul.f32.gmra.mxu0 %v2726
      %v2865 = vpop.f32.mrf.mxu0
      %v2866 = vadd.f32 0.0, %v2865
      %2867 = vmatmul.f32.gmra.mxu0 %v2729
      %v2868 = vpop.f32.mrf.mxu0
      %v2869 = vadd.f32 0.0, %v2868
      %2870 = vmatmul.f32.gmra.mxu0 %v2732
      %v2871 = vpop.f32.mrf.mxu0
      %v2872 = vadd.f32 0.0, %v2871
      %2873 = vmatmul.f32.gmra.mxu0 %v2735
      %v2874 = vpop.f32.mrf.mxu0
      %v2875 = vadd.f32 0.0, %v2874
      %2876 = vmatmul.f32.gmra.mxu0 %v2738
      %v2877 = vpop.f32.mrf.mxu0
      %v2878 = vadd.f32 0.0, %v2877
      %2879 = vmatmul.f32.gmra.mxu0 %v2741
      %v2880 = vpop.f32.mrf.mxu0
      %v2881 = vadd.f32 0.0, %v2880
      %2882 = vmatmul.f32.gmra.mxu0 %v2744
      %v2883 = vpop.f32.mrf.mxu0
      %v2884 = vadd.f32 0.0, %v2883
      %2885 = vmatmul.f32.gmra.mxu0 %v2747
      %v2886 = vpop.f32.mrf.mxu0
      %v2887 = vadd.f32 0.0, %v2886
      %2888 = vmatmul.f32.gmra.mxu0 %v2750
      %v2889 = vpop.f32.mrf.mxu0
      %v2890 = vadd.f32 0.0, %v2889
      %2891 = vmatmul.f32.gmra.mxu0 %v2753
      %v2892 = vpop.f32.mrf.mxu0
      %v2893 = vadd.f32 0.0, %v2892
      %2894 = vmatmul.f32.gmra.mxu0 %v2756
      %v2895 = vpop.f32.mrf.mxu0
      %v2896 = vadd.f32 0.0, %v2895
      %2897 = vmatmul.f32.gmra.mxu0 %v2759
      %v2898 = vpop.f32.mrf.mxu0
      %v2899 = vadd.f32 0.0, %v2898
      %2900 = vmatmul.f32.gmra.mxu0 %v2762
      %v2901 = vpop.f32.mrf.mxu0
      %v2902 = vadd.f32 0.0, %v2901
      %2903 = vmatmul.f32.gmra.mxu0 %v2765
      %v2904 = vpop.f32.mrf.mxu0
      %v2905 = vadd.f32 0.0, %v2904
      %2906 = vmatmul.f32.gmra.mxu0 %v2768
      %v2907 = vpop.f32.mrf.mxu0
      %v2908 = vadd.f32 0.0, %v2907
      %2909 = vdwg.mxu0
      %v2910 = vadd.f32 %v2568, %v2791
      %v2911 = vadd.f32 %v2569, %v2794
      %v2912 = vadd.f32 %v2570, %v2797
      %v2913 = vadd.f32 %v2571, %v2800
      %v2914 = vadd.f32 %v2572, %v2803
      %v2915 = vadd.f32 %v2573, %v2806
      %v2916 = vadd.f32 %v2574, %v2809
      %v2917 = vadd.f32 %v2575, %v2812
      %v2918 = vadd.f32 %v2576, %v2815
      %v2919 = vadd.f32 %v2577, %v2818
      %v2920 = vadd.f32 %v2578, %v2821
      %v2921 = vadd.f32 %v2579, %v2824
      %v2922 = vadd.f32 %v2580, %v2827
      %v2923 = vadd.f32 %v2581, %v2830
      %v2924 = vadd.f32 %v2582, %v2833
      %v2925 = vadd.f32 %v2583, %v2836
      %v2926 = vadd.f32 %v2584, %v2839
      %v2927 = vadd.f32 %v2585, %v2842
      %v2928 = vadd.f32 %v2586, %v2845
      %v2929 = vadd.f32 %v2587, %v2848
      %v2930 = vadd.f32 %v2588, %v2851
      %v2931 = vadd.f32 %v2589, %v2854
      %v2932 = vadd.f32 %v2590, %v2857
      %v2933 = vadd.f32 %v2591, %v2860
      %v2934 = vadd.f32 %v2592, %v2863
      %v2935 = vadd.f32 %v2593, %v2866
      %v2936 = vadd.f32 %v2594, %v2869
      %v2937 = vadd.f32 %v2595, %v2872
      %v2938 = vadd.f32 %v2596, %v2875
      %v2939 = vadd.f32 %v2597, %v2878
      %v2940 = vadd.f32 %v2598, %v2881
      %v2941 = vadd.f32 %v2599, %v2884
      %v2942 = vadd.f32 %v2600, %v2887
      %v2943 = vadd.f32 %v2601, %v2890
      %v2944 = vadd.f32 %v2602, %v2893
      %v2945 = vadd.f32 %v2603, %v2896
      %v2946 = vadd.f32 %v2604, %v2899
      %v2947 = vadd.f32 %v2605, %v2902
      %v2948 = vadd.f32 %v2606, %v2905
      %v2949 = vadd.f32 %v2607, %v2908
      %v2950 = vld [vmem:[%s197 + $0x3d] sm:$0xff]
      %v2951 = vld [vmem:[%s197 + $0x45] sm:$0xff]
      %v2952 = vld [vmem:[%s197 + $0x4d] sm:$0xff]
      %v2953 = vld [vmem:[%s197 + $0x55] sm:$0xff]
      %v2954 = vld [vmem:[%s197 + $0x5d] sm:$0xff]
      %v2955 = vld [vmem:[%s197 + $0x65] sm:$0xff]
      %v2956 = vld [vmem:[%s197 + $0x6d] sm:$0xff]
      %v2957 = vld [vmem:[%s197 + $0x75] sm:$0xff]
      %v2958 = vld [vmem:[%s197 + $0x7d] sm:$0xff]
      %v2959 = vld [vmem:[%s197 + $0x85] sm:$0xff]
      %v2960 = vld [vmem:[%s197 + $0x8d] sm:$0xff]
      %v2961 = vld [vmem:[%s197 + $0x95] sm:$0xff]
      %v2962 = vld [vmem:[%s197 + $0x9d] sm:$0xff]
      %v2963 = vld [vmem:[%s197 + $0xa5] sm:$0xff]
      %v2964 = vld [vmem:[%s197 + $0xad] sm:$0xff]
      %v2965 = vld [vmem:[%s197 + $0xb5] sm:$0xff]
      %v2966 = vld [vmem:[%s197 + $0xbd] sm:$0xff]
      %v2967 = vld [vmem:[%s197 + $0xc5] sm:$0xff]
      %v2968 = vld [vmem:[%s197 + $0xcd] sm:$0xff]
      %v2969 = vld [vmem:[%s197 + $0xd5] sm:$0xff]
      %v2970 = vld [vmem:[%s197 + $0xdd] sm:$0xff]
      %v2971 = vld [vmem:[%s197 + $0xe5] sm:$0xff]
      %v2972 = vld [vmem:[%s197 + $0xed] sm:$0xff]
      %v2973 = vld [vmem:[%s197 + $0xf5] sm:$0xff]
      %v2974 = vld [vmem:[%s197 + $0xfd] sm:$0xff]
      %v2975 = vld [vmem:[%s197 + $0x105] sm:$0xff]
      %v2976 = vld [vmem:[%s197 + $0x10d] sm:$0xff]
      %v2977 = vld [vmem:[%s197 + $0x115] sm:$0xff]
      %v2978 = vld [vmem:[%s197 + $0x11d] sm:$0xff]
      %v2979 = vld [vmem:[%s197 + $0x125] sm:$0xff]
      %v2980 = vld [vmem:[%s197 + $0x12d] sm:$0xff]
      %v2981 = vld [vmem:[%s197 + $0x135] sm:$0xff]
      %v2982 = vld [vmem:[%s197 + $0x13d] sm:$0xff]
      %v2983 = vld [vmem:[%s197 + $0x145] sm:$0xff]
      %v2984 = vld [vmem:[%s197 + $0x14d] sm:$0xff]
      %v2985 = vld [vmem:[%s197 + $0x155] sm:$0xff]
      %v2986 = vld [vmem:[%s197 + $0x15d] sm:$0xff]
      %v2987 = vld [vmem:[%s197 + $0x165] sm:$0xff]
      %v2988 = vld [vmem:[%s197 + $0x16d] sm:$0xff]
      %v2989 = vld [vmem:[%s197 + $0x175] sm:$0xff]
      %s2990 = scalar_lea.vmem %s1, 32
      %v2991 = vld [vmem:[%s2990] sm:$0xf]
      %v2993 = vsel %vm254, %v2950, 0
      %v2996 = vsel %vm254, %v2951, 0
      %v2999 = vsel %vm254, %v2952, 0
      %v3002 = vsel %vm254, %v2953, 0
      %v3005 = vsel %vm254, %v2954, 0
      %v3008 = vsel %vm254, %v2955, 0
      %v3011 = vsel %vm254, %v2956, 0
      %v3014 = vsel %vm254, %v2957, 0
      %v3017 = vsel %vm254, %v2958, 0
      %v3020 = vsel %vm254, %v2959, 0
      %v3023 = vsel %vm254, %v2960, 0
      %v3026 = vsel %vm254, %v2961, 0
      %v3029 = vsel %vm254, %v2962, 0
      %v3032 = vsel %vm254, %v2963, 0
      %v3035 = vsel %vm254, %v2964, 0
      %v3038 = vsel %vm254, %v2965, 0
      %v3041 = vsel %vm254, %v2966, 0
      %v3044 = vsel %vm254, %v2967, 0
      %v3047 = vsel %vm254, %v2968, 0
      %v3050 = vsel %vm254, %v2969, 0
      %v3053 = vsel %vm254, %v2970, 0
      %v3056 = vsel %vm254, %v2971, 0
      %v3059 = vsel %vm254, %v2972, 0
      %v3062 = vsel %vm254, %v2973, 0
      %v3065 = vsel %vm254, %v2974, 0
      %v3068 = vsel %vm254, %v2975, 0
      %v3071 = vsel %vm254, %v2976, 0
      %v3074 = vsel %vm254, %v2977, 0
      %v3077 = vsel %vm254, %v2978, 0
      %v3080 = vsel %vm254, %v2979, 0
      %v3083 = vsel %vm254, %v2980, 0
      %v3086 = vsel %vm254, %v2981, 0
      %v3089 = vsel %vm254, %v2982, 0
      %v3092 = vsel %vm254, %v2983, 0
      %v3095 = vsel %vm254, %v2984, 0
      %v3098 = vsel %vm254, %v2985, 0
      %v3101 = vsel %vm254, %v2986, 0
      %v3104 = vsel %vm254, %v2987, 0
      %v3107 = vsel %vm254, %v2988, 0
      %v3110 = vsel %vm254, %v2989, 0
      %v3113 = vsel %vm375, %v2991, 0
      %3115 = vmatpush.msra.mxu0 0.0
      %3116 = vmatpush.msra.mxu0 0.0
      %3117 = vmatpush.msra.mxu0 0.0
      %3118 = vmatpush.msra.mxu0 0.0
      %3119 = vmatpush.msra.mxu0 0.0
      %3120 = vmatpush.msra.mxu0 0.0
      %3121 = vmatpush.msra.mxu0 0.0
      %3122 = vmatpush.msra.mxu0 0.0
      %3123 = vmatpush.msra.mxu0 0.0
      %3124 = vmatpush.msra.mxu0 0.0
      %3125 = vmatpush.msra.mxu0 0.0
      %3126 = vmatpush.msra.mxu0 0.0
      %3127 = vmatpush.msra.mxu0 0.0
      %3128 = vmatpush.msra.mxu0 0.0
      %3129 = vmatpush.msra.mxu0 0.0
      %3130 = vmatpush.msra.mxu0 %v3113
      %3131 = vmatmul.f32.gmra.mxu0 %v2993
      %v3132 = vpop.f32.mrf.mxu0
      %v3133 = vadd.f32 0.0, %v3132
      %3134 = vmatmul.f32.gmra.mxu0 %v2996
      %v3135 = vpop.f32.mrf.mxu0
      %v3136 = vadd.f32 0.0, %v3135
      %3137 = vmatmul.f32.gmra.mxu0 %v2999
      %v3138 = vpop.f32.mrf.mxu0
      %v3139 = vadd.f32 0.0, %v3138
      %3140 = vmatmul.f32.gmra.mxu0 %v3002
      %v3141 = vpop.f32.mrf.mxu0
      %v3142 = vadd.f32 0.0, %v3141
      %3143 = vmatmul.f32.gmra.mxu0 %v3005
      %v3144 = vpop.f32.mrf.mxu0
      %v3145 = vadd.f32 0.0, %v3144
      %3146 = vmatmul.f32.gmra.mxu0 %v3008
      %v3147 = vpop.f32.mrf.mxu0
      %v3148 = vadd.f32 0.0, %v3147
      %3149 = vmatmul.f32.gmra.mxu0 %v3011
      %v3150 = vpop.f32.mrf.mxu0
      %v3151 = vadd.f32 0.0, %v3150
      %3152 = vmatmul.f32.gmra.mxu0 %v3014
      %v3153 = vpop.f32.mrf.mxu0
      %v3154 = vadd.f32 0.0, %v3153
      %3155 = vmatmul.f32.gmra.mxu0 %v3017
      %v3156 = vpop.f32.mrf.mxu0
      %v3157 = vadd.f32 0.0, %v3156
      %3158 = vmatmul.f32.gmra.mxu0 %v3020
      %v3159 = vpop.f32.mrf.mxu0
      %v3160 = vadd.f32 0.0, %v3159
      %3161 = vmatmul.f32.gmra.mxu0 %v3023
      %v3162 = vpop.f32.mrf.mxu0
      %v3163 = vadd.f32 0.0, %v3162
      %3164 = vmatmul.f32.gmra.mxu0 %v3026
      %v3165 = vpop.f32.mrf.mxu0
      %v3166 = vadd.f32 0.0, %v3165
      %3167 = vmatmul.f32.gmra.mxu0 %v3029
      %v3168 = vpop.f32.mrf.mxu0
      %v3169 = vadd.f32 0.0, %v3168
      %3170 = vmatmul.f32.gmra.mxu0 %v3032
      %v3171 = vpop.f32.mrf.mxu0
      %v3172 = vadd.f32 0.0, %v3171
      %3173 = vmatmul.f32.gmra.mxu0 %v3035
      %v3174 = vpop.f32.mrf.mxu0
      %v3175 = vadd.f32 0.0, %v3174
      %3176 = vmatmul.f32.gmra.mxu0 %v3038
      %v3177 = vpop.f32.mrf.mxu0
      %v3178 = vadd.f32 0.0, %v3177
      %3179 = vmatmul.f32.gmra.mxu0 %v3041
      %v3180 = vpop.f32.mrf.mxu0
      %v3181 = vadd.f32 0.0, %v3180
      %3182 = vmatmul.f32.gmra.mxu0 %v3044
      %v3183 = vpop.f32.mrf.mxu0
      %v3184 = vadd.f32 0.0, %v3183
      %3185 = vmatmul.f32.gmra.mxu0 %v3047
      %v3186 = vpop.f32.mrf.mxu0
      %v3187 = vadd.f32 0.0, %v3186
      %3188 = vmatmul.f32.gmra.mxu0 %v3050
      %v3189 = vpop.f32.mrf.mxu0
      %v3190 = vadd.f32 0.0, %v3189
      %3191 = vmatmul.f32.gmra.mxu0 %v3053
      %v3192 = vpop.f32.mrf.mxu0
      %v3193 = vadd.f32 0.0, %v3192
      %3194 = vmatmul.f32.gmra.mxu0 %v3056
      %v3195 = vpop.f32.mrf.mxu0
      %v3196 = vadd.f32 0.0, %v3195
      %3197 = vmatmul.f32.gmra.mxu0 %v3059
      %v3198 = vpop.f32.mrf.mxu0
      %v3199 = vadd.f32 0.0, %v3198
      %3200 = vmatmul.f32.gmra.mxu0 %v3062
      %v3201 = vpop.f32.mrf.mxu0
      %v3202 = vadd.f32 0.0, %v3201
      %3203 = vmatmul.f32.gmra.mxu0 %v3065
      %v3204 = vpop.f32.mrf.mxu0
      %v3205 = vadd.f32 0.0, %v3204
      %3206 = vmatmul.f32.gmra.mxu0 %v3068
      %v3207 = vpop.f32.mrf.mxu0
      %v3208 = vadd.f32 0.0, %v3207
      %3209 = vmatmul.f32.gmra.mxu0 %v3071
      %v3210 = vpop.f32.mrf.mxu0
      %v3211 = vadd.f32 0.0, %v3210
      %3212 = vmatmul.f32.gmra.mxu0 %v3074
      %v3213 = vpop.f32.mrf.mxu0
      %v3214 = vadd.f32 0.0, %v3213
      %3215 = vmatmul.f32.gmra.mxu0 %v3077
      %v3216 = vpop.f32.mrf.mxu0
      %v3217 = vadd.f32 0.0, %v3216
      %3218 = vmatmul.f32.gmra.mxu0 %v3080
      %v3219 = vpop.f32.mrf.mxu0
      %v3220 = vadd.f32 0.0, %v3219
      %3221 = vmatmul.f32.gmra.mxu0 %v3083
      %v3222 = vpop.f32.mrf.mxu0
      %v3223 = vadd.f32 0.0, %v3222
      %3224 = vmatmul.f32.gmra.mxu0 %v3086
      %v3225 = vpop.f32.mrf.mxu0
      %v3226 = vadd.f32 0.0, %v3225
      %3227 = vmatmul.f32.gmra.mxu0 %v3089
      %v3228 = vpop.f32.mrf.mxu0
      %v3229 = vadd.f32 0.0, %v3228
      %3230 = vmatmul.f32.gmra.mxu0 %v3092
      %v3231 = vpop.f32.mrf.mxu0
      %v3232 = vadd.f32 0.0, %v3231
      %3233 = vmatmul.f32.gmra.mxu0 %v3095
      %v3234 = vpop.f32.mrf.mxu0
      %v3235 = vadd.f32 0.0, %v3234
      %3236 = vmatmul.f32.gmra.mxu0 %v3098
      %v3237 = vpop.f32.mrf.mxu0
      %v3238 = vadd.f32 0.0, %v3237
      %3239 = vmatmul.f32.gmra.mxu0 %v3101
      %v3240 = vpop.f32.mrf.mxu0
      %v3241 = vadd.f32 0.0, %v3240
      %3242 = vmatmul.f32.gmra.mxu0 %v3104
      %v3243 = vpop.f32.mrf.mxu0
      %v3244 = vadd.f32 0.0, %v3243
      %3245 = vmatmul.f32.gmra.mxu0 %v3107
      %v3246 = vpop.f32.mrf.mxu0
      %v3247 = vadd.f32 0.0, %v3246
      %3248 = vmatmul.f32.gmra.mxu0 %v3110
      %v3249 = vpop.f32.mrf.mxu0
      %v3250 = vadd.f32 0.0, %v3249
      %3251 = vdwg.mxu0
      %v3252 = vadd.f32 %v2910, %v3133
      %v3253 = vadd.f32 %v2911, %v3136
      %v3254 = vadd.f32 %v2912, %v3139
      %v3255 = vadd.f32 %v2913, %v3142
      %v3256 = vadd.f32 %v2914, %v3145
      %v3257 = vadd.f32 %v2915, %v3148
      %v3258 = vadd.f32 %v2916, %v3151
      %v3259 = vadd.f32 %v2917, %v3154
      %v3260 = vadd.f32 %v2918, %v3157
      %v3261 = vadd.f32 %v2919, %v3160
      %v3262 = vadd.f32 %v2920, %v3163
      %v3263 = vadd.f32 %v2921, %v3166
      %v3264 = vadd.f32 %v2922, %v3169
      %v3265 = vadd.f32 %v2923, %v3172
      %v3266 = vadd.f32 %v2924, %v3175
      %v3267 = vadd.f32 %v2925, %v3178
      %v3268 = vadd.f32 %v2926, %v3181
      %v3269 = vadd.f32 %v2927, %v3184
      %v3270 = vadd.f32 %v2928, %v3187
      %v3271 = vadd.f32 %v2929, %v3190
      %v3272 = vadd.f32 %v2930, %v3193
      %v3273 = vadd.f32 %v2931, %v3196
      %v3274 = vadd.f32 %v2932, %v3199
      %v3275 = vadd.f32 %v2933, %v3202
      %v3276 = vadd.f32 %v2934, %v3205
      %v3277 = vadd.f32 %v2935, %v3208
      %v3278 = vadd.f32 %v2936, %v3211
      %v3279 = vadd.f32 %v2937, %v3214
      %v3280 = vadd.f32 %v2938, %v3217
      %v3281 = vadd.f32 %v2939, %v3220
      %v3282 = vadd.f32 %v2940, %v3223
      %v3283 = vadd.f32 %v2941, %v3226
      %v3284 = vadd.f32 %v2942, %v3229
      %v3285 = vadd.f32 %v2943, %v3232
      %v3286 = vadd.f32 %v2944, %v3235
      %v3287 = vadd.f32 %v2945, %v3238
      %v3288 = vadd.f32 %v2946, %v3241
      %v3289 = vadd.f32 %v2947, %v3244
      %v3290 = vadd.f32 %v2948, %v3247
      %v3291 = vadd.f32 %v2949, %v3250
      %3292 = vst.msk [vmem:[%s206] sm:$0xff] %vm254, %v3252
      %3293 = vst.msk [vmem:[%s206 + $0x8] sm:$0xff] %vm254, %v3253
      %3294 = vst.msk [vmem:[%s206 + $0x10] sm:$0xff] %vm254, %v3254
      %3295 = vst.msk [vmem:[%s206 + $0x18] sm:$0xff] %vm254, %v3255
      %3296 = vst.msk [vmem:[%s206 + $0x20] sm:$0xff] %vm254, %v3256
      %3297 = vst.msk [vmem:[%s206 + $0x28] sm:$0xff] %vm254, %v3257
      %3298 = vst.msk [vmem:[%s206 + $0x30] sm:$0xff] %vm254, %v3258
      %3299 = vst.msk [vmem:[%s206 + $0x38] sm:$0xff] %vm254, %v3259
      %3300 = vst.msk [vmem:[%s206 + $0x40] sm:$0xff] %vm254, %v3260
      %3301 = vst.msk [vmem:[%s206 + $0x48] sm:$0xff] %vm254, %v3261
      %3302 = vst.msk [vmem:[%s206 + $0x50] sm:$0xff] %vm254, %v3262
      %3303 = vst.msk [vmem:[%s206 + $0x58] sm:$0xff] %vm254, %v3263
      %3304 = vst.msk [vmem:[%s206 + $0x60] sm:$0xff] %vm254, %v3264
      %3305 = vst.msk [vmem:[%s206 + $0x68] sm:$0xff] %vm254, %v3265
      %3306 = vst.msk [vmem:[%s206 + $0x70] sm:$0xff] %vm254, %v3266
      %3307 = vst.msk [vmem:[%s206 + $0x78] sm:$0xff] %vm254, %v3267
      %3308 = vst.msk [vmem:[%s206 + $0x80] sm:$0xff] %vm254, %v3268
      %3309 = vst.msk [vmem:[%s206 + $0x88] sm:$0xff] %vm254, %v3269
      %3310 = vst.msk [vmem:[%s206 + $0x90] sm:$0xff] %vm254, %v3270
      %3311 = vst.msk [vmem:[%s206 + $0x98] sm:$0xff] %vm254, %v3271
      %3312 = vst.msk [vmem:[%s206 + $0xa0] sm:$0xff] %vm254, %v3272
      %3313 = vst.msk [vmem:[%s206 + $0xa8] sm:$0xff] %vm254, %v3273
      %3314 = vst.msk [vmem:[%s206 + $0xb0] sm:$0xff] %vm254, %v3274
      %3315 = vst.msk [vmem:[%s206 + $0xb8] sm:$0xff] %vm254, %v3275
      %3316 = vst.msk [vmem:[%s206 + $0xc0] sm:$0xff] %vm254, %v3276
      %3317 = vst.msk [vmem:[%s206 + $0xc8] sm:$0xff] %vm254, %v3277
      %3318 = vst.msk [vmem:[%s206 + $0xd0] sm:$0xff] %vm254, %v3278
      %3319 = vst.msk [vmem:[%s206 + $0xd8] sm:$0xff] %vm254, %v3279
      %3320 = vst.msk [vmem:[%s206 + $0xe0] sm:$0xff] %vm254, %v3280
      %3321 = vst.msk [vmem:[%s206 + $0xe8] sm:$0xff] %vm254, %v3281
      %3322 = vst.msk [vmem:[%s206 + $0xf0] sm:$0xff] %vm254, %v3282
      %3323 = vst.msk [vmem:[%s206 + $0xf8] sm:$0xff] %vm254, %v3283
      %3324 = vst.msk [vmem:[%s206 + $0x100] sm:$0xff] %vm254, %v3284
      %3325 = vst.msk [vmem:[%s206 + $0x108] sm:$0xff] %vm254, %v3285
      %3326 = vst.msk [vmem:[%s206 + $0x110] sm:$0xff] %vm254, %v3286
      %3327 = vst.msk [vmem:[%s206 + $0x118] sm:$0xff] %vm254, %v3287
      %3328 = vst.msk [vmem:[%s206 + $0x120] sm:$0xff] %vm254, %v3288
      %3329 = vst.msk [vmem:[%s206 + $0x128] sm:$0xff] %vm254, %v3289
      %3330 = vst.msk [vmem:[%s206 + $0x130] sm:$0xff] %vm254, %v3290
      %3331 = vst.msk [vmem:[%s206 + $0x138] sm:$0xff] %vm254, %v3291
      %s3332 = smul.u32 40, %s19
      %p3333 = scmp.lt.s32.totalorder %s18, 1
      %s3334 = scalar_select %p3333, %s18, 1
      %p3335 = scmp.lt.s32.totalorder %s3332, 39
      %s3336 = scalar_select %p3335, %s3332, 39
      %s3337 = smul.addr %s3334, 40
      %s3338 = sadd.s32 %s3336, %s3337
      %s3339 = smul.addr %s3338, 8
      %s3340 = scalar_lea.vmem %s3, %s3339
      // Predicated region
      $region33: #{spade_forward.8} parent=31 // pred_check
        %p3341 = pneg %p116
      $region34: #{spade_forward.8} parent=31 // pred_check_branch
        %3343 = sbr.rel (%p3341) target = $region36
      $region35: #{spade_forward.8} parent=31 // pred_region
        %s3344 = smul.u32 40, %s19
      $region36: #{spade_forward.8} parent=31 // pred_fallthru
        _
    $region32: #{spade_forward.8} parent=5 // pred_fallthru
      _
    %p3345 = scmp.le.s32.totalorder 2, %s9
    // Predicated region
    $region37: #{spade_forward.8} parent=5 // pred_check
      %p3346 = pneg %p3345
    $region38: #{spade_forward.8} parent=5 // pred_check_branch
      %3348 = sbr.rel (%p3346) target = $region40
    $region39: #{spade_forward.8} parent=5 // pred_region
      %s3349 = ssub.s32 %s9, 2
      // Predicated region
      $region41: #{spade_forward.8} parent=39 // pred_check
        %p3350 = pneg %p122
      $region42: #{spade_forward.8} parent=39 // pred_check_branch
        %3352 = sbr.rel (%p3350) target = $region44
      $region43: #{spade_forward.8} parent=39 // pred_region
        %s3353 = smul.u32 40, %s21
        %p3354 = scmp.lt.s32.totalorder %s20, 1
        %s3355 = scalar_select %p3354, %s20, 1
        %p3356 = scmp.lt.s32.totalorder %s3353, 39
        %s3357 = scalar_select %p3356, %s3353, 39
        %s3358 = smul.addr %s3355, 40
        %s3359 = sadd.s32 %s3357, %s3358
        %s3360 = smul.addr %s3359, 8
        %s3361 = scalar_lea.vmem %s3, %s3360
      $region44: #{spade_forward.8} parent=39 // pred_fallthru
        _
    $region40: #{spade_forward.8} parent=5 // pred_fallthru
      _
  $region6: #{spade_forward.8} parent=0 // loop_footer
    %s13 = sadd.s32 1, %s9
  $region7: #{spade_forward.8} parent=0 // loop_footer_branch
    %8 = sbr.rel target = $region3
  $region8: #{spade_forward.8} parent=0 // loop_exit
    _

// kernel: spade_forward.7
$region0: #{spade_forward.7}
  #allocation0 [shape = 'u32[]', space=smem, size = 0x4, offset = 0x4, fixed_abs, tag = 'smem constant byte address 0x4 - core index']
  #allocation1 [shape = 'u32[72,128]{1,0:T(1,128)}', space=vmem, size = 0x9000, scoped, tag = 'internal scratch']
  #allocation2 [shape = 'f32[400,32]{1,0:T(8,128)}', space=vmem, size = 0x32000, scoped, tag = 'scratch operand']
  %s0 = inlined_call_operand.vmem [shape: f32[2,320,4], index: 0, kind: input, shape index: {}]
  %s1 = inlined_call_operand.vmem [shape: f32[2,1,480,4], index: 1, kind: input, shape index: {}]
  %s2 = inlined_call_operand.vmem [shape: f32[1,400,1], index: 2, kind: input, shape index: {}]
  %s3 = inlined_call_operand.vmem [shape: f32[1,4], index: 3, kind: input, shape index: {}]
  %s4 = inlined_call_operand.vmem [shape: f32[1,4], index: 4, kind: input, shape index: {}]
  %s5 = inlined_call_operand.vmem [shape: f32[9,4,32], index: 5, kind: input, shape index: {}]
  %s6 = inlined_call_operand.vmem [shape: f32[1,32], index: 6, kind: input, shape index: {}]
  %s7 = inlined_call_operand.vmem [shape: f32[9,32,8], index: 7, kind: input, shape index: {}]
  %s8 = inlined_call_operand.vmem [shape: f32[1,8], index: 8, kind: input, shape index: {}]
  %s9 = inlined_call_operand.vmem [shape: f32[2,320,4], index: 9, kind: output, shape index: {}]
  %s10 = sld [smem:[#allocation0]]
  $region69: #{spade_forward.7} parent=0
    _
  %s12 = ssub.s32 1, %s10
  %s13 = scalar_select 0, %s12, %s10
  loop: start=0, step=1, limit=4
  $region2: #{spade_forward.7} parent=0 // loop_pre_header
    _
  $region3: #{spade_forward.7} parent=0 // loop_header
    %s15 = sphi 0, %s19
    %p16 = scmp.ge.s32.totalorder %s15, 4
    %s22 = sphi 0, %s34
    %s23 = sphi 0, %s30
    %s24 = sphi 0, %s22
    %s25 = sphi 0, %s23
    %s26 = sphi 0, %s24
    %s27 = sphi 0, %s25
    %s39 = sphi 0, %s41
    %s42 = sphi 0, %s39
    %s43 = sphi 0, %s42
    %s59 = sphi 0, %s43
    %s67 = sphi 0, %s69
    %s70 = sphi 0, %s67
    %s71 = sphi 0, %s70
    %s87 = sphi 0, %s71
    %s93 = sphi 0, %s95
    %s96 = sphi 0, %s93
    %s97 = sphi 0, %s96
    %s113 = sphi 0, %s97
    %s117 = sphi 0, %s117
    %s119 = sphi 0, %s117
    %s120 = sphi 0, %s119
    %s134 = sphi 0, %s120
    %s138 = sphi 0, %s138
    %s140 = sphi 0, %s138
    %s141 = sphi 0, %s140
    %s155 = sphi 0, %s141
    %s159 = sphi 0, %s159
    %s161 = sphi 0, %s159
    %s162 = sphi 0, %s161
    %s176 = sphi 0, %s162
    %s180 = sphi 0, %s180
    %s182 = sphi 0, %s180
    %s183 = sphi 0, %s182
    %s197 = sphi 0, %s183
    %s201 = sphi 0, %s201
    %s203 = sphi 0, %s201
    %s204 = sphi 0, %s203
    %s218 = sphi 0, %s204
    %s222 = sphi 0, %s222
    %s224 = sphi 0, %s222
    %s225 = sphi 0, %s224
    %s239 = sphi 0, %s225
    %s247 = sphi 0, %s249
    %s250 = sphi 0, %s247
    %s251 = sphi 0, %s250
    %s267 = sphi 0, %s251
  $region4: #{spade_forward.7} parent=0 // loop_header_branch
    %18 = sbr.rel (%p16) target = $region8
  $region5: #{spade_forward.7} parent=0 // loop_body
    %s20 = ssub.s32 %s15, 1
    %s21 = ssub.s32 %s15, 2
    %s28 = sadd.s32 1, %s23
    %p29 = scmp.ge.s32.totalorder %s28, 1
    %s30 = scalar_select %p29, 0, %s28
    %s31 = sadd.s32 1, %s22
    %s32 = scalar_select %p29, %s31, %s22
    %p33 = scmp.ge.s32.totalorder %s32, 2
    %s34 = scalar_select %p33, 0, %s32
    %s35 = ssub.s32 %s22, %s34
    %s36 = ssub.s32 %s23, %s30
    %s37 = sor.u32 %s35, %s36
    %p38 = scmp.eq.s32.totalorder %s37, 0
    %s40 = sadd.s32 %s39, 1
    %s41 = scalar_select %p38, %s39, %s40
    %p44 = pneg %p38
    %p45 = scmp.eq.s32.totalorder %s15, 1
    %p46 = por %p44, %p45
    %p47 = scmp.ne.s32.totalorder %s39, %s42
    %p48 = scmp.eq.s32.totalorder %s15, 0
    %p49 = por %p47, %p48
    %p50 = scmp.ne.s32.totalorder %s39, %s42
    %p51 = scmp.eq.s32.totalorder %s20, 1
    %p52 = por %p50, %p51
    %p53 = scmp.ne.s32.totalorder %s42, %s43
    %p54 = scmp.eq.s32.totalorder %s20, 0
    %p55 = por %p53, %p54
    %p56 = scmp.ne.s32.totalorder %s42, %s43
    %p57 = scmp.eq.s32.totalorder %s21, 1
    %p58 = por %p56, %p57
    %p60 = scmp.ne.s32.totalorder %s43, %s59
    %p61 = scmp.eq.s32.totalorder %s21, 0
    %p62 = por %p60, %p61
    %s63 = ssub.s32 %s22, %s34
    %s64 = ssub.s32 %s23, %s30
    %s65 = sor.u32 %s63, %s64
    %p66 = scmp.eq.s32.totalorder %s65, 0
    %s68 = sadd.s32 %s67, 1
    %s69 = scalar_select %p66, %s67, %s68
    %p72 = pneg %p66
    %p73 = scmp.eq.s32.totalorder %s15, 1
    %p74 = por %p72, %p73
    %p75 = scmp.ne.s32.totalorder %s67, %s70
    %p76 = scmp.eq.s32.totalorder %s15, 0
    %p77 = por %p75, %p76
    %p78 = scmp.ne.s32.totalorder %s67, %s70
    %p79 = scmp.eq.s32.totalorder %s20, 1
    %p80 = por %p78, %p79
    %p81 = scmp.ne.s32.totalorder %s70, %s71
    %p82 = scmp.eq.s32.totalorder %s20, 0
    %p83 = por %p81, %p82
    %p84 = scmp.ne.s32.totalorder %s70, %s71
    %p85 = scmp.eq.s32.totalorder %s21, 1
    %p86 = por %p84, %p85
    %p88 = scmp.ne.s32.totalorder %s71, %s87
    %p89 = scmp.eq.s32.totalorder %s21, 0
    %p90 = por %p88, %p89
    %s91 = ssub.s32 %s23, %s30
    %p92 = scmp.eq.s32.totalorder %s91, 0
    %s94 = sadd.s32 %s93, 1
    %s95 = scalar_select %p92, %s93, %s94
    %p98 = pneg %p92
    %p99 = scmp.eq.s32.totalorder %s15, 1
    %p100 = por %p98, %p99
    %p101 = scmp.ne.s32.totalorder %s93, %s96
    %p102 = scmp.eq.s32.totalorder %s15, 0
    %p103 = por %p101, %p102
    %p104 = scmp.ne.s32.totalorder %s93, %s96
    %p105 = scmp.eq.s32.totalorder %s20, 1
    %p106 = por %p104, %p105
    %p107 = scmp.ne.s32.totalorder %s96, %s97
    %p108 = scmp.eq.s32.totalorder %s20, 0
    %p109 = por %p107, %p108
    %p110 = scmp.ne.s32.totalorder %s96, %s97
    %p111 = scmp.eq.s32.totalorder %s21, 1
    %p112 = por %p110, %p111
    %p114 = scmp.ne.s32.totalorder %s97, %s113
    %p115 = scmp.eq.s32.totalorder %s21, 0
    %p116 = por %p114, %p115
    %s118 = sadd.s32 %s117, 1
    %p121 = scmp.eq.s32.totalorder %s15, 1
    %p122 = scmp.ne.s32.totalorder %s117, %s119
    %p123 = scmp.eq.s32.totalorder %s15, 0
    %p124 = por %p122, %p123
    %p125 = scmp.ne.s32.totalorder %s117, %s119
    %p126 = scmp.eq.s32.totalorder %s20, 1
    %p127 = por %p125, %p126
    %p128 = scmp.ne.s32.totalorder %s119, %s120
    %p129 = scmp.eq.s32.totalorder %s20, 0
    %p130 = por %p128, %p129
    %p131 = scmp.ne.s32.totalorder %s119, %s120
    %p132 = scmp.eq.s32.totalorder %s21, 1
    %p133 = por %p131, %p132
    %p135 = scmp.ne.s32.totalorder %s120, %s134
    %p136 = scmp.eq.s32.totalorder %s21, 0
    %p137 = por %p135, %p136
    %s139 = sadd.s32 %s138, 1
    %p142 = scmp.eq.s32.totalorder %s15, 1
    %p143 = scmp.ne.s32.totalorder %s138, %s140
    %p144 = scmp.eq.s32.totalorder %s15, 0
    %p145 = por %p143, %p144
    %p146 = scmp.ne.s32.totalorder %s138, %s140
    %p147 = scmp.eq.s32.totalorder %s20, 1
    %p148 = por %p146, %p147
    %p149 = scmp.ne.s32.totalorder %s140, %s141
    %p150 = scmp.eq.s32.totalorder %s20, 0
    %p151 = por %p149, %p150
    %p152 = scmp.ne.s32.totalorder %s140, %s141
    %p153 = scmp.eq.s32.totalorder %s21, 1
    %p154 = por %p152, %p153
    %p156 = scmp.ne.s32.totalorder %s141, %s155
    %p157 = scmp.eq.s32.totalorder %s21, 0
    %p158 = por %p156, %p157
    %s160 = sadd.s32 %s159, 1
    %p163 = scmp.eq.s32.totalorder %s15, 1
    %p164 = scmp.ne.s32.totalorder %s159, %s161
    %p165 = scmp.eq.s32.totalorder %s15, 0
    %p166 = por %p164, %p165
    %p167 = scmp.ne.s32.totalorder %s159, %s161
    %p168 = scmp.eq.s32.totalorder %s20, 1
    %p169 = por %p167, %p168
    %p170 = scmp.ne.s32.totalorder %s161, %s162
    %p171 = scmp.eq.s32.totalorder %s20, 0
    %p172 = por %p170, %p171
    %p173 = scmp.ne.s32.totalorder %s161, %s162
    %p174 = scmp.eq.s32.totalorder %s21, 1
    %p175 = por %p173, %p174
    %p177 = scmp.ne.s32.totalorder %s162, %s176
    %p178 = scmp.eq.s32.totalorder %s21, 0
    %p179 = por %p177, %p178
    %s181 = sadd.s32 %s180, 1
    %p184 = scmp.eq.s32.totalorder %s15, 1
    %p185 = scmp.ne.s32.totalorder %s180, %s182
    %p186 = scmp.eq.s32.totalorder %s15, 0
    %p187 = por %p185, %p186
    %p188 = scmp.ne.s32.totalorder %s180, %s182
    %p189 = scmp.eq.s32.totalorder %s20, 1
    %p190 = por %p188, %p189
    %p191 = scmp.ne.s32.totalorder %s182, %s183
    %p192 = scmp.eq.s32.totalorder %s20, 0
    %p193 = por %p191, %p192
    %p194 = scmp.ne.s32.totalorder %s182, %s183
    %p195 = scmp.eq.s32.totalorder %s21, 1
    %p196 = por %p194, %p195
    %p198 = scmp.ne.s32.totalorder %s183, %s197
    %p199 = scmp.eq.s32.totalorder %s21, 0
    %p200 = por %p198, %p199
    %s202 = sadd.s32 %s201, 1
    %p205 = scmp.eq.s32.totalorder %s15, 1
    %p206 = scmp.ne.s32.totalorder %s201, %s203
    %p207 = scmp.eq.s32.totalorder %s15, 0
    %p208 = por %p206, %p207
    %p209 = scmp.ne.s32.totalorder %s201, %s203
    %p210 = scmp.eq.s32.totalorder %s20, 1
    %p211 = por %p209, %p210
    %p212 = scmp.ne.s32.totalorder %s203, %s204
    %p213 = scmp.eq.s32.totalorder %s20, 0
    %p214 = por %p212, %p213
    %p215 = scmp.ne.s32.totalorder %s203, %s204
    %p216 = scmp.eq.s32.totalorder %s21, 1
    %p217 = por %p215, %p216
    %p219 = scmp.ne.s32.totalorder %s204, %s218
    %p220 = scmp.eq.s32.totalorder %s21, 0
    %p221 = por %p219, %p220
    %s223 = sadd.s32 %s222, 1
    %p226 = scmp.eq.s32.totalorder %s15, 1
    %p227 = scmp.ne.s32.totalorder %s222, %s224
    %p228 = scmp.eq.s32.totalorder %s15, 0
    %p229 = por %p227, %p228
    %p230 = scmp.ne.s32.totalorder %s222, %s224
    %p231 = scmp.eq.s32.totalorder %s20, 1
    %p232 = por %p230, %p231
    %p233 = scmp.ne.s32.totalorder %s224, %s225
    %p234 = scmp.eq.s32.totalorder %s20, 0
    %p235 = por %p233, %p234
    %p236 = scmp.ne.s32.totalorder %s224, %s225
    %p237 = scmp.eq.s32.totalorder %s21, 1
    %p238 = por %p236, %p237
    %p240 = scmp.ne.s32.totalorder %s225, %s239
    %p241 = scmp.eq.s32.totalorder %s21, 0
    %p242 = por %p240, %p241
    %s243 = ssub.s32 %s22, %s34
    %s244 = ssub.s32 %s23, %s30
    %s245 = sor.u32 %s243, %s244
    %p246 = scmp.eq.s32.totalorder %s245, 0
    %s248 = sadd.s32 %s247, 1
    %s249 = scalar_select %p246, %s247, %s248
    %p252 = pneg %p246
    %p253 = scmp.eq.s32.totalorder %s15, 1
    %p254 = por %p252, %p253
    %p255 = scmp.ne.s32.totalorder %s247, %s250
    %p256 = scmp.eq.s32.totalorder %s15, 0
    %p257 = por %p255, %p256
    %p258 = scmp.ne.s32.totalorder %s247, %s250
    %p259 = scmp.eq.s32.totalorder %s20, 1
    %p260 = por %p258, %p259
    %p261 = scmp.ne.s32.totalorder %s250, %s251
    %p262 = scmp.eq.s32.totalorder %s20, 0
    %p263 = por %p261, %p262
    %p264 = scmp.ne.s32.totalorder %s250, %s251
    %p265 = scmp.eq.s32.totalorder %s21, 1
    %p266 = por %p264, %p265
    %p268 = scmp.ne.s32.totalorder %s251, %s267
    %p269 = scmp.eq.s32.totalorder %s21, 0
    %p270 = por %p268, %p269
    %p271 = scmp.le.s32.totalorder 1, %s15
    %p272 = scmp.lt.s32.totalorder %s15, 3
    %p273 = pnand %p271, %p272
    %p274 = pneg %p273
    // Predicated region
    $region9: #{spade_forward.7} parent=5 // pred_check
      _
    $region10: #{spade_forward.7} parent=5 // pred_check_branch
      %276 = sbr.rel (%p273) target = $region12
    $region11: #{spade_forward.7} parent=5 // pred_region
      %s277 = ssub.s32 %s15, 1
      // Predicated region
      $region13: #{spade_forward.7} parent=11 // pred_check
        %p278 = pneg %p109
      $region14: #{spade_forward.7} parent=11 // pred_check_branch
        %280 = sbr.rel (%p278) target = $region16
      $region15: #{spade_forward.7} parent=11 // pred_region
        %p281 = scmp.lt.s32.totalorder %s25, 0
        %s282 = scalar_select %p281, %s25, 0
        %s283 = smul.addr %s282, 50
        %s284 = smul.addr %s283, 8
        %s285 = scalar_lea.vmem %s2, %s284
      $region16: #{spade_forward.7} parent=11 // pred_fallthru
        _
      // Predicated region
      $region17: #{spade_forward.7} parent=11 // pred_check
        %p286 = pneg %p130
      $region18: #{spade_forward.7} parent=11 // pred_check_branch
        %288 = sbr.rel (%p286) target = $region20
      $region19: #{spade_forward.7} parent=11 // pred_region
        _
      $region20: #{spade_forward.7} parent=11 // pred_fallthru
        _
      // Predicated region
      $region21: #{spade_forward.7} parent=11 // pred_check
        %p289 = pneg %p151
      $region22: #{spade_forward.7} parent=11 // pred_check_branch
        %291 = sbr.rel (%p289) target = $region24
      $region23: #{spade_forward.7} parent=11 // pred_region
        _
      $region24: #{spade_forward.7} parent=11 // pred_fallthru
        _
      // Predicated region
      $region25: #{spade_forward.7} parent=11 // pred_check
        %p292 = pneg %p172
      $region26: #{spade_forward.7} parent=11 // pred_check_branch
        %294 = sbr.rel (%p292) target = $region28
      $region27: #{spade_forward.7} parent=11 // pred_region
        _
      $region28: #{spade_forward.7} parent=11 // pred_fallthru
        _
      // Predicated region
      $region29: #{spade_forward.7} parent=11 // pred_check
        %p295 = pneg %p193
      $region30: #{spade_forward.7} parent=11 // pred_check_branch
        %297 = sbr.rel (%p295) target = $region32
      $region31: #{spade_forward.7} parent=11 // pred_region
        _
      $region32: #{spade_forward.7} parent=11 // pred_fallthru
        _
      // Predicated region
      $region33: #{spade_forward.7} parent=11 // pred_check
        %p298 = pneg %p214
      $region34: #{spade_forward.7} parent=11 // pred_check_branch
        %300 = sbr.rel (%p298) target = $region36
      $region35: #{spade_forward.7} parent=11 // pred_region
        _
      $region36: #{spade_forward.7} parent=11 // pred_fallthru
        _
      // Predicated region
      $region37: #{spade_forward.7} parent=11 // pred_check
        %p301 = pneg %p235
      $region38: #{spade_forward.7} parent=11 // pred_check_branch
        %303 = sbr.rel (%p301) target = $region40
      $region39: #{spade_forward.7} parent=11 // pred_region
        _
      $region40: #{spade_forward.7} parent=11 // pred_fallthru
        _
    $region12: #{spade_forward.7} parent=5 // pred_fallthru
      _
    %p304 = scmp.lt.s32.totalorder %s15, 2
    // Predicated region
    $region41: #{spade_forward.7} parent=5 // pred_check
      %p305 = pneg %p304
    $region42: #{spade_forward.7} parent=5 // pred_check_branch
      %307 = sbr.rel (%p305) target = $region44
    $region43: #{spade_forward.7} parent=5 // pred_region
      // Predicated region
      $region45: #{spade_forward.7} parent=43 // pred_check
        %p308 = pneg %p49
      $region46: #{spade_forward.7} parent=43 // pred_check_branch
        %310 = sbr.rel (%p308) target = $region48
      $region47: #{spade_forward.7} parent=43 // pred_region
        %s311 = smul.u32 40, %s23
        %p312 = scmp.lt.s32.totalorder %s22, 1
        %s313 = scalar_select %p312, %s22, 1
        %p314 = scmp.lt.s32.totalorder %s311, 39
        %s315 = scalar_select %p314, %s311, 39
        %s316 = smul.addr %s313, 40
        %s317 = sadd.s32 %s315, %s316
        %s318 = smul.addr %s317, 8
        %s319 = scalar_lea.vmem %s0, %s318
        %s320 = smul.u32 40, %s23
      $region48: #{spade_forward.7} parent=43 // pred_fallthru
        _
      // Predicated region
      $region49: #{spade_forward.7} parent=43 // pred_check
        %p321 = pneg %p77
      $region50: #{spade_forward.7} parent=43 // pred_check_branch
        %323 = sbr.rel (%p321) target = $region52
      $region51: #{spade_forward.7} parent=43 // pred_region
        %p324 = scmp.lt.s32.totalorder %s22, 1
        %s325 = scalar_select %p324, %s22, 1
        %p326 = scmp.lt.s32.totalorder %s23, 0
        %s327 = scalar_select %p326, %s23, 0
        %s328 = smul.addr %s327, 60
        %s329 = smul.addr %s325, 60
        %s330 = sadd.s32 %s328, %s329
        %s331 = smul.addr %s330, 8
        %s332 = scalar_lea.vmem %s1, %s331
      $region52: #{spade_forward.7} parent=43 // pred_fallthru
        _
    $region44: #{spade_forward.7} parent=5 // pred_fallthru
      _
    %p333 = scmp.le.s32.totalorder 1, %s15
    %p334 = scmp.lt.s32.totalorder %s15, 3
    %p335 = pnand %p333, %p334
    %p336 = pneg %p335
    // Predicated region
    $region53: #{spade_forward.7} parent=5 // pred_check
      _
    $region54: #{spade_forward.7} parent=5 // pred_check_branch
      %338 = sbr.rel (%p335) target = $region56
    $region55: #{spade_forward.7} parent=5 // pred_region
      %s339 = ssub.s32 %s15, 1
      %s340 = smul.u32 40, %s25
      %p341 = scmp.lt.s32.totalorder %s24, 1
      %s342 = scalar_select %p341, %s24, 1
      %p343 = scmp.lt.s32.totalorder %s340, 39
      %s344 = scalar_select %p343, %s340, 39
      %s345 = smul.addr %s342, 40
      %s346 = sadd.s32 %s344, %s345
      %s347 = smul.addr %s346, 8
      %s348 = scalar_lea.vmem %s0, %s347
      %p349 = pneg %p55
      %p350 = pneg %p52
      %p351 = scmp.lt.s32.totalorder %s24, 1
      %s352 = scalar_select %p351, %s24, 1
      %p353 = scmp.lt.s32.totalorder %s25, 0
      %s354 = scalar_select %p353, %s25, 0
      %s355 = smul.addr %s354, 60
      %s356 = smul.addr %s352, 60
      %s357 = sadd.s32 %s355, %s356
      %s358 = smul.addr %s357, 8
      %s359 = scalar_lea.vmem %s1, %s358
      %p360 = pneg %p83
      %p361 = pneg %p80
      %p362 = scmp.lt.s32.totalorder %s25, 0
      %s363 = scalar_select %p362, %s25, 0
      %s364 = smul.addr %s363, 50
      %s365 = smul.addr %s364, 8
      %s366 = scalar_lea.vmem %s2, %s365
      %p367 = pneg %p109
      %p368 = pneg %p106
      %p369 = pneg %p130
      %p370 = pneg %p127
      %p371 = pneg %p151
      %p372 = pneg %p148
      %p373 = pneg %p172
      %p374 = pneg %p169
      %p375 = pneg %p193
      %p376 = pneg %p190
      %p377 = pneg %p214
      %p378 = pneg %p211
      %p379 = pneg %p235
      %p380 = pneg %p232
      %p381 = pneg %p263
      %p382 = pneg %p260
      %s383 = smul.u32 40, %s25
      %p384 = scmp.lt.s32.totalorder %s24, 1
      %s385 = scalar_select %p384, %s24, 1
      %p386 = scmp.lt.s32.totalorder %s383, 39
      %s387 = scalar_select %p386, %s383, 39
      %s388 = smul.addr %s385, 40
      %s389 = sadd.s32 %s387, %s388
      %s390 = smul.addr %s389, 8
      %s391 = scalar_lea.vmem %s9, %s390
      %s392 = smul.u32 40, %s25
      %p393 = scmp.lt.s32.totalorder %s24, 1
      %s394 = scalar_select %p393, %s24, 1
      %p395 = scmp.lt.s32.totalorder %s392, 39
      %s396 = scalar_select %p395, %s392, 39
      %s397 = smul.addr %s394, 40
      %s398 = sadd.s32 %s396, %s397
      %s399 = smul.addr %s398, 8
      %s400 = scalar_lea.vmem %s0, %s399
      %s401 = smul.u32 40, %s25
      %p402 = scmp.lt.s32.totalorder %s24, 1
      %s403 = scalar_select %p402, %s24, 1
      %p404 = scmp.lt.s32.totalorder %s25, 0
      %s405 = scalar_select %p404, %s25, 0
      %s406 = smul.addr %s405, 60
      %s407 = smul.addr %s403, 60
      %s408 = sadd.s32 %s406, %s407
      %s409 = smul.addr %s408, 8
      %s410 = scalar_lea.vmem %s1, %s409
      %p411 = scmp.lt.s32.totalorder %s25, 0
      %s412 = scalar_select %p411, %s25, 0
      %s413 = smul.addr %s412, 50
      %s414 = smul.addr %s413, 8
      %s415 = scalar_lea.vmem %s2, %s414
      %s416 = smul.u32 40, %s25
      %p417 = scmp.lt.s32.totalorder %s24, 1
      %s418 = scalar_select %p417, %s24, 1
      %p419 = scmp.lt.s32.totalorder %s416, 39
      %s420 = scalar_select %p419, %s416, 39
      %s421 = smul.addr %s418, 40
      %s422 = sadd.s32 %s420, %s421
      %s423 = smul.addr %s422, 8
      %s424 = scalar_lea.vmem %s9, %s423
      %s425 = smul.u32 40, %s25
      %v426 = vld [vmem:[%s6] sm:$0x1]
      %v428 = vperm.slane %v426, 0
      %v430 = vadd.f32 %v428, 0.0
      %v431 = vld [vmem:[%s410 + $0x13] sm:$0xff]
      %v432 = vld [vmem:[%s410 + $0x1b] sm:$0xff]
      %v433 = vld [vmem:[%s410 + $0x23] sm:$0xff]
      %v434 = vld [vmem:[%s410 + $0x2b] sm:$0xff]
      %v435 = vld [vmem:[%s410 + $0x33] sm:$0xff]
      %v436 = vld [vmem:[%s410 + $0x3b] sm:$0xff]
      %v437 = vld [vmem:[%s410 + $0x43] sm:$0xff]
      %v438 = vld [vmem:[%s410 + $0x4b] sm:$0xff]
      %v439 = vld [vmem:[%s410 + $0x53] sm:$0xff]
      %v440 = vld [vmem:[%s410 + $0x5b] sm:$0xff]
      %v441 = vld [vmem:[%s410 + $0x63] sm:$0xff]
      %v442 = vld [vmem:[%s410 + $0x6b] sm:$0xff]
      %v443 = vld [vmem:[%s410 + $0x73] sm:$0xff]
      %v444 = vld [vmem:[%s410 + $0x7b] sm:$0xff]
      %v445 = vld [vmem:[%s410 + $0x83] sm:$0xff]
      %v446 = vld [vmem:[%s410 + $0x8b] sm:$0xff]
      %v447 = vld [vmem:[%s410 + $0x93] sm:$0xff]
      %v448 = vld [vmem:[%s410 + $0x9b] sm:$0xff]
      %v449 = vld [vmem:[%s410 + $0xa3] sm:$0xff]
      %v450 = vld [vmem:[%s410 + $0xab] sm:$0xff]
      %v451 = vld [vmem:[%s410 + $0xb3] sm:$0xff]
      %v452 = vld [vmem:[%s410 + $0xbb] sm:$0xff]
      %v453 = vld [vmem:[%s410 + $0xc3] sm:$0xff]
      %v454 = vld [vmem:[%s410 + $0xcb] sm:$0xff]
      %v455 = vld [vmem:[%s410 + $0xd3] sm:$0xff]
      %v456 = vld [vmem:[%s410 + $0xdb] sm:$0xff]
      %v457 = vld [vmem:[%s410 + $0xe3] sm:$0xff]
      %v458 = vld [vmem:[%s410 + $0xeb] sm:$0xff]
      %v459 = vld [vmem:[%s410 + $0xf3] sm:$0xff]
      %v460 = vld [vmem:[%s410 + $0xfb] sm:$0xff]
      %v461 = vld [vmem:[%s410 + $0x103] sm:$0xff]
      %v462 = vld [vmem:[%s410 + $0x10b] sm:$0xff]
      %v463 = vld [vmem:[%s410 + $0x113] sm:$0xff]
      %v464 = vld [vmem:[%s410 + $0x11b] sm:$0xff]
      %v465 = vld [vmem:[%s410 + $0x123] sm:$0xff]
      %v466 = vld [vmem:[%s410 + $0x12b] sm:$0xff]
      %v467 = vld [vmem:[%s410 + $0x133] sm:$0xff]
      %v468 = vld [vmem:[%s410 + $0x13b] sm:$0xff]
      %v469 = vld [vmem:[%s410 + $0x143] sm:$0xff]
      %v470 = vld [vmem:[%s410 + $0x14b] sm:$0xff]
      %v471 = vld [vmem:[%s410 + $0x153] sm:$0xff]
      %v472 = vld [vmem:[%s410 + $0x15b] sm:$0xff]
      %v473 = vld [vmem:[%s410 + $0x163] sm:$0xff]
      %v474 = vld [vmem:[%s410 + $0x16b] sm:$0xff]
      %v475 = vld [vmem:[%s410 + $0x173] sm:$0xff]
      %v476 = vld [vmem:[%s410 + $0x17b] sm:$0xff]
      %v477 = vld [vmem:[%s410 + $0x183] sm:$0xff]
      %v478 = vld [vmem:[%s410 + $0x18b] sm:$0xff]
      %v479 = vld [vmem:[%s410 + $0x193] sm:$0xff]
      %v480 = vld [vmem:[%s410 + $0x19b] sm:$0xff]
      %v481 = vld [vmem:[%s5] sm:$0xf]
      %vm482 = vcmask 31744
      %v484 = vsel %vm482, %v431, 0
      %v487 = vsel %vm482, %v432, 0
      %v490 = vsel %vm482, %v433, 0
      %v493 = vsel %vm482, %v434, 0
      %v496 = vsel %vm482, %v435, 0
      %v499 = vsel %vm482, %v436, 0
      %v502 = vsel %vm482, %v437, 0
      %v505 = vsel %vm482, %v438, 0
      %v508 = vsel %vm482, %v439, 0
      %v511 = vsel %vm482, %v440, 0
      %v514 = vsel %vm482, %v441, 0
      %v517 = vsel %vm482, %v442, 0
      %v520 = vsel %vm482, %v443, 0
      %v523 = vsel %vm482, %v444, 0
      %v526 = vsel %vm482, %v445, 0
      %v529 = vsel %vm482, %v446, 0
      %v532 = vsel %vm482, %v447, 0
      %v535 = vsel %vm482, %v448, 0
      %v538 = vsel %vm482, %v449, 0
      %v541 = vsel %vm482, %v450, 0
      %v544 = vsel %vm482, %v451, 0
      %v547 = vsel %vm482, %v452, 0
      %v550 = vsel %vm482, %v453, 0
      %v553 = vsel %vm482, %v454, 0
      %v556 = vsel %vm482, %v455, 0
      %v559 = vsel %vm482, %v456, 0
      %v562 = vsel %vm482, %v457, 0
      %v565 = vsel %vm482, %v458, 0
      %v568 = vsel %vm482, %v459, 0
      %v571 = vsel %vm482, %v460, 0
      %v574 = vsel %vm482, %v461, 0
      %v577 = vsel %vm482, %v462, 0
      %v580 = vsel %vm482, %v463, 0
      %v583 = vsel %vm482, %v464, 0
      %v586 = vsel %vm482, %v465, 0
      %v589 = vsel %vm482, %v466, 0
      %v592 = vsel %vm482, %v467, 0
      %v595 = vsel %vm482, %v468, 0
      %v598 = vsel %vm482, %v469, 0
      %v601 = vsel %vm482, %v470, 0
      %v604 = vsel %vm482, %v471, 0
      %v607 = vsel %vm482, %v472, 0
      %v610 = vsel %vm482, %v473, 0
      %v613 = vsel %vm482, %v474, 0
      %v616 = vsel %vm482, %v475, 0
      %v619 = vsel %vm482, %v476, 0
      %v622 = vsel %vm482, %v477, 0
      %v625 = vsel %vm482, %v478, 0
      %v628 = vsel %vm482, %v479, 0
      %v631 = vsel %vm482, %v480, 0
      %vm633 = vcmask 1043456
      %v635 = vsel %vm633, %v481, 0
      %637 = vmatpush.msra.mxu0 0.0
      %638 = vmatpush.msra.mxu0 0.0
      %639 = vmatpush.msra.mxu0 0.0
      %640 = vmatpush.msra.mxu0 0.0
      %641 = vmatpush.msra.mxu0 0.0
      %642 = vmatpush.msra.mxu0 0.0
      %643 = vmatpush.msra.mxu0 0.0
      %644 = vmatpush.msra.mxu0 0.0
      %645 = vmatpush.msra.mxu0 0.0
      %646 = vmatpush.msra.mxu0 0.0
      %647 = vmatpush.msra.mxu0 0.0
      %648 = vmatpush.msra.mxu0 0.0
      %649 = vmatpush.msra.mxu0 0.0
      %650 = vmatpush.msra.mxu0 0.0
      %651 = vmatpush.msra.mxu0 0.0
      %652 = vmatpush.msra.mxu0 %v635
      %653 = vmatmul.f32.gmra.mxu0 %v484
      %v654 = vpop.f32.mrf.mxu0
      %v655 = vadd.f32 0.0, %v654
      %656 = vmatmul.f32.gmra.mxu0 %v487
      %v657 = vpop.f32.mrf.mxu0
      %v658 = vadd.f32 0.0, %v657
      %659 = vmatmul.f32.gmra.mxu0 %v490
      %v660 = vpop.f32.mrf.mxu0
      %v661 = vadd.f32 0.0, %v660
      %662 = vmatmul.f32.gmra.mxu0 %v493
      %v663 = vpop.f32.mrf.mxu0
      %v664 = vadd.f32 0.0, %v663
      %665 = vmatmul.f32.gmra.mxu0 %v496
      %v666 = vpop.f32.mrf.mxu0
      %v667 = vadd.f32 0.0, %v666
      %668 = vmatmul.f32.gmra.mxu0 %v499
      %v669 = vpop.f32.mrf.mxu0
      %v670 = vadd.f32 0.0, %v669
      %671 = vmatmul.f32.gmra.mxu0 %v502
      %v672 = vpop.f32.mrf.mxu0
      %v673 = vadd.f32 0.0, %v672
      %674 = vmatmul.f32.gmra.mxu0 %v505
      %v675 = vpop.f32.mrf.mxu0
      %v676 = vadd.f32 0.0, %v675
      %677 = vmatmul.f32.gmra.mxu0 %v508
      %v678 = vpop.f32.mrf.mxu0
      %v679 = vadd.f32 0.0, %v678
      %680 = vmatmul.f32.gmra.mxu0 %v511
      %v681 = vpop.f32.mrf.mxu0
      %v682 = vadd.f32 0.0, %v681
      %683 = vmatmul.f32.gmra.mxu0 %v514
      %v684 = vpop.f32.mrf.mxu0
      %v685 = vadd.f32 0.0, %v684
      %686 = vmatmul.f32.gmra.mxu0 %v517
      %v687 = vpop.f32.mrf.mxu0
      %v688 = vadd.f32 0.0, %v687
      %689 = vmatmul.f32.gmra.mxu0 %v520
      %v690 = vpop.f32.mrf.mxu0
      %v691 = vadd.f32 0.0, %v690
      %692 = vmatmul.f32.gmra.mxu0 %v523
      %v693 = vpop.f32.mrf.mxu0
      %v694 = vadd.f32 0.0, %v693
      %695 = vmatmul.f32.gmra.mxu0 %v526
      %v696 = vpop.f32.mrf.mxu0
      %v697 = vadd.f32 0.0, %v696
      %698 = vmatmul.f32.gmra.mxu0 %v529
      %v699 = vpop.f32.mrf.mxu0
      %v700 = vadd.f32 0.0, %v699
      %701 = vmatmul.f32.gmra.mxu0 %v532
      %v702 = vpop.f32.mrf.mxu0
      %v703 = vadd.f32 0.0, %v702
      %704 = vmatmul.f32.gmra.mxu0 %v535
      %v705 = vpop.f32.mrf.mxu0
      %v706 = vadd.f32 0.0, %v705
      %707 = vmatmul.f32.gmra.mxu0 %v538
      %v708 = vpop.f32.mrf.mxu0
      %v709 = vadd.f32 0.0, %v708
      %710 = vmatmul.f32.gmra.mxu0 %v541
      %v711 = vpop.f32.mrf.mxu0
      %v712 = vadd.f32 0.0, %v711
      %713 = vmatmul.f32.gmra.mxu0 %v544
      %v714 = vpop.f32.mrf.mxu0
      %v715 = vadd.f32 0.0, %v714
      %716 = vmatmul.f32.gmra.mxu0 %v547
      %v717 = vpop.f32.mrf.mxu0
      %v718 = vadd.f32 0.0, %v717
      %719 = vmatmul.f32.gmra.mxu0 %v550
      %v720 = vpop.f32.mrf.mxu0
      %v721 = vadd.f32 0.0, %v720
      %722 = vmatmul.f32.gmra.mxu0 %v553
      %v723 = vpop.f32.mrf.mxu0
      %v724 = vadd.f32 0.0, %v723
      %725 = vmatmul.f32.gmra.mxu0 %v556
      %v726 = vpop.f32.mrf.mxu0
      %v727 = vadd.f32 0.0, %v726
      %728 = vmatmul.f32.gmra.mxu0 %v559
      %v729 = vpop.f32.mrf.mxu0
      %v730 = vadd.f32 0.0, %v729
      %731 = vmatmul.f32.gmra.mxu0 %v562
      %v732 = vpop.f32.mrf.mxu0
      %v733 = vadd.f32 0.0, %v732
      %734 = vmatmul.f32.gmra.mxu0 %v565
      %v735 = vpop.f32.mrf.mxu0
      %v736 = vadd.f32 0.0, %v735
      %737 = vmatmul.f32.gmra.mxu0 %v568
      %v738 = vpop.f32.mrf.mxu0
      %v739 = vadd.f32 0.0, %v738
      %740 = vmatmul.f32.gmra.mxu0 %v571
      %v741 = vpop.f32.mrf.mxu0
      %v742 = vadd.f32 0.0, %v741
      %743 = vmatmul.f32.gmra.mxu0 %v574
      %v744 = vpop.f32.mrf.mxu0
      %v745 = vadd.f32 0.0, %v744
      %746 = vmatmul.f32.gmra.mxu0 %v577
      %v747 = vpop.f32.mrf.mxu0
      %v748 = vadd.f32 0.0, %v747
      %749 = vmatmul.f32.gmra.mxu0 %v580
      %v750 = vpop.f32.mrf.mxu0
      %v751 = vadd.f32 0.0, %v750
      %752 = vmatmul.f32.gmra.mxu0 %v583
      %v753 = vpop.f32.mrf.mxu0
      %v754 = vadd.f32 0.0, %v753
      %755 = vmatmul.f32.gmra.mxu0 %v586
      %v756 = vpop.f32.mrf.mxu0
      %v757 = vadd.f32 0.0, %v756
      %758 = vmatmul.f32.gmra.mxu0 %v589
      %v759 = vpop.f32.mrf.mxu0
      %v760 = vadd.f32 0.0, %v759
      %761 = vmatmul.f32.gmra.mxu0 %v592
      %v762 = vpop.f32.mrf.mxu0
      %v763 = vadd.f32 0.0, %v762
      %764 = vmatmul.f32.gmra.mxu0 %v595
      %v765 = vpop.f32.mrf.mxu0
      %v766 = vadd.f32 0.0, %v765
      %767 = vmatmul.f32.gmra.mxu0 %v598
      %v768 = vpop.f32.mrf.mxu0
      %v769 = vadd.f32 0.0, %v768
      %770 = vmatmul.f32.gmra.mxu0 %v601
      %v771 = vpop.f32.mrf.mxu0
      %v772 = vadd.f32 0.0, %v771
      %773 = vmatmul.f32.gmra.mxu0 %v604
      %v774 = vpop.f32.mrf.mxu0
      %v775 = vadd.f32 0.0, %v774
      %776 = vmatmul.f32.gmra.mxu0 %v607
      %v777 = vpop.f32.mrf.mxu0
      %v778 = vadd.f32 0.0, %v777
      %779 = vmatmul.f32.gmra.mxu0 %v610
      %v780 = vpop.f32.mrf.mxu0
      %v781 = vadd.f32 0.0, %v780
      %782 = vmatmul.f32.gmra.mxu0 %v613
      %v783 = vpop.f32.mrf.mxu0
      %v784 = vadd.f32 0.0, %v783
      %785 = vmatmul.f32.gmra.mxu0 %v616
      %v786 = vpop.f32.mrf.mxu0
      %v787 = vadd.f32 0.0, %v786
      %788 = vmatmul.f32.gmra.mxu0 %v619
      %v789 = vpop.f32.mrf.mxu0
      %v790 = vadd.f32 0.0, %v789
      %791 = vmatmul.f32.gmra.mxu0 %v622
      %v792 = vpop.f32.mrf.mxu0
      %v793 = vadd.f32 0.0, %v792
      %794 = vmatmul.f32.gmra.mxu0 %v625
      %v795 = vpop.f32.mrf.mxu0
      %v796 = vadd.f32 0.0, %v795
      %797 = vmatmul.f32.gmra.mxu0 %v628
      %v798 = vpop.f32.mrf.mxu0
      %v799 = vadd.f32 0.0, %v798
      %800 = vmatmul.f32.gmra.mxu0 %v631
      %v801 = vpop.f32.mrf.mxu0
      %v802 = vadd.f32 0.0, %v801
      %803 = vdwg.mxu0
      %v804 = vadd.f32 %v430, %v655
      %v805 = vadd.f32 %v430, %v658
      %v806 = vadd.f32 %v430, %v661
      %v807 = vadd.f32 %v430, %v664
      %v808 = vadd.f32 %v430, %v667
      %v809 = vadd.f32 %v430, %v670
      %v810 = vadd.f32 %v430, %v673
      %v811 = vadd.f32 %v430, %v676
      %v812 = vadd.f32 %v430, %v679
      %v813 = vadd.f32 %v430, %v682
      %v814 = vadd.f32 %v430, %v685
      %v815 = vadd.f32 %v430, %v688
      %v816 = vadd.f32 %v430, %v691
      %v817 = vadd.f32 %v430, %v694
      %v818 = vadd.f32 %v430, %v697
      %v819 = vadd.f32 %v430, %v700
      %v820 = vadd.f32 %v430, %v703
      %v821 = vadd.f32 %v430, %v706
      %v822 = vadd.f32 %v430, %v709
      %v823 = vadd.f32 %v430, %v712
      %v824 = vadd.f32 %v430, %v715
      %v825 = vadd.f32 %v430, %v718
      %v826 = vadd.f32 %v430, %v721
      %v827 = vadd.f32 %v430, %v724
      %v828 = vadd.f32 %v430, %v727
      %v829 = vadd.f32 %v430, %v730
      %v830 = vadd.f32 %v430, %v733
      %v831 = vadd.f32 %v430, %v736
      %v832 = vadd.f32 %v430, %v739
      %v833 = vadd.f32 %v430, %v742
      %v834 = vadd.f32 %v430, %v745
      %v835 = vadd.f32 %v430, %v748
      %v836 = vadd.f32 %v430, %v751
      %v837 = vadd.f32 %v430, %v754
      %v838 = vadd.f32 %v430, %v757
      %v839 = vadd.f32 %v430, %v760
      %v840 = vadd.f32 %v430, %v763
      %v841 = vadd.f32 %v430, %v766
      %v842 = vadd.f32 %v430, %v769
      %v843 = vadd.f32 %v430, %v772
      %v844 = vadd.f32 %v430, %v775
      %v845 = vadd.f32 %v430, %v778
      %v846 = vadd.f32 %v430, %v781
      %v847 = vadd.f32 %v430, %v784
      %v848 = vadd.f32 %v430, %v787
      %v849 = vadd.f32 %v430, %v790
      %v850 = vadd.f32 %v430, %v793
      %v851 = vadd.f32 %v430, %v796
      %v852 = vadd.f32 %v430, %v799
      %v853 = vadd.f32 %v430, %v802
      %v854 = vld [vmem:[%s410 + $0x14] sm:$0xff]
      %v855 = vld [vmem:[%s410 + $0x1c] sm:$0xff]
      %v856 = vld [vmem:[%s410 + $0x24] sm:$0xff]
      %v857 = vld [vmem:[%s410 + $0x2c] sm:$0xff]
      %v858 = vld [vmem:[%s410 + $0x34] sm:$0xff]
      %v859 = vld [vmem:[%s410 + $0x3c] sm:$0xff]
      %v860 = vld [vmem:[%s410 + $0x44] sm:$0xff]
      %v861 = vld [vmem:[%s410 + $0x4c] sm:$0xff]
      %v862 = vld [vmem:[%s410 + $0x54] sm:$0xff]
      %v863 = vld [vmem:[%s410 + $0x5c] sm:$0xff]
      %v864 = vld [vmem:[%s410 + $0x64] sm:$0xff]
      %v865 = vld [vmem:[%s410 + $0x6c] sm:$0xff]
      %v866 = vld [vmem:[%s410 + $0x74] sm:$0xff]
      %v867 = vld [vmem:[%s410 + $0x7c] sm:$0xff]
      %v868 = vld [vmem:[%s410 + $0x84] sm:$0xff]
      %v869 = vld [vmem:[%s410 + $0x8c] sm:$0xff]
      %v870 = vld [vmem:[%s410 + $0x94] sm:$0xff]
      %v871 = vld [vmem:[%s410 + $0x9c] sm:$0xff]
      %v872 = vld [vmem:[%s410 + $0xa4] sm:$0xff]
      %v873 = vld [vmem:[%s410 + $0xac] sm:$0xff]
      %v874 = vld [vmem:[%s410 + $0xb4] sm:$0xff]
      %v875 = vld [vmem:[%s410 + $0xbc] sm:$0xff]
      %v876 = vld [vmem:[%s410 + $0xc4] sm:$0xff]
      %v877 = vld [vmem:[%s410 + $0xcc] sm:$0xff]
      %v878 = vld [vmem:[%s410 + $0xd4] sm:$0xff]
      %v879 = vld [vmem:[%s410 + $0xdc] sm:$0xff]
      %v880 = vld [vmem:[%s410 + $0xe4] sm:$0xff]
      %v881 = vld [vmem:[%s410 + $0xec] sm:$0xff]
      %v882 = vld [vmem:[%s410 + $0xf4] sm:$0xff]
      %v883 = vld [vmem:[%s410 + $0xfc] sm:$0xff]
      %v884 = vld [vmem:[%s410 + $0x104] sm:$0xff]
      %v885 = vld [vmem:[%s410 + $0x10c] sm:$0xff]
      %v886 = vld [vmem:[%s410 + $0x114] sm:$0xff]
      %v887 = vld [vmem:[%s410 + $0x11c] sm:$0xff]
      %v888 = vld [vmem:[%s410 + $0x124] sm:$0xff]
      %v889 = vld [vmem:[%s410 + $0x12c] sm:$0xff]
      %v890 = vld [vmem:[%s410 + $0x134] sm:$0xff]
      %v891 = vld [vmem:[%s410 + $0x13c] sm:$0xff]
      %v892 = vld [vmem:[%s410 + $0x144] sm:$0xff]
      %v893 = vld [vmem:[%s410 + $0x14c] sm:$0xff]
      %v894 = vld [vmem:[%s410 + $0x154] sm:$0xff]
      %v895 = vld [vmem:[%s410 + $0x15c] sm:$0xff]
      %v896 = vld [vmem:[%s410 + $0x164] sm:$0xff]
      %v897 = vld [vmem:[%s410 + $0x16c] sm:$0xff]
      %v898 = vld [vmem:[%s410 + $0x174] sm:$0xff]
      %v899 = vld [vmem:[%s410 + $0x17c] sm:$0xff]
      %v900 = vld [vmem:[%s410 + $0x184] sm:$0xff]
      %v901 = vld [vmem:[%s410 + $0x18c] sm:$0xff]
      %v902 = vld [vmem:[%s410 + $0x194] sm:$0xff]
      %v903 = vld [vmem:[%s410 + $0x19c] sm:$0xff]
      %s904 = scalar_lea.vmem %s5, 4
      %v905 = vld [vmem:[%s904] sm:$0xf]
      %v907 = vsel %vm482, %v854, 0
      %v910 = vsel %vm482, %v855, 0
      %v913 = vsel %vm482, %v856, 0
      %v916 = vsel %vm482, %v857, 0
      %v919 = vsel %vm482, %v858, 0
      %v922 = vsel %vm482, %v859, 0
      %v925 = vsel %vm482, %v860, 0
      %v928 = vsel %vm482, %v861, 0
      %v931 = vsel %vm482, %v862, 0
      %v934 = vsel %vm482, %v863, 0
      %v937 = vsel %vm482, %v864, 0
      %v940 = vsel %vm482, %v865, 0
      %v943 = vsel %vm482, %v866, 0
      %v946 = vsel %vm482, %v867, 0
      %v949 = vsel %vm482, %v868, 0
      %v952 = vsel %vm482, %v869, 0
      %v955 = vsel %vm482, %v870, 0
      %v958 = vsel %vm482, %v871, 0
      %v961 = vsel %vm482, %v872, 0
      %v964 = vsel %vm482, %v873, 0
      %v967 = vsel %vm482, %v874, 0
      %v970 = vsel %vm482, %v875, 0
      %v973 = vsel %vm482, %v876, 0
      %v976 = vsel %vm482, %v877, 0
      %v979 = vsel %vm482, %v878, 0
      %v982 = vsel %vm482, %v879, 0
      %v985 = vsel %vm482, %v880, 0
      %v988 = vsel %vm482, %v881, 0
      %v991 = vsel %vm482, %v882, 0
      %v994 = vsel %vm482, %v883, 0
      %v997 = vsel %vm482, %v884, 0
      %v1000 = vsel %vm482, %v885, 0
      %v1003 = vsel %vm482, %v886, 0
      %v1006 = vsel %vm482, %v887, 0
      %v1009 = vsel %vm482, %v888, 0
      %v1012 = vsel %vm482, %v889, 0
      %v1015 = vsel %vm482, %v890, 0
      %v1018 = vsel %vm482, %v891, 0
      %v1021 = vsel %vm482, %v892, 0
      %v1024 = vsel %vm482, %v893, 0
      %v1027 = vsel %vm482, %v894, 0
      %v1030 = vsel %vm482, %v895, 0
      %v1033 = vsel %vm482, %v896, 0
      %v1036 = vsel %vm482, %v897, 0
      %v1039 = vsel %vm482, %v898, 0
      %v1042 = vsel %vm482, %v899, 0
      %v1045 = vsel %vm482, %v900, 0
      %v1048 = vsel %vm482, %v901, 0
      %v1051 = vsel %vm482, %v902, 0
      %v1054 = vsel %vm482, %v903, 0
      %v1057 = vsel %vm633, %v905, 0
      %1059 = vmatpush.msra.mxu0 0.0
      %1060 = vmatpush.msra.mxu0 0.0
      %1061 = vmatpush.msra.mxu0 0.0
      %1062 = vmatpush.msra.mxu0 0.0
      %1063 = vmatpush.msra.mxu0 0.0
      %1064 = vmatpush.msra.mxu0 0.0
      %1065 = vmatpush.msra.mxu0 0.0
      %1066 = vmatpush.msra.mxu0 0.0
      %1067 = vmatpush.msra.mxu0 0.0
      %1068 = vmatpush.msra.mxu0 0.0
      %1069 = vmatpush.msra.mxu0 0.0
      %1070 = vmatpush.msra.mxu0 0.0
      %1071 = vmatpush.msra.mxu0 0.0
      %1072 = vmatpush.msra.mxu0 0.0
      %1073 = vmatpush.msra.mxu0 0.0
      %1074 = vmatpush.msra.mxu0 %v1057
      %1075 = vmatmul.f32.gmra.mxu0 %v907
      %v1076 = vpop.f32.mrf.mxu0
      %v1077 = vadd.f32 0.0, %v1076
      %1078 = vmatmul.f32.gmra.mxu0 %v910
      %v1079 = vpop.f32.mrf.mxu0
      %v1080 = vadd.f32 0.0, %v1079
      %1081 = vmatmul.f32.gmra.mxu0 %v913
      %v1082 = vpop.f32.mrf.mxu0
      %v1083 = vadd.f32 0.0, %v1082
      %1084 = vmatmul.f32.gmra.mxu0 %v916
      %v1085 = vpop.f32.mrf.mxu0
      %v1086 = vadd.f32 0.0, %v1085
      %1087 = vmatmul.f32.gmra.mxu0 %v919
      %v1088 = vpop.f32.mrf.mxu0
      %v1089 = vadd.f32 0.0, %v1088
      %1090 = vmatmul.f32.gmra.mxu0 %v922
      %v1091 = vpop.f32.mrf.mxu0
      %v1092 = vadd.f32 0.0, %v1091
      %1093 = vmatmul.f32.gmra.mxu0 %v925
      %v1094 = vpop.f32.mrf.mxu0
      %v1095 = vadd.f32 0.0, %v1094
      %1096 = vmatmul.f32.gmra.mxu0 %v928
      %v1097 = vpop.f32.mrf.mxu0
      %v1098 = vadd.f32 0.0, %v1097
      %1099 = vmatmul.f32.gmra.mxu0 %v931
      %v1100 = vpop.f32.mrf.mxu0
      %v1101 = vadd.f32 0.0, %v1100
      %1102 = vmatmul.f32.gmra.mxu0 %v934
      %v1103 = vpop.f32.mrf.mxu0
      %v1104 = vadd.f32 0.0, %v1103
      %1105 = vmatmul.f32.gmra.mxu0 %v937
      %v1106 = vpop.f32.mrf.mxu0
      %v1107 = vadd.f32 0.0, %v1106
      %1108 = vmatmul.f32.gmra.mxu0 %v940
      %v1109 = vpop.f32.mrf.mxu0
      %v1110 = vadd.f32 0.0, %v1109
      %1111 = vmatmul.f32.gmra.mxu0 %v943
      %v1112 = vpop.f32.mrf.mxu0
      %v1113 = vadd.f32 0.0, %v1112
      %1114 = vmatmul.f32.gmra.mxu0 %v946
      %v1115 = vpop.f32.mrf.mxu0
      %v1116 = vadd.f32 0.0, %v1115
      %1117 = vmatmul.f32.gmra.mxu0 %v949
      %v1118 = vpop.f32.mrf.mxu0
      %v1119 = vadd.f32 0.0, %v1118
      %1120 = vmatmul.f32.gmra.mxu0 %v952
      %v1121 = vpop.f32.mrf.mxu0
      %v1122 = vadd.f32 0.0, %v1121
      %1123 = vmatmul.f32.gmra.mxu0 %v955
      %v1124 = vpop.f32.mrf.mxu0
      %v1125 = vadd.f32 0.0, %v1124
      %1126 = vmatmul.f32.gmra.mxu0 %v958
      %v1127 = vpop.f32.mrf.mxu0
      %v1128 = vadd.f32 0.0, %v1127
      %1129 = vmatmul.f32.gmra.mxu0 %v961
      %v1130 = vpop.f32.mrf.mxu0
      %v1131 = vadd.f32 0.0, %v1130
      %1132 = vmatmul.f32.gmra.mxu0 %v964
      %v1133 = vpop.f32.mrf.mxu0
      %v1134 = vadd.f32 0.0, %v1133
      %1135 = vmatmul.f32.gmra.mxu0 %v967
      %v1136 = vpop.f32.mrf.mxu0
      %v1137 = vadd.f32 0.0, %v1136
      %1138 = vmatmul.f32.gmra.mxu0 %v970
      %v1139 = vpop.f32.mrf.mxu0
      %v1140 = vadd.f32 0.0, %v1139
      %1141 = vmatmul.f32.gmra.mxu0 %v973
      %v1142 = vpop.f32.mrf.mxu0
      %v1143 = vadd.f32 0.0, %v1142
      %1144 = vmatmul.f32.gmra.mxu0 %v976
      %v1145 = vpop.f32.mrf.mxu0
      %v1146 = vadd.f32 0.0, %v1145
      %1147 = vmatmul.f32.gmra.mxu0 %v979
      %v1148 = vpop.f32.mrf.mxu0
      %v1149 = vadd.f32 0.0, %v1148
      %1150 = vmatmul.f32.gmra.mxu0 %v982
      %v1151 = vpop.f32.mrf.mxu0
      %v1152 = vadd.f32 0.0, %v1151
      %1153 = vmatmul.f32.gmra.mxu0 %v985
      %v1154 = vpop.f32.mrf.mxu0
      %v1155 = vadd.f32 0.0, %v1154
      %1156 = vmatmul.f32.gmra.mxu0 %v988
      %v1157 = vpop.f32.mrf.mxu0
      %v1158 = vadd.f32 0.0, %v1157
      %1159 = vmatmul.f32.gmra.mxu0 %v991
      %v1160 = vpop.f32.mrf.mxu0
      %v1161 = vadd.f32 0.0, %v1160
      %1162 = vmatmul.f32.gmra.mxu0 %v994
      %v1163 = vpop.f32.mrf.mxu0
      %v1164 = vadd.f32 0.0, %v1163
      %1165 = vmatmul.f32.gmra.mxu0 %v997
      %v1166 = vpop.f32.mrf.mxu0
      %v1167 = vadd.f32 0.0, %v1166
      %1168 = vmatmul.f32.gmra.mxu0 %v1000
      %v1169 = vpop.f32.mrf.mxu0
      %v1170 = vadd.f32 0.0, %v1169
      %1171 = vmatmul.f32.gmra.mxu0 %v1003
      %v1172 = vpop.f32.mrf.mxu0
      %v1173 = vadd.f32 0.0, %v1172
      %1174 = vmatmul.f32.gmra.mxu0 %v1006
      %v1175 = vpop.f32.mrf.mxu0
      %v1176 = vadd.f32 0.0, %v1175
      %1177 = vmatmul.f32.gmra.mxu0 %v1009
      %v1178 = vpop.f32.mrf.mxu0
      %v1179 = vadd.f32 0.0, %v1178
      %1180 = vmatmul.f32.gmra.mxu0 %v1012
      %v1181 = vpop.f32.mrf.mxu0
      %v1182 = vadd.f32 0.0, %v1181
      %1183 = vmatmul.f32.gmra.mxu0 %v1015
      %v1184 = vpop.f32.mrf.mxu0
      %v1185 = vadd.f32 0.0, %v1184
      %1186 = vmatmul.f32.gmra.mxu0 %v1018
      %v1187 = vpop.f32.mrf.mxu0
      %v1188 = vadd.f32 0.0, %v1187
      %1189 = vmatmul.f32.gmra.mxu0 %v1021
      %v1190 = vpop.f32.mrf.mxu0
      %v1191 = vadd.f32 0.0, %v1190
      %1192 = vmatmul.f32.gmra.mxu0 %v1024
      %v1193 = vpop.f32.mrf.mxu0
      %v1194 = vadd.f32 0.0, %v1193
      %1195 = vmatmul.f32.gmra.mxu0 %v1027
      %v1196 = vpop.f32.mrf.mxu0
      %v1197 = vadd.f32 0.0, %v1196
      %1198 = vmatmul.f32.gmra.mxu0 %v1030
      %v1199 = vpop.f32.mrf.mxu0
      %v1200 = vadd.f32 0.0, %v1199
      %1201 = vmatmul.f32.gmra.mxu0 %v1033
      %v1202 = vpop.f32.mrf.mxu0
      %v1203 = vadd.f32 0.0, %v1202
      %1204 = vmatmul.f32.gmra.mxu0 %v1036
      %v1205 = vpop.f32.mrf.mxu0
      %v1206 = vadd.f32 0.0, %v1205
      %1207 = vmatmul.f32.gmra.mxu0 %v1039
      %v1208 = vpop.f32.mrf.mxu0
      %v1209 = vadd.f32 0.0, %v1208
      %1210 = vmatmul.f32.gmra.mxu0 %v1042
      %v1211 = vpop.f32.mrf.mxu0
      %v1212 = vadd.f32 0.0, %v1211
      %1213 = vmatmul.f32.gmra.mxu0 %v1045
      %v1214 = vpop.f32.mrf.mxu0
      %v1215 = vadd.f32 0.0, %v1214
      %1216 = vmatmul.f32.gmra.mxu0 %v1048
      %v1217 = vpop.f32.mrf.mxu0
      %v1218 = vadd.f32 0.0, %v1217
      %1219 = vmatmul.f32.gmra.mxu0 %v1051
      %v1220 = vpop.f32.mrf.mxu0
      %v1221 = vadd.f32 0.0, %v1220
      %1222 = vmatmul.f32.gmra.mxu0 %v1054
      %v1223 = vpop.f32.mrf.mxu0
      %v1224 = vadd.f32 0.0, %v1223
      %1225 = vdwg.mxu0
      %v1226 = vadd.f32 %v804, %v1077
      %v1227 = vadd.f32 %v805, %v1080
      %v1228 = vadd.f32 %v806, %v1083
      %v1229 = vadd.f32 %v807, %v1086
      %v1230 = vadd.f32 %v808, %v1089
      %v1231 = vadd.f32 %v809, %v1092
      %v1232 = vadd.f32 %v810, %v1095
      %v1233 = vadd.f32 %v811, %v1098
      %v1234 = vadd.f32 %v812, %v1101
      %v1235 = vadd.f32 %v813, %v1104
      %v1236 = vadd.f32 %v814, %v1107
      %v1237 = vadd.f32 %v815, %v1110
      %v1238 = vadd.f32 %v816, %v1113
      %v1239 = vadd.f32 %v817, %v1116
      %v1240 = vadd.f32 %v818, %v1119
      %v1241 = vadd.f32 %v819, %v1122
      %v1242 = vadd.f32 %v820, %v1125
      %v1243 = vadd.f32 %v821, %v1128
      %v1244 = vadd.f32 %v822, %v1131
      %v1245 = vadd.f32 %v823, %v1134
      %v1246 = vadd.f32 %v824, %v1137
      %v1247 = vadd.f32 %v825, %v1140
      %v1248 = vadd.f32 %v826, %v1143
      %v1249 = vadd.f32 %v827, %v1146
      %v1250 = vadd.f32 %v828, %v1149
      %v1251 = vadd.f32 %v829, %v1152
      %v1252 = vadd.f32 %v830, %v1155
      %v1253 = vadd.f32 %v831, %v1158
      %v1254 = vadd.f32 %v832, %v1161
      %v1255 = vadd.f32 %v833, %v1164
      %v1256 = vadd.f32 %v834, %v1167
      %v1257 = vadd.f32 %v835, %v1170
      %v1258 = vadd.f32 %v836, %v1173
      %v1259 = vadd.f32 %v837, %v1176
      %v1260 = vadd.f32 %v838, %v1179
      %v1261 = vadd.f32 %v839, %v1182
      %v1262 = vadd.f32 %v840, %v1185
      %v1263 = vadd.f32 %v841, %v1188
      %v1264 = vadd.f32 %v842, %v1191
      %v1265 = vadd.f32 %v843, %v1194
      %v1266 = vadd.f32 %v844, %v1197
      %v1267 = vadd.f32 %v845, %v1200
      %v1268 = vadd.f32 %v846, %v1203
      %v1269 = vadd.f32 %v847, %v1206
      %v1270 = vadd.f32 %v848, %v1209
      %v1271 = vadd.f32 %v849, %v1212
      %v1272 = vadd.f32 %v850, %v1215
      %v1273 = vadd.f32 %v851, %v1218
      %v1274 = vadd.f32 %v852, %v1221
      %v1275 = vadd.f32 %v853, %v1224
      %v1276 = vld [vmem:[%s410 + $0x15] sm:$0xff]
      %v1277 = vld [vmem:[%s410 + $0x1d] sm:$0xff]
      %v1278 = vld [vmem:[%s410 + $0x25] sm:$0xff]
      %v1279 = vld [vmem:[%s410 + $0x2d] sm:$0xff]
      %v1280 = vld [vmem:[%s410 + $0x35] sm:$0xff]
      %v1281 = vld [vmem:[%s410 + $0x3d] sm:$0xff]
      %v1282 = vld [vmem:[%s410 + $0x45] sm:$0xff]
      %v1283 = vld [vmem:[%s410 + $0x4d] sm:$0xff]
      %v1284 = vld [vmem:[%s410 + $0x55] sm:$0xff]
      %v1285 = vld [vmem:[%s410 + $0x5d] sm:$0xff]
      %v1286 = vld [vmem:[%s410 + $0x65] sm:$0xff]
      %v1287 = vld [vmem:[%s410 + $0x6d] sm:$0xff]
      %v1288 = vld [vmem:[%s410 + $0x75] sm:$0xff]
      %v1289 = vld [vmem:[%s410 + $0x7d] sm:$0xff]
      %v1290 = vld [vmem:[%s410 + $0x85] sm:$0xff]
      %v1291 = vld [vmem:[%s410 + $0x8d] sm:$0xff]
      %v1292 = vld [vmem:[%s410 + $0x95] sm:$0xff]
      %v1293 = vld [vmem:[%s410 + $0x9d] sm:$0xff]
      %v1294 = vld [vmem:[%s410 + $0xa5] sm:$0xff]
      %v1295 = vld [vmem:[%s410 + $0xad] sm:$0xff]
      %v1296 = vld [vmem:[%s410 + $0xb5] sm:$0xff]
      %v1297 = vld [vmem:[%s410 + $0xbd] sm:$0xff]
      %v1298 = vld [vmem:[%s410 + $0xc5] sm:$0xff]
      %v1299 = vld [vmem:[%s410 + $0xcd] sm:$0xff]
      %v1300 = vld [vmem:[%s410 + $0xd5] sm:$0xff]
      %v1301 = vld [vmem:[%s410 + $0xdd] sm:$0xff]
      %v1302 = vld [vmem:[%s410 + $0xe5] sm:$0xff]
      %v1303 = vld [vmem:[%s410 + $0xed] sm:$0xff]
      %v1304 = vld [vmem:[%s410 + $0xf5] sm:$0xff]
      %v1305 = vld [vmem:[%s410 + $0xfd] sm:$0xff]
      %v1306 = vld [vmem:[%s410 + $0x105] sm:$0xff]
      %v1307 = vld [vmem:[%s410 + $0x10d] sm:$0xff]
      %v1308 = vld [vmem:[%s410 + $0x115] sm:$0xff]
      %v1309 = vld [vmem:[%s410 + $0x11d] sm:$0xff]
      %v1310 = vld [vmem:[%s410 + $0x125] sm:$0xff]
      %v1311 = vld [vmem:[%s410 + $0x12d] sm:$0xff]
      %v1312 = vld [vmem:[%s410 + $0x135] sm:$0xff]
      %v1313 = vld [vmem:[%s410 + $0x13d] sm:$0xff]
      %v1314 = vld [vmem:[%s410 + $0x145] sm:$0xff]
      %v1315 = vld [vmem:[%s410 + $0x14d] sm:$0xff]
      %v1316 = vld [vmem:[%s410 + $0x155] sm:$0xff]
      %v1317 = vld [vmem:[%s410 + $0x15d] sm:$0xff]
      %v1318 = vld [vmem:[%s410 + $0x165] sm:$0xff]
      %v1319 = vld [vmem:[%s410 + $0x16d] sm:$0xff]
      %v1320 = vld [vmem:[%s410 + $0x175] sm:$0xff]
      %v1321 = vld [vmem:[%s410 + $0x17d] sm:$0xff]
      %v1322 = vld [vmem:[%s410 + $0x185] sm:$0xff]
      %v1323 = vld [vmem:[%s410 + $0x18d] sm:$0xff]
      %v1324 = vld [vmem:[%s410 + $0x195] sm:$0xff]
      %v1325 = vld [vmem:[%s410 + $0x19d] sm:$0xff]
      %s1326 = scalar_lea.vmem %s5, 8
      %v1327 = vld [vmem:[%s1326] sm:$0xf]
      %v1329 = vsel %vm482, %v1276, 0
      %v1332 = vsel %vm482, %v1277, 0
      %v1335 = vsel %vm482, %v1278, 0
      %v1338 = vsel %vm482, %v1279, 0
      %v1341 = vsel %vm482, %v1280, 0
      %v1344 = vsel %vm482, %v1281, 0
      %v1347 = vsel %vm482, %v1282, 0
      %v1350 = vsel %vm482, %v1283, 0
      %v1353 = vsel %vm482, %v1284, 0
      %v1356 = vsel %vm482, %v1285, 0
      %v1359 = vsel %vm482, %v1286, 0
      %v1362 = vsel %vm482, %v1287, 0
      %v1365 = vsel %vm482, %v1288, 0
      %v1368 = vsel %vm482, %v1289, 0
      %v1371 = vsel %vm482, %v1290, 0
      %v1374 = vsel %vm482, %v1291, 0
      %v1377 = vsel %vm482, %v1292, 0
      %v1380 = vsel %vm482, %v1293, 0
      %v1383 = vsel %vm482, %v1294, 0
      %v1386 = vsel %vm482, %v1295, 0
      %v1389 = vsel %vm482, %v1296, 0
      %v1392 = vsel %vm482, %v1297, 0
      %v1395 = vsel %vm482, %v1298, 0
      %v1398 = vsel %vm482, %v1299, 0
      %v1401 = vsel %vm482, %v1300, 0
      %v1404 = vsel %vm482, %v1301, 0
      %v1407 = vsel %vm482, %v1302, 0
      %v1410 = vsel %vm482, %v1303, 0
      %v1413 = vsel %vm482, %v1304, 0
      %v1416 = vsel %vm482, %v1305, 0
      %v1419 = vsel %vm482, %v1306, 0
      %v1422 = vsel %vm482, %v1307, 0
      %v1425 = vsel %vm482, %v1308, 0
      %v1428 = vsel %vm482, %v1309, 0
      %v1431 = vsel %vm482, %v1310, 0
      %v1434 = vsel %vm482, %v1311, 0
      %v1437 = vsel %vm482, %v1312, 0
      %v1440 = vsel %vm482, %v1313, 0
      %v1443 = vsel %vm482, %v1314, 0
      %v1446 = vsel %vm482, %v1315, 0
      %v1449 = vsel %vm482, %v1316, 0
      %v1452 = vsel %vm482, %v1317, 0
      %v1455 = vsel %vm482, %v1318, 0
      %v1458 = vsel %vm482, %v1319, 0
      %v1461 = vsel %vm482, %v1320, 0
      %v1464 = vsel %vm482, %v1321, 0
      %v1467 = vsel %vm482, %v1322, 0
      %v1470 = vsel %vm482, %v1323, 0
      %v1473 = vsel %vm482, %v1324, 0
      %v1476 = vsel %vm482, %v1325, 0
      %v1479 = vsel %vm633, %v1327, 0
      %1481 = vmatpush.msra.mxu0 0.0
      %1482 = vmatpush.msra.mxu0 0.0
      %1483 = vmatpush.msra.mxu0 0.0
      %1484 = vmatpush.msra.mxu0 0.0
      %1485 = vmatpush.msra.mxu0 0.0
      %1486 = vmatpush.msra.mxu0 0.0
      %1487 = vmatpush.msra.mxu0 0.0
      %1488 = vmatpush.msra.mxu0 0.0
      %1489 = vmatpush.msra.mxu0 0.0
      %1490 = vmatpush.msra.mxu0 0.0
      %1491 = vmatpush.msra.mxu0 0.0
      %1492 = vmatpush.msra.mxu0 0.0
      %1493 = vmatpush.msra.mxu0 0.0
      %1494 = vmatpush.msra.mxu0 0.0
      %1495 = vmatpush.msra.mxu0 0.0
      %1496 = vmatpush.msra.mxu0 %v1479
      %1497 = vmatmul.f32.gmra.mxu0 %v1329
      %v1498 = vpop.f32.mrf.mxu0
      %v1499 = vadd.f32 0.0, %v1498
      %1500 = vmatmul.f32.gmra.mxu0 %v1332
      %v1501 = vpop.f32.mrf.mxu0
      %v1502 = vadd.f32 0.0, %v1501
      %1503 = vmatmul.f32.gmra.mxu0 %v1335
      %v1504 = vpop.f32.mrf.mxu0
      %v1505 = vadd.f32 0.0, %v1504
      %1506 = vmatmul.f32.gmra.mxu0 %v1338
      %v1507 = vpop.f32.mrf.mxu0
      %v1508 = vadd.f32 0.0, %v1507
      %1509 = vmatmul.f32.gmra.mxu0 %v1341
      %v1510 = vpop.f32.mrf.mxu0
      %v1511 = vadd.f32 0.0, %v1510
      %1512 = vmatmul.f32.gmra.mxu0 %v1344
      %v1513 = vpop.f32.mrf.mxu0
      %v1514 = vadd.f32 0.0, %v1513
      %1515 = vmatmul.f32.gmra.mxu0 %v1347
      %v1516 = vpop.f32.mrf.mxu0
      %v1517 = vadd.f32 0.0, %v1516
      %1518 = vmatmul.f32.gmra.mxu0 %v1350
      %v1519 = vpop.f32.mrf.mxu0
      %v1520 = vadd.f32 0.0, %v1519
      %1521 = vmatmul.f32.gmra.mxu0 %v1353
      %v1522 = vpop.f32.mrf.mxu0
      %v1523 = vadd.f32 0.0, %v1522
      %1524 = vmatmul.f32.gmra.mxu0 %v1356
      %v1525 = vpop.f32.mrf.mxu0
      %v1526 = vadd.f32 0.0, %v1525
      %1527 = vmatmul.f32.gmra.mxu0 %v1359
      %v1528 = vpop.f32.mrf.mxu0
      %v1529 = vadd.f32 0.0, %v1528
      %1530 = vmatmul.f32.gmra.mxu0 %v1362
      %v1531 = vpop.f32.mrf.mxu0
      %v1532 = vadd.f32 0.0, %v1531
      %1533 = vmatmul.f32.gmra.mxu0 %v1365
      %v1534 = vpop.f32.mrf.mxu0
      %v1535 = vadd.f32 0.0, %v1534
      %1536 = vmatmul.f32.gmra.mxu0 %v1368
      %v1537 = vpop.f32.mrf.mxu0
      %v1538 = vadd.f32 0.0, %v1537
      %1539 = vmatmul.f32.gmra.mxu0 %v1371
      %v1540 = vpop.f32.mrf.mxu0
      %v1541 = vadd.f32 0.0, %v1540
      %1542 = vmatmul.f32.gmra.mxu0 %v1374
      %v1543 = vpop.f32.mrf.mxu0
      %v1544 = vadd.f32 0.0, %v1543
      %1545 = vmatmul.f32.gmra.mxu0 %v1377
      %v1546 = vpop.f32.mrf.mxu0
      %v1547 = vadd.f32 0.0, %v1546
      %1548 = vmatmul.f32.gmra.mxu0 %v1380
      %v1549 = vpop.f32.mrf.mxu0
      %v1550 = vadd.f32 0.0, %v1549
      %1551 = vmatmul.f32.gmra.mxu0 %v1383
      %v1552 = vpop.f32.mrf.mxu0
      %v1553 = vadd.f32 0.0, %v1552
      %1554 = vmatmul.f32.gmra.mxu0 %v1386
      %v1555 = vpop.f32.mrf.mxu0
      %v1556 = vadd.f32 0.0, %v1555
      %1557 = vmatmul.f32.gmra.mxu0 %v1389
      %v1558 = vpop.f32.mrf.mxu0
      %v1559 = vadd.f32 0.0, %v1558
      %1560 = vmatmul.f32.gmra.mxu0 %v1392
      %v1561 = vpop.f32.mrf.mxu0
      %v1562 = vadd.f32 0.0, %v1561
      %1563 = vmatmul.f32.gmra.mxu0 %v1395
      %v1564 = vpop.f32.mrf.mxu0
      %v1565 = vadd.f32 0.0, %v1564
      %1566 = vmatmul.f32.gmra.mxu0 %v1398
      %v1567 = vpop.f32.mrf.mxu0
      %v1568 = vadd.f32 0.0, %v1567
      %1569 = vmatmul.f32.gmra.mxu0 %v1401
      %v1570 = vpop.f32.mrf.mxu0
      %v1571 = vadd.f32 0.0, %v1570
      %1572 = vmatmul.f32.gmra.mxu0 %v1404
      %v1573 = vpop.f32.mrf.mxu0
      %v1574 = vadd.f32 0.0, %v1573
      %1575 = vmatmul.f32.gmra.mxu0 %v1407
      %v1576 = vpop.f32.mrf.mxu0
      %v1577 = vadd.f32 0.0, %v1576
      %1578 = vmatmul.f32.gmra.mxu0 %v1410
      %v1579 = vpop.f32.mrf.mxu0
      %v1580 = vadd.f32 0.0, %v1579
      %1581 = vmatmul.f32.gmra.mxu0 %v1413
      %v1582 = vpop.f32.mrf.mxu0
      %v1583 = vadd.f32 0.0, %v1582
      %1584 = vmatmul.f32.gmra.mxu0 %v1416
      %v1585 = vpop.f32.mrf.mxu0
      %v1586 = vadd.f32 0.0, %v1585
      %1587 = vmatmul.f32.gmra.mxu0 %v1419
      %v1588 = vpop.f32.mrf.mxu0
      %v1589 = vadd.f32 0.0, %v1588
      %1590 = vmatmul.f32.gmra.mxu0 %v1422
      %v1591 = vpop.f32.mrf.mxu0
      %v1592 = vadd.f32 0.0, %v1591
      %1593 = vmatmul.f32.gmra.mxu0 %v1425
      %v1594 = vpop.f32.mrf.mxu0
      %v1595 = vadd.f32 0.0, %v1594
      %1596 = vmatmul.f32.gmra.mxu0 %v1428
      %v1597 = vpop.f32.mrf.mxu0
      %v1598 = vadd.f32 0.0, %v1597
      %1599 = vmatmul.f32.gmra.mxu0 %v1431
      %v1600 = vpop.f32.mrf.mxu0
      %v1601 = vadd.f32 0.0, %v1600
      %1602 = vmatmul.f32.gmra.mxu0 %v1434
      %v1603 = vpop.f32.mrf.mxu0
      %v1604 = vadd.f32 0.0, %v1603
      %1605 = vmatmul.f32.gmra.mxu0 %v1437
      %v1606 = vpop.f32.mrf.mxu0
      %v1607 = vadd.f32 0.0, %v1606
      %1608 = vmatmul.f32.gmra.mxu0 %v1440
      %v1609 = vpop.f32.mrf.mxu0
      %v1610 = vadd.f32 0.0, %v1609
      %1611 = vmatmul.f32.gmra.mxu0 %v1443
      %v1612 = vpop.f32.mrf.mxu0
      %v1613 = vadd.f32 0.0, %v1612
      %1614 = vmatmul.f32.gmra.mxu0 %v1446
      %v1615 = vpop.f32.mrf.mxu0
      %v1616 = vadd.f32 0.0, %v1615
      %1617 = vmatmul.f32.gmra.mxu0 %v1449
      %v1618 = vpop.f32.mrf.mxu0
      %v1619 = vadd.f32 0.0, %v1618
      %1620 = vmatmul.f32.gmra.mxu0 %v1452
      %v1621 = vpop.f32.mrf.mxu0
      %v1622 = vadd.f32 0.0, %v1621
      %1623 = vmatmul.f32.gmra.mxu0 %v1455
      %v1624 = vpop.f32.mrf.mxu0
      %v1625 = vadd.f32 0.0, %v1624
      %1626 = vmatmul.f32.gmra.mxu0 %v1458
      %v1627 = vpop.f32.mrf.mxu0
      %v1628 = vadd.f32 0.0, %v1627
      %1629 = vmatmul.f32.gmra.mxu0 %v1461
      %v1630 = vpop.f32.mrf.mxu0
      %v1631 = vadd.f32 0.0, %v1630
      %1632 = vmatmul.f32.gmra.mxu0 %v1464
      %v1633 = vpop.f32.mrf.mxu0
      %v1634 = vadd.f32 0.0, %v1633
      %1635 = vmatmul.f32.gmra.mxu0 %v1467
      %v1636 = vpop.f32.mrf.mxu0
      %v1637 = vadd.f32 0.0, %v1636
      %1638 = vmatmul.f32.gmra.mxu0 %v1470
      %v1639 = vpop.f32.mrf.mxu0
      %v1640 = vadd.f32 0.0, %v1639
      %1641 = vmatmul.f32.gmra.mxu0 %v1473
      %v1642 = vpop.f32.mrf.mxu0
      %v1643 = vadd.f32 0.0, %v1642
      %1644 = vmatmul.f32.gmra.mxu0 %v1476
      %v1645 = vpop.f32.mrf.mxu0
      %v1646 = vadd.f32 0.0, %v1645
      %1647 = vdwg.mxu0
      %v1648 = vadd.f32 %v1226, %v1499
      %v1649 = vadd.f32 %v1227, %v1502
      %v1650 = vadd.f32 %v1228, %v1505
      %v1651 = vadd.f32 %v1229, %v1508
      %v1652 = vadd.f32 %v1230, %v1511
      %v1653 = vadd.f32 %v1231, %v1514
      %v1654 = vadd.f32 %v1232, %v1517
      %v1655 = vadd.f32 %v1233, %v1520
      %v1656 = vadd.f32 %v1234, %v1523
      %v1657 = vadd.f32 %v1235, %v1526
      %v1658 = vadd.f32 %v1236, %v1529
      %v1659 = vadd.f32 %v1237, %v1532
      %v1660 = vadd.f32 %v1238, %v1535
      %v1661 = vadd.f32 %v1239, %v1538
      %v1662 = vadd.f32 %v1240, %v1541
      %v1663 = vadd.f32 %v1241, %v1544
      %v1664 = vadd.f32 %v1242, %v1547
      %v1665 = vadd.f32 %v1243, %v1550
      %v1666 = vadd.f32 %v1244, %v1553
      %v1667 = vadd.f32 %v1245, %v1556
      %v1668 = vadd.f32 %v1246, %v1559
      %v1669 = vadd.f32 %v1247, %v1562
      %v1670 = vadd.f32 %v1248, %v1565
      %v1671 = vadd.f32 %v1249, %v1568
      %v1672 = vadd.f32 %v1250, %v1571
      %v1673 = vadd.f32 %v1251, %v1574
      %v1674 = vadd.f32 %v1252, %v1577
      %v1675 = vadd.f32 %v1253, %v1580
      %v1676 = vadd.f32 %v1254, %v1583
      %v1677 = vadd.f32 %v1255, %v1586
      %v1678 = vadd.f32 %v1256, %v1589
      %v1679 = vadd.f32 %v1257, %v1592
      %v1680 = vadd.f32 %v1258, %v1595
      %v1681 = vadd.f32 %v1259, %v1598
      %v1682 = vadd.f32 %v1260, %v1601
      %v1683 = vadd.f32 %v1261, %v1604
      %v1684 = vadd.f32 %v1262, %v1607
      %v1685 = vadd.f32 %v1263, %v1610
      %v1686 = vadd.f32 %v1264, %v1613
      %v1687 = vadd.f32 %v1265, %v1616
      %v1688 = vadd.f32 %v1266, %v1619
      %v1689 = vadd.f32 %v1267, %v1622
      %v1690 = vadd.f32 %v1268, %v1625
      %v1691 = vadd.f32 %v1269, %v1628
      %v1692 = vadd.f32 %v1270, %v1631
      %v1693 = vadd.f32 %v1271, %v1634
      %v1694 = vadd.f32 %v1272, %v1637
      %v1695 = vadd.f32 %v1273, %v1640
      %v1696 = vadd.f32 %v1274, %v1643
      %v1697 = vadd.f32 %v1275, %v1646
      %v1698 = vld [vmem:[%s410 + $0x27] sm:$0xff]
      %v1699 = vld [vmem:[%s410 + $0x2f] sm:$0xff]
      %v1700 = vld [vmem:[%s410 + $0x37] sm:$0xff]
      %v1701 = vld [vmem:[%s410 + $0x3f] sm:$0xff]
      %v1702 = vld [vmem:[%s410 + $0x47] sm:$0xff]
      %v1703 = vld [vmem:[%s410 + $0x4f] sm:$0xff]
      %v1704 = vld [vmem:[%s410 + $0x57] sm:$0xff]
      %v1705 = vld [vmem:[%s410 + $0x5f] sm:$0xff]
      %v1706 = vld [vmem:[%s410 + $0x67] sm:$0xff]
      %v1707 = vld [vmem:[%s410 + $0x6f] sm:$0xff]
      %v1708 = vld [vmem:[%s410 + $0x77] sm:$0xff]
      %v1709 = vld [vmem:[%s410 + $0x7f] sm:$0xff]
      %v1710 = vld [vmem:[%s410 + $0x87] sm:$0xff]
      %v1711 = vld [vmem:[%s410 + $0x8f] sm:$0xff]
      %v1712 = vld [vmem:[%s410 + $0x97] sm:$0xff]
      %v1713 = vld [vmem:[%s410 + $0x9f] sm:$0xff]
      %v1714 = vld [vmem:[%s410 + $0xa7] sm:$0xff]
      %v1715 = vld [vmem:[%s410 + $0xaf] sm:$0xff]
      %v1716 = vld [vmem:[%s410 + $0xb7] sm:$0xff]
      %v1717 = vld [vmem:[%s410 + $0xbf] sm:$0xff]
      %v1718 = vld [vmem:[%s410 + $0xc7] sm:$0xff]
      %v1719 = vld [vmem:[%s410 + $0xcf] sm:$0xff]
      %v1720 = vld [vmem:[%s410 + $0xd7] sm:$0xff]
      %v1721 = vld [vmem:[%s410 + $0xdf] sm:$0xff]
      %v1722 = vld [vmem:[%s410 + $0xe7] sm:$0xff]
      %v1723 = vld [vmem:[%s410 + $0xef] sm:$0xff]
      %v1724 = vld [vmem:[%s410 + $0xf7] sm:$0xff]
      %v1725 = vld [vmem:[%s410 + $0xff] sm:$0xff]
      %v1726 = vld [vmem:[%s410 + $0x107] sm:$0xff]
      %v1727 = vld [vmem:[%s410 + $0x10f] sm:$0xff]
      %v1728 = vld [vmem:[%s410 + $0x117] sm:$0xff]
      %v1729 = vld [vmem:[%s410 + $0x11f] sm:$0xff]
      %v1730 = vld [vmem:[%s410 + $0x127] sm:$0xff]
      %v1731 = vld [vmem:[%s410 + $0x12f] sm:$0xff]
      %v1732 = vld [vmem:[%s410 + $0x137] sm:$0xff]
      %v1733 = vld [vmem:[%s410 + $0x13f] sm:$0xff]
      %v1734 = vld [vmem:[%s410 + $0x147] sm:$0xff]
      %v1735 = vld [vmem:[%s410 + $0x14f] sm:$0xff]
      %v1736 = vld [vmem:[%s410 + $0x157] sm:$0xff]
      %v1737 = vld [vmem:[%s410 + $0x15f] sm:$0xff]
      %v1738 = vld [vmem:[%s410 + $0x167] sm:$0xff]
      %v1739 = vld [vmem:[%s410 + $0x16f] sm:$0xff]
      %v1740 = vld [vmem:[%s410 + $0x177] sm:$0xff]
      %v1741 = vld [vmem:[%s410 + $0x17f] sm:$0xff]
      %v1742 = vld [vmem:[%s410 + $0x187] sm:$0xff]
      %v1743 = vld [vmem:[%s410 + $0x18f] sm:$0xff]
      %v1744 = vld [vmem:[%s410 + $0x197] sm:$0xff]
      %v1745 = vld [vmem:[%s410 + $0x19f] sm:$0xff]
      %v1746 = vld [vmem:[%s410 + $0x1a7] sm:$0xff]
      %v1747 = vld [vmem:[%s410 + $0x1af] sm:$0xff]
      %s1748 = scalar_lea.vmem %s5, 12
      %v1749 = vld [vmem:[%s1748] sm:$0xf]
      %v1751 = vsel %vm482, %v1698, 0
      %v1754 = vsel %vm482, %v1699, 0
      %v1757 = vsel %vm482, %v1700, 0
      %v1760 = vsel %vm482, %v1701, 0
      %v1763 = vsel %vm482, %v1702, 0
      %v1766 = vsel %vm482, %v1703, 0
      %v1769 = vsel %vm482, %v1704, 0
      %v1772 = vsel %vm482, %v1705, 0
      %v1775 = vsel %vm482, %v1706, 0
      %v1778 = vsel %vm482, %v1707, 0
      %v1781 = vsel %vm482, %v1708, 0
      %v1784 = vsel %vm482, %v1709, 0
      %v1787 = vsel %vm482, %v1710, 0
      %v1790 = vsel %vm482, %v1711, 0
      %v1793 = vsel %vm482, %v1712, 0
      %v1796 = vsel %vm482, %v1713, 0
      %v1799 = vsel %vm482, %v1714, 0
      %v1802 = vsel %vm482, %v1715, 0
      %v1805 = vsel %vm482, %v1716, 0
      %v1808 = vsel %vm482, %v1717, 0
      %v1811 = vsel %vm482, %v1718, 0
      %v1814 = vsel %vm482, %v1719, 0
      %v1817 = vsel %vm482, %v1720, 0
      %v1820 = vsel %vm482, %v1721, 0
      %v1823 = vsel %vm482, %v1722, 0
      %v1826 = vsel %vm482, %v1723, 0
      %v1829 = vsel %vm482, %v1724, 0
      %v1832 = vsel %vm482, %v1725, 0
      %v1835 = vsel %vm482, %v1726, 0
      %v1838 = vsel %vm482, %v1727, 0
      %v1841 = vsel %vm482, %v1728, 0
      %v1844 = vsel %vm482, %v1729, 0
      %v1847 = vsel %vm482, %v1730, 0
      %v1850 = vsel %vm482, %v1731, 0
      %v1853 = vsel %vm482, %v1732, 0
      %v1856 = vsel %vm482, %v1733, 0
      %v1859 = vsel %vm482, %v1734, 0
      %v1862 = vsel %vm482, %v1735, 0
      %v1865 = vsel %vm482, %v1736, 0
      %v1868 = vsel %vm482, %v1737, 0
      %v1871 = vsel %vm482, %v1738, 0
      %v1874 = vsel %vm482, %v1739, 0
      %v1877 = vsel %vm482, %v1740, 0
      %v1880 = vsel %vm482, %v1741, 0
      %v1883 = vsel %vm482, %v1742, 0
      %v1886 = vsel %vm482, %v1743, 0
      %v1889 = vsel %vm482, %v1744, 0
      %v1892 = vsel %vm482, %v1745, 0
      %v1895 = vsel %vm482, %v1746, 0
      %v1898 = vsel %vm482, %v1747, 0
      %v1901 = vsel %vm633, %v1749, 0
      %1903 = vmatpush.msra.mxu0 0.0
      %1904 = vmatpush.msra.mxu0 0.0
      %1905 = vmatpush.msra.mxu0 0.0
      %1906 = vmatpush.msra.mxu0 0.0
      %1907 = vmatpush.msra.mxu0 0.0
      %1908 = vmatpush.msra.mxu0 0.0
      %1909 = vmatpush.msra.mxu0 0.0
      %1910 = vmatpush.msra.mxu0 0.0
      %1911 = vmatpush.msra.mxu0 0.0
      %1912 = vmatpush.msra.mxu0 0.0
      %1913 = vmatpush.msra.mxu0 0.0
      %1914 = vmatpush.msra.mxu0 0.0
      %1915 = vmatpush.msra.mxu0 0.0
      %1916 = vmatpush.msra.mxu0 0.0
      %1917 = vmatpush.msra.mxu0 0.0
      %1918 = vmatpush.msra.mxu0 %v1901
      %1919 = vmatmul.f32.gmra.mxu0 %v1751
      %v1920 = vpop.f32.mrf.mxu0
      %v1921 = vadd.f32 0.0, %v1920
      %1922 = vmatmul.f32.gmra.mxu0 %v1754
      %v1923 = vpop.f32.mrf.mxu0
      %v1924 = vadd.f32 0.0, %v1923
      %1925 = vmatmul.f32.gmra.mxu0 %v1757
      %v1926 = vpop.f32.mrf.mxu0
      %v1927 = vadd.f32 0.0, %v1926
      %1928 = vmatmul.f32.gmra.mxu0 %v1760
      %v1929 = vpop.f32.mrf.mxu0
      %v1930 = vadd.f32 0.0, %v1929
      %1931 = vmatmul.f32.gmra.mxu0 %v1763
      %v1932 = vpop.f32.mrf.mxu0
      %v1933 = vadd.f32 0.0, %v1932
      %1934 = vmatmul.f32.gmra.mxu0 %v1766
      %v1935 = vpop.f32.mrf.mxu0
      %v1936 = vadd.f32 0.0, %v1935
      %1937 = vmatmul.f32.gmra.mxu0 %v1769
      %v1938 = vpop.f32.mrf.mxu0
      %v1939 = vadd.f32 0.0, %v1938
      %1940 = vmatmul.f32.gmra.mxu0 %v1772
      %v1941 = vpop.f32.mrf.mxu0
      %v1942 = vadd.f32 0.0, %v1941
      %1943 = vmatmul.f32.gmra.mxu0 %v1775
      %v1944 = vpop.f32.mrf.mxu0
      %v1945 = vadd.f32 0.0, %v1944
      %1946 = vmatmul.f32.gmra.mxu0 %v1778
      %v1947 = vpop.f32.mrf.mxu0
      %v1948 = vadd.f32 0.0, %v1947
      %1949 = vmatmul.f32.gmra.mxu0 %v1781
      %v1950 = vpop.f32.mrf.mxu0
      %v1951 = vadd.f32 0.0, %v1950
      %1952 = vmatmul.f32.gmra.mxu0 %v1784
      %v1953 = vpop.f32.mrf.mxu0
      %v1954 = vadd.f32 0.0, %v1953
      %1955 = vmatmul.f32.gmra.mxu0 %v1787
      %v1956 = vpop.f32.mrf.mxu0
      %v1957 = vadd.f32 0.0, %v1956
      %1958 = vmatmul.f32.gmra.mxu0 %v1790
      %v1959 = vpop.f32.mrf.mxu0
      %v1960 = vadd.f32 0.0, %v1959
      %1961 = vmatmul.f32.gmra.mxu0 %v1793
      %v1962 = vpop.f32.mrf.mxu0
      %v1963 = vadd.f32 0.0, %v1962
      %1964 = vmatmul.f32.gmra.mxu0 %v1796
      %v1965 = vpop.f32.mrf.mxu0
      %v1966 = vadd.f32 0.0, %v1965
      %1967 = vmatmul.f32.gmra.mxu0 %v1799
      %v1968 = vpop.f32.mrf.mxu0
      %v1969 = vadd.f32 0.0, %v1968
      %1970 = vmatmul.f32.gmra.mxu0 %v1802
      %v1971 = vpop.f32.mrf.mxu0
      %v1972 = vadd.f32 0.0, %v1971
      %1973 = vmatmul.f32.gmra.mxu0 %v1805
      %v1974 = vpop.f32.mrf.mxu0
      %v1975 = vadd.f32 0.0, %v1974
      %1976 = vmatmul.f32.gmra.mxu0 %v1808
      %v1977 = vpop.f32.mrf.mxu0
      %v1978 = vadd.f32 0.0, %v1977
      %1979 = vmatmul.f32.gmra.mxu0 %v1811
      %v1980 = vpop.f32.mrf.mxu0
      %v1981 = vadd.f32 0.0, %v1980
      %1982 = vmatmul.f32.gmra.mxu0 %v1814
      %v1983 = vpop.f32.mrf.mxu0
      %v1984 = vadd.f32 0.0, %v1983
      %1985 = vmatmul.f32.gmra.mxu0 %v1817
      %v1986 = vpop.f32.mrf.mxu0
      %v1987 = vadd.f32 0.0, %v1986
      %1988 = vmatmul.f32.gmra.mxu0 %v1820
      %v1989 = vpop.f32.mrf.mxu0
      %v1990 = vadd.f32 0.0, %v1989
      %1991 = vmatmul.f32.gmra.mxu0 %v1823
      %v1992 = vpop.f32.mrf.mxu0
      %v1993 = vadd.f32 0.0, %v1992
      %1994 = vmatmul.f32.gmra.mxu0 %v1826
      %v1995 = vpop.f32.mrf.mxu0
      %v1996 = vadd.f32 0.0, %v1995
      %1997 = vmatmul.f32.gmra.mxu0 %v1829
      %v1998 = vpop.f32.mrf.mxu0
      %v1999 = vadd.f32 0.0, %v1998
      %2000 = vmatmul.f32.gmra.mxu0 %v1832
      %v2001 = vpop.f32.mrf.mxu0
      %v2002 = vadd.f32 0.0, %v2001
      %2003 = vmatmul.f32.gmra.mxu0 %v1835
      %v2004 = vpop.f32.mrf.mxu0
      %v2005 = vadd.f32 0.0, %v2004
      %2006 = vmatmul.f32.gmra.mxu0 %v1838
      %v2007 = vpop.f32.mrf.mxu0
      %v2008 = vadd.f32 0.0, %v2007
      %2009 = vmatmul.f32.gmra.mxu0 %v1841
      %v2010 = vpop.f32.mrf.mxu0
      %v2011 = vadd.f32 0.0, %v2010
      %2012 = vmatmul.f32.gmra.mxu0 %v1844
      %v2013 = vpop.f32.mrf.mxu0
      %v2014 = vadd.f32 0.0, %v2013
      %2015 = vmatmul.f32.gmra.mxu0 %v1847
      %v2016 = vpop.f32.mrf.mxu0
      %v2017 = vadd.f32 0.0, %v2016
      %2018 = vmatmul.f32.gmra.mxu0 %v1850
      %v2019 = vpop.f32.mrf.mxu0
      %v2020 = vadd.f32 0.0, %v2019
      %2021 = vmatmul.f32.gmra.mxu0 %v1853
      %v2022 = vpop.f32.mrf.mxu0
      %v2023 = vadd.f32 0.0, %v2022
      %2024 = vmatmul.f32.gmra.mxu0 %v1856
      %v2025 = vpop.f32.mrf.mxu0
      %v2026 = vadd.f32 0.0, %v2025
      %2027 = vmatmul.f32.gmra.mxu0 %v1859
      %v2028 = vpop.f32.mrf.mxu0
      %v2029 = vadd.f32 0.0, %v2028
      %2030 = vmatmul.f32.gmra.mxu0 %v1862
      %v2031 = vpop.f32.mrf.mxu0
      %v2032 = vadd.f32 0.0, %v2031
      %2033 = vmatmul.f32.gmra.mxu0 %v1865
      %v2034 = vpop.f32.mrf.mxu0
      %v2035 = vadd.f32 0.0, %v2034
      %2036 = vmatmul.f32.gmra.mxu0 %v1868
      %v2037 = vpop.f32.mrf.mxu0
      %v2038 = vadd.f32 0.0, %v2037
      %2039 = vmatmul.f32.gmra.mxu0 %v1871
      %v2040 = vpop.f32.mrf.mxu0
      %v2041 = vadd.f32 0.0, %v2040
      %2042 = vmatmul.f32.gmra.mxu0 %v1874
      %v2043 = vpop.f32.mrf.mxu0
      %v2044 = vadd.f32 0.0, %v2043
      %2045 = vmatmul.f32.gmra.mxu0 %v1877
      %v2046 = vpop.f32.mrf.mxu0
      %v2047 = vadd.f32 0.0, %v2046
      %2048 = vmatmul.f32.gmra.mxu0 %v1880
      %v2049 = vpop.f32.mrf.mxu0
      %v2050 = vadd.f32 0.0, %v2049
      %2051 = vmatmul.f32.gmra.mxu0 %v1883
      %v2052 = vpop.f32.mrf.mxu0
      %v2053 = vadd.f32 0.0, %v2052
      %2054 = vmatmul.f32.gmra.mxu0 %v1886
      %v2055 = vpop.f32.mrf.mxu0
      %v2056 = vadd.f32 0.0, %v2055
      %2057 = vmatmul.f32.gmra.mxu0 %v1889
      %v2058 = vpop.f32.mrf.mxu0
      %v2059 = vadd.f32 0.0, %v2058
      %2060 = vmatmul.f32.gmra.mxu0 %v1892
      %v2061 = vpop.f32.mrf.mxu0
      %v2062 = vadd.f32 0.0, %v2061
      %2063 = vmatmul.f32.gmra.mxu0 %v1895
      %v2064 = vpop.f32.mrf.mxu0
      %v2065 = vadd.f32 0.0, %v2064
      %2066 = vmatmul.f32.gmra.mxu0 %v1898
      %v2067 = vpop.f32.mrf.mxu0
      %v2068 = vadd.f32 0.0, %v2067
      %2069 = vdwg.mxu0
      %v2070 = vadd.f32 %v1648, %v1921
      %v2071 = vadd.f32 %v1649, %v1924
      %v2072 = vadd.f32 %v1650, %v1927
      %v2073 = vadd.f32 %v1651, %v1930
      %v2074 = vadd.f32 %v1652, %v1933
      %v2075 = vadd.f32 %v1653, %v1936
      %v2076 = vadd.f32 %v1654, %v1939
      %v2077 = vadd.f32 %v1655, %v1942
      %v2078 = vadd.f32 %v1656, %v1945
      %v2079 = vadd.f32 %v1657, %v1948
      %v2080 = vadd.f32 %v1658, %v1951
      %v2081 = vadd.f32 %v1659, %v1954
      %v2082 = vadd.f32 %v1660, %v1957
      %v2083 = vadd.f32 %v1661, %v1960
      %v2084 = vadd.f32 %v1662, %v1963
      %v2085 = vadd.f32 %v1663, %v1966
      %v2086 = vadd.f32 %v1664, %v1969
      %v2087 = vadd.f32 %v1665, %v1972
      %v2088 = vadd.f32 %v1666, %v1975
      %v2089 = vadd.f32 %v1667, %v1978
      %v2090 = vadd.f32 %v1668, %v1981
      %v2091 = vadd.f32 %v1669, %v1984
      %v2092 = vadd.f32 %v1670, %v1987
      %v2093 = vadd.f32 %v1671, %v1990
      %v2094 = vadd.f32 %v1672, %v1993
      %v2095 = vadd.f32 %v1673, %v1996
      %v2096 = vadd.f32 %v1674, %v1999
      %v2097 = vadd.f32 %v1675, %v2002
      %v2098 = vadd.f32 %v1676, %v2005
      %v2099 = vadd.f32 %v1677, %v2008
      %v2100 = vadd.f32 %v1678, %v2011
      %v2101 = vadd.f32 %v1679, %v2014
      %v2102 = vadd.f32 %v1680, %v2017
      %v2103 = vadd.f32 %v1681, %v2020
      %v2104 = vadd.f32 %v1682, %v2023
      %v2105 = vadd.f32 %v1683, %v2026
      %v2106 = vadd.f32 %v1684, %v2029
      %v2107 = vadd.f32 %v1685, %v2032
      %v2108 = vadd.f32 %v1686, %v2035
      %v2109 = vadd.f32 %v1687, %v2038
      %v2110 = vadd.f32 %v1688, %v2041
      %v2111 = vadd.f32 %v1689, %v2044
      %v2112 = vadd.f32 %v1690, %v2047
      %v2113 = vadd.f32 %v1691, %v2050
      %v2114 = vadd.f32 %v1692, %v2053
      %v2115 = vadd.f32 %v1693, %v2056
      %v2116 = vadd.f32 %v1694, %v2059
      %v2117 = vadd.f32 %v1695, %v2062
      %v2118 = vadd.f32 %v1696, %v2065
      %v2119 = vadd.f32 %v1697, %v2068
      %v2120 = vld [vmem:[%s410 + $0x28] sm:$0xff]
      %v2121 = vld [vmem:[%s410 + $0x30] sm:$0xff]
      %v2122 = vld [vmem:[%s410 + $0x38] sm:$0xff]
      %v2123 = vld [vmem:[%s410 + $0x40] sm:$0xff]
      %v2124 = vld [vmem:[%s410 + $0x48] sm:$0xff]
      %v2125 = vld [vmem:[%s410 + $0x50] sm:$0xff]
      %v2126 = vld [vmem:[%s410 + $0x58] sm:$0xff]
      %v2127 = vld [vmem:[%s410 + $0x60] sm:$0xff]
      %v2128 = vld [vmem:[%s410 + $0x68] sm:$0xff]
      %v2129 = vld [vmem:[%s410 + $0x70] sm:$0xff]
      %v2130 = vld [vmem:[%s410 + $0x78] sm:$0xff]
      %v2131 = vld [vmem:[%s410 + $0x80] sm:$0xff]
      %v2132 = vld [vmem:[%s410 + $0x88] sm:$0xff]
      %v2133 = vld [vmem:[%s410 + $0x90] sm:$0xff]
      %v2134 = vld [vmem:[%s410 + $0x98] sm:$0xff]
      %v2135 = vld [vmem:[%s410 + $0xa0] sm:$0xff]
      %v2136 = vld [vmem:[%s410 + $0xa8] sm:$0xff]
      %v2137 = vld [vmem:[%s410 + $0xb0] sm:$0xff]
      %v2138 = vld [vmem:[%s410 + $0xb8] sm:$0xff]
      %v2139 = vld [vmem:[%s410 + $0xc0] sm:$0xff]
      %v2140 = vld [vmem:[%s410 + $0xc8] sm:$0xff]
      %v2141 = vld [vmem:[%s410 + $0xd0] sm:$0xff]
      %v2142 = vld [vmem:[%s410 + $0xd8] sm:$0xff]
      %v2143 = vld [vmem:[%s410 + $0xe0] sm:$0xff]
      %v2144 = vld [vmem:[%s410 + $0xe8] sm:$0xff]
      %v2145 = vld [vmem:[%s410 + $0xf0] sm:$0xff]
      %v2146 = vld [vmem:[%s410 + $0xf8] sm:$0xff]
      %v2147 = vld [vmem:[%s410 + $0x100] sm:$0xff]
      %v2148 = vld [vmem:[%s410 + $0x108] sm:$0xff]
      %v2149 = vld [vmem:[%s410 + $0x110] sm:$0xff]
      %v2150 = vld [vmem:[%s410 + $0x118] sm:$0xff]
      %v2151 = vld [vmem:[%s410 + $0x120] sm:$0xff]
      %v2152 = vld [vmem:[%s410 + $0x128] sm:$0xff]
      %v2153 = vld [vmem:[%s410 + $0x130] sm:$0xff]
      %v2154 = vld [vmem:[%s410 + $0x138] sm:$0xff]
      %v2155 = vld [vmem:[%s410 + $0x140] sm:$0xff]
      %v2156 = vld [vmem:[%s410 + $0x148] sm:$0xff]
      %v2157 = vld [vmem:[%s410 + $0x150] sm:$0xff]
      %v2158 = vld [vmem:[%s410 + $0x158] sm:$0xff]
      %v2159 = vld [vmem:[%s410 + $0x160] sm:$0xff]
      %v2160 = vld [vmem:[%s410 + $0x168] sm:$0xff]
      %v2161 = vld [vmem:[%s410 + $0x170] sm:$0xff]
      %v2162 = vld [vmem:[%s410 + $0x178] sm:$0xff]
      %v2163 = vld [vmem:[%s410 + $0x180] sm:$0xff]
      %v2164 = vld [vmem:[%s410 + $0x188] sm:$0xff]
      %v2165 = vld [vmem:[%s410 + $0x190] sm:$0xff]
      %v2166 = vld [vmem:[%s410 + $0x198] sm:$0xff]
      %v2167 = vld [vmem:[%s410 + $0x1a0] sm:$0xff]
      %v2168 = vld [vmem:[%s410 + $0x1a8] sm:$0xff]
      %v2169 = vld [vmem:[%s410 + $0x1b0] sm:$0xff]
      %s2170 = scalar_lea.vmem %s5, 16
      %v2171 = vld [vmem:[%s2170] sm:$0xf]
      %v2173 = vsel %vm482, %v2120, 0
      %v2176 = vsel %vm482, %v2121, 0
      %v2179 = vsel %vm482, %v2122, 0
      %v2182 = vsel %vm482, %v2123, 0
      %v2185 = vsel %vm482, %v2124, 0
      %v2188 = vsel %vm482, %v2125, 0
      %v2191 = vsel %vm482, %v2126, 0
      %v2194 = vsel %vm482, %v2127, 0
      %v2197 = vsel %vm482, %v2128, 0
      %v2200 = vsel %vm482, %v2129, 0
      %v2203 = vsel %vm482, %v2130, 0
      %v2206 = vsel %vm482, %v2131, 0
      %v2209 = vsel %vm482, %v2132, 0
      %v2212 = vsel %vm482, %v2133, 0
      %v2215 = vsel %vm482, %v2134, 0
      %v2218 = vsel %vm482, %v2135, 0
      %v2221 = vsel %vm482, %v2136, 0
      %v2224 = vsel %vm482, %v2137, 0
      %v2227 = vsel %vm482, %v2138, 0
      %v2230 = vsel %vm482, %v2139, 0
      %v2233 = vsel %vm482, %v2140, 0
      %v2236 = vsel %vm482, %v2141, 0
      %v2239 = vsel %vm482, %v2142, 0
      %v2242 = vsel %vm482, %v2143, 0
      %v2245 = vsel %vm482, %v2144, 0
      %v2248 = vsel %vm482, %v2145, 0
      %v2251 = vsel %vm482, %v2146, 0
      %v2254 = vsel %vm482, %v2147, 0
      %v2257 = vsel %vm482, %v2148, 0
      %v2260 = vsel %vm482, %v2149, 0
      %v2263 = vsel %vm482, %v2150, 0
      %v2266 = vsel %vm482, %v2151, 0
      %v2269 = vsel %vm482, %v2152, 0
      %v2272 = vsel %vm482, %v2153, 0
      %v2275 = vsel %vm482, %v2154, 0
      %v2278 = vsel %vm482, %v2155, 0
      %v2281 = vsel %vm482, %v2156, 0
      %v2284 = vsel %vm482, %v2157, 0
      %v2287 = vsel %vm482, %v2158, 0
      %v2290 = vsel %vm482, %v2159, 0
      %v2293 = vsel %vm482, %v2160, 0
      %v2296 = vsel %vm482, %v2161, 0
      %v2299 = vsel %vm482, %v2162, 0
      %v2302 = vsel %vm482, %v2163, 0
      %v2305 = vsel %vm482, %v2164, 0
      %v2308 = vsel %vm482, %v2165, 0
      %v2311 = vsel %vm482, %v2166, 0
      %v2314 = vsel %vm482, %v2167, 0
      %v2317 = vsel %vm482, %v2168, 0
      %v2320 = vsel %vm482, %v2169, 0
      %v2323 = vsel %vm633, %v2171, 0
      %2325 = vmatpush.msra.mxu0 0.0
      %2326 = vmatpush.msra.mxu0 0.0
      %2327 = vmatpush.msra.mxu0 0.0
      %2328 = vmatpush.msra.mxu0 0.0
      %2329 = vmatpush.msra.mxu0 0.0
      %2330 = vmatpush.msra.mxu0 0.0
      %2331 = vmatpush.msra.mxu0 0.0
      %2332 = vmatpush.msra.mxu0 0.0
      %2333 = vmatpush.msra.mxu0 0.0
      %2334 = vmatpush.msra.mxu0 0.0
      %2335 = vmatpush.msra.mxu0 0.0
      %2336 = vmatpush.msra.mxu0 0.0
      %2337 = vmatpush.msra.mxu0 0.0
      %2338 = vmatpush.msra.mxu0 0.0
      %2339 = vmatpush.msra.mxu0 0.0
      %2340 = vmatpush.msra.mxu0 %v2323
      %2341 = vmatmul.f32.gmra.mxu0 %v2173
      %v2342 = vpop.f32.mrf.mxu0
      %v2343 = vadd.f32 0.0, %v2342
      %2344 = vmatmul.f32.gmra.mxu0 %v2176
      %v2345 = vpop.f32.mrf.mxu0
      %v2346 = vadd.f32 0.0, %v2345
      %2347 = vmatmul.f32.gmra.mxu0 %v2179
      %v2348 = vpop.f32.mrf.mxu0
      %v2349 = vadd.f32 0.0, %v2348
      %2350 = vmatmul.f32.gmra.mxu0 %v2182
      %v2351 = vpop.f32.mrf.mxu0
      %v2352 = vadd.f32 0.0, %v2351
      %2353 = vmatmul.f32.gmra.mxu0 %v2185
      %v2354 = vpop.f32.mrf.mxu0
      %v2355 = vadd.f32 0.0, %v2354
      %2356 = vmatmul.f32.gmra.mxu0 %v2188
      %v2357 = vpop.f32.mrf.mxu0
      %v2358 = vadd.f32 0.0, %v2357
      %2359 = vmatmul.f32.gmra.mxu0 %v2191
      %v2360 = vpop.f32.mrf.mxu0
      %v2361 = vadd.f32 0.0, %v2360
      %2362 = vmatmul.f32.gmra.mxu0 %v2194
      %v2363 = vpop.f32.mrf.mxu0
      %v2364 = vadd.f32 0.0, %v2363
      %2365 = vmatmul.f32.gmra.mxu0 %v2197
      %v2366 = vpop.f32.mrf.mxu0
      %v2367 = vadd.f32 0.0, %v2366
      %2368 = vmatmul.f32.gmra.mxu0 %v2200
      %v2369 = vpop.f32.mrf.mxu0
      %v2370 = vadd.f32 0.0, %v2369
      %2371 = vmatmul.f32.gmra.mxu0 %v2203
      %v2372 = vpop.f32.mrf.mxu0
      %v2373 = vadd.f32 0.0, %v2372
      %2374 = vmatmul.f32.gmra.mxu0 %v2206
      %v2375 = vpop.f32.mrf.mxu0
      %v2376 = vadd.f32 0.0, %v2375
      %2377 = vmatmul.f32.gmra.mxu0 %v2209
      %v2378 = vpop.f32.mrf.mxu0
      %v2379 = vadd.f32 0.0, %v2378
      %2380 = vmatmul.f32.gmra.mxu0 %v2212
      %v2381 = vpop.f32.mrf.mxu0
      %v2382 = vadd.f32 0.0, %v2381
      %2383 = vmatmul.f32.gmra.mxu0 %v2215
      %v2384 = vpop.f32.mrf.mxu0
      %v2385 = vadd.f32 0.0, %v2384
      %2386 = vmatmul.f32.gmra.mxu0 %v2218
      %v2387 = vpop.f32.mrf.mxu0
      %v2388 = vadd.f32 0.0, %v2387
      %2389 = vmatmul.f32.gmra.mxu0 %v2221
      %v2390 = vpop.f32.mrf.mxu0
      %v2391 = vadd.f32 0.0, %v2390
      %2392 = vmatmul.f32.gmra.mxu0 %v2224
      %v2393 = vpop.f32.mrf.mxu0
      %v2394 = vadd.f32 0.0, %v2393
      %2395 = vmatmul.f32.gmra.mxu0 %v2227
      %v2396 = vpop.f32.mrf.mxu0
      %v2397 = vadd.f32 0.0, %v2396
      %2398 = vmatmul.f32.gmra.mxu0 %v2230
      %v2399 = vpop.f32.mrf.mxu0
      %v2400 = vadd.f32 0.0, %v2399
      %2401 = vmatmul.f32.gmra.mxu0 %v2233
      %v2402 = vpop.f32.mrf.mxu0
      %v2403 = vadd.f32 0.0, %v2402
      %2404 = vmatmul.f32.gmra.mxu0 %v2236
      %v2405 = vpop.f32.mrf.mxu0
      %v2406 = vadd.f32 0.0, %v2405
      %2407 = vmatmul.f32.gmra.mxu0 %v2239
      %v2408 = vpop.f32.mrf.mxu0
      %v2409 = vadd.f32 0.0, %v2408
      %2410 = vmatmul.f32.gmra.mxu0 %v2242
      %v2411 = vpop.f32.mrf.mxu0
      %v2412 = vadd.f32 0.0, %v2411
      %2413 = vmatmul.f32.gmra.mxu0 %v2245
      %v2414 = vpop.f32.mrf.mxu0
      %v2415 = vadd.f32 0.0, %v2414
      %2416 = vmatmul.f32.gmra.mxu0 %v2248
      %v2417 = vpop.f32.mrf.mxu0
      %v2418 = vadd.f32 0.0, %v2417
      %2419 = vmatmul.f32.gmra.mxu0 %v2251
      %v2420 = vpop.f32.mrf.mxu0
      %v2421 = vadd.f32 0.0, %v2420
      %2422 = vmatmul.f32.gmra.mxu0 %v2254
      %v2423 = vpop.f32.mrf.mxu0
      %v2424 = vadd.f32 0.0, %v2423
      %2425 = vmatmul.f32.gmra.mxu0 %v2257
      %v2426 = vpop.f32.mrf.mxu0
      %v2427 = vadd.f32 0.0, %v2426
      %2428 = vmatmul.f32.gmra.mxu0 %v2260
      %v2429 = vpop.f32.mrf.mxu0
      %v2430 = vadd.f32 0.0, %v2429
      %2431 = vmatmul.f32.gmra.mxu0 %v2263
      %v2432 = vpop.f32.mrf.mxu0
      %v2433 = vadd.f32 0.0, %v2432
      %2434 = vmatmul.f32.gmra.mxu0 %v2266
      %v2435 = vpop.f32.mrf.mxu0
      %v2436 = vadd.f32 0.0, %v2435
      %2437 = vmatmul.f32.gmra.mxu0 %v2269
      %v2438 = vpop.f32.mrf.mxu0
      %v2439 = vadd.f32 0.0, %v2438
      %2440 = vmatmul.f32.gmra.mxu0 %v2272
      %v2441 = vpop.f32.mrf.mxu0
      %v2442 = vadd.f32 0.0, %v2441
      %2443 = vmatmul.f32.gmra.mxu0 %v2275
      %v2444 = vpop.f32.mrf.mxu0
      %v2445 = vadd.f32 0.0, %v2444
      %2446 = vmatmul.f32.gmra.mxu0 %v2278
      %v2447 = vpop.f32.mrf.mxu0
      %v2448 = vadd.f32 0.0, %v2447
      %2449 = vmatmul.f32.gmra.mxu0 %v2281
      %v2450 = vpop.f32.mrf.mxu0
      %v2451 = vadd.f32 0.0, %v2450
      %2452 = vmatmul.f32.gmra.mxu0 %v2284
      %v2453 = vpop.f32.mrf.mxu0
      %v2454 = vadd.f32 0.0, %v2453
      %2455 = vmatmul.f32.gmra.mxu0 %v2287
      %v2456 = vpop.f32.mrf.mxu0
      %v2457 = vadd.f32 0.0, %v2456
      %2458 = vmatmul.f32.gmra.mxu0 %v2290
      %v2459 = vpop.f32.mrf.mxu0
      %v2460 = vadd.f32 0.0, %v2459
      %2461 = vmatmul.f32.gmra.mxu0 %v2293
      %v2462 = vpop.f32.mrf.mxu0
      %v2463 = vadd.f32 0.0, %v2462
      %2464 = vmatmul.f32.gmra.mxu0 %v2296
      %v2465 = vpop.f32.mrf.mxu0
      %v2466 = vadd.f32 0.0, %v2465
      %2467 = vmatmul.f32.gmra.mxu0 %v2299
      %v2468 = vpop.f32.mrf.mxu0
      %v2469 = vadd.f32 0.0, %v2468
      %2470 = vmatmul.f32.gmra.mxu0 %v2302
      %v2471 = vpop.f32.mrf.mxu0
      %v2472 = vadd.f32 0.0, %v2471
      %2473 = vmatmul.f32.gmra.mxu0 %v2305
      %v2474 = vpop.f32.mrf.mxu0
      %v2475 = vadd.f32 0.0, %v2474
      %2476 = vmatmul.f32.gmra.mxu0 %v2308
      %v2477 = vpop.f32.mrf.mxu0
      %v2478 = vadd.f32 0.0, %v2477
      %2479 = vmatmul.f32.gmra.mxu0 %v2311
      %v2480 = vpop.f32.mrf.mxu0
      %v2481 = vadd.f32 0.0, %v2480
      %2482 = vmatmul.f32.gmra.mxu0 %v2314
      %v2483 = vpop.f32.mrf.mxu0
      %v2484 = vadd.f32 0.0, %v2483
      %2485 = vmatmul.f32.gmra.mxu0 %v2317
      %v2486 = vpop.f32.mrf.mxu0
      %v2487 = vadd.f32 0.0, %v2486
      %2488 = vmatmul.f32.gmra.mxu0 %v2320
      %v2489 = vpop.f32.mrf.mxu0
      %v2490 = vadd.f32 0.0, %v2489
      %2491 = vdwg.mxu0
      %v2492 = vadd.f32 %v2070, %v2343
      %v2493 = vadd.f32 %v2071, %v2346
      %v2494 = vadd.f32 %v2072, %v2349
      %v2495 = vadd.f32 %v2073, %v2352
      %v2496 = vadd.f32 %v2074, %v2355
      %v2497 = vadd.f32 %v2075, %v2358
      %v2498 = vadd.f32 %v2076, %v2361
      %v2499 = vadd.f32 %v2077, %v2364
      %v2500 = vadd.f32 %v2078, %v2367
      %v2501 = vadd.f32 %v2079, %v2370
      %v2502 = vadd.f32 %v2080, %v2373
      %v2503 = vadd.f32 %v2081, %v2376
      %v2504 = vadd.f32 %v2082, %v2379
      %v2505 = vadd.f32 %v2083, %v2382
      %v2506 = vadd.f32 %v2084, %v2385
      %v2507 = vadd.f32 %v2085, %v2388
      %v2508 = vadd.f32 %v2086, %v2391
      %v2509 = vadd.f32 %v2087, %v2394
      %v2510 = vadd.f32 %v2088, %v2397
      %v2511 = vadd.f32 %v2089, %v2400
      %v2512 = vadd.f32 %v2090, %v2403
      %v2513 = vadd.f32 %v2091, %v2406
      %v2514 = vadd.f32 %v2092, %v2409
      %v2515 = vadd.f32 %v2093, %v2412
      %v2516 = vadd.f32 %v2094, %v2415
      %v2517 = vadd.f32 %v2095, %v2418
      %v2518 = vadd.f32 %v2096, %v2421
      %v2519 = vadd.f32 %v2097, %v2424
      %v2520 = vadd.f32 %v2098, %v2427
      %v2521 = vadd.f32 %v2099, %v2430
      %v2522 = vadd.f32 %v2100, %v2433
      %v2523 = vadd.f32 %v2101, %v2436
      %v2524 = vadd.f32 %v2102, %v2439
      %v2525 = vadd.f32 %v2103, %v2442
      %v2526 = vadd.f32 %v2104, %v2445
      %v2527 = vadd.f32 %v2105, %v2448
      %v2528 = vadd.f32 %v2106, %v2451
      %v2529 = vadd.f32 %v2107, %v2454
      %v2530 = vadd.f32 %v2108, %v2457
      %v2531 = vadd.f32 %v2109, %v2460
      %v2532 = vadd.f32 %v2110, %v2463
      %v2533 = vadd.f32 %v2111, %v2466
      %v2534 = vadd.f32 %v2112, %v2469
      %v2535 = vadd.f32 %v2113, %v2472
      %v2536 = vadd.f32 %v2114, %v2475
      %v2537 = vadd.f32 %v2115, %v2478
      %v2538 = vadd.f32 %v2116, %v2481
      %v2539 = vadd.f32 %v2117, %v2484
      %v2540 = vadd.f32 %v2118, %v2487
      %v2541 = vadd.f32 %v2119, %v2490
      %v2542 = vld [vmem:[%s410 + $0x29] sm:$0xff]
      %v2543 = vld [vmem:[%s410 + $0x31] sm:$0xff]
      %v2544 = vld [vmem:[%s410 + $0x39] sm:$0xff]
      %v2545 = vld [vmem:[%s410 + $0x41] sm:$0xff]
      %v2546 = vld [vmem:[%s410 + $0x49] sm:$0xff]
      %v2547 = vld [vmem:[%s410 + $0x51] sm:$0xff]
      %v2548 = vld [vmem:[%s410 + $0x59] sm:$0xff]
      %v2549 = vld [vmem:[%s410 + $0x61] sm:$0xff]
      %v2550 = vld [vmem:[%s410 + $0x69] sm:$0xff]
      %v2551 = vld [vmem:[%s410 + $0x71] sm:$0xff]
      %v2552 = vld [vmem:[%s410 + $0x79] sm:$0xff]
      %v2553 = vld [vmem:[%s410 + $0x81] sm:$0xff]
      %v2554 = vld [vmem:[%s410 + $0x89] sm:$0xff]
      %v2555 = vld [vmem:[%s410 + $0x91] sm:$0xff]
      %v2556 = vld [vmem:[%s410 + $0x99] sm:$0xff]
      %v2557 = vld [vmem:[%s410 + $0xa1] sm:$0xff]
      %v2558 = vld [vmem:[%s410 + $0xa9] sm:$0xff]
      %v2559 = vld [vmem:[%s410 + $0xb1] sm:$0xff]
      %v2560 = vld [vmem:[%s410 + $0xb9] sm:$0xff]
      %v2561 = vld [vmem:[%s410 + $0xc1] sm:$0xff]
      %v2562 = vld [vmem:[%s410 + $0xc9] sm:$0xff]
      %v2563 = vld [vmem:[%s410 + $0xd1] sm:$0xff]
      %v2564 = vld [vmem:[%s410 + $0xd9] sm:$0xff]
      %v2565 = vld [vmem:[%s410 + $0xe1] sm:$0xff]
      %v2566 = vld [vmem:[%s410 + $0xe9] sm:$0xff]
      %v2567 = vld [vmem:[%s410 + $0xf1] sm:$0xff]
      %v2568 = vld [vmem:[%s410 + $0xf9] sm:$0xff]
      %v2569 = vld [vmem:[%s410 + $0x101] sm:$0xff]
      %v2570 = vld [vmem:[%s410 + $0x109] sm:$0xff]
      %v2571 = vld [vmem:[%s410 + $0x111] sm:$0xff]
      %v2572 = vld [vmem:[%s410 + $0x119] sm:$0xff]
      %v2573 = vld [vmem:[%s410 + $0x121] sm:$0xff]
      %v2574 = vld [vmem:[%s410 + $0x129] sm:$0xff]
      %v2575 = vld [vmem:[%s410 + $0x131] sm:$0xff]
      %v2576 = vld [vmem:[%s410 + $0x139] sm:$0xff]
      %v2577 = vld [vmem:[%s410 + $0x141] sm:$0xff]
      %v2578 = vld [vmem:[%s410 + $0x149] sm:$0xff]
      %v2579 = vld [vmem:[%s410 + $0x151] sm:$0xff]
      %v2580 = vld [vmem:[%s410 + $0x159] sm:$0xff]
      %v2581 = vld [vmem:[%s410 + $0x161] sm:$0xff]
      %v2582 = vld [vmem:[%s410 + $0x169] sm:$0xff]
      %v2583 = vld [vmem:[%s410 + $0x171] sm:$0xff]
      %v2584 = vld [vmem:[%s410 + $0x179] sm:$0xff]
      %v2585 = vld [vmem:[%s410 + $0x181] sm:$0xff]
      %v2586 = vld [vmem:[%s410 + $0x189] sm:$0xff]
      %v2587 = vld [vmem:[%s410 + $0x191] sm:$0xff]
      %v2588 = vld [vmem:[%s410 + $0x199] sm:$0xff]
      %v2589 = vld [vmem:[%s410 + $0x1a1] sm:$0xff]
      %v2590 = vld [vmem:[%s410 + $0x1a9] sm:$0xff]
      %v2591 = vld [vmem:[%s410 + $0x1b1] sm:$0xff]
      %s2592 = scalar_lea.vmem %s5, 20
      %v2593 = vld [vmem:[%s2592] sm:$0xf]
      %v2595 = vsel %vm482, %v2542, 0
      %v2598 = vsel %vm482, %v2543, 0
      %v2601 = vsel %vm482, %v2544, 0
      %v2604 = vsel %vm482, %v2545, 0
      %v2607 = vsel %vm482, %v2546, 0
      %v2610 = vsel %vm482, %v2547, 0
      %v2613 = vsel %vm482, %v2548, 0
      %v2616 = vsel %vm482, %v2549, 0
      %v2619 = vsel %vm482, %v2550, 0
      %v2622 = vsel %vm482, %v2551, 0
      %v2625 = vsel %vm482, %v2552, 0
      %v2628 = vsel %vm482, %v2553, 0
      %v2631 = vsel %vm482, %v2554, 0
      %v2634 = vsel %vm482, %v2555, 0
      %v2637 = vsel %vm482, %v2556, 0
      %v2640 = vsel %vm482, %v2557, 0
      %v2643 = vsel %vm482, %v2558, 0
      %v2646 = vsel %vm482, %v2559, 0
      %v2649 = vsel %vm482, %v2560, 0
      %v2652 = vsel %vm482, %v2561, 0
      %v2655 = vsel %vm482, %v2562, 0
      %v2658 = vsel %vm482, %v2563, 0
      %v2661 = vsel %vm482, %v2564, 0
      %v2664 = vsel %vm482, %v2565, 0
      %v2667 = vsel %vm482, %v2566, 0
      %v2670 = vsel %vm482, %v2567, 0
      %v2673 = vsel %vm482, %v2568, 0
      %v2676 = vsel %vm482, %v2569, 0
      %v2679 = vsel %vm482, %v2570, 0
      %v2682 = vsel %vm482, %v2571, 0
      %v2685 = vsel %vm482, %v2572, 0
      %v2688 = vsel %vm482, %v2573, 0
      %v2691 = vsel %vm482, %v2574, 0
      %v2694 = vsel %vm482, %v2575, 0
      %v2697 = vsel %vm482, %v2576, 0
      %v2700 = vsel %vm482, %v2577, 0
      %v2703 = vsel %vm482, %v2578, 0
      %v2706 = vsel %vm482, %v2579, 0
      %v2709 = vsel %vm482, %v2580, 0
      %v2712 = vsel %vm482, %v2581, 0
      %v2715 = vsel %vm482, %v2582, 0
      %v2718 = vsel %vm482, %v2583, 0
      %v2721 = vsel %vm482, %v2584, 0
      %v2724 = vsel %vm482, %v2585, 0
      %v2727 = vsel %vm482, %v2586, 0
      %v2730 = vsel %vm482, %v2587, 0
      %v2733 = vsel %vm482, %v2588, 0
      %v2736 = vsel %vm482, %v2589, 0
      %v2739 = vsel %vm482, %v2590, 0
      %v2742 = vsel %vm482, %v2591, 0
      %v2745 = vsel %vm633, %v2593, 0
      %2747 = vmatpush.msra.mxu0 0.0
      %2748 = vmatpush.msra.mxu0 0.0
      %2749 = vmatpush.msra.mxu0 0.0
      %2750 = vmatpush.msra.mxu0 0.0
      %2751 = vmatpush.msra.mxu0 0.0
      %2752 = vmatpush.msra.mxu0 0.0
      %2753 = vmatpush.msra.mxu0 0.0
      %2754 = vmatpush.msra.mxu0 0.0
      %2755 = vmatpush.msra.mxu0 0.0
      %2756 = vmatpush.msra.mxu0 0.0
      %2757 = vmatpush.msra.mxu0 0.0
      %2758 = vmatpush.msra.mxu0 0.0
      %2759 = vmatpush.msra.mxu0 0.0
      %2760 = vmatpush.msra.mxu0 0.0
      %2761 = vmatpush.msra.mxu0 0.0
      %2762 = vmatpush.msra.mxu0 %v2745
      %2763 = vmatmul.f32.gmra.mxu0 %v2595
      %v2764 = vpop.f32.mrf.mxu0
      %v2765 = vadd.f32 0.0, %v2764
      %2766 = vmatmul.f32.gmra.mxu0 %v2598
      %v2767 = vpop.f32.mrf.mxu0
      %v2768 = vadd.f32 0.0, %v2767
      %2769 = vmatmul.f32.gmra.mxu0 %v2601
      %v2770 = vpop.f32.mrf.mxu0
      %v2771 = vadd.f32 0.0, %v2770
      %2772 = vmatmul.f32.gmra.mxu0 %v2604
      %v2773 = vpop.f32.mrf.mxu0
      %v2774 = vadd.f32 0.0, %v2773
      %2775 = vmatmul.f32.gmra.mxu0 %v2607
      %v2776 = vpop.f32.mrf.mxu0
      %v2777 = vadd.f32 0.0, %v2776
      %2778 = vmatmul.f32.gmra.mxu0 %v2610
      %v2779 = vpop.f32.mrf.mxu0
      %v2780 = vadd.f32 0.0, %v2779
      %2781 = vmatmul.f32.gmra.mxu0 %v2613
      %v2782 = vpop.f32.mrf.mxu0
      %v2783 = vadd.f32 0.0, %v2782
      %2784 = vmatmul.f32.gmra.mxu0 %v2616
      %v2785 = vpop.f32.mrf.mxu0
      %v2786 = vadd.f32 0.0, %v2785
      %2787 = vmatmul.f32.gmra.mxu0 %v2619
      %v2788 = vpop.f32.mrf.mxu0
      %v2789 = vadd.f32 0.0, %v2788
      %2790 = vmatmul.f32.gmra.mxu0 %v2622
      %v2791 = vpop.f32.mrf.mxu0
      %v2792 = vadd.f32 0.0, %v2791
      %2793 = vmatmul.f32.gmra.mxu0 %v2625
      %v2794 = vpop.f32.mrf.mxu0
      %v2795 = vadd.f32 0.0, %v2794
      %2796 = vmatmul.f32.gmra.mxu0 %v2628
      %v2797 = vpop.f32.mrf.mxu0
      %v2798 = vadd.f32 0.0, %v2797
      %2799 = vmatmul.f32.gmra.mxu0 %v2631
      %v2800 = vpop.f32.mrf.mxu0
      %v2801 = vadd.f32 0.0, %v2800
      %2802 = vmatmul.f32.gmra.mxu0 %v2634
      %v2803 = vpop.f32.mrf.mxu0
      %v2804 = vadd.f32 0.0, %v2803
      %2805 = vmatmul.f32.gmra.mxu0 %v2637
      %v2806 = vpop.f32.mrf.mxu0
      %v2807 = vadd.f32 0.0, %v2806
      %2808 = vmatmul.f32.gmra.mxu0 %v2640
      %v2809 = vpop.f32.mrf.mxu0
      %v2810 = vadd.f32 0.0, %v2809
      %2811 = vmatmul.f32.gmra.mxu0 %v2643
      %v2812 = vpop.f32.mrf.mxu0
      %v2813 = vadd.f32 0.0, %v2812
      %2814 = vmatmul.f32.gmra.mxu0 %v2646
      %v2815 = vpop.f32.mrf.mxu0
      %v2816 = vadd.f32 0.0, %v2815
      %2817 = vmatmul.f32.gmra.mxu0 %v2649
      %v2818 = vpop.f32.mrf.mxu0
      %v2819 = vadd.f32 0.0, %v2818
      %2820 = vmatmul.f32.gmra.mxu0 %v2652
      %v2821 = vpop.f32.mrf.mxu0
      %v2822 = vadd.f32 0.0, %v2821
      %2823 = vmatmul.f32.gmra.mxu0 %v2655
      %v2824 = vpop.f32.mrf.mxu0
      %v2825 = vadd.f32 0.0, %v2824
      %2826 = vmatmul.f32.gmra.mxu0 %v2658
      %v2827 = vpop.f32.mrf.mxu0
      %v2828 = vadd.f32 0.0, %v2827
      %2829 = vmatmul.f32.gmra.mxu0 %v2661
      %v2830 = vpop.f32.mrf.mxu0
      %v2831 = vadd.f32 0.0, %v2830
      %2832 = vmatmul.f32.gmra.mxu0 %v2664
      %v2833 = vpop.f32.mrf.mxu0
      %v2834 = vadd.f32 0.0, %v2833
      %2835 = vmatmul.f32.gmra.mxu0 %v2667
      %v2836 = vpop.f32.mrf.mxu0
      %v2837 = vadd.f32 0.0, %v2836
      %2838 = vmatmul.f32.gmra.mxu0 %v2670
      %v2839 = vpop.f32.mrf.mxu0
      %v2840 = vadd.f32 0.0, %v2839
      %2841 = vmatmul.f32.gmra.mxu0 %v2673
      %v2842 = vpop.f32.mrf.mxu0
      %v2843 = vadd.f32 0.0, %v2842
      %2844 = vmatmul.f32.gmra.mxu0 %v2676
      %v2845 = vpop.f32.mrf.mxu0
      %v2846 = vadd.f32 0.0, %v2845
      %2847 = vmatmul.f32.gmra.mxu0 %v2679
      %v2848 = vpop.f32.mrf.mxu0
      %v2849 = vadd.f32 0.0, %v2848
      %2850 = vmatmul.f32.gmra.mxu0 %v2682
      %v2851 = vpop.f32.mrf.mxu0
      %v2852 = vadd.f32 0.0, %v2851
      %2853 = vmatmul.f32.gmra.mxu0 %v2685
      %v2854 = vpop.f32.mrf.mxu0
      %v2855 = vadd.f32 0.0, %v2854
      %2856 = vmatmul.f32.gmra.mxu0 %v2688
      %v2857 = vpop.f32.mrf.mxu0
      %v2858 = vadd.f32 0.0, %v2857
      %2859 = vmatmul.f32.gmra.mxu0 %v2691
      %v2860 = vpop.f32.mrf.mxu0
      %v2861 = vadd.f32 0.0, %v2860
      %2862 = vmatmul.f32.gmra.mxu0 %v2694
      %v2863 = vpop.f32.mrf.mxu0
      %v2864 = vadd.f32 0.0, %v2863
      %2865 = vmatmul.f32.gmra.mxu0 %v2697
      %v2866 = vpop.f32.mrf.mxu0
      %v2867 = vadd.f32 0.0, %v2866
      %2868 = vmatmul.f32.gmra.mxu0 %v2700
      %v2869 = vpop.f32.mrf.mxu0
      %v2870 = vadd.f32 0.0, %v2869
      %2871 = vmatmul.f32.gmra.mxu0 %v2703
      %v2872 = vpop.f32.mrf.mxu0
      %v2873 = vadd.f32 0.0, %v2872
      %2874 = vmatmul.f32.gmra.mxu0 %v2706
      %v2875 = vpop.f32.mrf.mxu0
      %v2876 = vadd.f32 0.0, %v2875
      %2877 = vmatmul.f32.gmra.mxu0 %v2709
      %v2878 = vpop.f32.mrf.mxu0
      %v2879 = vadd.f32 0.0, %v2878
      %2880 = vmatmul.f32.gmra.mxu0 %v2712
      %v2881 = vpop.f32.mrf.mxu0
      %v2882 = vadd.f32 0.0, %v2881
      %2883 = vmatmul.f32.gmra.mxu0 %v2715
      %v2884 = vpop.f32.mrf.mxu0
      %v2885 = vadd.f32 0.0, %v2884
      %2886 = vmatmul.f32.gmra.mxu0 %v2718
      %v2887 = vpop.f32.mrf.mxu0
      %v2888 = vadd.f32 0.0, %v2887
      %2889 = vmatmul.f32.gmra.mxu0 %v2721
      %v2890 = vpop.f32.mrf.mxu0
      %v2891 = vadd.f32 0.0, %v2890
      %2892 = vmatmul.f32.gmra.mxu0 %v2724
      %v2893 = vpop.f32.mrf.mxu0
      %v2894 = vadd.f32 0.0, %v2893
      %2895 = vmatmul.f32.gmra.mxu0 %v2727
      %v2896 = vpop.f32.mrf.mxu0
      %v2897 = vadd.f32 0.0, %v2896
      %2898 = vmatmul.f32.gmra.mxu0 %v2730
      %v2899 = vpop.f32.mrf.mxu0
      %v2900 = vadd.f32 0.0, %v2899
      %2901 = vmatmul.f32.gmra.mxu0 %v2733
      %v2902 = vpop.f32.mrf.mxu0
      %v2903 = vadd.f32 0.0, %v2902
      %2904 = vmatmul.f32.gmra.mxu0 %v2736
      %v2905 = vpop.f32.mrf.mxu0
      %v2906 = vadd.f32 0.0, %v2905
      %2907 = vmatmul.f32.gmra.mxu0 %v2739
      %v2908 = vpop.f32.mrf.mxu0
      %v2909 = vadd.f32 0.0, %v2908
      %2910 = vmatmul.f32.gmra.mxu0 %v2742
      %v2911 = vpop.f32.mrf.mxu0
      %v2912 = vadd.f32 0.0, %v2911
      %2913 = vdwg.mxu0
      %v2914 = vadd.f32 %v2492, %v2765
      %v2915 = vadd.f32 %v2493, %v2768
      %v2916 = vadd.f32 %v2494, %v2771
      %v2917 = vadd.f32 %v2495, %v2774
      %v2918 = vadd.f32 %v2496, %v2777
      %v2919 = vadd.f32 %v2497, %v2780
      %v2920 = vadd.f32 %v2498, %v2783
      %v2921 = vadd.f32 %v2499, %v2786
      %v2922 = vadd.f32 %v2500, %v2789
      %v2923 = vadd.f32 %v2501, %v2792
      %v2924 = vadd.f32 %v2502, %v2795
      %v2925 = vadd.f32 %v2503, %v2798
      %v2926 = vadd.f32 %v2504, %v2801
      %v2927 = vadd.f32 %v2505, %v2804
      %v2928 = vadd.f32 %v2506, %v2807
      %v2929 = vadd.f32 %v2507, %v2810
      %v2930 = vadd.f32 %v2508, %v2813
      %v2931 = vadd.f32 %v2509, %v2816
      %v2932 = vadd.f32 %v2510, %v2819
      %v2933 = vadd.f32 %v2511, %v2822
      %v2934 = vadd.f32 %v2512, %v2825
      %v2935 = vadd.f32 %v2513, %v2828
      %v2936 = vadd.f32 %v2514, %v2831
      %v2937 = vadd.f32 %v2515, %v2834
      %v2938 = vadd.f32 %v2516, %v2837
      %v2939 = vadd.f32 %v2517, %v2840
      %v2940 = vadd.f32 %v2518, %v2843
      %v2941 = vadd.f32 %v2519, %v2846
      %v2942 = vadd.f32 %v2520, %v2849
      %v2943 = vadd.f32 %v2521, %v2852
      %v2944 = vadd.f32 %v2522, %v2855
      %v2945 = vadd.f32 %v2523, %v2858
      %v2946 = vadd.f32 %v2524, %v2861
      %v2947 = vadd.f32 %v2525, %v2864
      %v2948 = vadd.f32 %v2526, %v2867
      %v2949 = vadd.f32 %v2527, %v2870
      %v2950 = vadd.f32 %v2528, %v2873
      %v2951 = vadd.f32 %v2529, %v2876
      %v2952 = vadd.f32 %v2530, %v2879
      %v2953 = vadd.f32 %v2531, %v2882
      %v2954 = vadd.f32 %v2532, %v2885
      %v2955 = vadd.f32 %v2533, %v2888
      %v2956 = vadd.f32 %v2534, %v2891
      %v2957 = vadd.f32 %v2535, %v2894
      %v2958 = vadd.f32 %v2536, %v2897
      %v2959 = vadd.f32 %v2537, %v2900
      %v2960 = vadd.f32 %v2538, %v2903
      %v2961 = vadd.f32 %v2539, %v2906
      %v2962 = vadd.f32 %v2540, %v2909
      %v2963 = vadd.f32 %v2541, %v2912
      %v2964 = vld [vmem:[%s410 + $0x3b] sm:$0xff]
      %v2965 = vld [vmem:[%s410 + $0x43] sm:$0xff]
      %v2966 = vld [vmem:[%s410 + $0x4b] sm:$0xff]
      %v2967 = vld [vmem:[%s410 + $0x53] sm:$0xff]
      %v2968 = vld [vmem:[%s410 + $0x5b] sm:$0xff]
      %v2969 = vld [vmem:[%s410 + $0x63] sm:$0xff]
      %v2970 = vld [vmem:[%s410 + $0x6b] sm:$0xff]
      %v2971 = vld [vmem:[%s410 + $0x73] sm:$0xff]
      %v2972 = vld [vmem:[%s410 + $0x7b] sm:$0xff]
      %v2973 = vld [vmem:[%s410 + $0x83] sm:$0xff]
      %v2974 = vld [vmem:[%s410 + $0x8b] sm:$0xff]
      %v2975 = vld [vmem:[%s410 + $0x93] sm:$0xff]
      %v2976 = vld [vmem:[%s410 + $0x9b] sm:$0xff]
      %v2977 = vld [vmem:[%s410 + $0xa3] sm:$0xff]
      %v2978 = vld [vmem:[%s410 + $0xab] sm:$0xff]
      %v2979 = vld [vmem:[%s410 + $0xb3] sm:$0xff]
      %v2980 = vld [vmem:[%s410 + $0xbb] sm:$0xff]
      %v2981 = vld [vmem:[%s410 + $0xc3] sm:$0xff]
      %v2982 = vld [vmem:[%s410 + $0xcb] sm:$0xff]
      %v2983 = vld [vmem:[%s410 + $0xd3] sm:$0xff]
      %v2984 = vld [vmem:[%s410 + $0xdb] sm:$0xff]
      %v2985 = vld [vmem:[%s410 + $0xe3] sm:$0xff]
      %v2986 = vld [vmem:[%s410 + $0xeb] sm:$0xff]
      %v2987 = vld [vmem:[%s410 + $0xf3] sm:$0xff]
      %v2988 = vld [vmem:[%s410 + $0xfb] sm:$0xff]
      %v2989 = vld [vmem:[%s410 + $0x103] sm:$0xff]
      %v2990 = vld [vmem:[%s410 + $0x10b] sm:$0xff]
      %v2991 = vld [vmem:[%s410 + $0x113] sm:$0xff]
      %v2992 = vld [vmem:[%s410 + $0x11b] sm:$0xff]
      %v2993 = vld [vmem:[%s410 + $0x123] sm:$0xff]
      %v2994 = vld [vmem:[%s410 + $0x12b] sm:$0xff]
      %v2995 = vld [vmem:[%s410 + $0x133] sm:$0xff]
      %v2996 = vld [vmem:[%s410 + $0x13b] sm:$0xff]
      %v2997 = vld [vmem:[%s410 + $0x143] sm:$0xff]
      %v2998 = vld [vmem:[%s410 + $0x14b] sm:$0xff]
      %v2999 = vld [vmem:[%s410 + $0x153] sm:$0xff]
      %v3000 = vld [vmem:[%s410 + $0x15b] sm:$0xff]
      %v3001 = vld [vmem:[%s410 + $0x163] sm:$0xff]
      %v3002 = vld [vmem:[%s410 + $0x16b] sm:$0xff]
      %v3003 = vld [vmem:[%s410 + $0x173] sm:$0xff]
      %v3004 = vld [vmem:[%s410 + $0x17b] sm:$0xff]
      %v3005 = vld [vmem:[%s410 + $0x183] sm:$0xff]
      %v3006 = vld [vmem:[%s410 + $0x18b] sm:$0xff]
      %v3007 = vld [vmem:[%s410 + $0x193] sm:$0xff]
      %v3008 = vld [vmem:[%s410 + $0x19b] sm:$0xff]
      %v3009 = vld [vmem:[%s410 + $0x1a3] sm:$0xff]
      %v3010 = vld [vmem:[%s410 + $0x1ab] sm:$0xff]
      %v3011 = vld [vmem:[%s410 + $0x1b3] sm:$0xff]
      %v3012 = vld [vmem:[%s410 + $0x1bb] sm:$0xff]
      %v3013 = vld [vmem:[%s410 + $0x1c3] sm:$0xff]
      %s3014 = scalar_lea.vmem %s5, 24
      %v3015 = vld [vmem:[%s3014] sm:$0xf]
      %v3017 = vsel %vm482, %v2964, 0
      %v3020 = vsel %vm482, %v2965, 0
      %v3023 = vsel %vm482, %v2966, 0
      %v3026 = vsel %vm482, %v2967, 0
      %v3029 = vsel %vm482, %v2968, 0
      %v3032 = vsel %vm482, %v2969, 0
      %v3035 = vsel %vm482, %v2970, 0
      %v3038 = vsel %vm482, %v2971, 0
      %v3041 = vsel %vm482, %v2972, 0
      %v3044 = vsel %vm482, %v2973, 0
      %v3047 = vsel %vm482, %v2974, 0
      %v3050 = vsel %vm482, %v2975, 0
      %v3053 = vsel %vm482, %v2976, 0
      %v3056 = vsel %vm482, %v2977, 0
      %v3059 = vsel %vm482, %v2978, 0
      %v3062 = vsel %vm482, %v2979, 0
      %v3065 = vsel %vm482, %v2980, 0
      %v3068 = vsel %vm482, %v2981, 0
      %v3071 = vsel %vm482, %v2982, 0
      %v3074 = vsel %vm482, %v2983, 0
      %v3077 = vsel %vm482, %v2984, 0
      %v3080 = vsel %vm482, %v2985, 0
      %v3083 = vsel %vm482, %v2986, 0
      %v3086 = vsel %vm482, %v2987, 0
      %v3089 = vsel %vm482, %v2988, 0
      %v3092 = vsel %vm482, %v2989, 0
      %v3095 = vsel %vm482, %v2990, 0
      %v3098 = vsel %vm482, %v2991, 0
      %v3101 = vsel %vm482, %v2992, 0
      %v3104 = vsel %vm482, %v2993, 0
      %v3107 = vsel %vm482, %v2994, 0
      %v3110 = vsel %vm482, %v2995, 0
      %v3113 = vsel %vm482, %v2996, 0
      %v3116 = vsel %vm482, %v2997, 0
      %v3119 = vsel %vm482, %v2998, 0
      %v3122 = vsel %vm482, %v2999, 0
      %v3125 = vsel %vm482, %v3000, 0
      %v3128 = vsel %vm482, %v3001, 0
      %v3131 = vsel %vm482, %v3002, 0
      %v3134 = vsel %vm482, %v3003, 0
      %v3137 = vsel %vm482, %v3004, 0
      %v3140 = vsel %vm482, %v3005, 0
      %v3143 = vsel %vm482, %v3006, 0
      %v3146 = vsel %vm482, %v3007, 0
      %v3149 = vsel %vm482, %v3008, 0
      %v3152 = vsel %vm482, %v3009, 0
      %v3155 = vsel %vm482, %v3010, 0
      %v3158 = vsel %vm482, %v3011, 0
      %v3161 = vsel %vm482, %v3012, 0
      %v3164 = vsel %vm482, %v3013, 0
      %v3167 = vsel %vm633, %v3015, 0
      %3169 = vmatpush.msra.mxu0 0.0
      %3170 = vmatpush.msra.mxu0 0.0
      %3171 = vmatpush.msra.mxu0 0.0
      %3172 = vmatpush.msra.mxu0 0.0
      %3173 = vmatpush.msra.mxu0 0.0
      %3174 = vmatpush.msra.mxu0 0.0
      %3175 = vmatpush.msra.mxu0 0.0
      %3176 = vmatpush.msra.mxu0 0.0
      %3177 = vmatpush.msra.mxu0 0.0
      %3178 = vmatpush.msra.mxu0 0.0
      %3179 = vmatpush.msra.mxu0 0.0
      %3180 = vmatpush.msra.mxu0 0.0
      %3181 = vmatpush.msra.mxu0 0.0
      %3182 = vmatpush.msra.mxu0 0.0
      %3183 = vmatpush.msra.mxu0 0.0
      %3184 = vmatpush.msra.mxu0 %v3167
      %3185 = vmatmul.f32.gmra.mxu0 %v3017
      %v3186 = vpop.f32.mrf.mxu0
      %v3187 = vadd.f32 0.0, %v3186
      %3188 = vmatmul.f32.gmra.mxu0 %v3020
      %v3189 = vpop.f32.mrf.mxu0
      %v3190 = vadd.f32 0.0, %v3189
      %3191 = vmatmul.f32.gmra.mxu0 %v3023
      %v3192 = vpop.f32.mrf.mxu0
      %v3193 = vadd.f32 0.0, %v3192
      %3194 = vmatmul.f32.gmra.mxu0 %v3026
      %v3195 = vpop.f32.mrf.mxu0
      %v3196 = vadd.f32 0.0, %v3195
      %3197 = vmatmul.f32.gmra.mxu0 %v3029
      %v3198 = vpop.f32.mrf.mxu0
      %v3199 = vadd.f32 0.0, %v3198
      %3200 = vmatmul.f32.gmra.mxu0 %v3032
      %v3201 = vpop.f32.mrf.mxu0
      %v3202 = vadd.f32 0.0, %v3201
      %3203 = vmatmul.f32.gmra.mxu0 %v3035
      %v3204 = vpop.f32.mrf.mxu0
      %v3205 = vadd.f32 0.0, %v3204
      %3206 = vmatmul.f32.gmra.mxu0 %v3038
      %v3207 = vpop.f32.mrf.mxu0
      %v3208 = vadd.f32 0.0, %v3207
      %3209 = vmatmul.f32.gmra.mxu0 %v3041
      %v3210 = vpop.f32.mrf.mxu0
      %v3211 = vadd.f32 0.0, %v3210
      %3212 = vmatmul.f32.gmra.mxu0 %v3044
      %v3213 = vpop.f32.mrf.mxu0
      %v3214 = vadd.f32 0.0, %v3213
      %3215 = vmatmul.f32.gmra.mxu0 %v3047
      %v3216 = vpop.f32.mrf.mxu0
      %v3217 = vadd.f32 0.0, %v3216
      %3218 = vmatmul.f32.gmra.mxu0 %v3050
      %v3219 = vpop.f32.mrf.mxu0
      %v3220 = vadd.f32 0.0, %v3219
      %3221 = vmatmul.f32.gmra.mxu0 %v3053
      %v3222 = vpop.f32.mrf.mxu0
      %v3223 = vadd.f32 0.0, %v3222
      %3224 = vmatmul.f32.gmra.mxu0 %v3056
      %v3225 = vpop.f32.mrf.mxu0
      %v3226 = vadd.f32 0.0, %v3225
      %3227 = vmatmul.f32.gmra.mxu0 %v3059
      %v3228 = vpop.f32.mrf.mxu0
      %v3229 = vadd.f32 0.0, %v3228
      %3230 = vmatmul.f32.gmra.mxu0 %v3062
      %v3231 = vpop.f32.mrf.mxu0
      %v3232 = vadd.f32 0.0, %v3231
      %3233 = vmatmul.f32.gmra.mxu0 %v3065
      %v3234 = vpop.f32.mrf.mxu0
      %v3235 = vadd.f32 0.0, %v3234
      %3236 = vmatmul.f32.gmra.mxu0 %v3068
      %v3237 = vpop.f32.mrf.mxu0
      %v3238 = vadd.f32 0.0, %v3237
      %3239 = vmatmul.f32.gmra.mxu0 %v3071
      %v3240 = vpop.f32.mrf.mxu0
      %v3241 = vadd.f32 0.0, %v3240
      %3242 = vmatmul.f32.gmra.mxu0 %v3074
      %v3243 = vpop.f32.mrf.mxu0
      %v3244 = vadd.f32 0.0, %v3243
      %3245 = vmatmul.f32.gmra.mxu0 %v3077
      %v3246 = vpop.f32.mrf.mxu0
      %v3247 = vadd.f32 0.0, %v3246
      %3248 = vmatmul.f32.gmra.mxu0 %v3080
      %v3249 = vpop.f32.mrf.mxu0
      %v3250 = vadd.f32 0.0, %v3249
      %3251 = vmatmul.f32.gmra.mxu0 %v3083
      %v3252 = vpop.f32.mrf.mxu0
      %v3253 = vadd.f32 0.0, %v3252
      %3254 = vmatmul.f32.gmra.mxu0 %v3086
      %v3255 = vpop.f32.mrf.mxu0
      %v3256 = vadd.f32 0.0, %v3255
      %3257 = vmatmul.f32.gmra.mxu0 %v3089
      %v3258 = vpop.f32.mrf.mxu0
      %v3259 = vadd.f32 0.0, %v3258
      %3260 = vmatmul.f32.gmra.mxu0 %v3092
      %v3261 = vpop.f32.mrf.mxu0
      %v3262 = vadd.f32 0.0, %v3261
      %3263 = vmatmul.f32.gmra.mxu0 %v3095
      %v3264 = vpop.f32.mrf.mxu0
      %v3265 = vadd.f32 0.0, %v3264
      %3266 = vmatmul.f32.gmra.mxu0 %v3098
      %v3267 = vpop.f32.mrf.mxu0
      %v3268 = vadd.f32 0.0, %v3267
      %3269 = vmatmul.f32.gmra.mxu0 %v3101
      %v3270 = vpop.f32.mrf.mxu0
      %v3271 = vadd.f32 0.0, %v3270
      %3272 = vmatmul.f32.gmra.mxu0 %v3104
      %v3273 = vpop.f32.mrf.mxu0
      %v3274 = vadd.f32 0.0, %v3273
      %3275 = vmatmul.f32.gmra.mxu0 %v3107
      %v3276 = vpop.f32.mrf.mxu0
      %v3277 = vadd.f32 0.0, %v3276
      %3278 = vmatmul.f32.gmra.mxu0 %v3110
      %v3279 = vpop.f32.mrf.mxu0
      %v3280 = vadd.f32 0.0, %v3279
      %3281 = vmatmul.f32.gmra.mxu0 %v3113
      %v3282 = vpop.f32.mrf.mxu0
      %v3283 = vadd.f32 0.0, %v3282
      %3284 = vmatmul.f32.gmra.mxu0 %v3116
      %v3285 = vpop.f32.mrf.mxu0
      %v3286 = vadd.f32 0.0, %v3285
      %3287 = vmatmul.f32.gmra.mxu0 %v3119
      %v3288 = vpop.f32.mrf.mxu0
      %v3289 = vadd.f32 0.0, %v3288
      %3290 = vmatmul.f32.gmra.mxu0 %v3122
      %v3291 = vpop.f32.mrf.mxu0
      %v3292 = vadd.f32 0.0, %v3291
      %3293 = vmatmul.f32.gmra.mxu0 %v3125
      %v3294 = vpop.f32.mrf.mxu0
      %v3295 = vadd.f32 0.0, %v3294
      %3296 = vmatmul.f32.gmra.mxu0 %v3128
      %v3297 = vpop.f32.mrf.mxu0
      %v3298 = vadd.f32 0.0, %v3297
      %3299 = vmatmul.f32.gmra.mxu0 %v3131
      %v3300 = vpop.f32.mrf.mxu0
      %v3301 = vadd.f32 0.0, %v3300
      %3302 = vmatmul.f32.gmra.mxu0 %v3134
      %v3303 = vpop.f32.mrf.mxu0
      %v3304 = vadd.f32 0.0, %v3303
      %3305 = vmatmul.f32.gmra.mxu0 %v3137
      %v3306 = vpop.f32.mrf.mxu0
      %v3307 = vadd.f32 0.0, %v3306
      %3308 = vmatmul.f32.gmra.mxu0 %v3140
      %v3309 = vpop.f32.mrf.mxu0
      %v3310 = vadd.f32 0.0, %v3309
      %3311 = vmatmul.f32.gmra.mxu0 %v3143
      %v3312 = vpop.f32.mrf.mxu0
      %v3313 = vadd.f32 0.0, %v3312
      %3314 = vmatmul.f32.gmra.mxu0 %v3146
      %v3315 = vpop.f32.mrf.mxu0
      %v3316 = vadd.f32 0.0, %v3315
      %3317 = vmatmul.f32.gmra.mxu0 %v3149
      %v3318 = vpop.f32.mrf.mxu0
      %v3319 = vadd.f32 0.0, %v3318
      %3320 = vmatmul.f32.gmra.mxu0 %v3152
      %v3321 = vpop.f32.mrf.mxu0
      %v3322 = vadd.f32 0.0, %v3321
      %3323 = vmatmul.f32.gmra.mxu0 %v3155
      %v3324 = vpop.f32.mrf.mxu0
      %v3325 = vadd.f32 0.0, %v3324
      %3326 = vmatmul.f32.gmra.mxu0 %v3158
      %v3327 = vpop.f32.mrf.mxu0
      %v3328 = vadd.f32 0.0, %v3327
      %3329 = vmatmul.f32.gmra.mxu0 %v3161
      %v3330 = vpop.f32.mrf.mxu0
      %v3331 = vadd.f32 0.0, %v3330
      %3332 = vmatmul.f32.gmra.mxu0 %v3164
      %v3333 = vpop.f32.mrf.mxu0
      %v3334 = vadd.f32 0.0, %v3333
      %3335 = vdwg.mxu0
      %v3336 = vadd.f32 %v2914, %v3187
      %v3337 = vadd.f32 %v2915, %v3190
      %v3338 = vadd.f32 %v2916, %v3193
      %v3339 = vadd.f32 %v2917, %v3196
      %v3340 = vadd.f32 %v2918, %v3199
      %v3341 = vadd.f32 %v2919, %v3202
      %v3342 = vadd.f32 %v2920, %v3205
      %v3343 = vadd.f32 %v2921, %v3208
      %v3344 = vadd.f32 %v2922, %v3211
      %v3345 = vadd.f32 %v2923, %v3214
      %v3346 = vadd.f32 %v2924, %v3217
      %v3347 = vadd.f32 %v2925, %v3220
      %v3348 = vadd.f32 %v2926, %v3223
      %v3349 = vadd.f32 %v2927, %v3226
      %v3350 = vadd.f32 %v2928, %v3229
      %v3351 = vadd.f32 %v2929, %v3232
      %v3352 = vadd.f32 %v2930, %v3235
      %v3353 = vadd.f32 %v2931, %v3238
      %v3354 = vadd.f32 %v2932, %v3241
      %v3355 = vadd.f32 %v2933, %v3244
      %v3356 = vadd.f32 %v2934, %v3247
      %v3357 = vadd.f32 %v2935, %v3250
      %v3358 = vadd.f32 %v2936, %v3253
      %v3359 = vadd.f32 %v2937, %v3256
      %v3360 = vadd.f32 %v2938, %v3259
      %v3361 = vadd.f32 %v2939, %v3262
      %v3362 = vadd.f32 %v2940, %v3265
      %v3363 = vadd.f32 %v2941, %v3268
      %v3364 = vadd.f32 %v2942, %v3271
      %v3365 = vadd.f32 %v2943, %v3274
      %v3366 = vadd.f32 %v2944, %v3277
      %v3367 = vadd.f32 %v2945, %v3280
      %v3368 = vadd.f32 %v2946, %v3283
      %v3369 = vadd.f32 %v2947, %v3286
      %v3370 = vadd.f32 %v2948, %v3289
      %v3371 = vadd.f32 %v2949, %v3292
      %v3372 = vadd.f32 %v2950, %v3295
      %v3373 = vadd.f32 %v2951, %v3298
      %v3374 = vadd.f32 %v2952, %v3301
      %v3375 = vadd.f32 %v2953, %v3304
      %v3376 = vadd.f32 %v2954, %v3307
      %v3377 = vadd.f32 %v2955, %v3310
      %v3378 = vadd.f32 %v2956, %v3313
      %v3379 = vadd.f32 %v2957, %v3316
      %v3380 = vadd.f32 %v2958, %v3319
      %v3381 = vadd.f32 %v2959, %v3322
      %v3382 = vadd.f32 %v2960, %v3325
      %v3383 = vadd.f32 %v2961, %v3328
      %v3384 = vadd.f32 %v2962, %v3331
      %v3385 = vadd.f32 %v2963, %v3334
      %v3386 = vld [vmem:[%s410 + $0x3c] sm:$0xff]
      %v3387 = vld [vmem:[%s410 + $0x44] sm:$0xff]
      %v3388 = vld [vmem:[%s410 + $0x4c] sm:$0xff]
      %v3389 = vld [vmem:[%s410 + $0x54] sm:$0xff]
      %v3390 = vld [vmem:[%s410 + $0x5c] sm:$0xff]
      %v3391 = vld [vmem:[%s410 + $0x64] sm:$0xff]
      %v3392 = vld [vmem:[%s410 + $0x6c] sm:$0xff]
      %v3393 = vld [vmem:[%s410 + $0x74] sm:$0xff]
      %v3394 = vld [vmem:[%s410 + $0x7c] sm:$0xff]
      %v3395 = vld [vmem:[%s410 + $0x84] sm:$0xff]
      %v3396 = vld [vmem:[%s410 + $0x8c] sm:$0xff]
      %v3397 = vld [vmem:[%s410 + $0x94] sm:$0xff]
      %v3398 = vld [vmem:[%s410 + $0x9c] sm:$0xff]
      %v3399 = vld [vmem:[%s410 + $0xa4] sm:$0xff]
      %v3400 = vld [vmem:[%s410 + $0xac] sm:$0xff]
      %v3401 = vld [vmem:[%s410 + $0xb4] sm:$0xff]
      %v3402 = vld [vmem:[%s410 + $0xbc] sm:$0xff]
      %v3403 = vld [vmem:[%s410 + $0xc4] sm:$0xff]
      %v3404 = vld [vmem:[%s410 + $0xcc] sm:$0xff]
      %v3405 = vld [vmem:[%s410 + $0xd4] sm:$0xff]
      %v3406 = vld [vmem:[%s410 + $0xdc] sm:$0xff]
      %v3407 = vld [vmem:[%s410 + $0xe4] sm:$0xff]
      %v3408 = vld [vmem:[%s410 + $0xec] sm:$0xff]
      %v3409 = vld [vmem:[%s410 + $0xf4] sm:$0xff]
      %v3410 = vld [vmem:[%s410 + $0xfc] sm:$0xff]
      %v3411 = vld [vmem:[%s410 + $0x104] sm:$0xff]
      %v3412 = vld [vmem:[%s410 + $0x10c] sm:$0xff]
      %v3413 = vld [vmem:[%s410 + $0x114] sm:$0xff]
      %v3414 = vld [vmem:[%s410 + $0x11c] sm:$0xff]
      %v3415 = vld [vmem:[%s410 + $0x124] sm:$0xff]
      %v3416 = vld [vmem:[%s410 + $0x12c] sm:$0xff]
      %v3417 = vld [vmem:[%s410 + $0x134] sm:$0xff]
      %v3418 = vld [vmem:[%s410 + $0x13c] sm:$0xff]
      %v3419 = vld [vmem:[%s410 + $0x144] sm:$0xff]
      %v3420 = vld [vmem:[%s410 + $0x14c] sm:$0xff]
      %v3421 = vld [vmem:[%s410 + $0x154] sm:$0xff]
      %v3422 = vld [vmem:[%s410 + $0x15c] sm:$0xff]
      %v3423 = vld [vmem:[%s410 + $0x164] sm:$0xff]
      %v3424 = vld [vmem:[%s410 + $0x16c] sm:$0xff]
      %v3425 = vld [vmem:[%s410 + $0x174] sm:$0xff]
      %v3426 = vld [vmem:[%s410 + $0x17c] sm:$0xff]
      %v3427 = vld [vmem:[%s410 + $0x184] sm:$0xff]
      %v3428 = vld [vmem:[%s410 + $0x18c] sm:$0xff]
      %v3429 = vld [vmem:[%s410 + $0x194] sm:$0xff]
      %v3430 = vld [vmem:[%s410 + $0x19c] sm:$0xff]
      %v3431 = vld [vmem:[%s410 + $0x1a4] sm:$0xff]
      %v3432 = vld [vmem:[%s410 + $0x1ac] sm:$0xff]
      %v3433 = vld [vmem:[%s410 + $0x1b4] sm:$0xff]
      %v3434 = vld [vmem:[%s410 + $0x1bc] sm:$0xff]
      %v3435 = vld [vmem:[%s410 + $0x1c4] sm:$0xff]
      %s3436 = scalar_lea.vmem %s5, 28
      %v3437 = vld [vmem:[%s3436] sm:$0xf]
      %v3439 = vsel %vm482, %v3386, 0
      %v3442 = vsel %vm482, %v3387, 0
      %v3445 = vsel %vm482, %v3388, 0
      %v3448 = vsel %vm482, %v3389, 0
      %v3451 = vsel %vm482, %v3390, 0
      %v3454 = vsel %vm482, %v3391, 0
      %v3457 = vsel %vm482, %v3392, 0
      %v3460 = vsel %vm482, %v3393, 0
      %v3463 = vsel %vm482, %v3394, 0
      %v3466 = vsel %vm482, %v3395, 0
      %v3469 = vsel %vm482, %v3396, 0
      %v3472 = vsel %vm482, %v3397, 0
      %v3475 = vsel %vm482, %v3398, 0
      %v3478 = vsel %vm482, %v3399, 0
      %v3481 = vsel %vm482, %v3400, 0
      %v3484 = vsel %vm482, %v3401, 0
      %v3487 = vsel %vm482, %v3402, 0
      %v3490 = vsel %vm482, %v3403, 0
      %v3493 = vsel %vm482, %v3404, 0
      %v3496 = vsel %vm482, %v3405, 0
      %v3499 = vsel %vm482, %v3406, 0
      %v3502 = vsel %vm482, %v3407, 0
      %v3505 = vsel %vm482, %v3408, 0
      %v3508 = vsel %vm482, %v3409, 0
      %v3511 = vsel %vm482, %v3410, 0
      %v3514 = vsel %vm482, %v3411, 0
      %v3517 = vsel %vm482, %v3412, 0
      %v3520 = vsel %vm482, %v3413, 0
      %v3523 = vsel %vm482, %v3414, 0
      %v3526 = vsel %vm482, %v3415, 0
      %v3529 = vsel %vm482, %v3416, 0
      %v3532 = vsel %vm482, %v3417, 0
      %v3535 = vsel %vm482, %v3418, 0
      %v3538 = vsel %vm482, %v3419, 0
      %v3541 = vsel %vm482, %v3420, 0
      %v3544 = vsel %vm482, %v3421, 0
      %v3547 = vsel %vm482, %v3422, 0
      %v3550 = vsel %vm482, %v3423, 0
      %v3553 = vsel %vm482, %v3424, 0
      %v3556 = vsel %vm482, %v3425, 0
      %v3559 = vsel %vm482, %v3426, 0
      %v3562 = vsel %vm482, %v3427, 0
      %v3565 = vsel %vm482, %v3428, 0
      %v3568 = vsel %vm482, %v3429, 0
      %v3571 = vsel %vm482, %v3430, 0
      %v3574 = vsel %vm482, %v3431, 0
      %v3577 = vsel %vm482, %v3432, 0
      %v3580 = vsel %vm482, %v3433, 0
      %v3583 = vsel %vm482, %v3434, 0
      %v3586 = vsel %vm482, %v3435, 0
      %v3589 = vsel %vm633, %v3437, 0
      %3591 = vmatpush.msra.mxu0 0.0
      %3592 = vmatpush.msra.mxu0 0.0
      %3593 = vmatpush.msra.mxu0 0.0
      %3594 = vmatpush.msra.mxu0 0.0
      %3595 = vmatpush.msra.mxu0 0.0
      %3596 = vmatpush.msra.mxu0 0.0
      %3597 = vmatpush.msra.mxu0 0.0
      %3598 = vmatpush.msra.mxu0 0.0
      %3599 = vmatpush.msra.mxu0 0.0
      %3600 = vmatpush.msra.mxu0 0.0
      %3601 = vmatpush.msra.mxu0 0.0
      %3602 = vmatpush.msra.mxu0 0.0
      %3603 = vmatpush.msra.mxu0 0.0
      %3604 = vmatpush.msra.mxu0 0.0
      %3605 = vmatpush.msra.mxu0 0.0
      %3606 = vmatpush.msra.mxu0 %v3589
      %3607 = vmatmul.f32.gmra.mxu0 %v3439
      %v3608 = vpop.f32.mrf.mxu0
      %v3609 = vadd.f32 0.0, %v3608
      %3610 = vmatmul.f32.gmra.mxu0 %v3442
      %v3611 = vpop.f32.mrf.mxu0
      %v3612 = vadd.f32 0.0, %v3611
      %3613 = vmatmul.f32.gmra.mxu0 %v3445
      %v3614 = vpop.f32.mrf.mxu0
      %v3615 = vadd.f32 0.0, %v3614
      %3616 = vmatmul.f32.gmra.mxu0 %v3448
      %v3617 = vpop.f32.mrf.mxu0
      %v3618 = vadd.f32 0.0, %v3617
      %3619 = vmatmul.f32.gmra.mxu0 %v3451
      %v3620 = vpop.f32.mrf.mxu0
      %v3621 = vadd.f32 0.0, %v3620
      %3622 = vmatmul.f32.gmra.mxu0 %v3454
      %v3623 = vpop.f32.mrf.mxu0
      %v3624 = vadd.f32 0.0, %v3623
      %3625 = vmatmul.f32.gmra.mxu0 %v3457
      %v3626 = vpop.f32.mrf.mxu0
      %v3627 = vadd.f32 0.0, %v3626
      %3628 = vmatmul.f32.gmra.mxu0 %v3460
      %v3629 = vpop.f32.mrf.mxu0
      %v3630 = vadd.f32 0.0, %v3629
      %3631 = vmatmul.f32.gmra.mxu0 %v3463
      %v3632 = vpop.f32.mrf.mxu0
      %v3633 = vadd.f32 0.0, %v3632
      %3634 = vmatmul.f32.gmra.mxu0 %v3466
      %v3635 = vpop.f32.mrf.mxu0
      %v3636 = vadd.f32 0.0, %v3635
      %3637 = vmatmul.f32.gmra.mxu0 %v3469
      %v3638 = vpop.f32.mrf.mxu0
      %v3639 = vadd.f32 0.0, %v3638
      %3640 = vmatmul.f32.gmra.mxu0 %v3472
      %v3641 = vpop.f32.mrf.mxu0
      %v3642 = vadd.f32 0.0, %v3641
      %3643 = vmatmul.f32.gmra.mxu0 %v3475
      %v3644 = vpop.f32.mrf.mxu0
      %v3645 = vadd.f32 0.0, %v3644
      %3646 = vmatmul.f32.gmra.mxu0 %v3478
      %v3647 = vpop.f32.mrf.mxu0
      %v3648 = vadd.f32 0.0, %v3647
      %3649 = vmatmul.f32.gmra.mxu0 %v3481
      %v3650 = vpop.f32.mrf.mxu0
      %v3651 = vadd.f32 0.0, %v3650
      %3652 = vmatmul.f32.gmra.mxu0 %v3484
      %v3653 = vpop.f32.mrf.mxu0
      %v3654 = vadd.f32 0.0, %v3653
      %3655 = vmatmul.f32.gmra.mxu0 %v3487
      %v3656 = vpop.f32.mrf.mxu0
      %v3657 = vadd.f32 0.0, %v3656
      %3658 = vmatmul.f32.gmra.mxu0 %v3490
      %v3659 = vpop.f32.mrf.mxu0
      %v3660 = vadd.f32 0.0, %v3659
      %3661 = vmatmul.f32.gmra.mxu0 %v3493
      %v3662 = vpop.f32.mrf.mxu0
      %v3663 = vadd.f32 0.0, %v3662
      %3664 = vmatmul.f32.gmra.mxu0 %v3496
      %v3665 = vpop.f32.mrf.mxu0
      %v3666 = vadd.f32 0.0, %v3665
      %3667 = vmatmul.f32.gmra.mxu0 %v3499
      %v3668 = vpop.f32.mrf.mxu0
      %v3669 = vadd.f32 0.0, %v3668
      %3670 = vmatmul.f32.gmra.mxu0 %v3502
      %v3671 = vpop.f32.mrf.mxu0
      %v3672 = vadd.f32 0.0, %v3671
      %3673 = vmatmul.f32.gmra.mxu0 %v3505
      %v3674 = vpop.f32.mrf.mxu0
      %v3675 = vadd.f32 0.0, %v3674
      %3676 = vmatmul.f32.gmra.mxu0 %v3508
      %v3677 = vpop.f32.mrf.mxu0
      %v3678 = vadd.f32 0.0, %v3677
      %3679 = vmatmul.f32.gmra.mxu0 %v3511
      %v3680 = vpop.f32.mrf.mxu0
      %v3681 = vadd.f32 0.0, %v3680
      %3682 = vmatmul.f32.gmra.mxu0 %v3514
      %v3683 = vpop.f32.mrf.mxu0
      %v3684 = vadd.f32 0.0, %v3683
      %3685 = vmatmul.f32.gmra.mxu0 %v3517
      %v3686 = vpop.f32.mrf.mxu0
      %v3687 = vadd.f32 0.0, %v3686
      %3688 = vmatmul.f32.gmra.mxu0 %v3520
      %v3689 = vpop.f32.mrf.mxu0
      %v3690 = vadd.f32 0.0, %v3689
      %3691 = vmatmul.f32.gmra.mxu0 %v3523
      %v3692 = vpop.f32.mrf.mxu0
      %v3693 = vadd.f32 0.0, %v3692
      %3694 = vmatmul.f32.gmra.mxu0 %v3526
      %v3695 = vpop.f32.mrf.mxu0
      %v3696 = vadd.f32 0.0, %v3695
      %3697 = vmatmul.f32.gmra.mxu0 %v3529
      %v3698 = vpop.f32.mrf.mxu0
      %v3699 = vadd.f32 0.0, %v3698
      %3700 = vmatmul.f32.gmra.mxu0 %v3532
      %v3701 = vpop.f32.mrf.mxu0
      %v3702 = vadd.f32 0.0, %v3701
      %3703 = vmatmul.f32.gmra.mxu0 %v3535
      %v3704 = vpop.f32.mrf.mxu0
      %v3705 = vadd.f32 0.0, %v3704
      %3706 = vmatmul.f32.gmra.mxu0 %v3538
      %v3707 = vpop.f32.mrf.mxu0
      %v3708 = vadd.f32 0.0, %v3707
      %3709 = vmatmul.f32.gmra.mxu0 %v3541
      %v3710 = vpop.f32.mrf.mxu0
      %v3711 = vadd.f32 0.0, %v3710
      %3712 = vmatmul.f32.gmra.mxu0 %v3544
      %v3713 = vpop.f32.mrf.mxu0
      %v3714 = vadd.f32 0.0, %v3713
      %3715 = vmatmul.f32.gmra.mxu0 %v3547
      %v3716 = vpop.f32.mrf.mxu0
      %v3717 = vadd.f32 0.0, %v3716
      %3718 = vmatmul.f32.gmra.mxu0 %v3550
      %v3719 = vpop.f32.mrf.mxu0
      %v3720 = vadd.f32 0.0, %v3719
      %3721 = vmatmul.f32.gmra.mxu0 %v3553
      %v3722 = vpop.f32.mrf.mxu0
      %v3723 = vadd.f32 0.0, %v3722
      %3724 = vmatmul.f32.gmra.mxu0 %v3556
      %v3725 = vpop.f32.mrf.mxu0
      %v3726 = vadd.f32 0.0, %v3725
      %3727 = vmatmul.f32.gmra.mxu0 %v3559
      %v3728 = vpop.f32.mrf.mxu0
      %v3729 = vadd.f32 0.0, %v3728
      %3730 = vmatmul.f32.gmra.mxu0 %v3562
      %v3731 = vpop.f32.mrf.mxu0
      %v3732 = vadd.f32 0.0, %v3731
      %3733 = vmatmul.f32.gmra.mxu0 %v3565
      %v3734 = vpop.f32.mrf.mxu0
      %v3735 = vadd.f32 0.0, %v3734
      %3736 = vmatmul.f32.gmra.mxu0 %v3568
      %v3737 = vpop.f32.mrf.mxu0
      %v3738 = vadd.f32 0.0, %v3737
      %3739 = vmatmul.f32.gmra.mxu0 %v3571
      %v3740 = vpop.f32.mrf.mxu0
      %v3741 = vadd.f32 0.0, %v3740
      %3742 = vmatmul.f32.gmra.mxu0 %v3574
      %v3743 = vpop.f32.mrf.mxu0
      %v3744 = vadd.f32 0.0, %v3743
      %3745 = vmatmul.f32.gmra.mxu0 %v3577
      %v3746 = vpop.f32.mrf.mxu0
      %v3747 = vadd.f32 0.0, %v3746
      %3748 = vmatmul.f32.gmra.mxu0 %v3580
      %v3749 = vpop.f32.mrf.mxu0
      %v3750 = vadd.f32 0.0, %v3749
      %3751 = vmatmul.f32.gmra.mxu0 %v3583
      %v3752 = vpop.f32.mrf.mxu0
      %v3753 = vadd.f32 0.0, %v3752
      %3754 = vmatmul.f32.gmra.mxu0 %v3586
      %v3755 = vpop.f32.mrf.mxu0
      %v3756 = vadd.f32 0.0, %v3755
      %3757 = vdwg.mxu0
      %v3758 = vadd.f32 %v3336, %v3609
      %v3759 = vadd.f32 %v3337, %v3612
      %v3760 = vadd.f32 %v3338, %v3615
      %v3761 = vadd.f32 %v3339, %v3618
      %v3762 = vadd.f32 %v3340, %v3621
      %v3763 = vadd.f32 %v3341, %v3624
      %v3764 = vadd.f32 %v3342, %v3627
      %v3765 = vadd.f32 %v3343, %v3630
      %v3766 = vadd.f32 %v3344, %v3633
      %v3767 = vadd.f32 %v3345, %v3636
      %v3768 = vadd.f32 %v3346, %v3639
      %v3769 = vadd.f32 %v3347, %v3642
      %v3770 = vadd.f32 %v3348, %v3645
      %v3771 = vadd.f32 %v3349, %v3648
      %v3772 = vadd.f32 %v3350, %v3651
      %v3773 = vadd.f32 %v3351, %v3654
      %v3774 = vadd.f32 %v3352, %v3657
      %v3775 = vadd.f32 %v3353, %v3660
      %v3776 = vadd.f32 %v3354, %v3663
      %v3777 = vadd.f32 %v3355, %v3666
      %v3778 = vadd.f32 %v3356, %v3669
      %v3779 = vadd.f32 %v3357, %v3672
      %v3780 = vadd.f32 %v3358, %v3675
      %v3781 = vadd.f32 %v3359, %v3678
      %v3782 = vadd.f32 %v3360, %v3681
      %v3783 = vadd.f32 %v3361, %v3684
      %v3784 = vadd.f32 %v3362, %v3687
      %v3785 = vadd.f32 %v3363, %v3690
      %v3786 = vadd.f32 %v3364, %v3693
      %v3787 = vadd.f32 %v3365, %v3696
      %v3788 = vadd.f32 %v3366, %v3699
      %v3789 = vadd.f32 %v3367, %v3702
      %v3790 = vadd.f32 %v3368, %v3705
      %v3791 = vadd.f32 %v3369, %v3708
      %v3792 = vadd.f32 %v3370, %v3711
      %v3793 = vadd.f32 %v3371, %v3714
      %v3794 = vadd.f32 %v3372, %v3717
      %v3795 = vadd.f32 %v3373, %v3720
      %v3796 = vadd.f32 %v3374, %v3723
      %v3797 = vadd.f32 %v3375, %v3726
      %v3798 = vadd.f32 %v3376, %v3729
      %v3799 = vadd.f32 %v3377, %v3732
      %v3800 = vadd.f32 %v3378, %v3735
      %v3801 = vadd.f32 %v3379, %v3738
      %v3802 = vadd.f32 %v3380, %v3741
      %v3803 = vadd.f32 %v3381, %v3744
      %v3804 = vadd.f32 %v3382, %v3747
      %v3805 = vadd.f32 %v3383, %v3750
      %v3806 = vadd.f32 %v3384, %v3753
      %v3807 = vadd.f32 %v3385, %v3756
      %v3808 = vld [vmem:[%s410 + $0x3d] sm:$0xff]
      %v3809 = vld [vmem:[%s410 + $0x45] sm:$0xff]
      %v3810 = vld [vmem:[%s410 + $0x4d] sm:$0xff]
      %v3811 = vld [vmem:[%s410 + $0x55] sm:$0xff]
      %v3812 = vld [vmem:[%s410 + $0x5d] sm:$0xff]
      %v3813 = vld [vmem:[%s410 + $0x65] sm:$0xff]
      %v3814 = vld [vmem:[%s410 + $0x6d] sm:$0xff]
      %v3815 = vld [vmem:[%s410 + $0x75] sm:$0xff]
      %v3816 = vld [vmem:[%s410 + $0x7d] sm:$0xff]
      %v3817 = vld [vmem:[%s410 + $0x85] sm:$0xff]
      %v3818 = vld [vmem:[%s410 + $0x8d] sm:$0xff]
      %v3819 = vld [vmem:[%s410 + $0x95] sm:$0xff]
      %v3820 = vld [vmem:[%s410 + $0x9d] sm:$0xff]
      %v3821 = vld [vmem:[%s410 + $0xa5] sm:$0xff]
      %v3822 = vld [vmem:[%s410 + $0xad] sm:$0xff]
      %v3823 = vld [vmem:[%s410 + $0xb5] sm:$0xff]
      %v3824 = vld [vmem:[%s410 + $0xbd] sm:$0xff]
      %v3825 = vld [vmem:[%s410 + $0xc5] sm:$0xff]
      %v3826 = vld [vmem:[%s410 + $0xcd] sm:$0xff]
      %v3827 = vld [vmem:[%s410 + $0xd5] sm:$0xff]
      %v3828 = vld [vmem:[%s410 + $0xdd] sm:$0xff]
      %v3829 = vld [vmem:[%s410 + $0xe5] sm:$0xff]
      %v3830 = vld [vmem:[%s410 + $0xed] sm:$0xff]
      %v3831 = vld [vmem:[%s410 + $0xf5] sm:$0xff]
      %v3832 = vld [vmem:[%s410 + $0xfd] sm:$0xff]
      %v3833 = vld [vmem:[%s410 + $0x105] sm:$0xff]
      %v3834 = vld [vmem:[%s410 + $0x10d] sm:$0xff]
      %v3835 = vld [vmem:[%s410 + $0x115] sm:$0xff]
      %v3836 = vld [vmem:[%s410 + $0x11d] sm:$0xff]
      %v3837 = vld [vmem:[%s410 + $0x125] sm:$0xff]
      %v3838 = vld [vmem:[%s410 + $0x12d] sm:$0xff]
      %v3839 = vld [vmem:[%s410 + $0x135] sm:$0xff]
      %v3840 = vld [vmem:[%s410 + $0x13d] sm:$0xff]
      %v3841 = vld [vmem:[%s410 + $0x145] sm:$0xff]
      %v3842 = vld [vmem:[%s410 + $0x14d] sm:$0xff]
      %v3843 = vld [vmem:[%s410 + $0x155] sm:$0xff]
      %v3844 = vld [vmem:[%s410 + $0x15d] sm:$0xff]
      %v3845 = vld [vmem:[%s410 + $0x165] sm:$0xff]
      %v3846 = vld [vmem:[%s410 + $0x16d] sm:$0xff]
      %v3847 = vld [vmem:[%s410 + $0x175] sm:$0xff]
      %v3848 = vld [vmem:[%s410 + $0x17d] sm:$0xff]
      %v3849 = vld [vmem:[%s410 + $0x185] sm:$0xff]
      %v3850 = vld [vmem:[%s410 + $0x18d] sm:$0xff]
      %v3851 = vld [vmem:[%s410 + $0x195] sm:$0xff]
      %v3852 = vld [vmem:[%s410 + $0x19d] sm:$0xff]
      %v3853 = vld [vmem:[%s410 + $0x1a5] sm:$0xff]
      %v3854 = vld [vmem:[%s410 + $0x1ad] sm:$0xff]
      %v3855 = vld [vmem:[%s410 + $0x1b5] sm:$0xff]
      %v3856 = vld [vmem:[%s410 + $0x1bd] sm:$0xff]
      %v3857 = vld [vmem:[%s410 + $0x1c5] sm:$0xff]
      %s3858 = scalar_lea.vmem %s5, 32
      %v3859 = vld [vmem:[%s3858] sm:$0xf]
      %v3861 = vsel %vm482, %v3808, 0
      %v3864 = vsel %vm482, %v3809, 0
      %v3867 = vsel %vm482, %v3810, 0
      %v3870 = vsel %vm482, %v3811, 0
      %v3873 = vsel %vm482, %v3812, 0
      %v3876 = vsel %vm482, %v3813, 0
      %v3879 = vsel %vm482, %v3814, 0
      %v3882 = vsel %vm482, %v3815, 0
      %v3885 = vsel %vm482, %v3816, 0
      %v3888 = vsel %vm482, %v3817, 0
      %v3891 = vsel %vm482, %v3818, 0
      %v3894 = vsel %vm482, %v3819, 0
      %v3897 = vsel %vm482, %v3820, 0
      %v3900 = vsel %vm482, %v3821, 0
      %v3903 = vsel %vm482, %v3822, 0
      %v3906 = vsel %vm482, %v3823, 0
      %v3909 = vsel %vm482, %v3824, 0
      %v3912 = vsel %vm482, %v3825, 0
      %v3915 = vsel %vm482, %v3826, 0
      %v3918 = vsel %vm482, %v3827, 0
      %v3921 = vsel %vm482, %v3828, 0
      %v3924 = vsel %vm482, %v3829, 0
      %v3927 = vsel %vm482, %v3830, 0
      %v3930 = vsel %vm482, %v3831, 0
      %v3933 = vsel %vm482, %v3832, 0
      %v3936 = vsel %vm482, %v3833, 0
      %v3939 = vsel %vm482, %v3834, 0
      %v3942 = vsel %vm482, %v3835, 0
      %v3945 = vsel %vm482, %v3836, 0
      %v3948 = vsel %vm482, %v3837, 0
      %v3951 = vsel %vm482, %v3838, 0
      %v3954 = vsel %vm482, %v3839, 0
      %v3957 = vsel %vm482, %v3840, 0
      %v3960 = vsel %vm482, %v3841, 0
      %v3963 = vsel %vm482, %v3842, 0
      %v3966 = vsel %vm482, %v3843, 0
      %v3969 = vsel %vm482, %v3844, 0
      %v3972 = vsel %vm482, %v3845, 0
      %v3975 = vsel %vm482, %v3846, 0
      %v3978 = vsel %vm482, %v3847, 0
      %v3981 = vsel %vm482, %v3848, 0
      %v3984 = vsel %vm482, %v3849, 0
      %v3987 = vsel %vm482, %v3850, 0
      %v3990 = vsel %vm482, %v3851, 0
      %v3993 = vsel %vm482, %v3852, 0
      %v3996 = vsel %vm482, %v3853, 0
      %v3999 = vsel %vm482, %v3854, 0
      %v4002 = vsel %vm482, %v3855, 0
      %v4005 = vsel %vm482, %v3856, 0
      %v4008 = vsel %vm482, %v3857, 0
      %v4011 = vsel %vm633, %v3859, 0
      %4013 = vmatpush.msra.mxu0 0.0
      %4014 = vmatpush.msra.mxu0 0.0
      %4015 = vmatpush.msra.mxu0 0.0
      %4016 = vmatpush.msra.mxu0 0.0
      %4017 = vmatpush.msra.mxu0 0.0
      %4018 = vmatpush.msra.mxu0 0.0
      %4019 = vmatpush.msra.mxu0 0.0
      %4020 = vmatpush.msra.mxu0 0.0
      %4021 = vmatpush.msra.mxu0 0.0
      %4022 = vmatpush.msra.mxu0 0.0
      %4023 = vmatpush.msra.mxu0 0.0
      %4024 = vmatpush.msra.mxu0 0.0
      %4025 = vmatpush.msra.mxu0 0.0
      %4026 = vmatpush.msra.mxu0 0.0
      %4027 = vmatpush.msra.mxu0 0.0
      %4028 = vmatpush.msra.mxu0 %v4011
      %4029 = vmatmul.f32.gmra.mxu0 %v3861
      %v4030 = vpop.f32.mrf.mxu0
      %v4031 = vadd.f32 0.0, %v4030
      %4032 = vmatmul.f32.gmra.mxu0 %v3864
      %v4033 = vpop.f32.mrf.mxu0
      %v4034 = vadd.f32 0.0, %v4033
      %4035 = vmatmul.f32.gmra.mxu0 %v3867
      %v4036 = vpop.f32.mrf.mxu0
      %v4037 = vadd.f32 0.0, %v4036
      %4038 = vmatmul.f32.gmra.mxu0 %v3870
      %v4039 = vpop.f32.mrf.mxu0
      %v4040 = vadd.f32 0.0, %v4039
      %4041 = vmatmul.f32.gmra.mxu0 %v3873
      %v4042 = vpop.f32.mrf.mxu0
      %v4043 = vadd.f32 0.0, %v4042
      %4044 = vmatmul.f32.gmra.mxu0 %v3876
      %v4045 = vpop.f32.mrf.mxu0
      %v4046 = vadd.f32 0.0, %v4045
      %4047 = vmatmul.f32.gmra.mxu0 %v3879
      %v4048 = vpop.f32.mrf.mxu0
      %v4049 = vadd.f32 0.0, %v4048
      %4050 = vmatmul.f32.gmra.mxu0 %v3882
      %v4051 = vpop.f32.mrf.mxu0
      %v4052 = vadd.f32 0.0, %v4051
      %4053 = vmatmul.f32.gmra.mxu0 %v3885
      %v4054 = vpop.f32.mrf.mxu0
      %v4055 = vadd.f32 0.0, %v4054
      %4056 = vmatmul.f32.gmra.mxu0 %v3888
      %v4057 = vpop.f32.mrf.mxu0
      %v4058 = vadd.f32 0.0, %v4057
      %4059 = vmatmul.f32.gmra.mxu0 %v3891
      %v4060 = vpop.f32.mrf.mxu0
      %v4061 = vadd.f32 0.0, %v4060
      %4062 = vmatmul.f32.gmra.mxu0 %v3894
      %v4063 = vpop.f32.mrf.mxu0
      %v4064 = vadd.f32 0.0, %v4063
      %4065 = vmatmul.f32.gmra.mxu0 %v3897
      %v4066 = vpop.f32.mrf.mxu0
      %v4067 = vadd.f32 0.0, %v4066
      %4068 = vmatmul.f32.gmra.mxu0 %v3900
      %v4069 = vpop.f32.mrf.mxu0
      %v4070 = vadd.f32 0.0, %v4069
      %4071 = vmatmul.f32.gmra.mxu0 %v3903
      %v4072 = vpop.f32.mrf.mxu0
      %v4073 = vadd.f32 0.0, %v4072
      %4074 = vmatmul.f32.gmra.mxu0 %v3906
      %v4075 = vpop.f32.mrf.mxu0
      %v4076 = vadd.f32 0.0, %v4075
      %4077 = vmatmul.f32.gmra.mxu0 %v3909
      %v4078 = vpop.f32.mrf.mxu0
      %v4079 = vadd.f32 0.0, %v4078
      %4080 = vmatmul.f32.gmra.mxu0 %v3912
      %v4081 = vpop.f32.mrf.mxu0
      %v4082 = vadd.f32 0.0, %v4081
      %4083 = vmatmul.f32.gmra.mxu0 %v3915
      %v4084 = vpop.f32.mrf.mxu0
      %v4085 = vadd.f32 0.0, %v4084
      %4086 = vmatmul.f32.gmra.mxu0 %v3918
      %v4087 = vpop.f32.mrf.mxu0
      %v4088 = vadd.f32 0.0, %v4087
      %4089 = vmatmul.f32.gmra.mxu0 %v3921
      %v4090 = vpop.f32.mrf.mxu0
      %v4091 = vadd.f32 0.0, %v4090
      %4092 = vmatmul.f32.gmra.mxu0 %v3924
      %v4093 = vpop.f32.mrf.mxu0
      %v4094 = vadd.f32 0.0, %v4093
      %4095 = vmatmul.f32.gmra.mxu0 %v3927
      %v4096 = vpop.f32.mrf.mxu0
      %v4097 = vadd.f32 0.0, %v4096
      %4098 = vmatmul.f32.gmra.mxu0 %v3930
      %v4099 = vpop.f32.mrf.mxu0
      %v4100 = vadd.f32 0.0, %v4099
      %4101 = vmatmul.f32.gmra.mxu0 %v3933
      %v4102 = vpop.f32.mrf.mxu0
      %v4103 = vadd.f32 0.0, %v4102
      %4104 = vmatmul.f32.gmra.mxu0 %v3936
      %v4105 = vpop.f32.mrf.mxu0
      %v4106 = vadd.f32 0.0, %v4105
      %4107 = vmatmul.f32.gmra.mxu0 %v3939
      %v4108 = vpop.f32.mrf.mxu0
      %v4109 = vadd.f32 0.0, %v4108
      %4110 = vmatmul.f32.gmra.mxu0 %v3942
      %v4111 = vpop.f32.mrf.mxu0
      %v4112 = vadd.f32 0.0, %v4111
      %4113 = vmatmul.f32.gmra.mxu0 %v3945
      %v4114 = vpop.f32.mrf.mxu0
      %v4115 = vadd.f32 0.0, %v4114
      %4116 = vmatmul.f32.gmra.mxu0 %v3948
      %v4117 = vpop.f32.mrf.mxu0
      %v4118 = vadd.f32 0.0, %v4117
      %4119 = vmatmul.f32.gmra.mxu0 %v3951
      %v4120 = vpop.f32.mrf.mxu0
      %v4121 = vadd.f32 0.0, %v4120
      %4122 = vmatmul.f32.gmra.mxu0 %v3954
      %v4123 = vpop.f32.mrf.mxu0
      %v4124 = vadd.f32 0.0, %v4123
      %4125 = vmatmul.f32.gmra.mxu0 %v3957
      %v4126 = vpop.f32.mrf.mxu0
      %v4127 = vadd.f32 0.0, %v4126
      %4128 = vmatmul.f32.gmra.mxu0 %v3960
      %v4129 = vpop.f32.mrf.mxu0
      %v4130 = vadd.f32 0.0, %v4129
      %4131 = vmatmul.f32.gmra.mxu0 %v3963
      %v4132 = vpop.f32.mrf.mxu0
      %v4133 = vadd.f32 0.0, %v4132
      %4134 = vmatmul.f32.gmra.mxu0 %v3966
      %v4135 = vpop.f32.mrf.mxu0
      %v4136 = vadd.f32 0.0, %v4135
      %4137 = vmatmul.f32.gmra.mxu0 %v3969
      %v4138 = vpop.f32.mrf.mxu0
      %v4139 = vadd.f32 0.0, %v4138
      %4140 = vmatmul.f32.gmra.mxu0 %v3972
      %v4141 = vpop.f32.mrf.mxu0
      %v4142 = vadd.f32 0.0, %v4141
      %4143 = vmatmul.f32.gmra.mxu0 %v3975
      %v4144 = vpop.f32.mrf.mxu0
      %v4145 = vadd.f32 0.0, %v4144
      %4146 = vmatmul.f32.gmra.mxu0 %v3978
      %v4147 = vpop.f32.mrf.mxu0
      %v4148 = vadd.f32 0.0, %v4147
      %4149 = vmatmul.f32.gmra.mxu0 %v3981
      %v4150 = vpop.f32.mrf.mxu0
      %v4151 = vadd.f32 0.0, %v4150
      %4152 = vmatmul.f32.gmra.mxu0 %v3984
      %v4153 = vpop.f32.mrf.mxu0
      %v4154 = vadd.f32 0.0, %v4153
      %4155 = vmatmul.f32.gmra.mxu0 %v3987
      %v4156 = vpop.f32.mrf.mxu0
      %v4157 = vadd.f32 0.0, %v4156
      %4158 = vmatmul.f32.gmra.mxu0 %v3990
      %v4159 = vpop.f32.mrf.mxu0
      %v4160 = vadd.f32 0.0, %v4159
      %4161 = vmatmul.f32.gmra.mxu0 %v3993
      %v4162 = vpop.f32.mrf.mxu0
      %v4163 = vadd.f32 0.0, %v4162
      %4164 = vmatmul.f32.gmra.mxu0 %v3996
      %v4165 = vpop.f32.mrf.mxu0
      %v4166 = vadd.f32 0.0, %v4165
      %4167 = vmatmul.f32.gmra.mxu0 %v3999
      %v4168 = vpop.f32.mrf.mxu0
      %v4169 = vadd.f32 0.0, %v4168
      %4170 = vmatmul.f32.gmra.mxu0 %v4002
      %v4171 = vpop.f32.mrf.mxu0
      %v4172 = vadd.f32 0.0, %v4171
      %4173 = vmatmul.f32.gmra.mxu0 %v4005
      %v4174 = vpop.f32.mrf.mxu0
      %v4175 = vadd.f32 0.0, %v4174
      %4176 = vmatmul.f32.gmra.mxu0 %v4008
      %v4177 = vpop.f32.mrf.mxu0
      %v4178 = vadd.f32 0.0, %v4177
      %4179 = vdwg.mxu0
      %v4180 = vadd.f32 %v3758, %v4031
      %v4181 = vadd.f32 %v3759, %v4034
      %v4182 = vadd.f32 %v3760, %v4037
      %v4183 = vadd.f32 %v3761, %v4040
      %v4184 = vadd.f32 %v3762, %v4043
      %v4185 = vadd.f32 %v3763, %v4046
      %v4186 = vadd.f32 %v3764, %v4049
      %v4187 = vadd.f32 %v3765, %v4052
      %v4188 = vadd.f32 %v3766, %v4055
      %v4189 = vadd.f32 %v3767, %v4058
      %v4190 = vadd.f32 %v3768, %v4061
      %v4191 = vadd.f32 %v3769, %v4064
      %v4192 = vadd.f32 %v3770, %v4067
      %v4193 = vadd.f32 %v3771, %v4070
      %v4194 = vadd.f32 %v3772, %v4073
      %v4195 = vadd.f32 %v3773, %v4076
      %v4196 = vadd.f32 %v3774, %v4079
      %v4197 = vadd.f32 %v3775, %v4082
      %v4198 = vadd.f32 %v3776, %v4085
      %v4199 = vadd.f32 %v3777, %v4088
      %v4200 = vadd.f32 %v3778, %v4091
      %v4201 = vadd.f32 %v3779, %v4094
      %v4202 = vadd.f32 %v3780, %v4097
      %v4203 = vadd.f32 %v3781, %v4100
      %v4204 = vadd.f32 %v3782, %v4103
      %v4205 = vadd.f32 %v3783, %v4106
      %v4206 = vadd.f32 %v3784, %v4109
      %v4207 = vadd.f32 %v3785, %v4112
      %v4208 = vadd.f32 %v3786, %v4115
      %v4209 = vadd.f32 %v3787, %v4118
      %v4210 = vadd.f32 %v3788, %v4121
      %v4211 = vadd.f32 %v3789, %v4124
      %v4212 = vadd.f32 %v3790, %v4127
      %v4213 = vadd.f32 %v3791, %v4130
      %v4214 = vadd.f32 %v3792, %v4133
      %v4215 = vadd.f32 %v3793, %v4136
      %v4216 = vadd.f32 %v3794, %v4139
      %v4217 = vadd.f32 %v3795, %v4142
      %v4218 = vadd.f32 %v3796, %v4145
      %v4219 = vadd.f32 %v3797, %v4148
      %v4220 = vadd.f32 %v3798, %v4151
      %v4221 = vadd.f32 %v3799, %v4154
      %v4222 = vadd.f32 %v3800, %v4157
      %v4223 = vadd.f32 %v3801, %v4160
      %v4224 = vadd.f32 %v3802, %v4163
      %v4225 = vadd.f32 %v3803, %v4166
      %v4226 = vadd.f32 %v3804, %v4169
      %v4227 = vadd.f32 %v3805, %v4172
      %v4228 = vadd.f32 %v3806, %v4175
      %v4229 = vadd.f32 %v3807, %v4178
      %v4230 = vld [vmem:[%s415] sm:$0xff]
      %v4231 = vld [vmem:[%s415 + $0x8] sm:$0xff]
      %v4232 = vld [vmem:[%s415 + $0x10] sm:$0xff]
      %v4233 = vld [vmem:[%s415 + $0x18] sm:$0xff]
      %v4234 = vld [vmem:[%s415 + $0x20] sm:$0xff]
      %v4235 = vld [vmem:[%s415 + $0x28] sm:$0xff]
      %v4236 = vld [vmem:[%s415 + $0x30] sm:$0xff]
      %v4237 = vld [vmem:[%s415 + $0x38] sm:$0xff]
      %v4238 = vld [vmem:[%s415 + $0x40] sm:$0xff]
      %v4239 = vld [vmem:[%s415 + $0x48] sm:$0xff]
      %v4240 = vld [vmem:[%s415 + $0x50] sm:$0xff]
      %v4241 = vld [vmem:[%s415 + $0x58] sm:$0xff]
      %v4242 = vld [vmem:[%s415 + $0x60] sm:$0xff]
      %v4243 = vld [vmem:[%s415 + $0x68] sm:$0xff]
      %v4244 = vld [vmem:[%s415 + $0x70] sm:$0xff]
      %v4245 = vld [vmem:[%s415 + $0x78] sm:$0xff]
      %v4246 = vld [vmem:[%s415 + $0x80] sm:$0xff]
      %v4247 = vld [vmem:[%s415 + $0x88] sm:$0xff]
      %v4248 = vld [vmem:[%s415 + $0x90] sm:$0xff]
      %v4249 = vld [vmem:[%s415 + $0x98] sm:$0xff]
      %v4250 = vld [vmem:[%s415 + $0xa0] sm:$0xff]
      %v4251 = vld [vmem:[%s415 + $0xa8] sm:$0xff]
      %v4252 = vld [vmem:[%s415 + $0xb0] sm:$0xff]
      %v4253 = vld [vmem:[%s415 + $0xb8] sm:$0xff]
      %v4254 = vld [vmem:[%s415 + $0xc0] sm:$0xff]
      %v4255 = vld [vmem:[%s415 + $0xc8] sm:$0xff]
      %v4256 = vld [vmem:[%s415 + $0xd0] sm:$0xff]
      %v4257 = vld [vmem:[%s415 + $0xd8] sm:$0xff]
      %v4258 = vld [vmem:[%s415 + $0xe0] sm:$0xff]
      %v4259 = vld [vmem:[%s415 + $0xe8] sm:$0xff]
      %v4260 = vld [vmem:[%s415 + $0xf0] sm:$0xff]
      %v4261 = vld [vmem:[%s415 + $0xf8] sm:$0xff]
      %v4262 = vld [vmem:[%s415 + $0x100] sm:$0xff]
      %v4263 = vld [vmem:[%s415 + $0x108] sm:$0xff]
      %v4264 = vld [vmem:[%s415 + $0x110] sm:$0xff]
      %v4265 = vld [vmem:[%s415 + $0x118] sm:$0xff]
      %v4266 = vld [vmem:[%s415 + $0x120] sm:$0xff]
      %v4267 = vld [vmem:[%s415 + $0x128] sm:$0xff]
      %v4268 = vld [vmem:[%s415 + $0x130] sm:$0xff]
      %v4269 = vld [vmem:[%s415 + $0x138] sm:$0xff]
      %v4270 = vld [vmem:[%s415 + $0x140] sm:$0xff]
      %v4271 = vld [vmem:[%s415 + $0x148] sm:$0xff]
      %v4272 = vld [vmem:[%s415 + $0x150] sm:$0xff]
      %v4273 = vld [vmem:[%s415 + $0x158] sm:$0xff]
      %v4274 = vld [vmem:[%s415 + $0x160] sm:$0xff]
      %v4275 = vld [vmem:[%s415 + $0x168] sm:$0xff]
      %v4276 = vld [vmem:[%s415 + $0x170] sm:$0xff]
      %v4277 = vld [vmem:[%s415 + $0x178] sm:$0xff]
      %v4278 = vld [vmem:[%s415 + $0x180] sm:$0xff]
      %v4279 = vld [vmem:[%s415 + $0x188] sm:$0xff]
      %4281 = vset.pattern.permute.xlu0 0
      %4282 = vperm.xlu0 %4281, %v4230
      %v4283 = vpop.permute.xlu0 %4282
      %4286 = vset.pattern.permute.xlu0 0
      %4287 = vperm.xlu0 %4286, %v4231
      %v4288 = vpop.permute.xlu0 %4287
      %4291 = vset.pattern.permute.xlu0 0
      %4292 = vperm.xlu0 %4291, %v4232
      %v4293 = vpop.permute.xlu0 %4292
      %4296 = vset.pattern.permute.xlu0 0
      %4297 = vperm.xlu0 %4296, %v4233
      %v4298 = vpop.permute.xlu0 %4297
      %4301 = vset.pattern.permute.xlu0 0
      %4302 = vperm.xlu0 %4301, %v4234
      %v4303 = vpop.permute.xlu0 %4302
      %4306 = vset.pattern.permute.xlu0 0
      %4307 = vperm.xlu0 %4306, %v4235
      %v4308 = vpop.permute.xlu0 %4307
      %4311 = vset.pattern.permute.xlu0 0
      %4312 = vperm.xlu0 %4311, %v4236
      %v4313 = vpop.permute.xlu0 %4312
      %4316 = vset.pattern.permute.xlu0 0
      %4317 = vperm.xlu0 %4316, %v4237
      %v4318 = vpop.permute.xlu0 %4317
      %4321 = vset.pattern.permute.xlu0 0
      %4322 = vperm.xlu0 %4321, %v4238
      %v4323 = vpop.permute.xlu0 %4322
      %4326 = vset.pattern.permute.xlu0 0
      %4327 = vperm.xlu0 %4326, %v4239
      %v4328 = vpop.permute.xlu0 %4327
      %4331 = vset.pattern.permute.xlu0 0
      %4332 = vperm.xlu0 %4331, %v4240
      %v4333 = vpop.permute.xlu0 %4332
      %4336 = vset.pattern.permute.xlu0 0
      %4337 = vperm.xlu0 %4336, %v4241
      %v4338 = vpop.permute.xlu0 %4337
      %4341 = vset.pattern.permute.xlu0 0
      %4342 = vperm.xlu0 %4341, %v4242
      %v4343 = vpop.permute.xlu0 %4342
      %4346 = vset.pattern.permute.xlu0 0
      %4347 = vperm.xlu0 %4346, %v4243
      %v4348 = vpop.permute.xlu0 %4347
      %4351 = vset.pattern.permute.xlu0 0
      %4352 = vperm.xlu0 %4351, %v4244
      %v4353 = vpop.permute.xlu0 %4352
      %4356 = vset.pattern.permute.xlu0 0
      %4357 = vperm.xlu0 %4356, %v4245
      %v4358 = vpop.permute.xlu0 %4357
      %4361 = vset.pattern.permute.xlu0 0
      %4362 = vperm.xlu0 %4361, %v4246
      %v4363 = vpop.permute.xlu0 %4362
      %4366 = vset.pattern.permute.xlu0 0
      %4367 = vperm.xlu0 %4366, %v4247
      %v4368 = vpop.permute.xlu0 %4367
      %4371 = vset.pattern.permute.xlu0 0
      %4372 = vperm.xlu0 %4371, %v4248
      %v4373 = vpop.permute.xlu0 %4372
      %4376 = vset.pattern.permute.xlu0 0
      %4377 = vperm.xlu0 %4376, %v4249
      %v4378 = vpop.permute.xlu0 %4377
      %4381 = vset.pattern.permute.xlu0 0
      %4382 = vperm.xlu0 %4381, %v4250
      %v4383 = vpop.permute.xlu0 %4382
      %4386 = vset.pattern.permute.xlu0 0
      %4387 = vperm.xlu0 %4386, %v4251
      %v4388 = vpop.permute.xlu0 %4387
      %4391 = vset.pattern.permute.xlu0 0
      %4392 = vperm.xlu0 %4391, %v4252
      %v4393 = vpop.permute.xlu0 %4392
      %4396 = vset.pattern.permute.xlu0 0
      %4397 = vperm.xlu0 %4396, %v4253
      %v4398 = vpop.permute.xlu0 %4397
      %4401 = vset.pattern.permute.xlu0 0
      %4402 = vperm.xlu0 %4401, %v4254
      %v4403 = vpop.permute.xlu0 %4402
      %4406 = vset.pattern.permute.xlu0 0
      %4407 = vperm.xlu0 %4406, %v4255
      %v4408 = vpop.permute.xlu0 %4407
      %4411 = vset.pattern.permute.xlu0 0
      %4412 = vperm.xlu0 %4411, %v4256
      %v4413 = vpop.permute.xlu0 %4412
      %4416 = vset.pattern.permute.xlu0 0
      %4417 = vperm.xlu0 %4416, %v4257
      %v4418 = vpop.permute.xlu0 %4417
      %4421 = vset.pattern.permute.xlu0 0
      %4422 = vperm.xlu0 %4421, %v4258
      %v4423 = vpop.permute.xlu0 %4422
      %4426 = vset.pattern.permute.xlu0 0
      %4427 = vperm.xlu0 %4426, %v4259
      %v4428 = vpop.permute.xlu0 %4427
      %4431 = vset.pattern.permute.xlu0 0
      %4432 = vperm.xlu0 %4431, %v4260
      %v4433 = vpop.permute.xlu0 %4432
      %4436 = vset.pattern.permute.xlu0 0
      %4437 = vperm.xlu0 %4436, %v4261
      %v4438 = vpop.permute.xlu0 %4437
      %4441 = vset.pattern.permute.xlu0 0
      %4442 = vperm.xlu0 %4441, %v4262
      %v4443 = vpop.permute.xlu0 %4442
      %4446 = vset.pattern.permute.xlu0 0
      %4447 = vperm.xlu0 %4446, %v4263
      %v4448 = vpop.permute.xlu0 %4447
      %4451 = vset.pattern.permute.xlu0 0
      %4452 = vperm.xlu0 %4451, %v4264
      %v4453 = vpop.permute.xlu0 %4452
      %4456 = vset.pattern.permute.xlu0 0
      %4457 = vperm.xlu0 %4456, %v4265
      %v4458 = vpop.permute.xlu0 %4457
      %4461 = vset.pattern.permute.xlu0 0
      %4462 = vperm.xlu0 %4461, %v4266
      %v4463 = vpop.permute.xlu0 %4462
      %4466 = vset.pattern.permute.xlu0 0
      %4467 = vperm.xlu0 %4466, %v4267
      %v4468 = vpop.permute.xlu0 %4467
      %4471 = vset.pattern.permute.xlu0 0
      %4472 = vperm.xlu0 %4471, %v4268
      %v4473 = vpop.permute.xlu0 %4472
      %4476 = vset.pattern.permute.xlu0 0
      %4477 = vperm.xlu0 %4476, %v4269
      %v4478 = vpop.permute.xlu0 %4477
      %4481 = vset.pattern.permute.xlu0 0
      %4482 = vperm.xlu0 %4481, %v4270
      %v4483 = vpop.permute.xlu0 %4482
      %4486 = vset.pattern.permute.xlu0 0
      %4487 = vperm.xlu0 %4486, %v4271
      %v4488 = vpop.permute.xlu0 %4487
      %4491 = vset.pattern.permute.xlu0 0
      %4492 = vperm.xlu0 %4491, %v4272
      %v4493 = vpop.permute.xlu0 %4492
      %4496 = vset.pattern.permute.xlu0 0
      %4497 = vperm.xlu0 %4496, %v4273
      %v4498 = vpop.permute.xlu0 %4497
      %4501 = vset.pattern.permute.xlu0 0
      %4502 = vperm.xlu0 %4501, %v4274
      %v4503 = vpop.permute.xlu0 %4502
      %4506 = vset.pattern.permute.xlu0 0
      %4507 = vperm.xlu0 %4506, %v4275
      %v4508 = vpop.permute.xlu0 %4507
      %4511 = vset.pattern.permute.xlu0 0
      %4512 = vperm.xlu0 %4511, %v4276
      %v4513 = vpop.permute.xlu0 %4512
      %4516 = vset.pattern.permute.xlu0 0
      %4517 = vperm.xlu0 %4516, %v4277
      %v4518 = vpop.permute.xlu0 %4517
      %4521 = vset.pattern.permute.xlu0 0
      %4522 = vperm.xlu0 %4521, %v4278
      %v4523 = vpop.permute.xlu0 %4522
      %4526 = vset.pattern.permute.xlu0 0
      %4527 = vperm.xlu0 %4526, %v4279
      %v4528 = vpop.permute.xlu0 %4527
      %v4530 = vmul.f32 %v4180, %v4283
      %v4531 = vmul.f32 %v4181, %v4288
      %v4532 = vmul.f32 %v4182, %v4293
      %v4533 = vmul.f32 %v4183, %v4298
      %v4534 = vmul.f32 %v4184, %v4303
      %v4535 = vmul.f32 %v4185, %v4308
      %v4536 = vmul.f32 %v4186, %v4313
      %v4537 = vmul.f32 %v4187, %v4318
      %v4538 = vmul.f32 %v4188, %v4323
      %v4539 = vmul.f32 %v4189, %v4328
      %v4540 = vmul.f32 %v4190, %v4333
      %v4541 = vmul.f32 %v4191, %v4338
      %v4542 = vmul.f32 %v4192, %v4343
      %v4543 = vmul.f32 %v4193, %v4348
      %v4544 = vmul.f32 %v4194, %v4353
      %v4545 = vmul.f32 %v4195, %v4358
      %v4546 = vmul.f32 %v4196, %v4363
      %v4547 = vmul.f32 %v4197, %v4368
      %v4548 = vmul.f32 %v4198, %v4373
      %v4549 = vmul.f32 %v4199, %v4378
      %v4550 = vmul.f32 %v4200, %v4383
      %v4551 = vmul.f32 %v4201, %v4388
      %v4552 = vmul.f32 %v4202, %v4393
      %v4553 = vmul.f32 %v4203, %v4398
      %v4554 = vmul.f32 %v4204, %v4403
      %v4555 = vmul.f32 %v4205, %v4408
      %v4556 = vmul.f32 %v4206, %v4413
      %v4557 = vmul.f32 %v4207, %v4418
      %v4558 = vmul.f32 %v4208, %v4423
      %v4559 = vmul.f32 %v4209, %v4428
      %v4560 = vmul.f32 %v4210, %v4433
      %v4561 = vmul.f32 %v4211, %v4438
      %v4562 = vmul.f32 %v4212, %v4443
      %v4563 = vmul.f32 %v4213, %v4448
      %v4564 = vmul.f32 %v4214, %v4453
      %v4565 = vmul.f32 %v4215, %v4458
      %v4566 = vmul.f32 %v4216, %v4463
      %v4567 = vmul.f32 %v4217, %v4468
      %v4568 = vmul.f32 %v4218, %v4473
      %v4569 = vmul.f32 %v4219, %v4478
      %v4570 = vmul.f32 %v4220, %v4483
      %v4571 = vmul.f32 %v4221, %v4488
      %v4572 = vmul.f32 %v4222, %v4493
      %v4573 = vmul.f32 %v4223, %v4498
      %v4574 = vmul.f32 %v4224, %v4503
      %v4575 = vmul.f32 %v4225, %v4508
      %v4576 = vmul.f32 %v4226, %v4513
      %v4577 = vmul.f32 %v4227, %v4518
      %v4578 = vmul.f32 %v4228, %v4523
      %v4579 = vmul.f32 %v4229, %v4528
      %vm4580 = vcmask 261120
      %4581 = vst.msk [vmem:[#allocation2] sm:$0xff] %vm4580, %v4530
      %4582 = vst.msk [vmem:[#allocation2 + $0x8] sm:$0xff] %vm4580, %v4531
      %4583 = vst.msk [vmem:[#allocation2 + $0x10] sm:$0xff] %vm4580, %v4532
      %4584 = vst.msk [vmem:[#allocation2 + $0x18] sm:$0xff] %vm4580, %v4533
      %4585 = vst.msk [vmem:[#allocation2 + $0x20] sm:$0xff] %vm4580, %v4534
      %4586 = vst.msk [vmem:[#allocation2 + $0x28] sm:$0xff] %vm4580, %v4535
      %4587 = vst.msk [vmem:[#allocation2 + $0x30] sm:$0xff] %vm4580, %v4536
      %4588 = vst.msk [vmem:[#allocation2 + $0x38] sm:$0xff] %vm4580, %v4537
      %4589 = vst.msk [vmem:[#allocation2 + $0x40] sm:$0xff] %vm4580, %v4538
      %4590 = vst.msk [vmem:[#allocation2 + $0x48] sm:$0xff] %vm4580, %v4539
      %4591 = vst.msk [vmem:[#allocation2 + $0x50] sm:$0xff] %vm4580, %v4540
      %4592 = vst.msk [vmem:[#allocation2 + $0x58] sm:$0xff] %vm4580, %v4541
      %4593 = vst.msk [vmem:[#allocation2 + $0x60] sm:$0xff] %vm4580, %v4542
      %4594 = vst.msk [vmem:[#allocation2 + $0x68] sm:$0xff] %vm4580, %v4543
      %4595 = vst.msk [vmem:[#allocation2 + $0x70] sm:$0xff] %vm4580, %v4544
      %4596 = vst.msk [vmem:[#allocation2 + $0x78] sm:$0xff] %vm4580, %v4545
      %4597 = vst.msk [vmem:[#allocation2 + $0x80] sm:$0xff] %vm4580, %v4546
      %4598 = vst.msk [vmem:[#allocation2 + $0x88] sm:$0xff] %vm4580, %v4547
      %4599 = vst.msk [vmem:[#allocation2 + $0x90] sm:$0xff] %vm4580, %v4548
      %4600 = vst.msk [vmem:[#allocation2 + $0x98] sm:$0xff] %vm4580, %v4549
      %4601 = vst.msk [vmem:[#allocation2 + $0xa0] sm:$0xff] %vm4580, %v4550
      %4602 = vst.msk [vmem:[#allocation2 + $0xa8] sm:$0xff] %vm4580, %v4551
      %4603 = vst.msk [vmem:[#allocation2 + $0xb0] sm:$0xff] %vm4580, %v4552
      %4604 = vst.msk [vmem:[#allocation2 + $0xb8] sm:$0xff] %vm4580, %v4553
      %4605 = vst.msk [vmem:[#allocation2 + $0xc0] sm:$0xff] %vm4580, %v4554
      %4606 = vst.msk [vmem:[#allocation2 + $0xc8] sm:$0xff] %vm4580, %v4555
      %4607 = vst.msk [vmem:[#allocation2 + $0xd0] sm:$0xff] %vm4580, %v4556
      %4608 = vst.msk [vmem:[#allocation2 + $0xd8] sm:$0xff] %vm4580, %v4557
      %4609 = vst.msk [vmem:[#allocation2 + $0xe0] sm:$0xff] %vm4580, %v4558
      %4610 = vst.msk [vmem:[#allocation2 + $0xe8] sm:$0xff] %vm4580, %v4559
      %4611 = vst.msk [vmem:[#allocation2 + $0xf0] sm:$0xff] %vm4580, %v4560
      %4612 = vst.msk [vmem:[#allocation2 + $0xf8] sm:$0xff] %vm4580, %v4561
      %4613 = vst.msk [vmem:[#allocation2 + $0x100] sm:$0xff] %vm4580, %v4562
      %4614 = vst.msk [vmem:[#allocation2 + $0x108] sm:$0xff] %vm4580, %v4563
      %4615 = vst.msk [vmem:[#allocation2 + $0x110] sm:$0xff] %vm4580, %v4564
      %4616 = vst.msk [vmem:[#allocation2 + $0x118] sm:$0xff] %vm4580, %v4565
      %4617 = vst.msk [vmem:[#allocation2 + $0x120] sm:$0xff] %vm4580, %v4566
      %4618 = vst.msk [vmem:[#allocation2 + $0x128] sm:$0xff] %vm4580, %v4567
      %4619 = vst.msk [vmem:[#allocation2 + $0x130] sm:$0xff] %vm4580, %v4568
      %4620 = vst.msk [vmem:[#allocation2 + $0x138] sm:$0xff] %vm4580, %v4569
      %4621 = vst.msk [vmem:[#allocation2 + $0x140] sm:$0xff] %vm4580, %v4570
      %4622 = vst.msk [vmem:[#allocation2 + $0x148] sm:$0xff] %vm4580, %v4571
      %4623 = vst.msk [vmem:[#allocation2 + $0x150] sm:$0xff] %vm4580, %v4572
      %4624 = vst.msk [vmem:[#allocation2 + $0x158] sm:$0xff] %vm4580, %v4573
      %4625 = vst.msk [vmem:[#allocation2 + $0x160] sm:$0xff] %vm4580, %v4574
      %4626 = vst.msk [vmem:[#allocation2 + $0x168] sm:$0xff] %vm4580, %v4575
      %4627 = vst.msk [vmem:[#allocation2 + $0x170] sm:$0xff] %vm4580, %v4576
      %4628 = vst.msk [vmem:[#allocation2 + $0x178] sm:$0xff] %vm4580, %v4577
      %4629 = vst.msk [vmem:[#allocation2 + $0x180] sm:$0xff] %vm4580, %v4578
      %4630 = vst.msk [vmem:[#allocation2 + $0x188] sm:$0xff] %vm4580, %v4579
      %v4631 = vld [vmem:[%s8] sm:$0x1]
      %v4633 = vperm.slane %v4631, 0
      %v4635 = vadd.f32 %v4633, 0.0
      %v4636 = vld [vmem:[#allocation2 + $0x13] sm:$0xff]
      %v4637 = vld [vmem:[#allocation2 + $0x1b] sm:$0xff]
      %v4638 = vld [vmem:[#allocation2 + $0x23] sm:$0xff]
      %v4639 = vld [vmem:[#allocation2 + $0x2b] sm:$0xff]
      %v4640 = vld [vmem:[#allocation2 + $0x33] sm:$0xff]
      %v4641 = vld [vmem:[#allocation2 + $0x3b] sm:$0xff]
      %v4642 = vld [vmem:[#allocation2 + $0x43] sm:$0xff]
      %v4643 = vld [vmem:[#allocation2 + $0x4b] sm:$0xff]
      %v4644 = vld [vmem:[#allocation2 + $0x53] sm:$0xff]
      %v4645 = vld [vmem:[#allocation2 + $0x5b] sm:$0xff]
      %v4646 = vld [vmem:[#allocation2 + $0x63] sm:$0xff]
      %v4647 = vld [vmem:[#allocation2 + $0x6b] sm:$0xff]
      %v4648 = vld [vmem:[#allocation2 + $0x73] sm:$0xff]
      %v4649 = vld [vmem:[#allocation2 + $0x7b] sm:$0xff]
      %v4650 = vld [vmem:[#allocation2 + $0x83] sm:$0xff]
      %v4651 = vld [vmem:[#allocation2 + $0x8b] sm:$0xff]
      %v4652 = vld [vmem:[#allocation2 + $0x93] sm:$0xff]
      %v4653 = vld [vmem:[#allocation2 + $0x9b] sm:$0xff]
      %v4654 = vld [vmem:[#allocation2 + $0xa3] sm:$0xff]
      %v4655 = vld [vmem:[#allocation2 + $0xab] sm:$0xff]
      %v4656 = vld [vmem:[#allocation2 + $0xb3] sm:$0xff]
      %v4657 = vld [vmem:[#allocation2 + $0xbb] sm:$0xff]
      %v4658 = vld [vmem:[#allocation2 + $0xc3] sm:$0xff]
      %v4659 = vld [vmem:[#allocation2 + $0xcb] sm:$0xff]
      %v4660 = vld [vmem:[#allocation2 + $0xd3] sm:$0xff]
      %v4661 = vld [vmem:[#allocation2 + $0xdb] sm:$0xff]
      %v4662 = vld [vmem:[#allocation2 + $0xe3] sm:$0xff]
      %v4663 = vld [vmem:[#allocation2 + $0xeb] sm:$0xff]
      %v4664 = vld [vmem:[#allocation2 + $0xf3] sm:$0xff]
      %v4665 = vld [vmem:[#allocation2 + $0xfb] sm:$0xff]
      %v4666 = vld [vmem:[#allocation2 + $0x103] sm:$0xff]
      %v4667 = vld [vmem:[#allocation2 + $0x10b] sm:$0xff]
      %v4668 = vld [vmem:[#allocation2 + $0x113] sm:$0xff]
      %v4669 = vld [vmem:[#allocation2 + $0x11b] sm:$0xff]
      %v4670 = vld [vmem:[#allocation2 + $0x123] sm:$0xff]
      %v4671 = vld [vmem:[#allocation2 + $0x12b] sm:$0xff]
      %v4672 = vld [vmem:[#allocation2 + $0x133] sm:$0xff]
      %v4673 = vld [vmem:[#allocation2 + $0x13b] sm:$0xff]
      %v4674 = vld [vmem:[#allocation2 + $0x143] sm:$0xff]
      %v4675 = vld [vmem:[#allocation2 + $0x14b] sm:$0xff]
      %v4676 = vld [vmem:[%s7] sm:$0xff]
      %v4677 = vld [vmem:[%s7 + $0x8] sm:$0xff]
      %v4678 = vld [vmem:[%s7 + $0x10] sm:$0xff]
      %v4679 = vld [vmem:[%s7 + $0x18] sm:$0xff]
      %v4681 = vsel %vm4580, %v4636, 0
      %v4684 = vsel %vm4580, %v4637, 0
      %v4687 = vsel %vm4580, %v4638, 0
      %v4690 = vsel %vm4580, %v4639, 0
      %v4693 = vsel %vm4580, %v4640, 0
      %v4696 = vsel %vm4580, %v4641, 0
      %v4699 = vsel %vm4580, %v4642, 0
      %v4702 = vsel %vm4580, %v4643, 0
      %v4705 = vsel %vm4580, %v4644, 0
      %v4708 = vsel %vm4580, %v4645, 0
      %v4711 = vsel %vm4580, %v4646, 0
      %v4714 = vsel %vm4580, %v4647, 0
      %v4717 = vsel %vm4580, %v4648, 0
      %v4720 = vsel %vm4580, %v4649, 0
      %v4723 = vsel %vm4580, %v4650, 0
      %v4726 = vsel %vm4580, %v4651, 0
      %v4729 = vsel %vm4580, %v4652, 0
      %v4732 = vsel %vm4580, %v4653, 0
      %v4735 = vsel %vm4580, %v4654, 0
      %v4738 = vsel %vm4580, %v4655, 0
      %v4741 = vsel %vm4580, %v4656, 0
      %v4744 = vsel %vm4580, %v4657, 0
      %v4747 = vsel %vm4580, %v4658, 0
      %v4750 = vsel %vm4580, %v4659, 0
      %v4753 = vsel %vm4580, %v4660, 0
      %v4756 = vsel %vm4580, %v4661, 0
      %v4759 = vsel %vm4580, %v4662, 0
      %v4762 = vsel %vm4580, %v4663, 0
      %v4765 = vsel %vm4580, %v4664, 0
      %v4768 = vsel %vm4580, %v4665, 0
      %v4771 = vsel %vm4580, %v4666, 0
      %v4774 = vsel %vm4580, %v4667, 0
      %v4777 = vsel %vm4580, %v4668, 0
      %v4780 = vsel %vm4580, %v4669, 0
      %v4783 = vsel %vm4580, %v4670, 0
      %v4786 = vsel %vm4580, %v4671, 0
      %v4789 = vsel %vm4580, %v4672, 0
      %v4792 = vsel %vm4580, %v4673, 0
      %v4795 = vsel %vm4580, %v4674, 0
      %v4798 = vsel %vm4580, %v4675, 0
      %4800 = vmatpush.msra.mxu0 0.0
      %4801 = vmatpush.msra.mxu0 0.0
      %4802 = vmatpush.msra.mxu0 0.0
      %4803 = vmatpush.msra.mxu0 0.0
      %4804 = vmatpush.msra.mxu0 0.0
      %4805 = vmatpush.msra.mxu0 0.0
      %4806 = vmatpush.msra.mxu0 0.0
      %4807 = vmatpush.msra.mxu0 0.0
      %4808 = vmatpush.msra.mxu0 0.0
      %4809 = vmatpush.msra.mxu0 0.0
      %4810 = vmatpush.msra.mxu0 0.0
      %4811 = vmatpush.msra.mxu0 0.0
      %4812 = vmatpush.msra.mxu0 %v4679
      %4813 = vmatpush.msra.mxu0 %v4678
      %4814 = vmatpush.msra.mxu0 %v4677
      %4815 = vmatpush.msra.mxu0 %v4676
      %4816 = vmatmul.f32.gmra.mxu0 %v4681
      %v4817 = vpop.f32.mrf.mxu0
      %v4818 = vadd.f32 0.0, %v4817
      %4819 = vmatmul.f32.gmra.mxu0 %v4684
      %v4820 = vpop.f32.mrf.mxu0
      %v4821 = vadd.f32 0.0, %v4820
      %4822 = vmatmul.f32.gmra.mxu0 %v4687
      %v4823 = vpop.f32.mrf.mxu0
      %v4824 = vadd.f32 0.0, %v4823
      %4825 = vmatmul.f32.gmra.mxu0 %v4690
      %v4826 = vpop.f32.mrf.mxu0
      %v4827 = vadd.f32 0.0, %v4826
      %4828 = vmatmul.f32.gmra.mxu0 %v4693
      %v4829 = vpop.f32.mrf.mxu0
      %v4830 = vadd.f32 0.0, %v4829
      %4831 = vmatmul.f32.gmra.mxu0 %v4696
      %v4832 = vpop.f32.mrf.mxu0
      %v4833 = vadd.f32 0.0, %v4832
      %4834 = vmatmul.f32.gmra.mxu0 %v4699
      %v4835 = vpop.f32.mrf.mxu0
      %v4836 = vadd.f32 0.0, %v4835
      %4837 = vmatmul.f32.gmra.mxu0 %v4702
      %v4838 = vpop.f32.mrf.mxu0
      %v4839 = vadd.f32 0.0, %v4838
      %4840 = vmatmul.f32.gmra.mxu0 %v4705
      %v4841 = vpop.f32.mrf.mxu0
      %v4842 = vadd.f32 0.0, %v4841
      %4843 = vmatmul.f32.gmra.mxu0 %v4708
      %v4844 = vpop.f32.mrf.mxu0
      %v4845 = vadd.f32 0.0, %v4844
      %4846 = vmatmul.f32.gmra.mxu0 %v4711
      %v4847 = vpop.f32.mrf.mxu0
      %v4848 = vadd.f32 0.0, %v4847
      %4849 = vmatmul.f32.gmra.mxu0 %v4714
      %v4850 = vpop.f32.mrf.mxu0
      %v4851 = vadd.f32 0.0, %v4850
      %4852 = vmatmul.f32.gmra.mxu0 %v4717
      %v4853 = vpop.f32.mrf.mxu0
      %v4854 = vadd.f32 0.0, %v4853
      %4855 = vmatmul.f32.gmra.mxu0 %v4720
      %v4856 = vpop.f32.mrf.mxu0
      %v4857 = vadd.f32 0.0, %v4856
      %4858 = vmatmul.f32.gmra.mxu0 %v4723
      %v4859 = vpop.f32.mrf.mxu0
      %v4860 = vadd.f32 0.0, %v4859
      %4861 = vmatmul.f32.gmra.mxu0 %v4726
      %v4862 = vpop.f32.mrf.mxu0
      %v4863 = vadd.f32 0.0, %v4862
      %4864 = vmatmul.f32.gmra.mxu0 %v4729
      %v4865 = vpop.f32.mrf.mxu0
      %v4866 = vadd.f32 0.0, %v4865
      %4867 = vmatmul.f32.gmra.mxu0 %v4732
      %v4868 = vpop.f32.mrf.mxu0
      %v4869 = vadd.f32 0.0, %v4868
      %4870 = vmatmul.f32.gmra.mxu0 %v4735
      %v4871 = vpop.f32.mrf.mxu0
      %v4872 = vadd.f32 0.0, %v4871
      %4873 = vmatmul.f32.gmra.mxu0 %v4738
      %v4874 = vpop.f32.mrf.mxu0
      %v4875 = vadd.f32 0.0, %v4874
      %4876 = vmatmul.f32.gmra.mxu0 %v4741
      %v4877 = vpop.f32.mrf.mxu0
      %v4878 = vadd.f32 0.0, %v4877
      %4879 = vmatmul.f32.gmra.mxu0 %v4744
      %v4880 = vpop.f32.mrf.mxu0
      %v4881 = vadd.f32 0.0, %v4880
      %4882 = vmatmul.f32.gmra.mxu0 %v4747
      %v4883 = vpop.f32.mrf.mxu0
      %v4884 = vadd.f32 0.0, %v4883
      %4885 = vmatmul.f32.gmra.mxu0 %v4750
      %v4886 = vpop.f32.mrf.mxu0
      %v4887 = vadd.f32 0.0, %v4886
      %4888 = vmatmul.f32.gmra.mxu0 %v4753
      %v4889 = vpop.f32.mrf.mxu0
      %v4890 = vadd.f32 0.0, %v4889
      %4891 = vmatmul.f32.gmra.mxu0 %v4756
      %v4892 = vpop.f32.mrf.mxu0
      %v4893 = vadd.f32 0.0, %v4892
      %4894 = vmatmul.f32.gmra.mxu0 %v4759
      %v4895 = vpop.f32.mrf.mxu0
      %v4896 = vadd.f32 0.0, %v4895
      %4897 = vmatmul.f32.gmra.mxu0 %v4762
      %v4898 = vpop.f32.mrf.mxu0
      %v4899 = vadd.f32 0.0, %v4898
      %4900 = vmatmul.f32.gmra.mxu0 %v4765
      %v4901 = vpop.f32.mrf.mxu0
      %v4902 = vadd.f32 0.0, %v4901
      %4903 = vmatmul.f32.gmra.mxu0 %v4768
      %v4904 = vpop.f32.mrf.mxu0
      %v4905 = vadd.f32 0.0, %v4904
      %4906 = vmatmul.f32.gmra.mxu0 %v4771
      %v4907 = vpop.f32.mrf.mxu0
      %v4908 = vadd.f32 0.0, %v4907
      %4909 = vmatmul.f32.gmra.mxu0 %v4774
      %v4910 = vpop.f32.mrf.mxu0
      %v4911 = vadd.f32 0.0, %v4910
      %4912 = vmatmul.f32.gmra.mxu0 %v4777
      %v4913 = vpop.f32.mrf.mxu0
      %v4914 = vadd.f32 0.0, %v4913
      %4915 = vmatmul.f32.gmra.mxu0 %v4780
      %v4916 = vpop.f32.mrf.mxu0
      %v4917 = vadd.f32 0.0, %v4916
      %4918 = vmatmul.f32.gmra.mxu0 %v4783
      %v4919 = vpop.f32.mrf.mxu0
      %v4920 = vadd.f32 0.0, %v4919
      %4921 = vmatmul.f32.gmra.mxu0 %v4786
      %v4922 = vpop.f32.mrf.mxu0
      %v4923 = vadd.f32 0.0, %v4922
      %4924 = vmatmul.f32.gmra.mxu0 %v4789
      %v4925 = vpop.f32.mrf.mxu0
      %v4926 = vadd.f32 0.0, %v4925
      %4927 = vmatmul.f32.gmra.mxu0 %v4792
      %v4928 = vpop.f32.mrf.mxu0
      %v4929 = vadd.f32 0.0, %v4928
      %4930 = vmatmul.f32.gmra.mxu0 %v4795
      %v4931 = vpop.f32.mrf.mxu0
      %v4932 = vadd.f32 0.0, %v4931
      %4933 = vmatmul.f32.gmra.mxu0 %v4798
      %v4934 = vpop.f32.mrf.mxu0
      %v4935 = vadd.f32 0.0, %v4934
      %4936 = vdwg.mxu0
      %v4937 = vadd.f32 %v4635, %v4818
      %v4938 = vadd.f32 %v4635, %v4821
      %v4939 = vadd.f32 %v4635, %v4824
      %v4940 = vadd.f32 %v4635, %v4827
      %v4941 = vadd.f32 %v4635, %v4830
      %v4942 = vadd.f32 %v4635, %v4833
      %v4943 = vadd.f32 %v4635, %v4836
      %v4944 = vadd.f32 %v4635, %v4839
      %v4945 = vadd.f32 %v4635, %v4842
      %v4946 = vadd.f32 %v4635, %v4845
      %v4947 = vadd.f32 %v4635, %v4848
      %v4948 = vadd.f32 %v4635, %v4851
      %v4949 = vadd.f32 %v4635, %v4854
      %v4950 = vadd.f32 %v4635, %v4857
      %v4951 = vadd.f32 %v4635, %v4860
      %v4952 = vadd.f32 %v4635, %v4863
      %v4953 = vadd.f32 %v4635, %v4866
      %v4954 = vadd.f32 %v4635, %v4869
      %v4955 = vadd.f32 %v4635, %v4872
      %v4956 = vadd.f32 %v4635, %v4875
      %v4957 = vadd.f32 %v4635, %v4878
      %v4958 = vadd.f32 %v4635, %v4881
      %v4959 = vadd.f32 %v4635, %v4884
      %v4960 = vadd.f32 %v4635, %v4887
      %v4961 = vadd.f32 %v4635, %v4890
      %v4962 = vadd.f32 %v4635, %v4893
      %v4963 = vadd.f32 %v4635, %v4896
      %v4964 = vadd.f32 %v4635, %v4899
      %v4965 = vadd.f32 %v4635, %v4902
      %v4966 = vadd.f32 %v4635, %v4905
      %v4967 = vadd.f32 %v4635, %v4908
      %v4968 = vadd.f32 %v4635, %v4911
      %v4969 = vadd.f32 %v4635, %v4914
      %v4970 = vadd.f32 %v4635, %v4917
      %v4971 = vadd.f32 %v4635, %v4920
      %v4972 = vadd.f32 %v4635, %v4923
      %v4973 = vadd.f32 %v4635, %v4926
      %v4974 = vadd.f32 %v4635, %v4929
      %v4975 = vadd.f32 %v4635, %v4932
      %v4976 = vadd.f32 %v4635, %v4935
      %v4977 = vld [vmem:[#allocation2 + $0x14] sm:$0xff]
      %v4978 = vld [vmem:[#allocation2 + $0x1c] sm:$0xff]
      %v4979 = vld [vmem:[#allocation2 + $0x24] sm:$0xff]
      %v4980 = vld [vmem:[#allocation2 + $0x2c] sm:$0xff]
      %v4981 = vld [vmem:[#allocation2 + $0x34] sm:$0xff]
      %v4982 = vld [vmem:[#allocation2 + $0x3c] sm:$0xff]
      %v4983 = vld [vmem:[#allocation2 + $0x44] sm:$0xff]
      %v4984 = vld [vmem:[#allocation2 + $0x4c] sm:$0xff]
      %v4985 = vld [vmem:[#allocation2 + $0x54] sm:$0xff]
      %v4986 = vld [vmem:[#allocation2 + $0x5c] sm:$0xff]
      %v4987 = vld [vmem:[#allocation2 + $0x64] sm:$0xff]
      %v4988 = vld [vmem:[#allocation2 + $0x6c] sm:$0xff]
      %v4989 = vld [vmem:[#allocation2 + $0x74] sm:$0xff]
      %v4990 = vld [vmem:[#allocation2 + $0x7c] sm:$0xff]
      %v4991 = vld [vmem:[#allocation2 + $0x84] sm:$0xff]
      %v4992 = vld [vmem:[#allocation2 + $0x8c] sm:$0xff]
      %v4993 = vld [vmem:[#allocation2 + $0x94] sm:$0xff]
      %v4994 = vld [vmem:[#allocation2 + $0x9c] sm:$0xff]
      %v4995 = vld [vmem:[#allocation2 + $0xa4] sm:$0xff]
      %v4996 = vld [vmem:[#allocation2 + $0xac] sm:$0xff]
      %v4997 = vld [vmem:[#allocation2 + $0xb4] sm:$0xff]
      %v4998 = vld [vmem:[#allocation2 + $0xbc] sm:$0xff]
      %v4999 = vld [vmem:[#allocation2 + $0xc4] sm:$0xff]
      %v5000 = vld [vmem:[#allocation2 + $0xcc] sm:$0xff]
      %v5001 = vld [vmem:[#allocation2 + $0xd4] sm:$0xff]
      %v5002 = vld [vmem:[#allocation2 + $0xdc] sm:$0xff]
      %v5003 = vld [vmem:[#allocation2 + $0xe4] sm:$0xff]
      %v5004 = vld [vmem:[#allocation2 + $0xec] sm:$0xff]
      %v5005 = vld [vmem:[#allocation2 + $0xf4] sm:$0xff]
      %v5006 = vld [vmem:[#allocation2 + $0xfc] sm:$0xff]
      %v5007 = vld [vmem:[#allocation2 + $0x104] sm:$0xff]
      %v5008 = vld [vmem:[#allocation2 + $0x10c] sm:$0xff]
      %v5009 = vld [vmem:[#allocation2 + $0x114] sm:$0xff]
      %v5010 = vld [vmem:[#allocation2 + $0x11c] sm:$0xff]
      %v5011 = vld [vmem:[#allocation2 + $0x124] sm:$0xff]
      %v5012 = vld [vmem:[#allocation2 + $0x12c] sm:$0xff]
      %v5013 = vld [vmem:[#allocation2 + $0x134] sm:$0xff]
      %v5014 = vld [vmem:[#allocation2 + $0x13c] sm:$0xff]
      %v5015 = vld [vmem:[#allocation2 + $0x144] sm:$0xff]
      %v5016 = vld [vmem:[#allocation2 + $0x14c] sm:$0xff]
      %s5017 = scalar_lea.vmem %s7, 32
      %v5018 = vld [vmem:[%s5017] sm:$0xff]
      %v5019 = vld [vmem:[%s5017 + $0x8] sm:$0xff]
      %v5020 = vld [vmem:[%s5017 + $0x10] sm:$0xff]
      %v5021 = vld [vmem:[%s5017 + $0x18] sm:$0xff]
      %v5023 = vsel %vm4580, %v4977, 0
      %v5026 = vsel %vm4580, %v4978, 0
      %v5029 = vsel %vm4580, %v4979, 0
      %v5032 = vsel %vm4580, %v4980, 0
      %v5035 = vsel %vm4580, %v4981, 0
      %v5038 = vsel %vm4580, %v4982, 0
      %v5041 = vsel %vm4580, %v4983, 0
      %v5044 = vsel %vm4580, %v4984, 0
      %v5047 = vsel %vm4580, %v4985, 0
      %v5050 = vsel %vm4580, %v4986, 0
      %v5053 = vsel %vm4580, %v4987, 0
      %v5056 = vsel %vm4580, %v4988, 0
      %v5059 = vsel %vm4580, %v4989, 0
      %v5062 = vsel %vm4580, %v4990, 0
      %v5065 = vsel %vm4580, %v4991, 0
      %v5068 = vsel %vm4580, %v4992, 0
      %v5071 = vsel %vm4580, %v4993, 0
      %v5074 = vsel %vm4580, %v4994, 0
      %v5077 = vsel %vm4580, %v4995, 0
      %v5080 = vsel %vm4580, %v4996, 0
      %v5083 = vsel %vm4580, %v4997, 0
      %v5086 = vsel %vm4580, %v4998, 0
      %v5089 = vsel %vm4580, %v4999, 0
      %v5092 = vsel %vm4580, %v5000, 0
      %v5095 = vsel %vm4580, %v5001, 0
      %v5098 = vsel %vm4580, %v5002, 0
      %v5101 = vsel %vm4580, %v5003, 0
      %v5104 = vsel %vm4580, %v5004, 0
      %v5107 = vsel %vm4580, %v5005, 0
      %v5110 = vsel %vm4580, %v5006, 0
      %v5113 = vsel %vm4580, %v5007, 0
      %v5116 = vsel %vm4580, %v5008, 0
      %v5119 = vsel %vm4580, %v5009, 0
      %v5122 = vsel %vm4580, %v5010, 0
      %v5125 = vsel %vm4580, %v5011, 0
      %v5128 = vsel %vm4580, %v5012, 0
      %v5131 = vsel %vm4580, %v5013, 0
      %v5134 = vsel %vm4580, %v5014, 0
      %v5137 = vsel %vm4580, %v5015, 0
      %v5140 = vsel %vm4580, %v5016, 0
      %5142 = vmatpush.msra.mxu0 0.0
      %5143 = vmatpush.msra.mxu0 0.0
      %5144 = vmatpush.msra.mxu0 0.0
      %5145 = vmatpush.msra.mxu0 0.0
      %5146 = vmatpush.msra.mxu0 0.0
      %5147 = vmatpush.msra.mxu0 0.0
      %5148 = vmatpush.msra.mxu0 0.0
      %5149 = vmatpush.msra.mxu0 0.0
      %5150 = vmatpush.msra.mxu0 0.0
      %5151 = vmatpush.msra.mxu0 0.0
      %5152 = vmatpush.msra.mxu0 0.0
      %5153 = vmatpush.msra.mxu0 0.0
      %5154 = vmatpush.msra.mxu0 %v5021
      %5155 = vmatpush.msra.mxu0 %v5020
      %5156 = vmatpush.msra.mxu0 %v5019
      %5157 = vmatpush.msra.mxu0 %v5018
      %5158 = vmatmul.f32.gmra.mxu0 %v5023
      %v5159 = vpop.f32.mrf.mxu0
      %v5160 = vadd.f32 0.0, %v5159
      %5161 = vmatmul.f32.gmra.mxu0 %v5026
      %v5162 = vpop.f32.mrf.mxu0
      %v5163 = vadd.f32 0.0, %v5162
      %5164 = vmatmul.f32.gmra.mxu0 %v5029
      %v5165 = vpop.f32.mrf.mxu0
      %v5166 = vadd.f32 0.0, %v5165
      %5167 = vmatmul.f32.gmra.mxu0 %v5032
      %v5168 = vpop.f32.mrf.mxu0
      %v5169 = vadd.f32 0.0, %v5168
      %5170 = vmatmul.f32.gmra.mxu0 %v5035
      %v5171 = vpop.f32.mrf.mxu0
      %v5172 = vadd.f32 0.0, %v5171
      %5173 = vmatmul.f32.gmra.mxu0 %v5038
      %v5174 = vpop.f32.mrf.mxu0
      %v5175 = vadd.f32 0.0, %v5174
      %5176 = vmatmul.f32.gmra.mxu0 %v5041
      %v5177 = vpop.f32.mrf.mxu0
      %v5178 = vadd.f32 0.0, %v5177
      %5179 = vmatmul.f32.gmra.mxu0 %v5044
      %v5180 = vpop.f32.mrf.mxu0
      %v5181 = vadd.f32 0.0, %v5180
      %5182 = vmatmul.f32.gmra.mxu0 %v5047
      %v5183 = vpop.f32.mrf.mxu0
      %v5184 = vadd.f32 0.0, %v5183
      %5185 = vmatmul.f32.gmra.mxu0 %v5050
      %v5186 = vpop.f32.mrf.mxu0
      %v5187 = vadd.f32 0.0, %v5186
      %5188 = vmatmul.f32.gmra.mxu0 %v5053
      %v5189 = vpop.f32.mrf.mxu0
      %v5190 = vadd.f32 0.0, %v5189
      %5191 = vmatmul.f32.gmra.mxu0 %v5056
      %v5192 = vpop.f32.mrf.mxu0
      %v5193 = vadd.f32 0.0, %v5192
      %5194 = vmatmul.f32.gmra.mxu0 %v5059
      %v5195 = vpop.f32.mrf.mxu0
      %v5196 = vadd.f32 0.0, %v5195
      %5197 = vmatmul.f32.gmra.mxu0 %v5062
      %v5198 = vpop.f32.mrf.mxu0
      %v5199 = vadd.f32 0.0, %v5198
      %5200 = vmatmul.f32.gmra.mxu0 %v5065
      %v5201 = vpop.f32.mrf.mxu0
      %v5202 = vadd.f32 0.0, %v5201
      %5203 = vmatmul.f32.gmra.mxu0 %v5068
      %v5204 = vpop.f32.mrf.mxu0
      %v5205 = vadd.f32 0.0, %v5204
      %5206 = vmatmul.f32.gmra.mxu0 %v5071
      %v5207 = vpop.f32.mrf.mxu0
      %v5208 = vadd.f32 0.0, %v5207
      %5209 = vmatmul.f32.gmra.mxu0 %v5074
      %v5210 = vpop.f32.mrf.mxu0
      %v5211 = vadd.f32 0.0, %v5210
      %5212 = vmatmul.f32.gmra.mxu0 %v5077
      %v5213 = vpop.f32.mrf.mxu0
      %v5214 = vadd.f32 0.0, %v5213
      %5215 = vmatmul.f32.gmra.mxu0 %v5080
      %v5216 = vpop.f32.mrf.mxu0
      %v5217 = vadd.f32 0.0, %v5216
      %5218 = vmatmul.f32.gmra.mxu0 %v5083
      %v5219 = vpop.f32.mrf.mxu0
      %v5220 = vadd.f32 0.0, %v5219
      %5221 = vmatmul.f32.gmra.mxu0 %v5086
      %v5222 = vpop.f32.mrf.mxu0
      %v5223 = vadd.f32 0.0, %v5222
      %5224 = vmatmul.f32.gmra.mxu0 %v5089
      %v5225 = vpop.f32.mrf.mxu0
      %v5226 = vadd.f32 0.0, %v5225
      %5227 = vmatmul.f32.gmra.mxu0 %v5092
      %v5228 = vpop.f32.mrf.mxu0
      %v5229 = vadd.f32 0.0, %v5228
      %5230 = vmatmul.f32.gmra.mxu0 %v5095
      %v5231 = vpop.f32.mrf.mxu0
      %v5232 = vadd.f32 0.0, %v5231
      %5233 = vmatmul.f32.gmra.mxu0 %v5098
      %v5234 = vpop.f32.mrf.mxu0
      %v5235 = vadd.f32 0.0, %v5234
      %5236 = vmatmul.f32.gmra.mxu0 %v5101
      %v5237 = vpop.f32.mrf.mxu0
      %v5238 = vadd.f32 0.0, %v5237
      %5239 = vmatmul.f32.gmra.mxu0 %v5104
      %v5240 = vpop.f32.mrf.mxu0
      %v5241 = vadd.f32 0.0, %v5240
      %5242 = vmatmul.f32.gmra.mxu0 %v5107
      %v5243 = vpop.f32.mrf.mxu0
      %v5244 = vadd.f32 0.0, %v5243
      %5245 = vmatmul.f32.gmra.mxu0 %v5110
      %v5246 = vpop.f32.mrf.mxu0
      %v5247 = vadd.f32 0.0, %v5246
      %5248 = vmatmul.f32.gmra.mxu0 %v5113
      %v5249 = vpop.f32.mrf.mxu0
      %v5250 = vadd.f32 0.0, %v5249
      %5251 = vmatmul.f32.gmra.mxu0 %v5116
      %v5252 = vpop.f32.mrf.mxu0
      %v5253 = vadd.f32 0.0, %v5252
      %5254 = vmatmul.f32.gmra.mxu0 %v5119
      %v5255 = vpop.f32.mrf.mxu0
      %v5256 = vadd.f32 0.0, %v5255
      %5257 = vmatmul.f32.gmra.mxu0 %v5122
      %v5258 = vpop.f32.mrf.mxu0
      %v5259 = vadd.f32 0.0, %v5258
      %5260 = vmatmul.f32.gmra.mxu0 %v5125
      %v5261 = vpop.f32.mrf.mxu0
      %v5262 = vadd.f32 0.0, %v5261
      %5263 = vmatmul.f32.gmra.mxu0 %v5128
      %v5264 = vpop.f32.mrf.mxu0
      %v5265 = vadd.f32 0.0, %v5264
      %5266 = vmatmul.f32.gmra.mxu0 %v5131
      %v5267 = vpop.f32.mrf.mxu0
      %v5268 = vadd.f32 0.0, %v5267
      %5269 = vmatmul.f32.gmra.mxu0 %v5134
      %v5270 = vpop.f32.mrf.mxu0
      %v5271 = vadd.f32 0.0, %v5270
      %5272 = vmatmul.f32.gmra.mxu0 %v5137
      %v5273 = vpop.f32.mrf.mxu0
      %v5274 = vadd.f32 0.0, %v5273
      %5275 = vmatmul.f32.gmra.mxu0 %v5140
      %v5276 = vpop.f32.mrf.mxu0
      %v5277 = vadd.f32 0.0, %v5276
      %5278 = vdwg.mxu0
      %v5279 = vadd.f32 %v4937, %v5160
      %v5280 = vadd.f32 %v4938, %v5163
      %v5281 = vadd.f32 %v4939, %v5166
      %v5282 = vadd.f32 %v4940, %v5169
      %v5283 = vadd.f32 %v4941, %v5172
      %v5284 = vadd.f32 %v4942, %v5175
      %v5285 = vadd.f32 %v4943, %v5178
      %v5286 = vadd.f32 %v4944, %v5181
      %v5287 = vadd.f32 %v4945, %v5184
      %v5288 = vadd.f32 %v4946, %v5187
      %v5289 = vadd.f32 %v4947, %v5190
      %v5290 = vadd.f32 %v4948, %v5193
      %v5291 = vadd.f32 %v4949, %v5196
      %v5292 = vadd.f32 %v4950, %v5199
      %v5293 = vadd.f32 %v4951, %v5202
      %v5294 = vadd.f32 %v4952, %v5205
      %v5295 = vadd.f32 %v4953, %v5208
      %v5296 = vadd.f32 %v4954, %v5211
      %v5297 = vadd.f32 %v4955, %v5214
      %v5298 = vadd.f32 %v4956, %v5217
      %v5299 = vadd.f32 %v4957, %v5220
      %v5300 = vadd.f32 %v4958, %v5223
      %v5301 = vadd.f32 %v4959, %v5226
      %v5302 = vadd.f32 %v4960, %v5229
      %v5303 = vadd.f32 %v4961, %v5232
      %v5304 = vadd.f32 %v4962, %v5235
      %v5305 = vadd.f32 %v4963, %v5238
      %v5306 = vadd.f32 %v4964, %v5241
      %v5307 = vadd.f32 %v4965, %v5244
      %v5308 = vadd.f32 %v4966, %v5247
      %v5309 = vadd.f32 %v4967, %v5250
      %v5310 = vadd.f32 %v4968, %v5253
      %v5311 = vadd.f32 %v4969, %v5256
      %v5312 = vadd.f32 %v4970, %v5259
      %v5313 = vadd.f32 %v4971, %v5262
      %v5314 = vadd.f32 %v4972, %v5265
      %v5315 = vadd.f32 %v4973, %v5268
      %v5316 = vadd.f32 %v4974, %v5271
      %v5317 = vadd.f32 %v4975, %v5274
      %v5318 = vadd.f32 %v4976, %v5277
      %v5319 = vld [vmem:[#allocation2 + $0x15] sm:$0xff]
      %v5320 = vld [vmem:[#allocation2 + $0x1d] sm:$0xff]
      %v5321 = vld [vmem:[#allocation2 + $0x25] sm:$0xff]
      %v5322 = vld [vmem:[#allocation2 + $0x2d] sm:$0xff]
      %v5323 = vld [vmem:[#allocation2 + $0x35] sm:$0xff]
      %v5324 = vld [vmem:[#allocation2 + $0x3d] sm:$0xff]
      %v5325 = vld [vmem:[#allocation2 + $0x45] sm:$0xff]
      %v5326 = vld [vmem:[#allocation2 + $0x4d] sm:$0xff]
      %v5327 = vld [vmem:[#allocation2 + $0x55] sm:$0xff]
      %v5328 = vld [vmem:[#allocation2 + $0x5d] sm:$0xff]
      %v5329 = vld [vmem:[#allocation2 + $0x65] sm:$0xff]
      %v5330 = vld [vmem:[#allocation2 + $0x6d] sm:$0xff]
      %v5331 = vld [vmem:[#allocation2 + $0x75] sm:$0xff]
      %v5332 = vld [vmem:[#allocation2 + $0x7d] sm:$0xff]
      %v5333 = vld [vmem:[#allocation2 + $0x85] sm:$0xff]
      %v5334 = vld [vmem:[#allocation2 + $0x8d] sm:$0xff]
      %v5335 = vld [vmem:[#allocation2 + $0x95] sm:$0xff]
      %v5336 = vld [vmem:[#allocation2 + $0x9d] sm:$0xff]
      %v5337 = vld [vmem:[#allocation2 + $0xa5] sm:$0xff]
      %v5338 = vld [vmem:[#allocation2 + $0xad] sm:$0xff]
      %v5339 = vld [vmem:[#allocation2 + $0xb5] sm:$0xff]
      %v5340 = vld [vmem:[#allocation2 + $0xbd] sm:$0xff]
      %v5341 = vld [vmem:[#allocation2 + $0xc5] sm:$0xff]
      %v5342 = vld [vmem:[#allocation2 + $0xcd] sm:$0xff]
      %v5343 = vld [vmem:[#allocation2 + $0xd5] sm:$0xff]
      %v5344 = vld [vmem:[#allocation2 + $0xdd] sm:$0xff]
      %v5345 = vld [vmem:[#allocation2 + $0xe5] sm:$0xff]
      %v5346 = vld [vmem:[#allocation2 + $0xed] sm:$0xff]
      %v5347 = vld [vmem:[#allocation2 + $0xf5] sm:$0xff]
      %v5348 = vld [vmem:[#allocation2 + $0xfd] sm:$0xff]
      %v5349 = vld [vmem:[#allocation2 + $0x105] sm:$0xff]
      %v5350 = vld [vmem:[#allocation2 + $0x10d] sm:$0xff]
      %v5351 = vld [vmem:[#allocation2 + $0x115] sm:$0xff]
      %v5352 = vld [vmem:[#allocation2 + $0x11d] sm:$0xff]
      %v5353 = vld [vmem:[#allocation2 + $0x125] sm:$0xff]
      %v5354 = vld [vmem:[#allocation2 + $0x12d] sm:$0xff]
      %v5355 = vld [vmem:[#allocation2 + $0x135] sm:$0xff]
      %v5356 = vld [vmem:[#allocation2 + $0x13d] sm:$0xff]
      %v5357 = vld [vmem:[#allocation2 + $0x145] sm:$0xff]
      %v5358 = vld [vmem:[#allocation2 + $0x14d] sm:$0xff]
      %s5359 = scalar_lea.vmem %s7, 64
      %v5360 = vld [vmem:[%s5359] sm:$0xff]
      %v5361 = vld [vmem:[%s5359 + $0x8] sm:$0xff]
      %v5362 = vld [vmem:[%s5359 + $0x10] sm:$0xff]
      %v5363 = vld [vmem:[%s5359 + $0x18] sm:$0xff]
      %v5365 = vsel %vm4580, %v5319, 0
      %v5368 = vsel %vm4580, %v5320, 0
      %v5371 = vsel %vm4580, %v5321, 0
      %v5374 = vsel %vm4580, %v5322, 0
      %v5377 = vsel %vm4580, %v5323, 0
      %v5380 = vsel %vm4580, %v5324, 0
      %v5383 = vsel %vm4580, %v5325, 0
      %v5386 = vsel %vm4580, %v5326, 0
      %v5389 = vsel %vm4580, %v5327, 0
      %v5392 = vsel %vm4580, %v5328, 0
      %v5395 = vsel %vm4580, %v5329, 0
      %v5398 = vsel %vm4580, %v5330, 0
      %v5401 = vsel %vm4580, %v5331, 0
      %v5404 = vsel %vm4580, %v5332, 0
      %v5407 = vsel %vm4580, %v5333, 0
      %v5410 = vsel %vm4580, %v5334, 0
      %v5413 = vsel %vm4580, %v5335, 0
      %v5416 = vsel %vm4580, %v5336, 0
      %v5419 = vsel %vm4580, %v5337, 0
      %v5422 = vsel %vm4580, %v5338, 0
      %v5425 = vsel %vm4580, %v5339, 0
      %v5428 = vsel %vm4580, %v5340, 0
      %v5431 = vsel %vm4580, %v5341, 0
      %v5434 = vsel %vm4580, %v5342, 0
      %v5437 = vsel %vm4580, %v5343, 0
      %v5440 = vsel %vm4580, %v5344, 0
      %v5443 = vsel %vm4580, %v5345, 0
      %v5446 = vsel %vm4580, %v5346, 0
      %v5449 = vsel %vm4580, %v5347, 0
      %v5452 = vsel %vm4580, %v5348, 0
      %v5455 = vsel %vm4580, %v5349, 0
      %v5458 = vsel %vm4580, %v5350, 0
      %v5461 = vsel %vm4580, %v5351, 0
      %v5464 = vsel %vm4580, %v5352, 0
      %v5467 = vsel %vm4580, %v5353, 0
      %v5470 = vsel %vm4580, %v5354, 0
      %v5473 = vsel %vm4580, %v5355, 0
      %v5476 = vsel %vm4580, %v5356, 0
      %v5479 = vsel %vm4580, %v5357, 0
      %v5482 = vsel %vm4580, %v5358, 0
      %5484 = vmatpush.msra.mxu0 0.0
      %5485 = vmatpush.msra.mxu0 0.0
      %5486 = vmatpush.msra.mxu0 0.0
      %5487 = vmatpush.msra.mxu0 0.0
      %5488 = vmatpush.msra.mxu0 0.0
      %5489 = vmatpush.msra.mxu0 0.0
      %5490 = vmatpush.msra.mxu0 0.0
      %5491 = vmatpush.msra.mxu0 0.0
      %5492 = vmatpush.msra.mxu0 0.0
      %5493 = vmatpush.msra.mxu0 0.0
      %5494 = vmatpush.msra.mxu0 0.0
      %5495 = vmatpush.msra.mxu0 0.0
      %5496 = vmatpush.msra.mxu0 %v5363
      %5497 = vmatpush.msra.mxu0 %v5362
      %5498 = vmatpush.msra.mxu0 %v5361
      %5499 = vmatpush.msra.mxu0 %v5360
      %5500 = vmatmul.f32.gmra.mxu0 %v5365
      %v5501 = vpop.f32.mrf.mxu0
      %v5502 = vadd.f32 0.0, %v5501
      %5503 = vmatmul.f32.gmra.mxu0 %v5368
      %v5504 = vpop.f32.mrf.mxu0
      %v5505 = vadd.f32 0.0, %v5504
      %5506 = vmatmul.f32.gmra.mxu0 %v5371
      %v5507 = vpop.f32.mrf.mxu0
      %v5508 = vadd.f32 0.0, %v5507
      %5509 = vmatmul.f32.gmra.mxu0 %v5374
      %v5510 = vpop.f32.mrf.mxu0
      %v5511 = vadd.f32 0.0, %v5510
      %5512 = vmatmul.f32.gmra.mxu0 %v5377
      %v5513 = vpop.f32.mrf.mxu0
      %v5514 = vadd.f32 0.0, %v5513
      %5515 = vmatmul.f32.gmra.mxu0 %v5380
      %v5516 = vpop.f32.mrf.mxu0
      %v5517 = vadd.f32 0.0, %v5516
      %5518 = vmatmul.f32.gmra.mxu0 %v5383
      %v5519 = vpop.f32.mrf.mxu0
      %v5520 = vadd.f32 0.0, %v5519
      %5521 = vmatmul.f32.gmra.mxu0 %v5386
      %v5522 = vpop.f32.mrf.mxu0
      %v5523 = vadd.f32 0.0, %v5522
      %5524 = vmatmul.f32.gmra.mxu0 %v5389
      %v5525 = vpop.f32.mrf.mxu0
      %v5526 = vadd.f32 0.0, %v5525
      %5527 = vmatmul.f32.gmra.mxu0 %v5392
      %v5528 = vpop.f32.mrf.mxu0
      %v5529 = vadd.f32 0.0, %v5528
      %5530 = vmatmul.f32.gmra.mxu0 %v5395
      %v5531 = vpop.f32.mrf.mxu0
      %v5532 = vadd.f32 0.0, %v5531
      %5533 = vmatmul.f32.gmra.mxu0 %v5398
      %v5534 = vpop.f32.mrf.mxu0
      %v5535 = vadd.f32 0.0, %v5534
      %5536 = vmatmul.f32.gmra.mxu0 %v5401
      %v5537 = vpop.f32.mrf.mxu0
      %v5538 = vadd.f32 0.0, %v5537
      %5539 = vmatmul.f32.gmra.mxu0 %v5404
      %v5540 = vpop.f32.mrf.mxu0
      %v5541 = vadd.f32 0.0, %v5540
      %5542 = vmatmul.f32.gmra.mxu0 %v5407
      %v5543 = vpop.f32.mrf.mxu0
      %v5544 = vadd.f32 0.0, %v5543
      %5545 = vmatmul.f32.gmra.mxu0 %v5410
      %v5546 = vpop.f32.mrf.mxu0
      %v5547 = vadd.f32 0.0, %v5546
      %5548 = vmatmul.f32.gmra.mxu0 %v5413
      %v5549 = vpop.f32.mrf.mxu0
      %v5550 = vadd.f32 0.0, %v5549
      %5551 = vmatmul.f32.gmra.mxu0 %v5416
      %v5552 = vpop.f32.mrf.mxu0
      %v5553 = vadd.f32 0.0, %v5552
      %5554 = vmatmul.f32.gmra.mxu0 %v5419
      %v5555 = vpop.f32.mrf.mxu0
      %v5556 = vadd.f32 0.0, %v5555
      %5557 = vmatmul.f32.gmra.mxu0 %v5422
      %v5558 = vpop.f32.mrf.mxu0
      %v5559 = vadd.f32 0.0, %v5558
      %5560 = vmatmul.f32.gmra.mxu0 %v5425
      %v5561 = vpop.f32.mrf.mxu0
      %v5562 = vadd.f32 0.0, %v5561
      %5563 = vmatmul.f32.gmra.mxu0 %v5428
      %v5564 = vpop.f32.mrf.mxu0
      %v5565 = vadd.f32 0.0, %v5564
      %5566 = vmatmul.f32.gmra.mxu0 %v5431
      %v5567 = vpop.f32.mrf.mxu0
      %v5568 = vadd.f32 0.0, %v5567
      %5569 = vmatmul.f32.gmra.mxu0 %v5434
      %v5570 = vpop.f32.mrf.mxu0
      %v5571 = vadd.f32 0.0, %v5570
      %5572 = vmatmul.f32.gmra.mxu0 %v5437
      %v5573 = vpop.f32.mrf.mxu0
      %v5574 = vadd.f32 0.0, %v5573
      %5575 = vmatmul.f32.gmra.mxu0 %v5440
      %v5576 = vpop.f32.mrf.mxu0
      %v5577 = vadd.f32 0.0, %v5576
      %5578 = vmatmul.f32.gmra.mxu0 %v5443
      %v5579 = vpop.f32.mrf.mxu0
      %v5580 = vadd.f32 0.0, %v5579
      %5581 = vmatmul.f32.gmra.mxu0 %v5446
      %v5582 = vpop.f32.mrf.mxu0
      %v5583 = vadd.f32 0.0, %v5582
      %5584 = vmatmul.f32.gmra.mxu0 %v5449
      %v5585 = vpop.f32.mrf.mxu0
      %v5586 = vadd.f32 0.0, %v5585
      %5587 = vmatmul.f32.gmra.mxu0 %v5452
      %v5588 = vpop.f32.mrf.mxu0
      %v5589 = vadd.f32 0.0, %v5588
      %5590 = vmatmul.f32.gmra.mxu0 %v5455
      %v5591 = vpop.f32.mrf.mxu0
      %v5592 = vadd.f32 0.0, %v5591
      %5593 = vmatmul.f32.gmra.mxu0 %v5458
      %v5594 = vpop.f32.mrf.mxu0
      %v5595 = vadd.f32 0.0, %v5594
      %5596 = vmatmul.f32.gmra.mxu0 %v5461
      %v5597 = vpop.f32.mrf.mxu0
      %v5598 = vadd.f32 0.0, %v5597
      %5599 = vmatmul.f32.gmra.mxu0 %v5464
      %v5600 = vpop.f32.mrf.mxu0
      %v5601 = vadd.f32 0.0, %v5600
      %5602 = vmatmul.f32.gmra.mxu0 %v5467
      %v5603 = vpop.f32.mrf.mxu0
      %v5604 = vadd.f32 0.0, %v5603
      %5605 = vmatmul.f32.gmra.mxu0 %v5470
      %v5606 = vpop.f32.mrf.mxu0
      %v5607 = vadd.f32 0.0, %v5606
      %5608 = vmatmul.f32.gmra.mxu0 %v5473
      %v5609 = vpop.f32.mrf.mxu0
      %v5610 = vadd.f32 0.0, %v5609
      %5611 = vmatmul.f32.gmra.mxu0 %v5476
      %v5612 = vpop.f32.mrf.mxu0
      %v5613 = vadd.f32 0.0, %v5612
      %5614 = vmatmul.f32.gmra.mxu0 %v5479
      %v5615 = vpop.f32.mrf.mxu0
      %v5616 = vadd.f32 0.0, %v5615
      %5617 = vmatmul.f32.gmra.mxu0 %v5482
      %v5618 = vpop.f32.mrf.mxu0
      %v5619 = vadd.f32 0.0, %v5618
      %5620 = vdwg.mxu0
      %v5621 = vadd.f32 %v5279, %v5502
      %v5622 = vadd.f32 %v5280, %v5505
      %v5623 = vadd.f32 %v5281, %v5508
      %v5624 = vadd.f32 %v5282, %v5511
      %v5625 = vadd.f32 %v5283, %v5514
      %v5626 = vadd.f32 %v5284, %v5517
      %v5627 = vadd.f32 %v5285, %v5520
      %v5628 = vadd.f32 %v5286, %v5523
      %v5629 = vadd.f32 %v5287, %v5526
      %v5630 = vadd.f32 %v5288, %v5529
      %v5631 = vadd.f32 %v5289, %v5532
      %v5632 = vadd.f32 %v5290, %v5535
      %v5633 = vadd.f32 %v5291, %v5538
      %v5634 = vadd.f32 %v5292, %v5541
      %v5635 = vadd.f32 %v5293, %v5544
      %v5636 = vadd.f32 %v5294, %v5547
      %v5637 = vadd.f32 %v5295, %v5550
      %v5638 = vadd.f32 %v5296, %v5553
      %v5639 = vadd.f32 %v5297, %v5556
      %v5640 = vadd.f32 %v5298, %v5559
      %v5641 = vadd.f32 %v5299, %v5562
      %v5642 = vadd.f32 %v5300, %v5565
      %v5643 = vadd.f32 %v5301, %v5568
      %v5644 = vadd.f32 %v5302, %v5571
      %v5645 = vadd.f32 %v5303, %v5574
      %v5646 = vadd.f32 %v5304, %v5577
      %v5647 = vadd.f32 %v5305, %v5580
      %v5648 = vadd.f32 %v5306, %v5583
      %v5649 = vadd.f32 %v5307, %v5586
      %v5650 = vadd.f32 %v5308, %v5589
      %v5651 = vadd.f32 %v5309, %v5592
      %v5652 = vadd.f32 %v5310, %v5595
      %v5653 = vadd.f32 %v5311, %v5598
      %v5654 = vadd.f32 %v5312, %v5601
      %v5655 = vadd.f32 %v5313, %v5604
      %v5656 = vadd.f32 %v5314, %v5607
      %v5657 = vadd.f32 %v5315, %v5610
      %v5658 = vadd.f32 %v5316, %v5613
      %v5659 = vadd.f32 %v5317, %v5616
      %v5660 = vadd.f32 %v5318, %v5619
      %v5661 = vld [vmem:[#allocation2 + $0x27] sm:$0xff]
      %v5662 = vld [vmem:[#allocation2 + $0x2f] sm:$0xff]
      %v5663 = vld [vmem:[#allocation2 + $0x37] sm:$0xff]
      %v5664 = vld [vmem:[#allocation2 + $0x3f] sm:$0xff]
      %v5665 = vld [vmem:[#allocation2 + $0x47] sm:$0xff]
      %v5666 = vld [vmem:[#allocation2 + $0x4f] sm:$0xff]
      %v5667 = vld [vmem:[#allocation2 + $0x57] sm:$0xff]
      %v5668 = vld [vmem:[#allocation2 + $0x5f] sm:$0xff]
      %v5669 = vld [vmem:[#allocation2 + $0x67] sm:$0xff]
      %v5670 = vld [vmem:[#allocation2 + $0x6f] sm:$0xff]
      %v5671 = vld [vmem:[#allocation2 + $0x77] sm:$0xff]
      %v5672 = vld [vmem:[#allocation2 + $0x7f] sm:$0xff]
      %v5673 = vld [vmem:[#allocation2 + $0x87] sm:$0xff]
      %v5674 = vld [vmem:[#allocation2 + $0x8f] sm:$0xff]
      %v5675 = vld [vmem:[#allocation2 + $0x97] sm:$0xff]
      %v5676 = vld [vmem:[#allocation2 + $0x9f] sm:$0xff]
      %v5677 = vld [vmem:[#allocation2 + $0xa7] sm:$0xff]
      %v5678 = vld [vmem:[#allocation2 + $0xaf] sm:$0xff]
      %v5679 = vld [vmem:[#allocation2 + $0xb7] sm:$0xff]
      %v5680 = vld [vmem:[#allocation2 + $0xbf] sm:$0xff]
      %v5681 = vld [vmem:[#allocation2 + $0xc7] sm:$0xff]
      %v5682 = vld [vmem:[#allocation2 + $0xcf] sm:$0xff]
      %v5683 = vld [vmem:[#allocation2 + $0xd7] sm:$0xff]
      %v5684 = vld [vmem:[#allocation2 + $0xdf] sm:$0xff]
      %v5685 = vld [vmem:[#allocation2 + $0xe7] sm:$0xff]
      %v5686 = vld [vmem:[#allocation2 + $0xef] sm:$0xff]
      %v5687 = vld [vmem:[#allocation2 + $0xf7] sm:$0xff]
      %v5688 = vld [vmem:[#allocation2 + $0xff] sm:$0xff]
      %v5689 = vld [vmem:[#allocation2 + $0x107] sm:$0xff]
      %v5690 = vld [vmem:[#allocation2 + $0x10f] sm:$0xff]
      %v5691 = vld [vmem:[#allocation2 + $0x117] sm:$0xff]
      %v5692 = vld [vmem:[#allocation2 + $0x11f] sm:$0xff]
      %v5693 = vld [vmem:[#allocation2 + $0x127] sm:$0xff]
      %v5694 = vld [vmem:[#allocation2 + $0x12f] sm:$0xff]
      %v5695 = vld [vmem:[#allocation2 + $0x137] sm:$0xff]
      %v5696 = vld [vmem:[#allocation2 + $0x13f] sm:$0xff]
      %v5697 = vld [vmem:[#allocation2 + $0x147] sm:$0xff]
      %v5698 = vld [vmem:[#allocation2 + $0x14f] sm:$0xff]
      %v5699 = vld [vmem:[#allocation2 + $0x157] sm:$0xff]
      %v5700 = vld [vmem:[#allocation2 + $0x15f] sm:$0xff]
      %s5701 = scalar_lea.vmem %s7, 96
      %v5702 = vld [vmem:[%s5701] sm:$0xff]
      %v5703 = vld [vmem:[%s5701 + $0x8] sm:$0xff]
      %v5704 = vld [vmem:[%s5701 + $0x10] sm:$0xff]
      %v5705 = vld [vmem:[%s5701 + $0x18] sm:$0xff]
      %v5707 = vsel %vm4580, %v5661, 0
      %v5710 = vsel %vm4580, %v5662, 0
      %v5713 = vsel %vm4580, %v5663, 0
      %v5716 = vsel %vm4580, %v5664, 0
      %v5719 = vsel %vm4580, %v5665, 0
      %v5722 = vsel %vm4580, %v5666, 0
      %v5725 = vsel %vm4580, %v5667, 0
      %v5728 = vsel %vm4580, %v5668, 0
      %v5731 = vsel %vm4580, %v5669, 0
      %v5734 = vsel %vm4580, %v5670, 0
      %v5737 = vsel %vm4580, %v5671, 0
      %v5740 = vsel %vm4580, %v5672, 0
      %v5743 = vsel %vm4580, %v5673, 0
      %v5746 = vsel %vm4580, %v5674, 0
      %v5749 = vsel %vm4580, %v5675, 0
      %v5752 = vsel %vm4580, %v5676, 0
      %v5755 = vsel %vm4580, %v5677, 0
      %v5758 = vsel %vm4580, %v5678, 0
      %v5761 = vsel %vm4580, %v5679, 0
      %v5764 = vsel %vm4580, %v5680, 0
      %v5767 = vsel %vm4580, %v5681, 0
      %v5770 = vsel %vm4580, %v5682, 0
      %v5773 = vsel %vm4580, %v5683, 0
      %v5776 = vsel %vm4580, %v5684, 0
      %v5779 = vsel %vm4580, %v5685, 0
      %v5782 = vsel %vm4580, %v5686, 0
      %v5785 = vsel %vm4580, %v5687, 0
      %v5788 = vsel %vm4580, %v5688, 0
      %v5791 = vsel %vm4580, %v5689, 0
      %v5794 = vsel %vm4580, %v5690, 0
      %v5797 = vsel %vm4580, %v5691, 0
      %v5800 = vsel %vm4580, %v5692, 0
      %v5803 = vsel %vm4580, %v5693, 0
      %v5806 = vsel %vm4580, %v5694, 0
      %v5809 = vsel %vm4580, %v5695, 0
      %v5812 = vsel %vm4580, %v5696, 0
      %v5815 = vsel %vm4580, %v5697, 0
      %v5818 = vsel %vm4580, %v5698, 0
      %v5821 = vsel %vm4580, %v5699, 0
      %v5824 = vsel %vm4580, %v5700, 0
      %5826 = vmatpush.msra.mxu0 0.0
      %5827 = vmatpush.msra.mxu0 0.0
      %5828 = vmatpush.msra.mxu0 0.0
      %5829 = vmatpush.msra.mxu0 0.0
      %5830 = vmatpush.msra.mxu0 0.0
      %5831 = vmatpush.msra.mxu0 0.0
      %5832 = vmatpush.msra.mxu0 0.0
      %5833 = vmatpush.msra.mxu0 0.0
      %5834 = vmatpush.msra.mxu0 0.0
      %5835 = vmatpush.msra.mxu0 0.0
      %5836 = vmatpush.msra.mxu0 0.0
      %5837 = vmatpush.msra.mxu0 0.0
      %5838 = vmatpush.msra.mxu0 %v5705
      %5839 = vmatpush.msra.mxu0 %v5704
      %5840 = vmatpush.msra.mxu0 %v5703
      %5841 = vmatpush.msra.mxu0 %v5702
      %5842 = vmatmul.f32.gmra.mxu0 %v5707
      %v5843 = vpop.f32.mrf.mxu0
      %v5844 = vadd.f32 0.0, %v5843
      %5845 = vmatmul.f32.gmra.mxu0 %v5710
      %v5846 = vpop.f32.mrf.mxu0
      %v5847 = vadd.f32 0.0, %v5846
      %5848 = vmatmul.f32.gmra.mxu0 %v5713
      %v5849 = vpop.f32.mrf.mxu0
      %v5850 = vadd.f32 0.0, %v5849
      %5851 = vmatmul.f32.gmra.mxu0 %v5716
      %v5852 = vpop.f32.mrf.mxu0
      %v5853 = vadd.f32 0.0, %v5852
      %5854 = vmatmul.f32.gmra.mxu0 %v5719
      %v5855 = vpop.f32.mrf.mxu0
      %v5856 = vadd.f32 0.0, %v5855
      %5857 = vmatmul.f32.gmra.mxu0 %v5722
      %v5858 = vpop.f32.mrf.mxu0
      %v5859 = vadd.f32 0.0, %v5858
      %5860 = vmatmul.f32.gmra.mxu0 %v5725
      %v5861 = vpop.f32.mrf.mxu0
      %v5862 = vadd.f32 0.0, %v5861
      %5863 = vmatmul.f32.gmra.mxu0 %v5728
      %v5864 = vpop.f32.mrf.mxu0
      %v5865 = vadd.f32 0.0, %v5864
      %5866 = vmatmul.f32.gmra.mxu0 %v5731
      %v5867 = vpop.f32.mrf.mxu0
      %v5868 = vadd.f32 0.0, %v5867
      %5869 = vmatmul.f32.gmra.mxu0 %v5734
      %v5870 = vpop.f32.mrf.mxu0
      %v5871 = vadd.f32 0.0, %v5870
      %5872 = vmatmul.f32.gmra.mxu0 %v5737
      %v5873 = vpop.f32.mrf.mxu0
      %v5874 = vadd.f32 0.0, %v5873
      %5875 = vmatmul.f32.gmra.mxu0 %v5740
      %v5876 = vpop.f32.mrf.mxu0
      %v5877 = vadd.f32 0.0, %v5876
      %5878 = vmatmul.f32.gmra.mxu0 %v5743
      %v5879 = vpop.f32.mrf.mxu0
      %v5880 = vadd.f32 0.0, %v5879
      %5881 = vmatmul.f32.gmra.mxu0 %v5746
      %v5882 = vpop.f32.mrf.mxu0
      %v5883 = vadd.f32 0.0, %v5882
      %5884 = vmatmul.f32.gmra.mxu0 %v5749
      %v5885 = vpop.f32.mrf.mxu0
      %v5886 = vadd.f32 0.0, %v5885
      %5887 = vmatmul.f32.gmra.mxu0 %v5752
      %v5888 = vpop.f32.mrf.mxu0
      %v5889 = vadd.f32 0.0, %v5888
      %5890 = vmatmul.f32.gmra.mxu0 %v5755
      %v5891 = vpop.f32.mrf.mxu0
      %v5892 = vadd.f32 0.0, %v5891
      %5893 = vmatmul.f32.gmra.mxu0 %v5758
      %v5894 = vpop.f32.mrf.mxu0
      %v5895 = vadd.f32 0.0, %v5894
      %5896 = vmatmul.f32.gmra.mxu0 %v5761
      %v5897 = vpop.f32.mrf.mxu0
      %v5898 = vadd.f32 0.0, %v5897
      %5899 = vmatmul.f32.gmra.mxu0 %v5764
      %v5900 = vpop.f32.mrf.mxu0
      %v5901 = vadd.f32 0.0, %v5900
      %5902 = vmatmul.f32.gmra.mxu0 %v5767
      %v5903 = vpop.f32.mrf.mxu0
      %v5904 = vadd.f32 0.0, %v5903
      %5905 = vmatmul.f32.gmra.mxu0 %v5770
      %v5906 = vpop.f32.mrf.mxu0
      %v5907 = vadd.f32 0.0, %v5906
      %5908 = vmatmul.f32.gmra.mxu0 %v5773
      %v5909 = vpop.f32.mrf.mxu0
      %v5910 = vadd.f32 0.0, %v5909
      %5911 = vmatmul.f32.gmra.mxu0 %v5776
      %v5912 = vpop.f32.mrf.mxu0
      %v5913 = vadd.f32 0.0, %v5912
      %5914 = vmatmul.f32.gmra.mxu0 %v5779
      %v5915 = vpop.f32.mrf.mxu0
      %v5916 = vadd.f32 0.0, %v5915
      %5917 = vmatmul.f32.gmra.mxu0 %v5782
      %v5918 = vpop.f32.mrf.mxu0
      %v5919 = vadd.f32 0.0, %v5918
      %5920 = vmatmul.f32.gmra.mxu0 %v5785
      %v5921 = vpop.f32.mrf.mxu0
      %v5922 = vadd.f32 0.0, %v5921
      %5923 = vmatmul.f32.gmra.mxu0 %v5788
      %v5924 = vpop.f32.mrf.mxu0
      %v5925 = vadd.f32 0.0, %v5924
      %5926 = vmatmul.f32.gmra.mxu0 %v5791
      %v5927 = vpop.f32.mrf.mxu0
      %v5928 = vadd.f32 0.0, %v5927
      %5929 = vmatmul.f32.gmra.mxu0 %v5794
      %v5930 = vpop.f32.mrf.mxu0
      %v5931 = vadd.f32 0.0, %v5930
      %5932 = vmatmul.f32.gmra.mxu0 %v5797
      %v5933 = vpop.f32.mrf.mxu0
      %v5934 = vadd.f32 0.0, %v5933
      %5935 = vmatmul.f32.gmra.mxu0 %v5800
      %v5936 = vpop.f32.mrf.mxu0
      %v5937 = vadd.f32 0.0, %v5936
      %5938 = vmatmul.f32.gmra.mxu0 %v5803
      %v5939 = vpop.f32.mrf.mxu0
      %v5940 = vadd.f32 0.0, %v5939
      %5941 = vmatmul.f32.gmra.mxu0 %v5806
      %v5942 = vpop.f32.mrf.mxu0
      %v5943 = vadd.f32 0.0, %v5942
      %5944 = vmatmul.f32.gmra.mxu0 %v5809
      %v5945 = vpop.f32.mrf.mxu0
      %v5946 = vadd.f32 0.0, %v5945
      %5947 = vmatmul.f32.gmra.mxu0 %v5812
      %v5948 = vpop.f32.mrf.mxu0
      %v5949 = vadd.f32 0.0, %v5948
      %5950 = vmatmul.f32.gmra.mxu0 %v5815
      %v5951 = vpop.f32.mrf.mxu0
      %v5952 = vadd.f32 0.0, %v5951
      %5953 = vmatmul.f32.gmra.mxu0 %v5818
      %v5954 = vpop.f32.mrf.mxu0
      %v5955 = vadd.f32 0.0, %v5954
      %5956 = vmatmul.f32.gmra.mxu0 %v5821
      %v5957 = vpop.f32.mrf.mxu0
      %v5958 = vadd.f32 0.0, %v5957
      %5959 = vmatmul.f32.gmra.mxu0 %v5824
      %v5960 = vpop.f32.mrf.mxu0
      %v5961 = vadd.f32 0.0, %v5960
      %5962 = vdwg.mxu0
      %v5963 = vadd.f32 %v5621, %v5844
      %v5964 = vadd.f32 %v5622, %v5847
      %v5965 = vadd.f32 %v5623, %v5850
      %v5966 = vadd.f32 %v5624, %v5853
      %v5967 = vadd.f32 %v5625, %v5856
      %v5968 = vadd.f32 %v5626, %v5859
      %v5969 = vadd.f32 %v5627, %v5862
      %v5970 = vadd.f32 %v5628, %v5865
      %v5971 = vadd.f32 %v5629, %v5868
      %v5972 = vadd.f32 %v5630, %v5871
      %v5973 = vadd.f32 %v5631, %v5874
      %v5974 = vadd.f32 %v5632, %v5877
      %v5975 = vadd.f32 %v5633, %v5880
      %v5976 = vadd.f32 %v5634, %v5883
      %v5977 = vadd.f32 %v5635, %v5886
      %v5978 = vadd.f32 %v5636, %v5889
      %v5979 = vadd.f32 %v5637, %v5892
      %v5980 = vadd.f32 %v5638, %v5895
      %v5981 = vadd.f32 %v5639, %v5898
      %v5982 = vadd.f32 %v5640, %v5901
      %v5983 = vadd.f32 %v5641, %v5904
      %v5984 = vadd.f32 %v5642, %v5907
      %v5985 = vadd.f32 %v5643, %v5910
      %v5986 = vadd.f32 %v5644, %v5913
      %v5987 = vadd.f32 %v5645, %v5916
      %v5988 = vadd.f32 %v5646, %v5919
      %v5989 = vadd.f32 %v5647, %v5922
      %v5990 = vadd.f32 %v5648, %v5925
      %v5991 = vadd.f32 %v5649, %v5928
      %v5992 = vadd.f32 %v5650, %v5931
      %v5993 = vadd.f32 %v5651, %v5934
      %v5994 = vadd.f32 %v5652, %v5937
      %v5995 = vadd.f32 %v5653, %v5940
      %v5996 = vadd.f32 %v5654, %v5943
      %v5997 = vadd.f32 %v5655, %v5946
      %v5998 = vadd.f32 %v5656, %v5949
      %v5999 = vadd.f32 %v5657, %v5952
      %v6000 = vadd.f32 %v5658, %v5955
      %v6001 = vadd.f32 %v5659, %v5958
      %v6002 = vadd.f32 %v5660, %v5961
      %v6003 = vld [vmem:[#allocation2 + $0x28] sm:$0xff]
      %v6004 = vld [vmem:[#allocation2 + $0x30] sm:$0xff]
      %v6005 = vld [vmem:[#allocation2 + $0x38] sm:$0xff]
      %v6006 = vld [vmem:[#allocation2 + $0x40] sm:$0xff]
      %v6007 = vld [vmem:[#allocation2 + $0x48] sm:$0xff]
      %v6008 = vld [vmem:[#allocation2 + $0x50] sm:$0xff]
      %v6009 = vld [vmem:[#allocation2 + $0x58] sm:$0xff]
      %v6010 = vld [vmem:[#allocation2 + $0x60] sm:$0xff]
      %v6011 = vld [vmem:[#allocation2 + $0x68] sm:$0xff]
      %v6012 = vld [vmem:[#allocation2 + $0x70] sm:$0xff]
      %v6013 = vld [vmem:[#allocation2 + $0x78] sm:$0xff]
      %v6014 = vld [vmem:[#allocation2 + $0x80] sm:$0xff]
      %v6015 = vld [vmem:[#allocation2 + $0x88] sm:$0xff]
      %v6016 = vld [vmem:[#allocation2 + $0x90] sm:$0xff]
      %v6017 = vld [vmem:[#allocation2 + $0x98] sm:$0xff]
      %v6018 = vld [vmem:[#allocation2 + $0xa0] sm:$0xff]
      %v6019 = vld [vmem:[#allocation2 + $0xa8] sm:$0xff]
      %v6020 = vld [vmem:[#allocation2 + $0xb0] sm:$0xff]
      %v6021 = vld [vmem:[#allocation2 + $0xb8] sm:$0xff]
      %v6022 = vld [vmem:[#allocation2 + $0xc0] sm:$0xff]
      %v6023 = vld [vmem:[#allocation2 + $0xc8] sm:$0xff]
      %v6024 = vld [vmem:[#allocation2 + $0xd0] sm:$0xff]
      %v6025 = vld [vmem:[#allocation2 + $0xd8] sm:$0xff]
      %v6026 = vld [vmem:[#allocation2 + $0xe0] sm:$0xff]
      %v6027 = vld [vmem:[#allocation2 + $0xe8] sm:$0xff]
      %v6028 = vld [vmem:[#allocation2 + $0xf0] sm:$0xff]
      %v6029 = vld [vmem:[#allocation2 + $0xf8] sm:$0xff]
      %v6030 = vld [vmem:[#allocation2 + $0x100] sm:$0xff]
      %v6031 = vld [vmem:[#allocation2 + $0x108] sm:$0xff]
      %v6032 = vld [vmem:[#allocation2 + $0x110] sm:$0xff]
      %v6033 = vld [vmem:[#allocation2 + $0x118] sm:$0xff]
      %v6034 = vld [vmem:[#allocation2 + $0x120] sm:$0xff]
      %v6035 = vld [vmem:[#allocation2 + $0x128] sm:$0xff]
      %v6036 = vld [vmem:[#allocation2 + $0x130] sm:$0xff]
      %v6037 = vld [vmem:[#allocation2 + $0x138] sm:$0xff]
      %v6038 = vld [vmem:[#allocation2 + $0x140] sm:$0xff]
      %v6039 = vld [vmem:[#allocation2 + $0x148] sm:$0xff]
      %v6040 = vld [vmem:[#allocation2 + $0x150] sm:$0xff]
      %v6041 = vld [vmem:[#allocation2 + $0x158] sm:$0xff]
      %v6042 = vld [vmem:[#allocation2 + $0x160] sm:$0xff]
      %s6043 = scalar_lea.vmem %s7, 128
      %v6044 = vld [vmem:[%s6043] sm:$0xff]
      %v6045 = vld [vmem:[%s6043 + $0x8] sm:$0xff]
      %v6046 = vld [vmem:[%s6043 + $0x10] sm:$0xff]
      %v6047 = vld [vmem:[%s6043 + $0x18] sm:$0xff]
      %v6049 = vsel %vm4580, %v6003, 0
      %v6052 = vsel %vm4580, %v6004, 0
      %v6055 = vsel %vm4580, %v6005, 0
      %v6058 = vsel %vm4580, %v6006, 0
      %v6061 = vsel %vm4580, %v6007, 0
      %v6064 = vsel %vm4580, %v6008, 0
      %v6067 = vsel %vm4580, %v6009, 0
      %v6070 = vsel %vm4580, %v6010, 0
      %v6073 = vsel %vm4580, %v6011, 0
      %v6076 = vsel %vm4580, %v6012, 0
      %v6079 = vsel %vm4580, %v6013, 0
      %v6082 = vsel %vm4580, %v6014, 0
      %v6085 = vsel %vm4580, %v6015, 0
      %v6088 = vsel %vm4580, %v6016, 0
      %v6091 = vsel %vm4580, %v6017, 0
      %v6094 = vsel %vm4580, %v6018, 0
      %v6097 = vsel %vm4580, %v6019, 0
      %v6100 = vsel %vm4580, %v6020, 0
      %v6103 = vsel %vm4580, %v6021, 0
      %v6106 = vsel %vm4580, %v6022, 0
      %v6109 = vsel %vm4580, %v6023, 0
      %v6112 = vsel %vm4580, %v6024, 0
      %v6115 = vsel %vm4580, %v6025, 0
      %v6118 = vsel %vm4580, %v6026, 0
      %v6121 = vsel %vm4580, %v6027, 0
      %v6124 = vsel %vm4580, %v6028, 0
      %v6127 = vsel %vm4580, %v6029, 0
      %v6130 = vsel %vm4580, %v6030, 0
      %v6133 = vsel %vm4580, %v6031, 0
      %v6136 = vsel %vm4580, %v6032, 0
      %v6139 = vsel %vm4580, %v6033, 0
      %v6142 = vsel %vm4580, %v6034, 0
      %v6145 = vsel %vm4580, %v6035, 0
      %v6148 = vsel %vm4580, %v6036, 0
      %v6151 = vsel %vm4580, %v6037, 0
      %v6154 = vsel %vm4580, %v6038, 0
      %v6157 = vsel %vm4580, %v6039, 0
      %v6160 = vsel %vm4580, %v6040, 0
      %v6163 = vsel %vm4580, %v6041, 0
      %v6166 = vsel %vm4580, %v6042, 0
      %6168 = vmatpush.msra.mxu0 0.0
      %6169 = vmatpush.msra.mxu0 0.0
      %6170 = vmatpush.msra.mxu0 0.0
      %6171 = vmatpush.msra.mxu0 0.0
      %6172 = vmatpush.msra.mxu0 0.0
      %6173 = vmatpush.msra.mxu0 0.0
      %6174 = vmatpush.msra.mxu0 0.0
      %6175 = vmatpush.msra.mxu0 0.0
      %6176 = vmatpush.msra.mxu0 0.0
      %6177 = vmatpush.msra.mxu0 0.0
      %6178 = vmatpush.msra.mxu0 0.0
      %6179 = vmatpush.msra.mxu0 0.0
      %6180 = vmatpush.msra.mxu0 %v6047
      %6181 = vmatpush.msra.mxu0 %v6046
      %6182 = vmatpush.msra.mxu0 %v6045
      %6183 = vmatpush.msra.mxu0 %v6044
      %6184 = vmatmul.f32.gmra.mxu0 %v6049
      %v6185 = vpop.f32.mrf.mxu0
      %v6186 = vadd.f32 0.0, %v6185
      %6187 = vmatmul.f32.gmra.mxu0 %v6052
      %v6188 = vpop.f32.mrf.mxu0
      %v6189 = vadd.f32 0.0, %v6188
      %6190 = vmatmul.f32.gmra.mxu0 %v6055
      %v6191 = vpop.f32.mrf.mxu0
      %v6192 = vadd.f32 0.0, %v6191
      %6193 = vmatmul.f32.gmra.mxu0 %v6058
      %v6194 = vpop.f32.mrf.mxu0
      %v6195 = vadd.f32 0.0, %v6194
      %6196 = vmatmul.f32.gmra.mxu0 %v6061
      %v6197 = vpop.f32.mrf.mxu0
      %v6198 = vadd.f32 0.0, %v6197
      %6199 = vmatmul.f32.gmra.mxu0 %v6064
      %v6200 = vpop.f32.mrf.mxu0
      %v6201 = vadd.f32 0.0, %v6200
      %6202 = vmatmul.f32.gmra.mxu0 %v6067
      %v6203 = vpop.f32.mrf.mxu0
      %v6204 = vadd.f32 0.0, %v6203
      %6205 = vmatmul.f32.gmra.mxu0 %v6070
      %v6206 = vpop.f32.mrf.mxu0
      %v6207 = vadd.f32 0.0, %v6206
      %6208 = vmatmul.f32.gmra.mxu0 %v6073
      %v6209 = vpop.f32.mrf.mxu0
      %v6210 = vadd.f32 0.0, %v6209
      %6211 = vmatmul.f32.gmra.mxu0 %v6076
      %v6212 = vpop.f32.mrf.mxu0
      %v6213 = vadd.f32 0.0, %v6212
      %6214 = vmatmul.f32.gmra.mxu0 %v6079
      %v6215 = vpop.f32.mrf.mxu0
      %v6216 = vadd.f32 0.0, %v6215
      %6217 = vmatmul.f32.gmra.mxu0 %v6082
      %v6218 = vpop.f32.mrf.mxu0
      %v6219 = vadd.f32 0.0, %v6218
      %6220 = vmatmul.f32.gmra.mxu0 %v6085
      %v6221 = vpop.f32.mrf.mxu0
      %v6222 = vadd.f32 0.0, %v6221
      %6223 = vmatmul.f32.gmra.mxu0 %v6088
      %v6224 = vpop.f32.mrf.mxu0
      %v6225 = vadd.f32 0.0, %v6224
      %6226 = vmatmul.f32.gmra.mxu0 %v6091
      %v6227 = vpop.f32.mrf.mxu0
      %v6228 = vadd.f32 0.0, %v6227
      %6229 = vmatmul.f32.gmra.mxu0 %v6094
      %v6230 = vpop.f32.mrf.mxu0
      %v6231 = vadd.f32 0.0, %v6230
      %6232 = vmatmul.f32.gmra.mxu0 %v6097
      %v6233 = vpop.f32.mrf.mxu0
      %v6234 = vadd.f32 0.0, %v6233
      %6235 = vmatmul.f32.gmra.mxu0 %v6100
      %v6236 = vpop.f32.mrf.mxu0
      %v6237 = vadd.f32 0.0, %v6236
      %6238 = vmatmul.f32.gmra.mxu0 %v6103
      %v6239 = vpop.f32.mrf.mxu0
      %v6240 = vadd.f32 0.0, %v6239
      %6241 = vmatmul.f32.gmra.mxu0 %v6106
      %v6242 = vpop.f32.mrf.mxu0
      %v6243 = vadd.f32 0.0, %v6242
      %6244 = vmatmul.f32.gmra.mxu0 %v6109
      %v6245 = vpop.f32.mrf.mxu0
      %v6246 = vadd.f32 0.0, %v6245
      %6247 = vmatmul.f32.gmra.mxu0 %v6112
      %v6248 = vpop.f32.mrf.mxu0
      %v6249 = vadd.f32 0.0, %v6248
      %6250 = vmatmul.f32.gmra.mxu0 %v6115
      %v6251 = vpop.f32.mrf.mxu0
      %v6252 = vadd.f32 0.0, %v6251
      %6253 = vmatmul.f32.gmra.mxu0 %v6118
      %v6254 = vpop.f32.mrf.mxu0
      %v6255 = vadd.f32 0.0, %v6254
      %6256 = vmatmul.f32.gmra.mxu0 %v6121
      %v6257 = vpop.f32.mrf.mxu0
      %v6258 = vadd.f32 0.0, %v6257
      %6259 = vmatmul.f32.gmra.mxu0 %v6124
      %v6260 = vpop.f32.mrf.mxu0
      %v6261 = vadd.f32 0.0, %v6260
      %6262 = vmatmul.f32.gmra.mxu0 %v6127
      %v6263 = vpop.f32.mrf.mxu0
      %v6264 = vadd.f32 0.0, %v6263
      %6265 = vmatmul.f32.gmra.mxu0 %v6130
      %v6266 = vpop.f32.mrf.mxu0
      %v6267 = vadd.f32 0.0, %v6266
      %6268 = vmatmul.f32.gmra.mxu0 %v6133
      %v6269 = vpop.f32.mrf.mxu0
      %v6270 = vadd.f32 0.0, %v6269
      %6271 = vmatmul.f32.gmra.mxu0 %v6136
      %v6272 = vpop.f32.mrf.mxu0
      %v6273 = vadd.f32 0.0, %v6272
      %6274 = vmatmul.f32.gmra.mxu0 %v6139
      %v6275 = vpop.f32.mrf.mxu0
      %v6276 = vadd.f32 0.0, %v6275
      %6277 = vmatmul.f32.gmra.mxu0 %v6142
      %v6278 = vpop.f32.mrf.mxu0
      %v6279 = vadd.f32 0.0, %v6278
      %6280 = vmatmul.f32.gmra.mxu0 %v6145
      %v6281 = vpop.f32.mrf.mxu0
      %v6282 = vadd.f32 0.0, %v6281
      %6283 = vmatmul.f32.gmra.mxu0 %v6148
      %v6284 = vpop.f32.mrf.mxu0
      %v6285 = vadd.f32 0.0, %v6284
      %6286 = vmatmul.f32.gmra.mxu0 %v6151
      %v6287 = vpop.f32.mrf.mxu0
      %v6288 = vadd.f32 0.0, %v6287
      %6289 = vmatmul.f32.gmra.mxu0 %v6154
      %v6290 = vpop.f32.mrf.mxu0
      %v6291 = vadd.f32 0.0, %v6290
      %6292 = vmatmul.f32.gmra.mxu0 %v6157
      %v6293 = vpop.f32.mrf.mxu0
      %v6294 = vadd.f32 0.0, %v6293
      %6295 = vmatmul.f32.gmra.mxu0 %v6160
      %v6296 = vpop.f32.mrf.mxu0
      %v6297 = vadd.f32 0.0, %v6296
      %6298 = vmatmul.f32.gmra.mxu0 %v6163
      %v6299 = vpop.f32.mrf.mxu0
      %v6300 = vadd.f32 0.0, %v6299
      %6301 = vmatmul.f32.gmra.mxu0 %v6166
      %v6302 = vpop.f32.mrf.mxu0
      %v6303 = vadd.f32 0.0, %v6302
      %6304 = vdwg.mxu0
      %v6305 = vadd.f32 %v5963, %v6186
      %v6306 = vadd.f32 %v5964, %v6189
      %v6307 = vadd.f32 %v5965, %v6192
      %v6308 = vadd.f32 %v5966, %v6195
      %v6309 = vadd.f32 %v5967, %v6198
      %v6310 = vadd.f32 %v5968, %v6201
      %v6311 = vadd.f32 %v5969, %v6204
      %v6312 = vadd.f32 %v5970, %v6207
      %v6313 = vadd.f32 %v5971, %v6210
      %v6314 = vadd.f32 %v5972, %v6213
      %v6315 = vadd.f32 %v5973, %v6216
      %v6316 = vadd.f32 %v5974, %v6219
      %v6317 = vadd.f32 %v5975, %v6222
      %v6318 = vadd.f32 %v5976, %v6225
      %v6319 = vadd.f32 %v5977, %v6228
      %v6320 = vadd.f32 %v5978, %v6231
      %v6321 = vadd.f32 %v5979, %v6234
      %v6322 = vadd.f32 %v5980, %v6237
      %v6323 = vadd.f32 %v5981, %v6240
      %v6324 = vadd.f32 %v5982, %v6243
      %v6325 = vadd.f32 %v5983, %v6246
      %v6326 = vadd.f32 %v5984, %v6249
      %v6327 = vadd.f32 %v5985, %v6252
      %v6328 = vadd.f32 %v5986, %v6255
      %v6329 = vadd.f32 %v5987, %v6258
      %v6330 = vadd.f32 %v5988, %v6261
      %v6331 = vadd.f32 %v5989, %v6264
      %v6332 = vadd.f32 %v5990, %v6267
      %v6333 = vadd.f32 %v5991, %v6270
      %v6334 = vadd.f32 %v5992, %v6273
      %v6335 = vadd.f32 %v5993, %v6276
      %v6336 = vadd.f32 %v5994, %v6279
      %v6337 = vadd.f32 %v5995, %v6282
      %v6338 = vadd.f32 %v5996, %v6285
      %v6339 = vadd.f32 %v5997, %v6288
      %v6340 = vadd.f32 %v5998, %v6291
      %v6341 = vadd.f32 %v5999, %v6294
      %v6342 = vadd.f32 %v6000, %v6297
      %v6343 = vadd.f32 %v6001, %v6300
      %v6344 = vadd.f32 %v6002, %v6303
      %v6345 = vld [vmem:[#allocation2 + $0x29] sm:$0xff]
      %v6346 = vld [vmem:[#allocation2 + $0x31] sm:$0xff]
      %v6347 = vld [vmem:[#allocation2 + $0x39] sm:$0xff]
      %v6348 = vld [vmem:[#allocation2 + $0x41] sm:$0xff]
      %v6349 = vld [vmem:[#allocation2 + $0x49] sm:$0xff]
      %v6350 = vld [vmem:[#allocation2 + $0x51] sm:$0xff]
      %v6351 = vld [vmem:[#allocation2 + $0x59] sm:$0xff]
      %v6352 = vld [vmem:[#allocation2 + $0x61] sm:$0xff]
      %v6353 = vld [vmem:[#allocation2 + $0x69] sm:$0xff]
      %v6354 = vld [vmem:[#allocation2 + $0x71] sm:$0xff]
      %v6355 = vld [vmem:[#allocation2 + $0x79] sm:$0xff]
      %v6356 = vld [vmem:[#allocation2 + $0x81] sm:$0xff]
      %v6357 = vld [vmem:[#allocation2 + $0x89] sm:$0xff]
      %v6358 = vld [vmem:[#allocation2 + $0x91] sm:$0xff]
      %v6359 = vld [vmem:[#allocation2 + $0x99] sm:$0xff]
      %v6360 = vld [vmem:[#allocation2 + $0xa1] sm:$0xff]
      %v6361 = vld [vmem:[#allocation2 + $0xa9] sm:$0xff]
      %v6362 = vld [vmem:[#allocation2 + $0xb1] sm:$0xff]
      %v6363 = vld [vmem:[#allocation2 + $0xb9] sm:$0xff]
      %v6364 = vld [vmem:[#allocation2 + $0xc1] sm:$0xff]
      %v6365 = vld [vmem:[#allocation2 + $0xc9] sm:$0xff]
      %v6366 = vld [vmem:[#allocation2 + $0xd1] sm:$0xff]
      %v6367 = vld [vmem:[#allocation2 + $0xd9] sm:$0xff]
      %v6368 = vld [vmem:[#allocation2 + $0xe1] sm:$0xff]
      %v6369 = vld [vmem:[#allocation2 + $0xe9] sm:$0xff]
      %v6370 = vld [vmem:[#allocation2 + $0xf1] sm:$0xff]
      %v6371 = vld [vmem:[#allocation2 + $0xf9] sm:$0xff]
      %v6372 = vld [vmem:[#allocation2 + $0x101] sm:$0xff]
      %v6373 = vld [vmem:[#allocation2 + $0x109] sm:$0xff]
      %v6374 = vld [vmem:[#allocation2 + $0x111] sm:$0xff]
      %v6375 = vld [vmem:[#allocation2 + $0x119] sm:$0xff]
      %v6376 = vld [vmem:[#allocation2 + $0x121] sm:$0xff]
      %v6377 = vld [vmem:[#allocation2 + $0x129] sm:$0xff]
      %v6378 = vld [vmem:[#allocation2 + $0x131] sm:$0xff]
      %v6379 = vld [vmem:[#allocation2 + $0x139] sm:$0xff]
      %v6380 = vld [vmem:[#allocation2 + $0x141] sm:$0xff]
      %v6381 = vld [vmem:[#allocation2 + $0x149] sm:$0xff]
      %v6382 = vld [vmem:[#allocation2 + $0x151] sm:$0xff]
      %v6383 = vld [vmem:[#allocation2 + $0x159] sm:$0xff]
      %v6384 = vld [vmem:[#allocation2 + $0x161] sm:$0xff]
      %s6385 = scalar_lea.vmem %s7, 160
      %v6386 = vld [vmem:[%s6385] sm:$0xff]
      %v6387 = vld [vmem:[%s6385 + $0x8] sm:$0xff]
      %v6388 = vld [vmem:[%s6385 + $0x10] sm:$0xff]
      %v6389 = vld [vmem:[%s6385 + $0x18] sm:$0xff]
      %v6391 = vsel %vm4580, %v6345, 0
      %v6394 = vsel %vm4580, %v6346, 0
      %v6397 = vsel %vm4580, %v6347, 0
      %v6400 = vsel %vm4580, %v6348, 0
      %v6403 = vsel %vm4580, %v6349, 0
      %v6406 = vsel %vm4580, %v6350, 0
      %v6409 = vsel %vm4580, %v6351, 0
      %v6412 = vsel %vm4580, %v6352, 0
      %v6415 = vsel %vm4580, %v6353, 0
      %v6418 = vsel %vm4580, %v6354, 0
      %v6421 = vsel %vm4580, %v6355, 0
      %v6424 = vsel %vm4580, %v6356, 0
      %v6427 = vsel %vm4580, %v6357, 0
      %v6430 = vsel %vm4580, %v6358, 0
      %v6433 = vsel %vm4580, %v6359, 0
      %v6436 = vsel %vm4580, %v6360, 0
      %v6439 = vsel %vm4580, %v6361, 0
      %v6442 = vsel %vm4580, %v6362, 0
      %v6445 = vsel %vm4580, %v6363, 0
      %v6448 = vsel %vm4580, %v6364, 0
      %v6451 = vsel %vm4580, %v6365, 0
      %v6454 = vsel %vm4580, %v6366, 0
      %v6457 = vsel %vm4580, %v6367, 0
      %v6460 = vsel %vm4580, %v6368, 0
      %v6463 = vsel %vm4580, %v6369, 0
      %v6466 = vsel %vm4580, %v6370, 0
      %v6469 = vsel %vm4580, %v6371, 0
      %v6472 = vsel %vm4580, %v6372, 0
      %v6475 = vsel %vm4580, %v6373, 0
      %v6478 = vsel %vm4580, %v6374, 0
      %v6481 = vsel %vm4580, %v6375, 0
      %v6484 = vsel %vm4580, %v6376, 0
      %v6487 = vsel %vm4580, %v6377, 0
      %v6490 = vsel %vm4580, %v6378, 0
      %v6493 = vsel %vm4580, %v6379, 0
      %v6496 = vsel %vm4580, %v6380, 0
      %v6499 = vsel %vm4580, %v6381, 0
      %v6502 = vsel %vm4580, %v6382, 0
      %v6505 = vsel %vm4580, %v6383, 0
      %v6508 = vsel %vm4580, %v6384, 0
      %6510 = vmatpush.msra.mxu0 0.0
      %6511 = vmatpush.msra.mxu0 0.0
      %6512 = vmatpush.msra.mxu0 0.0
      %6513 = vmatpush.msra.mxu0 0.0
      %6514 = vmatpush.msra.mxu0 0.0
      %6515 = vmatpush.msra.mxu0 0.0
      %6516 = vmatpush.msra.mxu0 0.0
      %6517 = vmatpush.msra.mxu0 0.0
      %6518 = vmatpush.msra.mxu0 0.0
      %6519 = vmatpush.msra.mxu0 0.0
      %6520 = vmatpush.msra.mxu0 0.0
      %6521 = vmatpush.msra.mxu0 0.0
      %6522 = vmatpush.msra.mxu0 %v6389
      %6523 = vmatpush.msra.mxu0 %v6388
      %6524 = vmatpush.msra.mxu0 %v6387
      %6525 = vmatpush.msra.mxu0 %v6386
      %6526 = vmatmul.f32.gmra.mxu0 %v6391
      %v6527 = vpop.f32.mrf.mxu0
      %v6528 = vadd.f32 0.0, %v6527
      %6529 = vmatmul.f32.gmra.mxu0 %v6394
      %v6530 = vpop.f32.mrf.mxu0
      %v6531 = vadd.f32 0.0, %v6530
      %6532 = vmatmul.f32.gmra.mxu0 %v6397
      %v6533 = vpop.f32.mrf.mxu0
      %v6534 = vadd.f32 0.0, %v6533
      %6535 = vmatmul.f32.gmra.mxu0 %v6400
      %v6536 = vpop.f32.mrf.mxu0
      %v6537 = vadd.f32 0.0, %v6536
      %6538 = vmatmul.f32.gmra.mxu0 %v6403
      %v6539 = vpop.f32.mrf.mxu0
      %v6540 = vadd.f32 0.0, %v6539
      %6541 = vmatmul.f32.gmra.mxu0 %v6406
      %v6542 = vpop.f32.mrf.mxu0
      %v6543 = vadd.f32 0.0, %v6542
      %6544 = vmatmul.f32.gmra.mxu0 %v6409
      %v6545 = vpop.f32.mrf.mxu0
      %v6546 = vadd.f32 0.0, %v6545
      %6547 = vmatmul.f32.gmra.mxu0 %v6412
      %v6548 = vpop.f32.mrf.mxu0
      %v6549 = vadd.f32 0.0, %v6548
      %6550 = vmatmul.f32.gmra.mxu0 %v6415
      %v6551 = vpop.f32.mrf.mxu0
      %v6552 = vadd.f32 0.0, %v6551
      %6553 = vmatmul.f32.gmra.mxu0 %v6418
      %v6554 = vpop.f32.mrf.mxu0
      %v6555 = vadd.f32 0.0, %v6554
      %6556 = vmatmul.f32.gmra.mxu0 %v6421
      %v6557 = vpop.f32.mrf.mxu0
      %v6558 = vadd.f32 0.0, %v6557
      %6559 = vmatmul.f32.gmra.mxu0 %v6424
      %v6560 = vpop.f32.mrf.mxu0
      %v6561 = vadd.f32 0.0, %v6560
      %6562 = vmatmul.f32.gmra.mxu0 %v6427
      %v6563 = vpop.f32.mrf.mxu0
      %v6564 = vadd.f32 0.0, %v6563
      %6565 = vmatmul.f32.gmra.mxu0 %v6430
      %v6566 = vpop.f32.mrf.mxu0
      %v6567 = vadd.f32 0.0, %v6566
      %6568 = vmatmul.f32.gmra.mxu0 %v6433
      %v6569 = vpop.f32.mrf.mxu0
      %v6570 = vadd.f32 0.0, %v6569
      %6571 = vmatmul.f32.gmra.mxu0 %v6436
      %v6572 = vpop.f32.mrf.mxu0
      %v6573 = vadd.f32 0.0, %v6572
      %6574 = vmatmul.f32.gmra.mxu0 %v6439
      %v6575 = vpop.f32.mrf.mxu0
      %v6576 = vadd.f32 0.0, %v6575
      %6577 = vmatmul.f32.gmra.mxu0 %v6442
      %v6578 = vpop.f32.mrf.mxu0
      %v6579 = vadd.f32 0.0, %v6578
      %6580 = vmatmul.f32.gmra.mxu0 %v6445
      %v6581 = vpop.f32.mrf.mxu0
      %v6582 = vadd.f32 0.0, %v6581
      %6583 = vmatmul.f32.gmra.mxu0 %v6448
      %v6584 = vpop.f32.mrf.mxu0
      %v6585 = vadd.f32 0.0, %v6584
      %6586 = vmatmul.f32.gmra.mxu0 %v6451
      %v6587 = vpop.f32.mrf.mxu0
      %v6588 = vadd.f32 0.0, %v6587
      %6589 = vmatmul.f32.gmra.mxu0 %v6454
      %v6590 = vpop.f32.mrf.mxu0
      %v6591 = vadd.f32 0.0, %v6590
      %6592 = vmatmul.f32.gmra.mxu0 %v6457
      %v6593 = vpop.f32.mrf.mxu0
      %v6594 = vadd.f32 0.0, %v6593
      %6595 = vmatmul.f32.gmra.mxu0 %v6460
      %v6596 = vpop.f32.mrf.mxu0
      %v6597 = vadd.f32 0.0, %v6596
      %6598 = vmatmul.f32.gmra.mxu0 %v6463
      %v6599 = vpop.f32.mrf.mxu0
      %v6600 = vadd.f32 0.0, %v6599
      %6601 = vmatmul.f32.gmra.mxu0 %v6466
      %v6602 = vpop.f32.mrf.mxu0
      %v6603 = vadd.f32 0.0, %v6602
      %6604 = vmatmul.f32.gmra.mxu0 %v6469
      %v6605 = vpop.f32.mrf.mxu0
      %v6606 = vadd.f32 0.0, %v6605
      %6607 = vmatmul.f32.gmra.mxu0 %v6472
      %v6608 = vpop.f32.mrf.mxu0
      %v6609 = vadd.f32 0.0, %v6608
      %6610 = vmatmul.f32.gmra.mxu0 %v6475
      %v6611 = vpop.f32.mrf.mxu0
      %v6612 = vadd.f32 0.0, %v6611
      %6613 = vmatmul.f32.gmra.mxu0 %v6478
      %v6614 = vpop.f32.mrf.mxu0
      %v6615 = vadd.f32 0.0, %v6614
      %6616 = vmatmul.f32.gmra.mxu0 %v6481
      %v6617 = vpop.f32.mrf.mxu0
      %v6618 = vadd.f32 0.0, %v6617
      %6619 = vmatmul.f32.gmra.mxu0 %v6484
      %v6620 = vpop.f32.mrf.mxu0
      %v6621 = vadd.f32 0.0, %v6620
      %6622 = vmatmul.f32.gmra.mxu0 %v6487
      %v6623 = vpop.f32.mrf.mxu0
      %v6624 = vadd.f32 0.0, %v6623
      %6625 = vmatmul.f32.gmra.mxu0 %v6490
      %v6626 = vpop.f32.mrf.mxu0
      %v6627 = vadd.f32 0.0, %v6626
      %6628 = vmatmul.f32.gmra.mxu0 %v6493
      %v6629 = vpop.f32.mrf.mxu0
      %v6630 = vadd.f32 0.0, %v6629
      %6631 = vmatmul.f32.gmra.mxu0 %v6496
      %v6632 = vpop.f32.mrf.mxu0
      %v6633 = vadd.f32 0.0, %v6632
      %6634 = vmatmul.f32.gmra.mxu0 %v6499
      %v6635 = vpop.f32.mrf.mxu0
      %v6636 = vadd.f32 0.0, %v6635
      %6637 = vmatmul.f32.gmra.mxu0 %v6502
      %v6638 = vpop.f32.mrf.mxu0
      %v6639 = vadd.f32 0.0, %v6638
      %6640 = vmatmul.f32.gmra.mxu0 %v6505
      %v6641 = vpop.f32.mrf.mxu0
      %v6642 = vadd.f32 0.0, %v6641
      %6643 = vmatmul.f32.gmra.mxu0 %v6508
      %v6644 = vpop.f32.mrf.mxu0
      %v6645 = vadd.f32 0.0, %v6644
      %6646 = vdwg.mxu0
      %v6647 = vadd.f32 %v6305, %v6528
      %v6648 = vadd.f32 %v6306, %v6531
      %v6649 = vadd.f32 %v6307, %v6534
      %v6650 = vadd.f32 %v6308, %v6537
      %v6651 = vadd.f32 %v6309, %v6540
      %v6652 = vadd.f32 %v6310, %v6543
      %v6653 = vadd.f32 %v6311, %v6546
      %v6654 = vadd.f32 %v6312, %v6549
      %v6655 = vadd.f32 %v6313, %v6552
      %v6656 = vadd.f32 %v6314, %v6555
      %v6657 = vadd.f32 %v6315, %v6558
      %v6658 = vadd.f32 %v6316, %v6561
      %v6659 = vadd.f32 %v6317, %v6564
      %v6660 = vadd.f32 %v6318, %v6567
      %v6661 = vadd.f32 %v6319, %v6570
      %v6662 = vadd.f32 %v6320, %v6573
      %v6663 = vadd.f32 %v6321, %v6576
      %v6664 = vadd.f32 %v6322, %v6579
      %v6665 = vadd.f32 %v6323, %v6582
      %v6666 = vadd.f32 %v6324, %v6585
      %v6667 = vadd.f32 %v6325, %v6588
      %v6668 = vadd.f32 %v6326, %v6591
      %v6669 = vadd.f32 %v6327, %v6594
      %v6670 = vadd.f32 %v6328, %v6597
      %v6671 = vadd.f32 %v6329, %v6600
      %v6672 = vadd.f32 %v6330, %v6603
      %v6673 = vadd.f32 %v6331, %v6606
      %v6674 = vadd.f32 %v6332, %v6609
      %v6675 = vadd.f32 %v6333, %v6612
      %v6676 = vadd.f32 %v6334, %v6615
      %v6677 = vadd.f32 %v6335, %v6618
      %v6678 = vadd.f32 %v6336, %v6621
      %v6679 = vadd.f32 %v6337, %v6624
      %v6680 = vadd.f32 %v6338, %v6627
      %v6681 = vadd.f32 %v6339, %v6630
      %v6682 = vadd.f32 %v6340, %v6633
      %v6683 = vadd.f32 %v6341, %v6636
      %v6684 = vadd.f32 %v6342, %v6639
      %v6685 = vadd.f32 %v6343, %v6642
      %v6686 = vadd.f32 %v6344, %v6645
      %v6687 = vld [vmem:[#allocation2 + $0x3b] sm:$0xff]
      %v6688 = vld [vmem:[#allocation2 + $0x43] sm:$0xff]
      %v6689 = vld [vmem:[#allocation2 + $0x4b] sm:$0xff]
      %v6690 = vld [vmem:[#allocation2 + $0x53] sm:$0xff]
      %v6691 = vld [vmem:[#allocation2 + $0x5b] sm:$0xff]
      %v6692 = vld [vmem:[#allocation2 + $0x63] sm:$0xff]
      %v6693 = vld [vmem:[#allocation2 + $0x6b] sm:$0xff]
      %v6694 = vld [vmem:[#allocation2 + $0x73] sm:$0xff]
      %v6695 = vld [vmem:[#allocation2 + $0x7b] sm:$0xff]
      %v6696 = vld [vmem:[#allocation2 + $0x83] sm:$0xff]
      %v6697 = vld [vmem:[#allocation2 + $0x8b] sm:$0xff]
      %v6698 = vld [vmem:[#allocation2 + $0x93] sm:$0xff]
      %v6699 = vld [vmem:[#allocation2 + $0x9b] sm:$0xff]
      %v6700 = vld [vmem:[#allocation2 + $0xa3] sm:$0xff]
      %v6701 = vld [vmem:[#allocation2 + $0xab] sm:$0xff]
      %v6702 = vld [vmem:[#allocation2 + $0xb3] sm:$0xff]
      %v6703 = vld [vmem:[#allocation2 + $0xbb] sm:$0xff]
      %v6704 = vld [vmem:[#allocation2 + $0xc3] sm:$0xff]
      %v6705 = vld [vmem:[#allocation2 + $0xcb] sm:$0xff]
      %v6706 = vld [vmem:[#allocation2 + $0xd3] sm:$0xff]
      %v6707 = vld [vmem:[#allocation2 + $0xdb] sm:$0xff]
      %v6708 = vld [vmem:[#allocation2 + $0xe3] sm:$0xff]
      %v6709 = vld [vmem:[#allocation2 + $0xeb] sm:$0xff]
      %v6710 = vld [vmem:[#allocation2 + $0xf3] sm:$0xff]
      %v6711 = vld [vmem:[#allocation2 + $0xfb] sm:$0xff]
      %v6712 = vld [vmem:[#allocation2 + $0x103] sm:$0xff]
      %v6713 = vld [vmem:[#allocation2 + $0x10b] sm:$0xff]
      %v6714 = vld [vmem:[#allocation2 + $0x113] sm:$0xff]
      %v6715 = vld [vmem:[#allocation2 + $0x11b] sm:$0xff]
      %v6716 = vld [vmem:[#allocation2 + $0x123] sm:$0xff]
      %v6717 = vld [vmem:[#allocation2 + $0x12b] sm:$0xff]
      %v6718 = vld [vmem:[#allocation2 + $0x133] sm:$0xff]
      %v6719 = vld [vmem:[#allocation2 + $0x13b] sm:$0xff]
      %v6720 = vld [vmem:[#allocation2 + $0x143] sm:$0xff]
      %v6721 = vld [vmem:[#allocation2 + $0x14b] sm:$0xff]
      %v6722 = vld [vmem:[#allocation2 + $0x153] sm:$0xff]
      %v6723 = vld [vmem:[#allocation2 + $0x15b] sm:$0xff]
      %v6724 = vld [vmem:[#allocation2 + $0x163] sm:$0xff]
      %v6725 = vld [vmem:[#allocation2 + $0x16b] sm:$0xff]
      %v6726 = vld [vmem:[#allocation2 + $0x173] sm:$0xff]
      %s6727 = scalar_lea.vmem %s7, 192
      %v6728 = vld [vmem:[%s6727] sm:$0xff]
      %v6729 = vld [vmem:[%s6727 + $0x8] sm:$0xff]
      %v6730 = vld [vmem:[%s6727 + $0x10] sm:$0xff]
      %v6731 = vld [vmem:[%s6727 + $0x18] sm:$0xff]
      %v6733 = vsel %vm4580, %v6687, 0
      %v6736 = vsel %vm4580, %v6688, 0
      %v6739 = vsel %vm4580, %v6689, 0
      %v6742 = vsel %vm4580, %v6690, 0
      %v6745 = vsel %vm4580, %v6691, 0
      %v6748 = vsel %vm4580, %v6692, 0
      %v6751 = vsel %vm4580, %v6693, 0
      %v6754 = vsel %vm4580, %v6694, 0
      %v6757 = vsel %vm4580, %v6695, 0
      %v6760 = vsel %vm4580, %v6696, 0
      %v6763 = vsel %vm4580, %v6697, 0
      %v6766 = vsel %vm4580, %v6698, 0
      %v6769 = vsel %vm4580, %v6699, 0
      %v6772 = vsel %vm4580, %v6700, 0
      %v6775 = vsel %vm4580, %v6701, 0
      %v6778 = vsel %vm4580, %v6702, 0
      %v6781 = vsel %vm4580, %v6703, 0
      %v6784 = vsel %vm4580, %v6704, 0
      %v6787 = vsel %vm4580, %v6705, 0
      %v6790 = vsel %vm4580, %v6706, 0
      %v6793 = vsel %vm4580, %v6707, 0
      %v6796 = vsel %vm4580, %v6708, 0
      %v6799 = vsel %vm4580, %v6709, 0
      %v6802 = vsel %vm4580, %v6710, 0
      %v6805 = vsel %vm4580, %v6711, 0
      %v6808 = vsel %vm4580, %v6712, 0
      %v6811 = vsel %vm4580, %v6713, 0
      %v6814 = vsel %vm4580, %v6714, 0
      %v6817 = vsel %vm4580, %v6715, 0
      %v6820 = vsel %vm4580, %v6716, 0
      %v6823 = vsel %vm4580, %v6717, 0
      %v6826 = vsel %vm4580, %v6718, 0
      %v6829 = vsel %vm4580, %v6719, 0
      %v6832 = vsel %vm4580, %v6720, 0
      %v6835 = vsel %vm4580, %v6721, 0
      %v6838 = vsel %vm4580, %v6722, 0
      %v6841 = vsel %vm4580, %v6723, 0
      %v6844 = vsel %vm4580, %v6724, 0
      %v6847 = vsel %vm4580, %v6725, 0
      %v6850 = vsel %vm4580, %v6726, 0
      %6852 = vmatpush.msra.mxu0 0.0
      %6853 = vmatpush.msra.mxu0 0.0
      %6854 = vmatpush.msra.mxu0 0.0
      %6855 = vmatpush.msra.mxu0 0.0
      %6856 = vmatpush.msra.mxu0 0.0
      %6857 = vmatpush.msra.mxu0 0.0
      %6858 = vmatpush.msra.mxu0 0.0
      %6859 = vmatpush.msra.mxu0 0.0
      %6860 = vmatpush.msra.mxu0 0.0
      %6861 = vmatpush.msra.mxu0 0.0
      %6862 = vmatpush.msra.mxu0 0.0
      %6863 = vmatpush.msra.mxu0 0.0
      %6864 = vmatpush.msra.mxu0 %v6731
      %6865 = vmatpush.msra.mxu0 %v6730
      %6866 = vmatpush.msra.mxu0 %v6729
      %6867 = vmatpush.msra.mxu0 %v6728
      %6868 = vmatmul.f32.gmra.mxu0 %v6733
      %v6869 = vpop.f32.mrf.mxu0
      %v6870 = vadd.f32 0.0, %v6869
      %6871 = vmatmul.f32.gmra.mxu0 %v6736
      %v6872 = vpop.f32.mrf.mxu0
      %v6873 = vadd.f32 0.0, %v6872
      %6874 = vmatmul.f32.gmra.mxu0 %v6739
      %v6875 = vpop.f32.mrf.mxu0
      %v6876 = vadd.f32 0.0, %v6875
      %6877 = vmatmul.f32.gmra.mxu0 %v6742
      %v6878 = vpop.f32.mrf.mxu0
      %v6879 = vadd.f32 0.0, %v6878
      %6880 = vmatmul.f32.gmra.mxu0 %v6745
      %v6881 = vpop.f32.mrf.mxu0
      %v6882 = vadd.f32 0.0, %v6881
      %6883 = vmatmul.f32.gmra.mxu0 %v6748
      %v6884 = vpop.f32.mrf.mxu0
      %v6885 = vadd.f32 0.0, %v6884
      %6886 = vmatmul.f32.gmra.mxu0 %v6751
      %v6887 = vpop.f32.mrf.mxu0
      %v6888 = vadd.f32 0.0, %v6887
      %6889 = vmatmul.f32.gmra.mxu0 %v6754
      %v6890 = vpop.f32.mrf.mxu0
      %v6891 = vadd.f32 0.0, %v6890
      %6892 = vmatmul.f32.gmra.mxu0 %v6757
      %v6893 = vpop.f32.mrf.mxu0
      %v6894 = vadd.f32 0.0, %v6893
      %6895 = vmatmul.f32.gmra.mxu0 %v6760
      %v6896 = vpop.f32.mrf.mxu0
      %v6897 = vadd.f32 0.0, %v6896
      %6898 = vmatmul.f32.gmra.mxu0 %v6763
      %v6899 = vpop.f32.mrf.mxu0
      %v6900 = vadd.f32 0.0, %v6899
      %6901 = vmatmul.f32.gmra.mxu0 %v6766
      %v6902 = vpop.f32.mrf.mxu0
      %v6903 = vadd.f32 0.0, %v6902
      %6904 = vmatmul.f32.gmra.mxu0 %v6769
      %v6905 = vpop.f32.mrf.mxu0
      %v6906 = vadd.f32 0.0, %v6905
      %6907 = vmatmul.f32.gmra.mxu0 %v6772
      %v6908 = vpop.f32.mrf.mxu0
      %v6909 = vadd.f32 0.0, %v6908
      %6910 = vmatmul.f32.gmra.mxu0 %v6775
      %v6911 = vpop.f32.mrf.mxu0
      %v6912 = vadd.f32 0.0, %v6911
      %6913 = vmatmul.f32.gmra.mxu0 %v6778
      %v6914 = vpop.f32.mrf.mxu0
      %v6915 = vadd.f32 0.0, %v6914
      %6916 = vmatmul.f32.gmra.mxu0 %v6781
      %v6917 = vpop.f32.mrf.mxu0
      %v6918 = vadd.f32 0.0, %v6917
      %6919 = vmatmul.f32.gmra.mxu0 %v6784
      %v6920 = vpop.f32.mrf.mxu0
      %v6921 = vadd.f32 0.0, %v6920
      %6922 = vmatmul.f32.gmra.mxu0 %v6787
      %v6923 = vpop.f32.mrf.mxu0
      %v6924 = vadd.f32 0.0, %v6923
      %6925 = vmatmul.f32.gmra.mxu0 %v6790
      %v6926 = vpop.f32.mrf.mxu0
      %v6927 = vadd.f32 0.0, %v6926
      %6928 = vmatmul.f32.gmra.mxu0 %v6793
      %v6929 = vpop.f32.mrf.mxu0
      %v6930 = vadd.f32 0.0, %v6929
      %6931 = vmatmul.f32.gmra.mxu0 %v6796
      %v6932 = vpop.f32.mrf.mxu0
      %v6933 = vadd.f32 0.0, %v6932
      %6934 = vmatmul.f32.gmra.mxu0 %v6799
      %v6935 = vpop.f32.mrf.mxu0
      %v6936 = vadd.f32 0.0, %v6935
      %6937 = vmatmul.f32.gmra.mxu0 %v6802
      %v6938 = vpop.f32.mrf.mxu0
      %v6939 = vadd.f32 0.0, %v6938
      %6940 = vmatmul.f32.gmra.mxu0 %v6805
      %v6941 = vpop.f32.mrf.mxu0
      %v6942 = vadd.f32 0.0, %v6941
      %6943 = vmatmul.f32.gmra.mxu0 %v6808
      %v6944 = vpop.f32.mrf.mxu0
      %v6945 = vadd.f32 0.0, %v6944
      %6946 = vmatmul.f32.gmra.mxu0 %v6811
      %v6947 = vpop.f32.mrf.mxu0
      %v6948 = vadd.f32 0.0, %v6947
      %6949 = vmatmul.f32.gmra.mxu0 %v6814
      %v6950 = vpop.f32.mrf.mxu0
      %v6951 = vadd.f32 0.0, %v6950
      %6952 = vmatmul.f32.gmra.mxu0 %v6817
      %v6953 = vpop.f32.mrf.mxu0
      %v6954 = vadd.f32 0.0, %v6953
      %6955 = vmatmul.f32.gmra.mxu0 %v6820
      %v6956 = vpop.f32.mrf.mxu0
      %v6957 = vadd.f32 0.0, %v6956
      %6958 = vmatmul.f32.gmra.mxu0 %v6823
      %v6959 = vpop.f32.mrf.mxu0
      %v6960 = vadd.f32 0.0, %v6959
      %6961 = vmatmul.f32.gmra.mxu0 %v6826
      %v6962 = vpop.f32.mrf.mxu0
      %v6963 = vadd.f32 0.0, %v6962
      %6964 = vmatmul.f32.gmra.mxu0 %v6829
      %v6965 = vpop.f32.mrf.mxu0
      %v6966 = vadd.f32 0.0, %v6965
      %6967 = vmatmul.f32.gmra.mxu0 %v6832
      %v6968 = vpop.f32.mrf.mxu0
      %v6969 = vadd.f32 0.0, %v6968
      %6970 = vmatmul.f32.gmra.mxu0 %v6835
      %v6971 = vpop.f32.mrf.mxu0
      %v6972 = vadd.f32 0.0, %v6971
      %6973 = vmatmul.f32.gmra.mxu0 %v6838
      %v6974 = vpop.f32.mrf.mxu0
      %v6975 = vadd.f32 0.0, %v6974
      %6976 = vmatmul.f32.gmra.mxu0 %v6841
      %v6977 = vpop.f32.mrf.mxu0
      %v6978 = vadd.f32 0.0, %v6977
      %6979 = vmatmul.f32.gmra.mxu0 %v6844
      %v6980 = vpop.f32.mrf.mxu0
      %v6981 = vadd.f32 0.0, %v6980
      %6982 = vmatmul.f32.gmra.mxu0 %v6847
      %v6983 = vpop.f32.mrf.mxu0
      %v6984 = vadd.f32 0.0, %v6983
      %6985 = vmatmul.f32.gmra.mxu0 %v6850
      %v6986 = vpop.f32.mrf.mxu0
      %v6987 = vadd.f32 0.0, %v6986
      %6988 = vdwg.mxu0
      %v6989 = vadd.f32 %v6647, %v6870
      %v6990 = vadd.f32 %v6648, %v6873
      %v6991 = vadd.f32 %v6649, %v6876
      %v6992 = vadd.f32 %v6650, %v6879
      %v6993 = vadd.f32 %v6651, %v6882
      %v6994 = vadd.f32 %v6652, %v6885
      %v6995 = vadd.f32 %v6653, %v6888
      %v6996 = vadd.f32 %v6654, %v6891
      %v6997 = vadd.f32 %v6655, %v6894
      %v6998 = vadd.f32 %v6656, %v6897
      %v6999 = vadd.f32 %v6657, %v6900
      %v7000 = vadd.f32 %v6658, %v6903
      %v7001 = vadd.f32 %v6659, %v6906
      %v7002 = vadd.f32 %v6660, %v6909
      %v7003 = vadd.f32 %v6661, %v6912
      %v7004 = vadd.f32 %v6662, %v6915
      %v7005 = vadd.f32 %v6663, %v6918
      %v7006 = vadd.f32 %v6664, %v6921
      %v7007 = vadd.f32 %v6665, %v6924
      %v7008 = vadd.f32 %v6666, %v6927
      %v7009 = vadd.f32 %v6667, %v6930
      %v7010 = vadd.f32 %v6668, %v6933
      %v7011 = vadd.f32 %v6669, %v6936
      %v7012 = vadd.f32 %v6670, %v6939
      %v7013 = vadd.f32 %v6671, %v6942
      %v7014 = vadd.f32 %v6672, %v6945
      %v7015 = vadd.f32 %v6673, %v6948
      %v7016 = vadd.f32 %v6674, %v6951
      %v7017 = vadd.f32 %v6675, %v6954
      %v7018 = vadd.f32 %v6676, %v6957
      %v7019 = vadd.f32 %v6677, %v6960
      %v7020 = vadd.f32 %v6678, %v6963
      %v7021 = vadd.f32 %v6679, %v6966
      %v7022 = vadd.f32 %v6680, %v6969
      %v7023 = vadd.f32 %v6681, %v6972
      %v7024 = vadd.f32 %v6682, %v6975
      %v7025 = vadd.f32 %v6683, %v6978
      %v7026 = vadd.f32 %v6684, %v6981
      %v7027 = vadd.f32 %v6685, %v6984
      %v7028 = vadd.f32 %v6686, %v6987
      %v7029 = vld [vmem:[#allocation2 + $0x3c] sm:$0xff]
      %v7030 = vld [vmem:[#allocation2 + $0x44] sm:$0xff]
      %v7031 = vld [vmem:[#allocation2 + $0x4c] sm:$0xff]
      %v7032 = vld [vmem:[#allocation2 + $0x54] sm:$0xff]
      %v7033 = vld [vmem:[#allocation2 + $0x5c] sm:$0xff]
      %v7034 = vld [vmem:[#allocation2 + $0x64] sm:$0xff]
      %v7035 = vld [vmem:[#allocation2 + $0x6c] sm:$0xff]
      %v7036 = vld [vmem:[#allocation2 + $0x74] sm:$0xff]
      %v7037 = vld [vmem:[#allocation2 + $0x7c] sm:$0xff]
      %v7038 = vld [vmem:[#allocation2 + $0x84] sm:$0xff]
      %v7039 = vld [vmem:[#allocation2 + $0x8c] sm:$0xff]
      %v7040 = vld [vmem:[#allocation2 + $0x94] sm:$0xff]
      %v7041 = vld [vmem:[#allocation2 + $0x9c] sm:$0xff]
      %v7042 = vld [vmem:[#allocation2 + $0xa4] sm:$0xff]
      %v7043 = vld [vmem:[#allocation2 + $0xac] sm:$0xff]
      %v7044 = vld [vmem:[#allocation2 + $0xb4] sm:$0xff]
      %v7045 = vld [vmem:[#allocation2 + $0xbc] sm:$0xff]
      %v7046 = vld [vmem:[#allocation2 + $0xc4] sm:$0xff]
      %v7047 = vld [vmem:[#allocation2 + $0xcc] sm:$0xff]
      %v7048 = vld [vmem:[#allocation2 + $0xd4] sm:$0xff]
      %v7049 = vld [vmem:[#allocation2 + $0xdc] sm:$0xff]
      %v7050 = vld [vmem:[#allocation2 + $0xe4] sm:$0xff]
      %v7051 = vld [vmem:[#allocation2 + $0xec] sm:$0xff]
      %v7052 = vld [vmem:[#allocation2 + $0xf4] sm:$0xff]
      %v7053 = vld [vmem:[#allocation2 + $0xfc] sm:$0xff]
      %v7054 = vld [vmem:[#allocation2 + $0x104] sm:$0xff]
      %v7055 = vld [vmem:[#allocation2 + $0x10c] sm:$0xff]
      %v7056 = vld [vmem:[#allocation2 + $0x114] sm:$0xff]
      %v7057 = vld [vmem:[#allocation2 + $0x11c] sm:$0xff]
      %v7058 = vld [vmem:[#allocation2 + $0x124] sm:$0xff]
      %v7059 = vld [vmem:[#allocation2 + $0x12c] sm:$0xff]
      %v7060 = vld [vmem:[#allocation2 + $0x134] sm:$0xff]
      %v7061 = vld [vmem:[#allocation2 + $0x13c] sm:$0xff]
      %v7062 = vld [vmem:[#allocation2 + $0x144] sm:$0xff]
      %v7063 = vld [vmem:[#allocation2 + $0x14c] sm:$0xff]
      %v7064 = vld [vmem:[#allocation2 + $0x154] sm:$0xff]
      %v7065 = vld [vmem:[#allocation2 + $0x15c] sm:$0xff]
      %v7066 = vld [vmem:[#allocation2 + $0x164] sm:$0xff]
      %v7067 = vld [vmem:[#allocation2 + $0x16c] sm:$0xff]
      %v7068 = vld [vmem:[#allocation2 + $0x174] sm:$0xff]
      %s7069 = scalar_lea.vmem %s7, 224
      %v7070 = vld [vmem:[%s7069] sm:$0xff]
      %v7071 = vld [vmem:[%s7069 + $0x8] sm:$0xff]
      %v7072 = vld [vmem:[%s7069 + $0x10] sm:$0xff]
      %v7073 = vld [vmem:[%s7069 + $0x18] sm:$0xff]
      %v7075 = vsel %vm4580, %v7029, 0
      %v7078 = vsel %vm4580, %v7030, 0
      %v7081 = vsel %vm4580, %v7031, 0
      %v7084 = vsel %vm4580, %v7032, 0
      %v7087 = vsel %vm4580, %v7033, 0
      %v7090 = vsel %vm4580, %v7034, 0
      %v7093 = vsel %vm4580, %v7035, 0
      %v7096 = vsel %vm4580, %v7036, 0
      %v7099 = vsel %vm4580, %v7037, 0
      %v7102 = vsel %vm4580, %v7038, 0
      %v7105 = vsel %vm4580, %v7039, 0
      %v7108 = vsel %vm4580, %v7040, 0
      %v7111 = vsel %vm4580, %v7041, 0
      %v7114 = vsel %vm4580, %v7042, 0
      %v7117 = vsel %vm4580, %v7043, 0
      %v7120 = vsel %vm4580, %v7044, 0
      %v7123 = vsel %vm4580, %v7045, 0
      %v7126 = vsel %vm4580, %v7046, 0
      %v7129 = vsel %vm4580, %v7047, 0
      %v7132 = vsel %vm4580, %v7048, 0
      %v7135 = vsel %vm4580, %v7049, 0
      %v7138 = vsel %vm4580, %v7050, 0
      %v7141 = vsel %vm4580, %v7051, 0
      %v7144 = vsel %vm4580, %v7052, 0
      %v7147 = vsel %vm4580, %v7053, 0
      %v7150 = vsel %vm4580, %v7054, 0
      %v7153 = vsel %vm4580, %v7055, 0
      %v7156 = vsel %vm4580, %v7056, 0
      %v7159 = vsel %vm4580, %v7057, 0
      %v7162 = vsel %vm4580, %v7058, 0
      %v7165 = vsel %vm4580, %v7059, 0
      %v7168 = vsel %vm4580, %v7060, 0
      %v7171 = vsel %vm4580, %v7061, 0
      %v7174 = vsel %vm4580, %v7062, 0
      %v7177 = vsel %vm4580, %v7063, 0
      %v7180 = vsel %vm4580, %v7064, 0
      %v7183 = vsel %vm4580, %v7065, 0
      %v7186 = vsel %vm4580, %v7066, 0
      %v7189 = vsel %vm4580, %v7067, 0
      %v7192 = vsel %vm4580, %v7068, 0
      %7194 = vmatpush.msra.mxu0 0.0
      %7195 = vmatpush.msra.mxu0 0.0
      %7196 = vmatpush.msra.mxu0 0.0
      %7197 = vmatpush.msra.mxu0 0.0
      %7198 = vmatpush.msra.mxu0 0.0
      %7199 = vmatpush.msra.mxu0 0.0
      %7200 = vmatpush.msra.mxu0 0.0
      %7201 = vmatpush.msra.mxu0 0.0
      %7202 = vmatpush.msra.mxu0 0.0
      %7203 = vmatpush.msra.mxu0 0.0
      %7204 = vmatpush.msra.mxu0 0.0
      %7205 = vmatpush.msra.mxu0 0.0
      %7206 = vmatpush.msra.mxu0 %v7073
      %7207 = vmatpush.msra.mxu0 %v7072
      %7208 = vmatpush.msra.mxu0 %v7071
      %7209 = vmatpush.msra.mxu0 %v7070
      %7210 = vmatmul.f32.gmra.mxu0 %v7075
      %v7211 = vpop.f32.mrf.mxu0
      %v7212 = vadd.f32 0.0, %v7211
      %7213 = vmatmul.f32.gmra.mxu0 %v7078
      %v7214 = vpop.f32.mrf.mxu0
      %v7215 = vadd.f32 0.0, %v7214
      %7216 = vmatmul.f32.gmra.mxu0 %v7081
      %v7217 = vpop.f32.mrf.mxu0
      %v7218 = vadd.f32 0.0, %v7217
      %7219 = vmatmul.f32.gmra.mxu0 %v7084
      %v7220 = vpop.f32.mrf.mxu0
      %v7221 = vadd.f32 0.0, %v7220
      %7222 = vmatmul.f32.gmra.mxu0 %v7087
      %v7223 = vpop.f32.mrf.mxu0
      %v7224 = vadd.f32 0.0, %v7223
      %7225 = vmatmul.f32.gmra.mxu0 %v7090
      %v7226 = vpop.f32.mrf.mxu0
      %v7227 = vadd.f32 0.0, %v7226
      %7228 = vmatmul.f32.gmra.mxu0 %v7093
      %v7229 = vpop.f32.mrf.mxu0
      %v7230 = vadd.f32 0.0, %v7229
      %7231 = vmatmul.f32.gmra.mxu0 %v7096
      %v7232 = vpop.f32.mrf.mxu0
      %v7233 = vadd.f32 0.0, %v7232
      %7234 = vmatmul.f32.gmra.mxu0 %v7099
      %v7235 = vpop.f32.mrf.mxu0
      %v7236 = vadd.f32 0.0, %v7235
      %7237 = vmatmul.f32.gmra.mxu0 %v7102
      %v7238 = vpop.f32.mrf.mxu0
      %v7239 = vadd.f32 0.0, %v7238
      %7240 = vmatmul.f32.gmra.mxu0 %v7105
      %v7241 = vpop.f32.mrf.mxu0
      %v7242 = vadd.f32 0.0, %v7241
      %7243 = vmatmul.f32.gmra.mxu0 %v7108
      %v7244 = vpop.f32.mrf.mxu0
      %v7245 = vadd.f32 0.0, %v7244
      %7246 = vmatmul.f32.gmra.mxu0 %v7111
      %v7247 = vpop.f32.mrf.mxu0
      %v7248 = vadd.f32 0.0, %v7247
      %7249 = vmatmul.f32.gmra.mxu0 %v7114
      %v7250 = vpop.f32.mrf.mxu0
      %v7251 = vadd.f32 0.0, %v7250
      %7252 = vmatmul.f32.gmra.mxu0 %v7117
      %v7253 = vpop.f32.mrf.mxu0
      %v7254 = vadd.f32 0.0, %v7253
      %7255 = vmatmul.f32.gmra.mxu0 %v7120
      %v7256 = vpop.f32.mrf.mxu0
      %v7257 = vadd.f32 0.0, %v7256
      %7258 = vmatmul.f32.gmra.mxu0 %v7123
      %v7259 = vpop.f32.mrf.mxu0
      %v7260 = vadd.f32 0.0, %v7259
      %7261 = vmatmul.f32.gmra.mxu0 %v7126
      %v7262 = vpop.f32.mrf.mxu0
      %v7263 = vadd.f32 0.0, %v7262
      %7264 = vmatmul.f32.gmra.mxu0 %v7129
      %v7265 = vpop.f32.mrf.mxu0
      %v7266 = vadd.f32 0.0, %v7265
      %7267 = vmatmul.f32.gmra.mxu0 %v7132
      %v7268 = vpop.f32.mrf.mxu0
      %v7269 = vadd.f32 0.0, %v7268
      %7270 = vmatmul.f32.gmra.mxu0 %v7135
      %v7271 = vpop.f32.mrf.mxu0
      %v7272 = vadd.f32 0.0, %v7271
      %7273 = vmatmul.f32.gmra.mxu0 %v7138
      %v7274 = vpop.f32.mrf.mxu0
      %v7275 = vadd.f32 0.0, %v7274
      %7276 = vmatmul.f32.gmra.mxu0 %v7141
      %v7277 = vpop.f32.mrf.mxu0
      %v7278 = vadd.f32 0.0, %v7277
      %7279 = vmatmul.f32.gmra.mxu0 %v7144
      %v7280 = vpop.f32.mrf.mxu0
      %v7281 = vadd.f32 0.0, %v7280
      %7282 = vmatmul.f32.gmra.mxu0 %v7147
      %v7283 = vpop.f32.mrf.mxu0
      %v7284 = vadd.f32 0.0, %v7283
      %7285 = vmatmul.f32.gmra.mxu0 %v7150
      %v7286 = vpop.f32.mrf.mxu0
      %v7287 = vadd.f32 0.0, %v7286
      %7288 = vmatmul.f32.gmra.mxu0 %v7153
      %v7289 = vpop.f32.mrf.mxu0
      %v7290 = vadd.f32 0.0, %v7289
      %7291 = vmatmul.f32.gmra.mxu0 %v7156
      %v7292 = vpop.f32.mrf.mxu0
      %v7293 = vadd.f32 0.0, %v7292
      %7294 = vmatmul.f32.gmra.mxu0 %v7159
      %v7295 = vpop.f32.mrf.mxu0
      %v7296 = vadd.f32 0.0, %v7295
      %7297 = vmatmul.f32.gmra.mxu0 %v7162
      %v7298 = vpop.f32.mrf.mxu0
      %v7299 = vadd.f32 0.0, %v7298
      %7300 = vmatmul.f32.gmra.mxu0 %v7165
      %v7301 = vpop.f32.mrf.mxu0
      %v7302 = vadd.f32 0.0, %v7301
      %7303 = vmatmul.f32.gmra.mxu0 %v7168
      %v7304 = vpop.f32.mrf.mxu0
      %v7305 = vadd.f32 0.0, %v7304
      %7306 = vmatmul.f32.gmra.mxu0 %v7171
      %v7307 = vpop.f32.mrf.mxu0
      %v7308 = vadd.f32 0.0, %v7307
      %7309 = vmatmul.f32.gmra.mxu0 %v7174
      %v7310 = vpop.f32.mrf.mxu0
      %v7311 = vadd.f32 0.0, %v7310
      %7312 = vmatmul.f32.gmra.mxu0 %v7177
      %v7313 = vpop.f32.mrf.mxu0
      %v7314 = vadd.f32 0.0, %v7313
      %7315 = vmatmul.f32.gmra.mxu0 %v7180
      %v7316 = vpop.f32.mrf.mxu0
      %v7317 = vadd.f32 0.0, %v7316
      %7318 = vmatmul.f32.gmra.mxu0 %v7183
      %v7319 = vpop.f32.mrf.mxu0
      %v7320 = vadd.f32 0.0, %v7319
      %7321 = vmatmul.f32.gmra.mxu0 %v7186
      %v7322 = vpop.f32.mrf.mxu0
      %v7323 = vadd.f32 0.0, %v7322
      %7324 = vmatmul.f32.gmra.mxu0 %v7189
      %v7325 = vpop.f32.mrf.mxu0
      %v7326 = vadd.f32 0.0, %v7325
      %7327 = vmatmul.f32.gmra.mxu0 %v7192
      %v7328 = vpop.f32.mrf.mxu0
      %v7329 = vadd.f32 0.0, %v7328
      %7330 = vdwg.mxu0
      %v7331 = vadd.f32 %v6989, %v7212
      %v7332 = vadd.f32 %v6990, %v7215
      %v7333 = vadd.f32 %v6991, %v7218
      %v7334 = vadd.f32 %v6992, %v7221
      %v7335 = vadd.f32 %v6993, %v7224
      %v7336 = vadd.f32 %v6994, %v7227
      %v7337 = vadd.f32 %v6995, %v7230
      %v7338 = vadd.f32 %v6996, %v7233
      %v7339 = vadd.f32 %v6997, %v7236
      %v7340 = vadd.f32 %v6998, %v7239
      %v7341 = vadd.f32 %v6999, %v7242
      %v7342 = vadd.f32 %v7000, %v7245
      %v7343 = vadd.f32 %v7001, %v7248
      %v7344 = vadd.f32 %v7002, %v7251
      %v7345 = vadd.f32 %v7003, %v7254
      %v7346 = vadd.f32 %v7004, %v7257
      %v7347 = vadd.f32 %v7005, %v7260
      %v7348 = vadd.f32 %v7006, %v7263
      %v7349 = vadd.f32 %v7007, %v7266
      %v7350 = vadd.f32 %v7008, %v7269
      %v7351 = vadd.f32 %v7009, %v7272
      %v7352 = vadd.f32 %v7010, %v7275
      %v7353 = vadd.f32 %v7011, %v7278
      %v7354 = vadd.f32 %v7012, %v7281
      %v7355 = vadd.f32 %v7013, %v7284
      %v7356 = vadd.f32 %v7014, %v7287
      %v7357 = vadd.f32 %v7015, %v7290
      %v7358 = vadd.f32 %v7016, %v7293
      %v7359 = vadd.f32 %v7017, %v7296
      %v7360 = vadd.f32 %v7018, %v7299
      %v7361 = vadd.f32 %v7019, %v7302
      %v7362 = vadd.f32 %v7020, %v7305
      %v7363 = vadd.f32 %v7021, %v7308
      %v7364 = vadd.f32 %v7022, %v7311
      %v7365 = vadd.f32 %v7023, %v7314
      %v7366 = vadd.f32 %v7024, %v7317
      %v7367 = vadd.f32 %v7025, %v7320
      %v7368 = vadd.f32 %v7026, %v7323
      %v7369 = vadd.f32 %v7027, %v7326
      %v7370 = vadd.f32 %v7028, %v7329
      %v7371 = vld [vmem:[#allocation2 + $0x3d] sm:$0xff]
      %v7372 = vld [vmem:[#allocation2 + $0x45] sm:$0xff]
      %v7373 = vld [vmem:[#allocation2 + $0x4d] sm:$0xff]
      %v7374 = vld [vmem:[#allocation2 + $0x55] sm:$0xff]
      %v7375 = vld [vmem:[#allocation2 + $0x5d] sm:$0xff]
      %v7376 = vld [vmem:[#allocation2 + $0x65] sm:$0xff]
      %v7377 = vld [vmem:[#allocation2 + $0x6d] sm:$0xff]
      %v7378 = vld [vmem:[#allocation2 + $0x75] sm:$0xff]
      %v7379 = vld [vmem:[#allocation2 + $0x7d] sm:$0xff]
      %v7380 = vld [vmem:[#allocation2 + $0x85] sm:$0xff]
      %v7381 = vld [vmem:[#allocation2 + $0x8d] sm:$0xff]
      %v7382 = vld [vmem:[#allocation2 + $0x95] sm:$0xff]
      %v7383 = vld [vmem:[#allocation2 + $0x9d] sm:$0xff]
      %v7384 = vld [vmem:[#allocation2 + $0xa5] sm:$0xff]
      %v7385 = vld [vmem:[#allocation2 + $0xad] sm:$0xff]
      %v7386 = vld [vmem:[#allocation2 + $0xb5] sm:$0xff]
      %v7387 = vld [vmem:[#allocation2 + $0xbd] sm:$0xff]
      %v7388 = vld [vmem:[#allocation2 + $0xc5] sm:$0xff]
      %v7389 = vld [vmem:[#allocation2 + $0xcd] sm:$0xff]
      %v7390 = vld [vmem:[#allocation2 + $0xd5] sm:$0xff]
      %v7391 = vld [vmem:[#allocation2 + $0xdd] sm:$0xff]
      %v7392 = vld [vmem:[#allocation2 + $0xe5] sm:$0xff]
      %v7393 = vld [vmem:[#allocation2 + $0xed] sm:$0xff]
      %v7394 = vld [vmem:[#allocation2 + $0xf5] sm:$0xff]
      %v7395 = vld [vmem:[#allocation2 + $0xfd] sm:$0xff]
      %v7396 = vld [vmem:[#allocation2 + $0x105] sm:$0xff]
      %v7397 = vld [vmem:[#allocation2 + $0x10d] sm:$0xff]
      %v7398 = vld [vmem:[#allocation2 + $0x115] sm:$0xff]
      %v7399 = vld [vmem:[#allocation2 + $0x11d] sm:$0xff]
      %v7400 = vld [vmem:[#allocation2 + $0x125] sm:$0xff]
      %v7401 = vld [vmem:[#allocation2 + $0x12d] sm:$0xff]
      %v7402 = vld [vmem:[#allocation2 + $0x135] sm:$0xff]
      %v7403 = vld [vmem:[#allocation2 + $0x13d] sm:$0xff]
      %v7404 = vld [vmem:[#allocation2 + $0x145] sm:$0xff]
      %v7405 = vld [vmem:[#allocation2 + $0x14d] sm:$0xff]
      %v7406 = vld [vmem:[#allocation2 + $0x155] sm:$0xff]
      %v7407 = vld [vmem:[#allocation2 + $0x15d] sm:$0xff]
      %v7408 = vld [vmem:[#allocation2 + $0x165] sm:$0xff]
      %v7409 = vld [vmem:[#allocation2 + $0x16d] sm:$0xff]
      %v7410 = vld [vmem:[#allocation2 + $0x175] sm:$0xff]
      %s7411 = scalar_lea.vmem %s7, 256
      %v7412 = vld [vmem:[%s7411] sm:$0xff]
      %v7413 = vld [vmem:[%s7411 + $0x8] sm:$0xff]
      %v7414 = vld [vmem:[%s7411 + $0x10] sm:$0xff]
      %v7415 = vld [vmem:[%s7411 + $0x18] sm:$0xff]
      %v7417 = vsel %vm4580, %v7371, 0
      %v7420 = vsel %vm4580, %v7372, 0
      %v7423 = vsel %vm4580, %v7373, 0
      %v7426 = vsel %vm4580, %v7374, 0
      %v7429 = vsel %vm4580, %v7375, 0
      %v7432 = vsel %vm4580, %v7376, 0
      %v7435 = vsel %vm4580, %v7377, 0
      %v7438 = vsel %vm4580, %v7378, 0
      %v7441 = vsel %vm4580, %v7379, 0
      %v7444 = vsel %vm4580, %v7380, 0
      %v7447 = vsel %vm4580, %v7381, 0
      %v7450 = vsel %vm4580, %v7382, 0
      %v7453 = vsel %vm4580, %v7383, 0
      %v7456 = vsel %vm4580, %v7384, 0
      %v7459 = vsel %vm4580, %v7385, 0
      %v7462 = vsel %vm4580, %v7386, 0
      %v7465 = vsel %vm4580, %v7387, 0
      %v7468 = vsel %vm4580, %v7388, 0
      %v7471 = vsel %vm4580, %v7389, 0
      %v7474 = vsel %vm4580, %v7390, 0
      %v7477 = vsel %vm4580, %v7391, 0
      %v7480 = vsel %vm4580, %v7392, 0
      %v7483 = vsel %vm4580, %v7393, 0
      %v7486 = vsel %vm4580, %v7394, 0
      %v7489 = vsel %vm4580, %v7395, 0
      %v7492 = vsel %vm4580, %v7396, 0
      %v7495 = vsel %vm4580, %v7397, 0
      %v7498 = vsel %vm4580, %v7398, 0
      %v7501 = vsel %vm4580, %v7399, 0
      %v7504 = vsel %vm4580, %v7400, 0
      %v7507 = vsel %vm4580, %v7401, 0
      %v7510 = vsel %vm4580, %v7402, 0
      %v7513 = vsel %vm4580, %v7403, 0
      %v7516 = vsel %vm4580, %v7404, 0
      %v7519 = vsel %vm4580, %v7405, 0
      %v7522 = vsel %vm4580, %v7406, 0
      %v7525 = vsel %vm4580, %v7407, 0
      %v7528 = vsel %vm4580, %v7408, 0
      %v7531 = vsel %vm4580, %v7409, 0
      %v7534 = vsel %vm4580, %v7410, 0
      %7536 = vmatpush.msra.mxu0 0.0
      %7537 = vmatpush.msra.mxu0 0.0
      %7538 = vmatpush.msra.mxu0 0.0
      %7539 = vmatpush.msra.mxu0 0.0
      %7540 = vmatpush.msra.mxu0 0.0
      %7541 = vmatpush.msra.mxu0 0.0
      %7542 = vmatpush.msra.mxu0 0.0
      %7543 = vmatpush.msra.mxu0 0.0
      %7544 = vmatpush.msra.mxu0 0.0
      %7545 = vmatpush.msra.mxu0 0.0
      %7546 = vmatpush.msra.mxu0 0.0
      %7547 = vmatpush.msra.mxu0 0.0
      %7548 = vmatpush.msra.mxu0 %v7415
      %7549 = vmatpush.msra.mxu0 %v7414
      %7550 = vmatpush.msra.mxu0 %v7413
      %7551 = vmatpush.msra.mxu0 %v7412
      %7552 = vmatmul.f32.gmra.mxu0 %v7417
      %v7553 = vpop.f32.mrf.mxu0
      %v7554 = vadd.f32 0.0, %v7553
      %7555 = vmatmul.f32.gmra.mxu0 %v7420
      %v7556 = vpop.f32.mrf.mxu0
      %v7557 = vadd.f32 0.0, %v7556
      %7558 = vmatmul.f32.gmra.mxu0 %v7423
      %v7559 = vpop.f32.mrf.mxu0
      %v7560 = vadd.f32 0.0, %v7559
      %7561 = vmatmul.f32.gmra.mxu0 %v7426
      %v7562 = vpop.f32.mrf.mxu0
      %v7563 = vadd.f32 0.0, %v7562
      %7564 = vmatmul.f32.gmra.mxu0 %v7429
      %v7565 = vpop.f32.mrf.mxu0
      %v7566 = vadd.f32 0.0, %v7565
      %7567 = vmatmul.f32.gmra.mxu0 %v7432
      %v7568 = vpop.f32.mrf.mxu0
      %v7569 = vadd.f32 0.0, %v7568
      %7570 = vmatmul.f32.gmra.mxu0 %v7435
      %v7571 = vpop.f32.mrf.mxu0
      %v7572 = vadd.f32 0.0, %v7571
      %7573 = vmatmul.f32.gmra.mxu0 %v7438
      %v7574 = vpop.f32.mrf.mxu0
      %v7575 = vadd.f32 0.0, %v7574
      %7576 = vmatmul.f32.gmra.mxu0 %v7441
      %v7577 = vpop.f32.mrf.mxu0
      %v7578 = vadd.f32 0.0, %v7577
      %7579 = vmatmul.f32.gmra.mxu0 %v7444
      %v7580 = vpop.f32.mrf.mxu0
      %v7581 = vadd.f32 0.0, %v7580
      %7582 = vmatmul.f32.gmra.mxu0 %v7447
      %v7583 = vpop.f32.mrf.mxu0
      %v7584 = vadd.f32 0.0, %v7583
      %7585 = vmatmul.f32.gmra.mxu0 %v7450
      %v7586 = vpop.f32.mrf.mxu0
      %v7587 = vadd.f32 0.0, %v7586
      %7588 = vmatmul.f32.gmra.mxu0 %v7453
      %v7589 = vpop.f32.mrf.mxu0
      %v7590 = vadd.f32 0.0, %v7589
      %7591 = vmatmul.f32.gmra.mxu0 %v7456
      %v7592 = vpop.f32.mrf.mxu0
      %v7593 = vadd.f32 0.0, %v7592
      %7594 = vmatmul.f32.gmra.mxu0 %v7459
      %v7595 = vpop.f32.mrf.mxu0
      %v7596 = vadd.f32 0.0, %v7595
      %7597 = vmatmul.f32.gmra.mxu0 %v7462
      %v7598 = vpop.f32.mrf.mxu0
      %v7599 = vadd.f32 0.0, %v7598
      %7600 = vmatmul.f32.gmra.mxu0 %v7465
      %v7601 = vpop.f32.mrf.mxu0
      %v7602 = vadd.f32 0.0, %v7601
      %7603 = vmatmul.f32.gmra.mxu0 %v7468
      %v7604 = vpop.f32.mrf.mxu0
      %v7605 = vadd.f32 0.0, %v7604
      %7606 = vmatmul.f32.gmra.mxu0 %v7471
      %v7607 = vpop.f32.mrf.mxu0
      %v7608 = vadd.f32 0.0, %v7607
      %7609 = vmatmul.f32.gmra.mxu0 %v7474
      %v7610 = vpop.f32.mrf.mxu0
      %v7611 = vadd.f32 0.0, %v7610
      %7612 = vmatmul.f32.gmra.mxu0 %v7477
      %v7613 = vpop.f32.mrf.mxu0
      %v7614 = vadd.f32 0.0, %v7613
      %7615 = vmatmul.f32.gmra.mxu0 %v7480
      %v7616 = vpop.f32.mrf.mxu0
      %v7617 = vadd.f32 0.0, %v7616
      %7618 = vmatmul.f32.gmra.mxu0 %v7483
      %v7619 = vpop.f32.mrf.mxu0
      %v7620 = vadd.f32 0.0, %v7619
      %7621 = vmatmul.f32.gmra.mxu0 %v7486
      %v7622 = vpop.f32.mrf.mxu0
      %v7623 = vadd.f32 0.0, %v7622
      %7624 = vmatmul.f32.gmra.mxu0 %v7489
      %v7625 = vpop.f32.mrf.mxu0
      %v7626 = vadd.f32 0.0, %v7625
      %7627 = vmatmul.f32.gmra.mxu0 %v7492
      %v7628 = vpop.f32.mrf.mxu0
      %v7629 = vadd.f32 0.0, %v7628
      %7630 = vmatmul.f32.gmra.mxu0 %v7495
      %v7631 = vpop.f32.mrf.mxu0
      %v7632 = vadd.f32 0.0, %v7631
      %7633 = vmatmul.f32.gmra.mxu0 %v7498
      %v7634 = vpop.f32.mrf.mxu0
      %v7635 = vadd.f32 0.0, %v7634
      %7636 = vmatmul.f32.gmra.mxu0 %v7501
      %v7637 = vpop.f32.mrf.mxu0
      %v7638 = vadd.f32 0.0, %v7637
      %7639 = vmatmul.f32.gmra.mxu0 %v7504
      %v7640 = vpop.f32.mrf.mxu0
      %v7641 = vadd.f32 0.0, %v7640
      %7642 = vmatmul.f32.gmra.mxu0 %v7507
      %v7643 = vpop.f32.mrf.mxu0
      %v7644 = vadd.f32 0.0, %v7643
      %7645 = vmatmul.f32.gmra.mxu0 %v7510
      %v7646 = vpop.f32.mrf.mxu0
      %v7647 = vadd.f32 0.0, %v7646
      %7648 = vmatmul.f32.gmra.mxu0 %v7513
      %v7649 = vpop.f32.mrf.mxu0
      %v7650 = vadd.f32 0.0, %v7649
      %7651 = vmatmul.f32.gmra.mxu0 %v7516
      %v7652 = vpop.f32.mrf.mxu0
      %v7653 = vadd.f32 0.0, %v7652
      %7654 = vmatmul.f32.gmra.mxu0 %v7519
      %v7655 = vpop.f32.mrf.mxu0
      %v7656 = vadd.f32 0.0, %v7655
      %7657 = vmatmul.f32.gmra.mxu0 %v7522
      %v7658 = vpop.f32.mrf.mxu0
      %v7659 = vadd.f32 0.0, %v7658
      %7660 = vmatmul.f32.gmra.mxu0 %v7525
      %v7661 = vpop.f32.mrf.mxu0
      %v7662 = vadd.f32 0.0, %v7661
      %7663 = vmatmul.f32.gmra.mxu0 %v7528
      %v7664 = vpop.f32.mrf.mxu0
      %v7665 = vadd.f32 0.0, %v7664
      %7666 = vmatmul.f32.gmra.mxu0 %v7531
      %v7667 = vpop.f32.mrf.mxu0
      %v7668 = vadd.f32 0.0, %v7667
      %7669 = vmatmul.f32.gmra.mxu0 %v7534
      %v7670 = vpop.f32.mrf.mxu0
      %v7671 = vadd.f32 0.0, %v7670
      %7672 = vdwg.mxu0
      %v7673 = vadd.f32 %v7331, %v7554
      %v7674 = vadd.f32 %v7332, %v7557
      %v7675 = vadd.f32 %v7333, %v7560
      %v7676 = vadd.f32 %v7334, %v7563
      %v7677 = vadd.f32 %v7335, %v7566
      %v7678 = vadd.f32 %v7336, %v7569
      %v7679 = vadd.f32 %v7337, %v7572
      %v7680 = vadd.f32 %v7338, %v7575
      %v7681 = vadd.f32 %v7339, %v7578
      %v7682 = vadd.f32 %v7340, %v7581
      %v7683 = vadd.f32 %v7341, %v7584
      %v7684 = vadd.f32 %v7342, %v7587
      %v7685 = vadd.f32 %v7343, %v7590
      %v7686 = vadd.f32 %v7344, %v7593
      %v7687 = vadd.f32 %v7345, %v7596
      %v7688 = vadd.f32 %v7346, %v7599
      %v7689 = vadd.f32 %v7347, %v7602
      %v7690 = vadd.f32 %v7348, %v7605
      %v7691 = vadd.f32 %v7349, %v7608
      %v7692 = vadd.f32 %v7350, %v7611
      %v7693 = vadd.f32 %v7351, %v7614
      %v7694 = vadd.f32 %v7352, %v7617
      %v7695 = vadd.f32 %v7353, %v7620
      %v7696 = vadd.f32 %v7354, %v7623
      %v7697 = vadd.f32 %v7355, %v7626
      %v7698 = vadd.f32 %v7356, %v7629
      %v7699 = vadd.f32 %v7357, %v7632
      %v7700 = vadd.f32 %v7358, %v7635
      %v7701 = vadd.f32 %v7359, %v7638
      %v7702 = vadd.f32 %v7360, %v7641
      %v7703 = vadd.f32 %v7361, %v7644
      %v7704 = vadd.f32 %v7362, %v7647
      %v7705 = vadd.f32 %v7363, %v7650
      %v7706 = vadd.f32 %v7364, %v7653
      %v7707 = vadd.f32 %v7365, %v7656
      %v7708 = vadd.f32 %v7366, %v7659
      %v7709 = vadd.f32 %v7367, %v7662
      %v7710 = vadd.f32 %v7368, %v7665
      %v7711 = vadd.f32 %v7369, %v7668
      %v7712 = vadd.f32 %v7370, %v7671
      %v7713 = vld [vmem:[%s400] sm:$0xff]
      %v7714 = vld [vmem:[%s400 + $0x8] sm:$0xff]
      %v7715 = vld [vmem:[%s400 + $0x10] sm:$0xff]
      %v7716 = vld [vmem:[%s400 + $0x18] sm:$0xff]
      %v7717 = vld [vmem:[%s400 + $0x20] sm:$0xff]
      %v7718 = vld [vmem:[%s400 + $0x28] sm:$0xff]
      %v7719 = vld [vmem:[%s400 + $0x30] sm:$0xff]
      %v7720 = vld [vmem:[%s400 + $0x38] sm:$0xff]
      %v7721 = vld [vmem:[%s400 + $0x40] sm:$0xff]
      %v7722 = vld [vmem:[%s400 + $0x48] sm:$0xff]
      %v7723 = vld [vmem:[%s400 + $0x50] sm:$0xff]
      %v7724 = vld [vmem:[%s400 + $0x58] sm:$0xff]
      %v7725 = vld [vmem:[%s400 + $0x60] sm:$0xff]
      %v7726 = vld [vmem:[%s400 + $0x68] sm:$0xff]
      %v7727 = vld [vmem:[%s400 + $0x70] sm:$0xff]
      %v7728 = vld [vmem:[%s400 + $0x78] sm:$0xff]
      %v7729 = vld [vmem:[%s400 + $0x80] sm:$0xff]
      %v7730 = vld [vmem:[%s400 + $0x88] sm:$0xff]
      %v7731 = vld [vmem:[%s400 + $0x90] sm:$0xff]
      %v7732 = vld [vmem:[%s400 + $0x98] sm:$0xff]
      %v7733 = vld [vmem:[%s400 + $0xa0] sm:$0xff]
      %v7734 = vld [vmem:[%s400 + $0xa8] sm:$0xff]
      %v7735 = vld [vmem:[%s400 + $0xb0] sm:$0xff]
      %v7736 = vld [vmem:[%s400 + $0xb8] sm:$0xff]
      %v7737 = vld [vmem:[%s400 + $0xc0] sm:$0xff]
      %v7738 = vld [vmem:[%s400 + $0xc8] sm:$0xff]
      %v7739 = vld [vmem:[%s400 + $0xd0] sm:$0xff]
      %v7740 = vld [vmem:[%s400 + $0xd8] sm:$0xff]
      %v7741 = vld [vmem:[%s400 + $0xe0] sm:$0xff]
      %v7742 = vld [vmem:[%s400 + $0xe8] sm:$0xff]
      %v7743 = vld [vmem:[%s400 + $0xf0] sm:$0xff]
      %v7744 = vld [vmem:[%s400 + $0xf8] sm:$0xff]
      %v7745 = vld [vmem:[%s400 + $0x100] sm:$0xff]
      %v7746 = vld [vmem:[%s400 + $0x108] sm:$0xff]
      %v7747 = vld [vmem:[%s400 + $0x110] sm:$0xff]
      %v7748 = vld [vmem:[%s400 + $0x118] sm:$0xff]
      %v7749 = vld [vmem:[%s400 + $0x120] sm:$0xff]
      %v7750 = vld [vmem:[%s400 + $0x128] sm:$0xff]
      %v7751 = vld [vmem:[%s400 + $0x130] sm:$0xff]
      %v7752 = vld [vmem:[%s400 + $0x138] sm:$0xff]
      %v7753 = vld [vmem:[%s3] sm:$0x1]
      %v7755 = vperm.slane %v7753, 0
      %v7757 = vmul.f32 %v7713, %v7755
      %v7758 = vmul.f32 %v7714, %v7755
      %v7759 = vmul.f32 %v7715, %v7755
      %v7760 = vmul.f32 %v7716, %v7755
      %v7761 = vmul.f32 %v7717, %v7755
      %v7762 = vmul.f32 %v7718, %v7755
      %v7763 = vmul.f32 %v7719, %v7755
      %v7764 = vmul.f32 %v7720, %v7755
      %v7765 = vmul.f32 %v7721, %v7755
      %v7766 = vmul.f32 %v7722, %v7755
      %v7767 = vmul.f32 %v7723, %v7755
      %v7768 = vmul.f32 %v7724, %v7755
      %v7769 = vmul.f32 %v7725, %v7755
      %v7770 = vmul.f32 %v7726, %v7755
      %v7771 = vmul.f32 %v7727, %v7755
      %v7772 = vmul.f32 %v7728, %v7755
      %v7773 = vmul.f32 %v7729, %v7755
      %v7774 = vmul.f32 %v7730, %v7755
      %v7775 = vmul.f32 %v7731, %v7755
      %v7776 = vmul.f32 %v7732, %v7755
      %v7777 = vmul.f32 %v7733, %v7755
      %v7778 = vmul.f32 %v7734, %v7755
      %v7779 = vmul.f32 %v7735, %v7755
      %v7780 = vmul.f32 %v7736, %v7755
      %v7781 = vmul.f32 %v7737, %v7755
      %v7782 = vmul.f32 %v7738, %v7755
      %v7783 = vmul.f32 %v7739, %v7755
      %v7784 = vmul.f32 %v7740, %v7755
      %v7785 = vmul.f32 %v7741, %v7755
      %v7786 = vmul.f32 %v7742, %v7755
      %v7787 = vmul.f32 %v7743, %v7755
      %v7788 = vmul.f32 %v7744, %v7755
      %v7789 = vmul.f32 %v7745, %v7755
      %v7790 = vmul.f32 %v7746, %v7755
      %v7791 = vmul.f32 %v7747, %v7755
      %v7792 = vmul.f32 %v7748, %v7755
      %v7793 = vmul.f32 %v7749, %v7755
      %v7794 = vmul.f32 %v7750, %v7755
      %v7795 = vmul.f32 %v7751, %v7755
      %v7796 = vmul.f32 %v7752, %v7755
      %v7797 = vld [vmem:[%s4] sm:$0x1]
      %v7799 = vperm.slane %v7797, 0
      %v7801 = vadd.f32 %v7757, %v7799
      %v7802 = vadd.f32 %v7758, %v7799
      %v7803 = vadd.f32 %v7759, %v7799
      %v7804 = vadd.f32 %v7760, %v7799
      %v7805 = vadd.f32 %v7761, %v7799
      %v7806 = vadd.f32 %v7762, %v7799
      %v7807 = vadd.f32 %v7763, %v7799
      %v7808 = vadd.f32 %v7764, %v7799
      %v7809 = vadd.f32 %v7765, %v7799
      %v7810 = vadd.f32 %v7766, %v7799
      %v7811 = vadd.f32 %v7767, %v7799
      %v7812 = vadd.f32 %v7768, %v7799
      %v7813 = vadd.f32 %v7769, %v7799
      %v7814 = vadd.f32 %v7770, %v7799
      %v7815 = vadd.f32 %v7771, %v7799
      %v7816 = vadd.f32 %v7772, %v7799
      %v7817 = vadd.f32 %v7773, %v7799
      %v7818 = vadd.f32 %v7774, %v7799
      %v7819 = vadd.f32 %v7775, %v7799
      %v7820 = vadd.f32 %v7776, %v7799
      %v7821 = vadd.f32 %v7777, %v7799
      %v7822 = vadd.f32 %v7778, %v7799
      %v7823 = vadd.f32 %v7779, %v7799
      %v7824 = vadd.f32 %v7780, %v7799
      %v7825 = vadd.f32 %v7781, %v7799
      %v7826 = vadd.f32 %v7782, %v7799
      %v7827 = vadd.f32 %v7783, %v7799
      %v7828 = vadd.f32 %v7784, %v7799
      %v7829 = vadd.f32 %v7785, %v7799
      %v7830 = vadd.f32 %v7786, %v7799
      %v7831 = vadd.f32 %v7787, %v7799
      %v7832 = vadd.f32 %v7788, %v7799
      %v7833 = vadd.f32 %v7789, %v7799
      %v7834 = vadd.f32 %v7790, %v7799
      %v7835 = vadd.f32 %v7791, %v7799
      %v7836 = vadd.f32 %v7792, %v7799
      %v7837 = vadd.f32 %v7793, %v7799
      %v7838 = vadd.f32 %v7794, %v7799
      %v7839 = vadd.f32 %v7795, %v7799
      %v7840 = vadd.f32 %v7796, %v7799
      %v7841 = vmul.f32 %v7801, %v7673
      %v7842 = vmul.f32 %v7802, %v7674
      %v7843 = vmul.f32 %v7803, %v7675
      %v7844 = vmul.f32 %v7804, %v7676
      %v7845 = vmul.f32 %v7805, %v7677
      %v7846 = vmul.f32 %v7806, %v7678
      %v7847 = vmul.f32 %v7807, %v7679
      %v7848 = vmul.f32 %v7808, %v7680
      %v7849 = vmul.f32 %v7809, %v7681
      %v7850 = vmul.f32 %v7810, %v7682
      %v7851 = vmul.f32 %v7811, %v7683
      %v7852 = vmul.f32 %v7812, %v7684
      %v7853 = vmul.f32 %v7813, %v7685
      %v7854 = vmul.f32 %v7814, %v7686
      %v7855 = vmul.f32 %v7815, %v7687
      %v7856 = vmul.f32 %v7816, %v7688
      %v7857 = vmul.f32 %v7817, %v7689
      %v7858 = vmul.f32 %v7818, %v7690
      %v7859 = vmul.f32 %v7819, %v7691
      %v7860 = vmul.f32 %v7820, %v7692
      %v7861 = vmul.f32 %v7821, %v7693
      %v7862 = vmul.f32 %v7822, %v7694
      %v7863 = vmul.f32 %v7823, %v7695
      %v7864 = vmul.f32 %v7824, %v7696
      %v7865 = vmul.f32 %v7825, %v7697
      %v7866 = vmul.f32 %v7826, %v7698
      %v7867 = vmul.f32 %v7827, %v7699
      %v7868 = vmul.f32 %v7828, %v7700
      %v7869 = vmul.f32 %v7829, %v7701
      %v7870 = vmul.f32 %v7830, %v7702
      %v7871 = vmul.f32 %v7831, %v7703
      %v7872 = vmul.f32 %v7832, %v7704
      %v7873 = vmul.f32 %v7833, %v7705
      %v7874 = vmul.f32 %v7834, %v7706
      %v7875 = vmul.f32 %v7835, %v7707
      %v7876 = vmul.f32 %v7836, %v7708
      %v7877 = vmul.f32 %v7837, %v7709
      %v7878 = vmul.f32 %v7838, %v7710
      %v7879 = vmul.f32 %v7839, %v7711
      %v7880 = vmul.f32 %v7840, %v7712
      %v7881 = vadd.f32 %v7801, %v7841
      %v7882 = vadd.f32 %v7802, %v7842
      %v7883 = vadd.f32 %v7803, %v7843
      %v7884 = vadd.f32 %v7804, %v7844
      %v7885 = vadd.f32 %v7805, %v7845
      %v7886 = vadd.f32 %v7806, %v7846
      %v7887 = vadd.f32 %v7807, %v7847
      %v7888 = vadd.f32 %v7808, %v7848
      %v7889 = vadd.f32 %v7809, %v7849
      %v7890 = vadd.f32 %v7810, %v7850
      %v7891 = vadd.f32 %v7811, %v7851
      %v7892 = vadd.f32 %v7812, %v7852
      %v7893 = vadd.f32 %v7813, %v7853
      %v7894 = vadd.f32 %v7814, %v7854
      %v7895 = vadd.f32 %v7815, %v7855
      %v7896 = vadd.f32 %v7816, %v7856
      %v7897 = vadd.f32 %v7817, %v7857
      %v7898 = vadd.f32 %v7818, %v7858
      %v7899 = vadd.f32 %v7819, %v7859
      %v7900 = vadd.f32 %v7820, %v7860
      %v7901 = vadd.f32 %v7821, %v7861
      %v7902 = vadd.f32 %v7822, %v7862
      %v7903 = vadd.f32 %v7823, %v7863
      %v7904 = vadd.f32 %v7824, %v7864
      %v7905 = vadd.f32 %v7825, %v7865
      %v7906 = vadd.f32 %v7826, %v7866
      %v7907 = vadd.f32 %v7827, %v7867
      %v7908 = vadd.f32 %v7828, %v7868
      %v7909 = vadd.f32 %v7829, %v7869
      %v7910 = vadd.f32 %v7830, %v7870
      %v7911 = vadd.f32 %v7831, %v7871
      %v7912 = vadd.f32 %v7832, %v7872
      %v7913 = vadd.f32 %v7833, %v7873
      %v7914 = vadd.f32 %v7834, %v7874
      %v7915 = vadd.f32 %v7835, %v7875
      %v7916 = vadd.f32 %v7836, %v7876
      %v7917 = vadd.f32 %v7837, %v7877
      %v7918 = vadd.f32 %v7838, %v7878
      %v7919 = vadd.f32 %v7839, %v7879
      %v7920 = vadd.f32 %v7840, %v7880
      %7961 = vrot.lane.b32.xlu0 %v7673, 124
      %v7962 = vpop.permute.xlu0 %7961
      %7963 = vrot.lane.b32.xlu0 %v7674, 124
      %v7964 = vpop.permute.xlu0 %7963
      %7965 = vrot.lane.b32.xlu0 %v7675, 124
      %v7966 = vpop.permute.xlu0 %7965
      %7967 = vrot.lane.b32.xlu0 %v7676, 124
      %v7968 = vpop.permute.xlu0 %7967
      %7969 = vrot.lane.b32.xlu0 %v7677, 124
      %v7970 = vpop.permute.xlu0 %7969
      %7971 = vrot.lane.b32.xlu0 %v7678, 124
      %v7972 = vpop.permute.xlu0 %7971
      %7973 = vrot.lane.b32.xlu0 %v7679, 124
      %v7974 = vpop.permute.xlu0 %7973
      %7975 = vrot.lane.b32.xlu0 %v7680, 124
      %v7976 = vpop.permute.xlu0 %7975
      %7977 = vrot.lane.b32.xlu0 %v7681, 124
      %v7978 = vpop.permute.xlu0 %7977
      %7979 = vrot.lane.b32.xlu0 %v7682, 124
      %v7980 = vpop.permute.xlu0 %7979
      %7981 = vrot.lane.b32.xlu0 %v7683, 124
      %v7982 = vpop.permute.xlu0 %7981
      %7983 = vrot.lane.b32.xlu0 %v7684, 124
      %v7984 = vpop.permute.xlu0 %7983
      %7985 = vrot.lane.b32.xlu0 %v7685, 124
      %v7986 = vpop.permute.xlu0 %7985
      %7987 = vrot.lane.b32.xlu0 %v7686, 124
      %v7988 = vpop.permute.xlu0 %7987
      %7989 = vrot.lane.b32.xlu0 %v7687, 124
      %v7990 = vpop.permute.xlu0 %7989
      %7991 = vrot.lane.b32.xlu0 %v7688, 124
      %v7992 = vpop.permute.xlu0 %7991
      %7993 = vrot.lane.b32.xlu0 %v7689, 124
      %v7994 = vpop.permute.xlu0 %7993
      %7995 = vrot.lane.b32.xlu0 %v7690, 124
      %v7996 = vpop.permute.xlu0 %7995
      %7997 = vrot.lane.b32.xlu0 %v7691, 124
      %v7998 = vpop.permute.xlu0 %7997
      %7999 = vrot.lane.b32.xlu0 %v7692, 124
      %v8000 = vpop.permute.xlu0 %7999
      %8001 = vrot.lane.b32.xlu0 %v7693, 124
      %v8002 = vpop.permute.xlu0 %8001
      %8003 = vrot.lane.b32.xlu0 %v7694, 124
      %v8004 = vpop.permute.xlu0 %8003
      %8005 = vrot.lane.b32.xlu0 %v7695, 124
      %v8006 = vpop.permute.xlu0 %8005
      %8007 = vrot.lane.b32.xlu0 %v7696, 124
      %v8008 = vpop.permute.xlu0 %8007
      %8009 = vrot.lane.b32.xlu0 %v7697, 124
      %v8010 = vpop.permute.xlu0 %8009
      %8011 = vrot.lane.b32.xlu0 %v7698, 124
      %v8012 = vpop.permute.xlu0 %8011
      %8013 = vrot.lane.b32.xlu0 %v7699, 124
      %v8014 = vpop.permute.xlu0 %8013
      %8015 = vrot.lane.b32.xlu0 %v7700, 124
      %v8016 = vpop.permute.xlu0 %8015
      %8017 = vrot.lane.b32.xlu0 %v7701, 124
      %v8018 = vpop.permute.xlu0 %8017
      %8019 = vrot.lane.b32.xlu0 %v7702, 124
      %v8020 = vpop.permute.xlu0 %8019
      %8021 = vrot.lane.b32.xlu0 %v7703, 124
      %v8022 = vpop.permute.xlu0 %8021
      %8023 = vrot.lane.b32.xlu0 %v7704, 124
      %v8024 = vpop.permute.xlu0 %8023
      %8025 = vrot.lane.b32.xlu0 %v7705, 124
      %v8026 = vpop.permute.xlu0 %8025
      %8027 = vrot.lane.b32.xlu0 %v7706, 124
      %v8028 = vpop.permute.xlu0 %8027
      %8029 = vrot.lane.b32.xlu0 %v7707, 124
      %v8030 = vpop.permute.xlu0 %8029
      %8031 = vrot.lane.b32.xlu0 %v7708, 124
      %v8032 = vpop.permute.xlu0 %8031
      %8033 = vrot.lane.b32.xlu0 %v7709, 124
      %v8034 = vpop.permute.xlu0 %8033
      %8035 = vrot.lane.b32.xlu0 %v7710, 124
      %v8036 = vpop.permute.xlu0 %8035
      %8037 = vrot.lane.b32.xlu0 %v7711, 124
      %v8038 = vpop.permute.xlu0 %8037
      %8039 = vrot.lane.b32.xlu0 %v7712, 124
      %v8040 = vpop.permute.xlu0 %8039
      %v8081 = vadd.f32 %v7881, %v7962
      %v8082 = vadd.f32 %v7882, %v7964
      %v8083 = vadd.f32 %v7883, %v7966
      %v8084 = vadd.f32 %v7884, %v7968
      %v8085 = vadd.f32 %v7885, %v7970
      %v8086 = vadd.f32 %v7886, %v7972
      %v8087 = vadd.f32 %v7887, %v7974
      %v8088 = vadd.f32 %v7888, %v7976
      %v8089 = vadd.f32 %v7889, %v7978
      %v8090 = vadd.f32 %v7890, %v7980
      %v8091 = vadd.f32 %v7891, %v7982
      %v8092 = vadd.f32 %v7892, %v7984
      %v8093 = vadd.f32 %v7893, %v7986
      %v8094 = vadd.f32 %v7894, %v7988
      %v8095 = vadd.f32 %v7895, %v7990
      %v8096 = vadd.f32 %v7896, %v7992
      %v8097 = vadd.f32 %v7897, %v7994
      %v8098 = vadd.f32 %v7898, %v7996
      %v8099 = vadd.f32 %v7899, %v7998
      %v8100 = vadd.f32 %v7900, %v8000
      %v8101 = vadd.f32 %v7901, %v8002
      %v8102 = vadd.f32 %v7902, %v8004
      %v8103 = vadd.f32 %v7903, %v8006
      %v8104 = vadd.f32 %v7904, %v8008
      %v8105 = vadd.f32 %v7905, %v8010
      %v8106 = vadd.f32 %v7906, %v8012
      %v8107 = vadd.f32 %v7907, %v8014
      %v8108 = vadd.f32 %v7908, %v8016
      %v8109 = vadd.f32 %v7909, %v8018
      %v8110 = vadd.f32 %v7910, %v8020
      %v8111 = vadd.f32 %v7911, %v8022
      %v8112 = vadd.f32 %v7912, %v8024
      %v8113 = vadd.f32 %v7913, %v8026
      %v8114 = vadd.f32 %v7914, %v8028
      %v8115 = vadd.f32 %v7915, %v8030
      %v8116 = vadd.f32 %v7916, %v8032
      %v8117 = vadd.f32 %v7917, %v8034
      %v8118 = vadd.f32 %v7918, %v8036
      %v8119 = vadd.f32 %v7919, %v8038
      %v8120 = vadd.f32 %v7920, %v8040
      %vm8121 = vcmp.ge.f32.partialorder %v8081, 0.0
      %vm8122 = vcmp.ge.f32.partialorder %v8082, 0.0
      %vm8123 = vcmp.ge.f32.partialorder %v8083, 0.0
      %vm8124 = vcmp.ge.f32.partialorder %v8084, 0.0
      %vm8125 = vcmp.ge.f32.partialorder %v8085, 0.0
      %vm8126 = vcmp.ge.f32.partialorder %v8086, 0.0
      %vm8127 = vcmp.ge.f32.partialorder %v8087, 0.0
      %vm8128 = vcmp.ge.f32.partialorder %v8088, 0.0
      %vm8129 = vcmp.ge.f32.partialorder %v8089, 0.0
      %vm8130 = vcmp.ge.f32.partialorder %v8090, 0.0
      %vm8131 = vcmp.ge.f32.partialorder %v8091, 0.0
      %vm8132 = vcmp.ge.f32.partialorder %v8092, 0.0
      %vm8133 = vcmp.ge.f32.partialorder %v8093, 0.0
      %vm8134 = vcmp.ge.f32.partialorder %v8094, 0.0
      %vm8135 = vcmp.ge.f32.partialorder %v8095, 0.0
      %vm8136 = vcmp.ge.f32.partialorder %v8096, 0.0
      %vm8137 = vcmp.ge.f32.partialorder %v8097, 0.0
      %vm8138 = vcmp.ge.f32.partialorder %v8098, 0.0
      %vm8139 = vcmp.ge.f32.partialorder %v8099, 0.0
      %vm8140 = vcmp.ge.f32.partialorder %v8100, 0.0
      %vm8141 = vcmp.ge.f32.partialorder %v8101, 0.0
      %vm8142 = vcmp.ge.f32.partialorder %v8102, 0.0
      %vm8143 = vcmp.ge.f32.partialorder %v8103, 0.0
      %vm8144 = vcmp.ge.f32.partialorder %v8104, 0.0
      %vm8145 = vcmp.ge.f32.partialorder %v8105, 0.0
      %vm8146 = vcmp.ge.f32.partialorder %v8106, 0.0
      %vm8147 = vcmp.ge.f32.partialorder %v8107, 0.0
      %vm8148 = vcmp.ge.f32.partialorder %v8108, 0.0
      %vm8149 = vcmp.ge.f32.partialorder %v8109, 0.0
      %vm8150 = vcmp.ge.f32.partialorder %v8110, 0.0
      %vm8151 = vcmp.ge.f32.partialorder %v8111, 0.0
      %vm8152 = vcmp.ge.f32.partialorder %v8112, 0.0
      %vm8153 = vcmp.ge.f32.partialorder %v8113, 0.0
      %vm8154 = vcmp.ge.f32.partialorder %v8114, 0.0
      %vm8155 = vcmp.ge.f32.partialorder %v8115, 0.0
      %vm8156 = vcmp.ge.f32.partialorder %v8116, 0.0
      %vm8157 = vcmp.ge.f32.partialorder %v8117, 0.0
      %vm8158 = vcmp.ge.f32.partialorder %v8118, 0.0
      %vm8159 = vcmp.ge.f32.partialorder %v8119, 0.0
      %vm8160 = vcmp.ge.f32.partialorder %v8120, 0.0
      %v8161 = vmul.f32 %v8081, 0.2
      %v8162 = vmul.f32 %v8082, 0.2
      %v8163 = vmul.f32 %v8083, 0.2
      %v8164 = vmul.f32 %v8084, 0.2
      %v8165 = vmul.f32 %v8085, 0.2
      %v8166 = vmul.f32 %v8086, 0.2
      %v8167 = vmul.f32 %v8087, 0.2
      %v8168 = vmul.f32 %v8088, 0.2
      %v8169 = vmul.f32 %v8089, 0.2
      %v8170 = vmul.f32 %v8090, 0.2
      %v8171 = vmul.f32 %v8091, 0.2
      %v8172 = vmul.f32 %v8092, 0.2
      %v8173 = vmul.f32 %v8093, 0.2
      %v8174 = vmul.f32 %v8094, 0.2
      %v8175 = vmul.f32 %v8095, 0.2
      %v8176 = vmul.f32 %v8096, 0.2
      %v8177 = vmul.f32 %v8097, 0.2
      %v8178 = vmul.f32 %v8098, 0.2
      %v8179 = vmul.f32 %v8099, 0.2
      %v8180 = vmul.f32 %v8100, 0.2
      %v8181 = vmul.f32 %v8101, 0.2
      %v8182 = vmul.f32 %v8102, 0.2
      %v8183 = vmul.f32 %v8103, 0.2
      %v8184 = vmul.f32 %v8104, 0.2
      %v8185 = vmul.f32 %v8105, 0.2
      %v8186 = vmul.f32 %v8106, 0.2
      %v8187 = vmul.f32 %v8107, 0.2
      %v8188 = vmul.f32 %v8108, 0.2
      %v8189 = vmul.f32 %v8109, 0.2
      %v8190 = vmul.f32 %v8110, 0.2
      %v8191 = vmul.f32 %v8111, 0.2
      %v8192 = vmul.f32 %v8112, 0.2
      %v8193 = vmul.f32 %v8113, 0.2
      %v8194 = vmul.f32 %v8114, 0.2
      %v8195 = vmul.f32 %v8115, 0.2
      %v8196 = vmul.f32 %v8116, 0.2
      %v8197 = vmul.f32 %v8117, 0.2
      %v8198 = vmul.f32 %v8118, 0.2
      %v8199 = vmul.f32 %v8119, 0.2
      %v8200 = vmul.f32 %v8120, 0.2
      %v8201 = vsel %vm8121, %v8081, %v8161
      %v8202 = vsel %vm8122, %v8082, %v8162
      %v8203 = vsel %vm8123, %v8083, %v8163
      %v8204 = vsel %vm8124, %v8084, %v8164
      %v8205 = vsel %vm8125, %v8085, %v8165
      %v8206 = vsel %vm8126, %v8086, %v8166
      %v8207 = vsel %vm8127, %v8087, %v8167
      %v8208 = vsel %vm8128, %v8088, %v8168
      %v8209 = vsel %vm8129, %v8089, %v8169
      %v8210 = vsel %vm8130, %v8090, %v8170
      %v8211 = vsel %vm8131, %v8091, %v8171
      %v8212 = vsel %vm8132, %v8092, %v8172
      %v8213 = vsel %vm8133, %v8093, %v8173
      %v8214 = vsel %vm8134, %v8094, %v8174
      %v8215 = vsel %vm8135, %v8095, %v8175
      %v8216 = vsel %vm8136, %v8096, %v8176
      %v8217 = vsel %vm8137, %v8097, %v8177
      %v8218 = vsel %vm8138, %v8098, %v8178
      %v8219 = vsel %vm8139, %v8099, %v8179
      %v8220 = vsel %vm8140, %v8100, %v8180
      %v8221 = vsel %vm8141, %v8101, %v8181
      %v8222 = vsel %vm8142, %v8102, %v8182
      %v8223 = vsel %vm8143, %v8103, %v8183
      %v8224 = vsel %vm8144, %v8104, %v8184
      %v8225 = vsel %vm8145, %v8105, %v8185
      %v8226 = vsel %vm8146, %v8106, %v8186
      %v8227 = vsel %vm8147, %v8107, %v8187
      %v8228 = vsel %vm8148, %v8108, %v8188
      %v8229 = vsel %vm8149, %v8109, %v8189
      %v8230 = vsel %vm8150, %v8110, %v8190
      %v8231 = vsel %vm8151, %v8111, %v8191
      %v8232 = vsel %vm8152, %v8112, %v8192
      %v8233 = vsel %vm8153, %v8113, %v8193
      %v8234 = vsel %vm8154, %v8114, %v8194
      %v8235 = vsel %vm8155, %v8115, %v8195
      %v8236 = vsel %vm8156, %v8116, %v8196
      %v8237 = vsel %vm8157, %v8117, %v8197
      %v8238 = vsel %vm8158, %v8118, %v8198
      %v8239 = vsel %vm8159, %v8119, %v8199
      %v8240 = vsel %vm8160, %v8120, %v8200
      %8241 = vst.msk [vmem:[%s424] sm:$0xff] %vm482, %v8201
      %8242 = vst.msk [vmem:[%s424 + $0x8] sm:$0xff] %vm482, %v8202
      %8243 = vst.msk [vmem:[%s424 + $0x10] sm:$0xff] %vm482, %v8203
      %8244 = vst.msk [vmem:[%s424 + $0x18] sm:$0xff] %vm482, %v8204
      %8245 = vst.msk [vmem:[%s424 + $0x20] sm:$0xff] %vm482, %v8205
      %8246 = vst.msk [vmem:[%s424 + $0x28] sm:$0xff] %vm482, %v8206
      %8247 = vst.msk [vmem:[%s424 + $0x30] sm:$0xff] %vm482, %v8207
      %8248 = vst.msk [vmem:[%s424 + $0x38] sm:$0xff] %vm482, %v8208
      %8249 = vst.msk [vmem:[%s424 + $0x40] sm:$0xff] %vm482, %v8209
      %8250 = vst.msk [vmem:[%s424 + $0x48] sm:$0xff] %vm482, %v8210
      %8251 = vst.msk [vmem:[%s424 + $0x50] sm:$0xff] %vm482, %v8211
      %8252 = vst.msk [vmem:[%s424 + $0x58] sm:$0xff] %vm482, %v8212
      %8253 = vst.msk [vmem:[%s424 + $0x60] sm:$0xff] %vm482, %v8213
      %8254 = vst.msk [vmem:[%s424 + $0x68] sm:$0xff] %vm482, %v8214
      %8255 = vst.msk [vmem:[%s424 + $0x70] sm:$0xff] %vm482, %v8215
      %8256 = vst.msk [vmem:[%s424 + $0x78] sm:$0xff] %vm482, %v8216
      %8257 = vst.msk [vmem:[%s424 + $0x80] sm:$0xff] %vm482, %v8217
      %8258 = vst.msk [vmem:[%s424 + $0x88] sm:$0xff] %vm482, %v8218
      %8259 = vst.msk [vmem:[%s424 + $0x90] sm:$0xff] %vm482, %v8219
      %8260 = vst.msk [vmem:[%s424 + $0x98] sm:$0xff] %vm482, %v8220
      %8261 = vst.msk [vmem:[%s424 + $0xa0] sm:$0xff] %vm482, %v8221
      %8262 = vst.msk [vmem:[%s424 + $0xa8] sm:$0xff] %vm482, %v8222
      %8263 = vst.msk [vmem:[%s424 + $0xb0] sm:$0xff] %vm482, %v8223
      %8264 = vst.msk [vmem:[%s424 + $0xb8] sm:$0xff] %vm482, %v8224
      %8265 = vst.msk [vmem:[%s424 + $0xc0] sm:$0xff] %vm482, %v8225
      %8266 = vst.msk [vmem:[%s424 + $0xc8] sm:$0xff] %vm482, %v8226
      %8267 = vst.msk [vmem:[%s424 + $0xd0] sm:$0xff] %vm482, %v8227
      %8268 = vst.msk [vmem:[%s424 + $0xd8] sm:$0xff] %vm482, %v8228
      %8269 = vst.msk [vmem:[%s424 + $0xe0] sm:$0xff] %vm482, %v8229
      %8270 = vst.msk [vmem:[%s424 + $0xe8] sm:$0xff] %vm482, %v8230
      %8271 = vst.msk [vmem:[%s424 + $0xf0] sm:$0xff] %vm482, %v8231
      %8272 = vst.msk [vmem:[%s424 + $0xf8] sm:$0xff] %vm482, %v8232
      %8273 = vst.msk [vmem:[%s424 + $0x100] sm:$0xff] %vm482, %v8233
      %8274 = vst.msk [vmem:[%s424 + $0x108] sm:$0xff] %vm482, %v8234
      %8275 = vst.msk [vmem:[%s424 + $0x110] sm:$0xff] %vm482, %v8235
      %8276 = vst.msk [vmem:[%s424 + $0x118] sm:$0xff] %vm482, %v8236
      %8277 = vst.msk [vmem:[%s424 + $0x120] sm:$0xff] %vm482, %v8237
      %8278 = vst.msk [vmem:[%s424 + $0x128] sm:$0xff] %vm482, %v8238
      %8279 = vst.msk [vmem:[%s424 + $0x130] sm:$0xff] %vm482, %v8239
      %8280 = vst.msk [vmem:[%s424 + $0x138] sm:$0xff] %vm482, %v8240
      %s8281 = smul.u32 40, %s25
      %p8282 = scmp.lt.s32.totalorder %s24, 1
      %s8283 = scalar_select %p8282, %s24, 1
      %p8284 = scmp.lt.s32.totalorder %s8281, 39
      %s8285 = scalar_select %p8284, %s8281, 39
      %s8286 = smul.addr %s8283, 40
      %s8287 = sadd.s32 %s8285, %s8286
      %s8288 = smul.addr %s8287, 8
      %s8289 = scalar_lea.vmem %s9, %s8288
      // Predicated region
      $region57: #{spade_forward.7} parent=55 // pred_check
        %p8290 = pneg %p260
      $region58: #{spade_forward.7} parent=55 // pred_check_branch
        %8292 = sbr.rel (%p8290) target = $region60
      $region59: #{spade_forward.7} parent=55 // pred_region
        %s8293 = smul.u32 40, %s25
      $region60: #{spade_forward.7} parent=55 // pred_fallthru
        _
    $region56: #{spade_forward.7} parent=5 // pred_fallthru
      _
    %p8294 = scmp.le.s32.totalorder 2, %s15
    // Predicated region
    $region61: #{spade_forward.7} parent=5 // pred_check
      %p8295 = pneg %p8294
    $region62: #{spade_forward.7} parent=5 // pred_check_branch
      %8297 = sbr.rel (%p8295) target = $region64
    $region63: #{spade_forward.7} parent=5 // pred_region
      %s8298 = ssub.s32 %s15, 2
      // Predicated region
      $region65: #{spade_forward.7} parent=63 // pred_check
        %p8299 = pneg %p266
      $region66: #{spade_forward.7} parent=63 // pred_check_branch
        %8301 = sbr.rel (%p8299) target = $region68
      $region67: #{spade_forward.7} parent=63 // pred_region
        %s8302 = smul.u32 40, %s27
        %p8303 = scmp.lt.s32.totalorder %s26, 1
        %s8304 = scalar_select %p8303, %s26, 1
        %p8305 = scmp.lt.s32.totalorder %s8302, 39
        %s8306 = scalar_select %p8305, %s8302, 39
        %s8307 = smul.addr %s8304, 40
        %s8308 = sadd.s32 %s8306, %s8307
        %s8309 = smul.addr %s8308, 8
        %s8310 = scalar_lea.vmem %s9, %s8309
      $region68: #{spade_forward.7} parent=63 // pred_fallthru
        _
    $region64: #{spade_forward.7} parent=5 // pred_fallthru
      _
  $region6: #{spade_forward.7} parent=0 // loop_footer
    %s19 = sadd.s32 1, %s15
  $region7: #{spade_forward.7} parent=0 // loop_footer_branch
    %14 = sbr.rel target = $region3
  $region8: #{spade_forward.7} parent=0 // loop_exit
    _

</llo_original>
